<compile_context>
chip_gen: v6e
topology: v6e:2x2x1
jax: 0.10.0
libtpu: 0.0.40
codegen_flags: <defaults>
</compile_context>

<pallas_src>
import functools
import math

import jax
import jax.numpy as jnp
from jax import lax
from jax.experimental import pallas as pl
from jax.experimental.pallas import tpu as pltpu


def _round_up(x, m):
    return (x + m - 1) // m * m


# ------------------------------ fused kernel ------------------------------- #

def _conv_seq_kernel(xp1_ref, w1_ref, b1_ref, rw_ref, rb_ref, o_ref,
                     y1_ref, xp2_ref, xcur_ref, vbuf_ref,
                     *, H, W, Wp1, Ho, Wo, Wp2, Cout, row_chunk):
    """Whole ConvSequence for one image.

    xp1_ref : (1, (H+3)*Wp1, Cin)  bf16  zero-padded, row-flattened NHWC input
    w1_ref  : (9*Cin, Cout)        bf16  first-conv im2col weights
    b1_ref  : (1, Cout)            f32
    rw_ref  : (4, 9*Cout, Cout)    bf16  residual-conv im2col weights
    rb_ref  : (4, 1, Cout)         f32
    o_ref   : (1, Ho*Wo, Cout)     f32   final activations (NHWC, flattened)
    scratch : y1 (H*Wp1, Cout) f32 | xp2 ((Ho+3)*Wp2, Cout) bf16
              xcur (Ho*Wo, Cout) f32 | vbuf (>=W+1, Cout) f32
    """
    Fo2 = Ho * Wp2

    # ---------------- stage 1: 3x3 conv (pad=1) at H x W ---------------- #
    # One im2col matmul (K = 9*Cin) per 4-row chunk; chunking keeps the live
    # f32 result + bf16 patches well under the vreg budget (no spills).
    b1 = b1_ref[...]
    w1 = w1_ref[...]
    for i0 in range(0, H, row_chunk):
        nrows = row_chunk * Wp1
        patches = jnp.concatenate(
            [xp1_ref[0, pl.ds((i0 + di) * Wp1 + dj, nrows), :]
             for di in range(3) for dj in range(3)], axis=1)   # (nrows, 9*Cin) bf16
        y = jnp.dot(patches, w1, preferred_element_type=jnp.float32) + b1
        y1_ref[pl.ds(i0 * Wp1, nrows), :] = y

    # ------- stage 2: max_pool2d(k=3, s=2, p=1), subsample in-kernel ----- #
    # vbuf row 0 is the -inf left pad; rows 1..W hold the vertical max of the
    # (up to) 3 contributing image rows.  The three stride-2 reads pick columns
    # {2q-1, 2q, 2q+1} for q = 0..Wo-1.
    vbuf_ref[pl.ds(0, 1), :] = jnp.full((1, Cout), -jnp.inf, jnp.float32)
    for p in range(Ho):
        rows = [r for r in (2 * p - 1, 2 * p, 2 * p + 1) if 0 <= r < H]
        v = y1_ref[pl.ds(rows[0] * Wp1, W), :]
        for r in rows[1:]:
            v = jnp.maximum(v, y1_ref[pl.ds(r * Wp1, W), :])
        vbuf_ref[pl.ds(1, W), :] = v
        pooled = jnp.maximum(
            jnp.maximum(vbuf_ref[pl.ds(0, Wo, 2), :],
                        vbuf_ref[pl.ds(1, Wo, 2), :]),
            vbuf_ref[pl.ds(2, Wo, 2), :])
        xcur_ref[pl.ds(p * Wo, Wo), :] = pooled

    # -------------- stage 3: two residual blocks at Ho x Wo -------------- #
    # xp2 is the zero-padded, row-flattened conv input; padding positions are
    # zeroed once and only valid positions are ever rewritten (relu(0) == 0).
    xp2_ref[...] = jnp.zeros(xp2_ref.shape, xp2_ref.dtype)

    def scatter_relu(x, stride):        # rows of width Wo at p*stride -> xp2 (bf16)
        for p in range(Ho):
            xp2_ref[pl.ds((p + 1) * Wp2 + 1, Wo), :] = (
                jnp.maximum(x[p * stride:p * stride + Wo, :], 0.0)
                .astype(jnp.bfloat16))

    def gather_valid(y):                # drop junk cols in-kernel: (Fo2,C)->(Ho*Wo,C)
        return jnp.concatenate(
            [y[p * Wp2:p * Wp2 + Wo, :] for p in range(Ho)], axis=0)

    def conv_small(w, b):               # single im2col matmul, K = 9*Cout
        patches = jnp.concatenate(
            [xp2_ref[pl.ds(di * Wp2 + dj, Fo2), :]
             for di in range(3) for dj in range(3)], axis=1)
        return jnp.dot(patches, w, preferred_element_type=jnp.float32) + b

    for blk in range(2):
        scatter_relu(xcur_ref[...], Wo)                              # relu(x)
        h = conv_small(rw_ref[2 * blk], rb_ref[2 * blk])             # conv0
        scatter_relu(h, Wp2)                                         # relu(conv0)
        g = conv_small(rw_ref[2 * blk + 1], rb_ref[2 * blk + 1])     # conv1
        xcur_ref[...] = xcur_ref[...] + gather_valid(g)              # + residual

    o_ref[0] = xcur_ref[...]


# -------------------------------- wrapper ----------------------------------- #

def conv_sequence_forward(x_nchw, packed):
    """ConvSequence.forward (conv -> maxpool(3,2,1) -> 2 residual blocks), NCHW."""
    N, Cin, H, W = x_nchw.shape
    Cout = packed["b1"].shape[-1]
    row_chunk = 4
    assert H % 2 == 0 and W % 2 == 0 and H % row_chunk == 0
    # TODO(synk): odd H/W (e.g. 84x84 Atari frames) needs one extra -inf pooled
    #             row/col and a remainder row-chunk; not needed for this config.

    Wp1 = _round_up(W + 2, 8)            # sublane-aligned padded widths
    Ho, Wo = (H + 1) // 2, (W + 1) // 2
    Wp2 = _round_up(Wo + 2, 8)
    Fp1 = (H + 3) * Wp1
    Fp2 = (Ho + 3) * Wp2
    vbuf_rows = _round_up(W + 2, 8)

    # Tiny host-side prep (few KB, fused by XLA): NCHW -> padded bf16 flat NHWC.
    xp = jnp.transpose(x_nchw, (0, 2, 3, 1)).astype(jnp.bfloat16)
    xp = jnp.pad(xp, ((0, 0), (1, 2), (1, Wp1 - W - 1), (0, 0)))
    xp = xp.reshape(N, Fp1, Cin)

    kernel = functools.partial(
        _conv_seq_kernel, H=H, W=W, Wp1=Wp1, Ho=Ho, Wo=Wo, Wp2=Wp2,
        Cout=Cout, row_chunk=row_chunk)

    out = pl.pallas_call(
        kernel,
        out_shape=jax.ShapeDtypeStruct((N, Ho * Wo, Cout), jnp.float32),
        grid=(N,),
        in_specs=[
            pl.BlockSpec((1, Fp1, Cin), lambda n: (n, 0, 0)),
            pl.BlockSpec((9 * Cin, Cout), lambda n: (0, 0)),
            pl.BlockSpec((1, Cout), lambda n: (0, 0)),
            pl.BlockSpec((4, 9 * Cout, Cout), lambda n: (0, 0, 0)),
            pl.BlockSpec((4, 1, Cout), lambda n: (0, 0, 0)),
        ],
        out_specs=pl.BlockSpec((1, Ho * Wo, Cout), lambda n: (n, 0, 0)),
        # Total scratch ~36 KB (+ ~30 KB double-buffered I/O) -- far below the
        # scoped-VMEM default on v5e/v6e/v7x; re-budget here if scaled up on v7x.
        scratch_shapes=[
            pltpu.VMEM((H * Wp1, Cout), jnp.float32),     # conv1 output
            pltpu.VMEM((Fp2, Cout), jnp.bfloat16),        # padded res-conv input
            pltpu.VMEM((Ho * Wo, Cout), jnp.float32),     # residual stream x
            pltpu.VMEM((vbuf_rows, Cout), jnp.float32),   # pooling row buffer
        ],
        compiler_params=pltpu.CompilerParams(
            dimension_semantics=("parallel",)),           # 1 image per TC on v7x
    )(xp, packed["w1"], packed["b1"], packed["rw"], packed["rb"])

    out = out.reshape(N, Ho, Wo, Cout)
    return jnp.transpose(out, (0, 3, 1, 2))               # NHWC -> NCHW


# --------------------------- params (PyTorch-style) -------------------------- #

def init_conv(key, cin, cout):
    bound = 1.0 / math.sqrt(cin * 9)
    kw, kb = jax.random.split(key)
    w = jax.random.uniform(kw, (cout, cin, 3, 3), jnp.float32, -bound, bound)
    b = jax.random.uniform(kb, (cout,), jnp.float32, -bound, bound)
    return w, b


def init_conv_sequence_params(key, in_channels, out_channels):
    keys = jax.random.split(key, 5)
    p = {}
    p["conv_w"], p["conv_b"] = init_conv(keys[0], in_channels, out_channels)
    p["res0_w0"], p["res0_b0"] = init_conv(keys[1], out_channels, out_channels)
    p["res0_w1"], p["res0_b1"] = init_conv(keys[2], out_channels, out_channels)
    p["res1_w0"], p["res1_b0"] = init_conv(keys[3], out_channels, out_channels)
    p["res1_w1"], p["res1_b1"] = init_conv(keys[4], out_channels, out_channels)
    return p


def pack_params(p):
    """Repack PyTorch-layout weights into kernel-ready bf16 slabs (done once)."""
    def im2col_w(w):                                # (Co,Ci,3,3) -> (9*Ci,Co)
        co, ci = w.shape[0], w.shape[1]
        return jnp.transpose(w, (2, 3, 1, 0)).reshape(9 * ci, co)

    cout = p["conv_w"].shape[0]
    return {
        "w1": im2col_w(p["conv_w"]).astype(jnp.bfloat16),
        "b1": p["conv_b"].reshape(1, cout).astype(jnp.float32),
        "rw": jnp.stack([im2col_w(p[k]) for k in
                         ("res0_w0", "res0_w1", "res1_w0", "res1_w1")]
                        ).astype(jnp.bfloat16),
        "rb": jnp.stack([p[k].reshape(1, cout) for k in
                         ("res0_b0", "res0_b1", "res1_b0", "res1_b1")]
                        ).astype(jnp.float32),
    }


# ------------------------------ pure-JAX reference --------------------------- #

def _ref_conv(x, w, b):
    y = lax.conv_general_dilated(
        x, w, window_strides=(1, 1), padding=[(1, 1), (1, 1)],
        dimension_numbers=("NCHW", "OIHW", "NCHW"),
        precision=lax.Precision.HIGHEST)
    return y + b[None, :, None, None]


def conv_sequence_ref(x, p):
    x = _ref_conv(x, p["conv_w"], p["conv_b"])
    x = lax.reduce_window(x, -jnp.inf, lax.max, (1, 1, 3, 3), (1, 1, 2, 2),
                          [(0, 0), (0, 0), (1, 1), (1, 1)])
    for blk in ("res0", "res1"):
        inputs = x
        h = _ref_conv(jnp.maximum(x, 0.0), p[f"{blk}_w0"], p[f"{blk}_b0"])
        x = _ref_conv(jnp.maximum(h, 0.0), p[f"{blk}_w1"], p[f"{blk}_b1"]) + inputs
    return x


# ----------------------------------- main ------------------------------------ #

if __name__ == "__main__":
    key = jax.random.PRNGKey(0)
    k_x, k_p = jax.random.split(key)

    input_shape = (4, 16, 16)          # (C, H, W)
    out_channels = 16
    batch = 2

    x = jax.random.normal(k_x, (batch,) + input_shape, jnp.float32)
    params = init_conv_sequence_params(k_p, input_shape[0], out_channels)
    packed = pack_params(params)       # one-time weight repack, outside the hot path

    fwd = jax.jit(conv_sequence_forward)
    out = jax.block_until_ready(fwd(x, packed))

    # shape check mirrors ConvSequence.get_output_shape()
    expected = (batch, out_channels,
                (input_shape[1] + 1) // 2, (input_shape[2] + 1) // 2)
    assert out.shape == expected, (out.shape, expected)

    # numerical check against an f32 reference; bf16 MXU inputs through 4 stacked
    # convs give ~1e-2 worst-case abs error, so the tolerance is set accordingly.
    ref = jax.block_until_ready(conv_sequence_ref(x, params))
    max_err = float(jnp.max(jnp.abs(out - ref)))
    assert jnp.allclose(out, ref, rtol=2e-2, atol=2e-2), max_err

    print("KERNEL_OK")
</pallas_src>

<mosaic_0001>
module attributes {stable_mosaic.version = 11 : i64} {
  func.func @_conv_seq_kernel(%arg0: i32, %arg1: memref<1x456x4xbf16, #tpu.memory_space<vmem>>, %arg2: memref<36x16xbf16, #tpu.memory_space<vmem>>, %arg3: memref<1x16xf32, #tpu.memory_space<vmem>>, %arg4: memref<4x144x16xbf16, #tpu.memory_space<vmem>>, %arg5: memref<4x1x16xf32, #tpu.memory_space<vmem>>, %arg6: memref<1x64x16xf32, #tpu.memory_space<vmem>>, %arg7: memref<384x16xf32, #tpu.memory_space<vmem>>, %arg8: memref<176x16xbf16, #tpu.memory_space<vmem>>, %arg9: memref<64x16xf32, #tpu.memory_space<vmem>>, %arg10: memref<24x16xf32, #tpu.memory_space<vmem>>) attributes {dimension_semantics = [#tpu.dimension_semantics<parallel>], iteration_bounds = array<i64: 2>, scalar_prefetch = 0 : i64, scratch_operands = 4 : i64, tpu.core_type = #tpu.core_type<tc>, window_params = [{transform_indices = @transform_0, window_bounds = array<i64: 1, 456, 4>}, {pipeline_mode = #tpu.pipeline_mode<synchronous>, transform_indices = @transform_1, window_bounds = array<i64: 36, 16>}, {pipeline_mode = #tpu.pipeline_mode<synchronous>, transform_indices = @transform_2, window_bounds = array<i64: 1, 16>}, {pipeline_mode = #tpu.pipeline_mode<synchronous>, transform_indices = @transform_3, window_bounds = array<i64: 4, 144, 16>}, {pipeline_mode = #tpu.pipeline_mode<synchronous>, transform_indices = @transform_4, window_bounds = array<i64: 4, 1, 16>}, {transform_indices = @transform_5, window_bounds = array<i64: 1, 64, 16>}]} {
    %c0 = arith.constant 0 : index
    %c0_0 = arith.constant 0 : index
    %0 = vector.load %arg3[%c0, %c0_0] : memref<1x16xf32, #tpu.memory_space<vmem>>, vector<1x16xf32>
    %c0_1 = arith.constant 0 : index
    %c0_2 = arith.constant 0 : index
    %1 = vector.load %arg2[%c0_1, %c0_2] : memref<36x16xbf16, #tpu.memory_space<vmem>>, vector<36x16xbf16>
    %c0_3 = arith.constant 0 : index
    %c0_4 = arith.constant 0 : index
    %c0_5 = arith.constant 0 : index
    %2 = vector.load %arg1[%c0_3, %c0_4, %c0_5] : memref<1x456x4xbf16, #tpu.memory_space<vmem>>, vector<1x96x4xbf16>
    %3 = vector.shape_cast %2 : vector<1x96x4xbf16> to vector<96x4xbf16>
    %c0_6 = arith.constant 0 : index
    %c1 = arith.constant 1 : index
    %c0_7 = arith.constant 0 : index
    %4 = vector.load %arg1[%c0_6, %c1, %c0_7] : memref<1x456x4xbf16, #tpu.memory_space<vmem>>, vector<1x96x4xbf16>
    %5 = vector.shape_cast %4 : vector<1x96x4xbf16> to vector<96x4xbf16>
    %c0_8 = arith.constant 0 : index
    %c2 = arith.constant 2 : index
    %c0_9 = arith.constant 0 : index
    %6 = vector.load %arg1[%c0_8, %c2, %c0_9] : memref<1x456x4xbf16, #tpu.memory_space<vmem>>, vector<1x96x4xbf16>
    %7 = vector.shape_cast %6 : vector<1x96x4xbf16> to vector<96x4xbf16>
    %c0_10 = arith.constant 0 : index
    %c24 = arith.constant 24 : index
    %c0_11 = arith.constant 0 : index
    %8 = vector.load %arg1[%c0_10, %c24, %c0_11] : memref<1x456x4xbf16, #tpu.memory_space<vmem>>, vector<1x96x4xbf16>
    %9 = vector.shape_cast %8 : vector<1x96x4xbf16> to vector<96x4xbf16>
    %c0_12 = arith.constant 0 : index
    %c25 = arith.constant 25 : index
    %c0_13 = arith.constant 0 : index
    %10 = vector.load %arg1[%c0_12, %c25, %c0_13] : memref<1x456x4xbf16, #tpu.memory_space<vmem>>, vector<1x96x4xbf16>
    %11 = vector.shape_cast %10 : vector<1x96x4xbf16> to vector<96x4xbf16>
    %c0_14 = arith.constant 0 : index
    %c26 = arith.constant 26 : index
    %c0_15 = arith.constant 0 : index
    %12 = vector.load %arg1[%c0_14, %c26, %c0_15] : memref<1x456x4xbf16, #tpu.memory_space<vmem>>, vector<1x96x4xbf16>
    %13 = vector.shape_cast %12 : vector<1x96x4xbf16> to vector<96x4xbf16>
    %c0_16 = arith.constant 0 : index
    %c48 = arith.constant 48 : index
    %c0_17 = arith.constant 0 : index
    %14 = vector.load %arg1[%c0_16, %c48, %c0_17] : memref<1x456x4xbf16, #tpu.memory_space<vmem>>, vector<1x96x4xbf16>
    %15 = vector.shape_cast %14 : vector<1x96x4xbf16> to vector<96x4xbf16>
    %c0_18 = arith.constant 0 : index
    %c49 = arith.constant 49 : index
    %c0_19 = arith.constant 0 : index
    %16 = vector.load %arg1[%c0_18, %c49, %c0_19] : memref<1x456x4xbf16, #tpu.memory_space<vmem>>, vector<1x96x4xbf16>
    %17 = vector.shape_cast %16 : vector<1x96x4xbf16> to vector<96x4xbf16>
    %c0_20 = arith.constant 0 : index
    %c50 = arith.constant 50 : index
    %c0_21 = arith.constant 0 : index
    %18 = vector.load %arg1[%c0_20, %c50, %c0_21] : memref<1x456x4xbf16, #tpu.memory_space<vmem>>, vector<1x96x4xbf16>
    %19 = vector.shape_cast %18 : vector<1x96x4xbf16> to vector<96x4xbf16>
    %20 = tpu.concatenate %3, %5, %7, %9, %11, %13, %15, %17, %19 in 1 : vector<96x4xbf16>, vector<96x4xbf16>, vector<96x4xbf16>, vector<96x4xbf16>, vector<96x4xbf16>, vector<96x4xbf16>, vector<96x4xbf16>, vector<96x4xbf16>, vector<96x4xbf16> -> vector<96x36xbf16>
    %cst = arith.constant dense<0.000000e+00> : vector<96x16xf32>
    %21 = tpu.matmul %20, %1, %cst {dimension_numbers = #tpu.dot_dimension_numbers<[1], [0], [0], [1], [0, 0, 1, 1], [], []>} : vector<96x36xbf16>, vector<36x16xbf16>, vector<96x16xf32> -> vector<96x16xf32>
    %22 = vector.broadcast %0 : vector<1x16xf32> to vector<96x16xf32>
    %23 = arith.addf %21, %22 : vector<96x16xf32>
    %c0_22 = arith.constant 0 : index
    %c0_23 = arith.constant 0 : index
    %24 = vector.load %arg7[%c0_22, %c0_23] : memref<384x16xf32, #tpu.memory_space<vmem>>, vector<96x16xf32>
    tpu.vector_store %arg7[%c0_22, %c0_23], %23 {strides = array<i32>} : memref<384x16xf32, #tpu.memory_space<vmem>>, vector<96x16xf32>,
    %c0_24 = arith.constant 0 : index
    %c96 = arith.constant 96 : index
    %c0_25 = arith.constant 0 : index
    %25 = vector.load %arg1[%c0_24, %c96, %c0_25] : memref<1x456x4xbf16, #tpu.memory_space<vmem>>, vector<1x96x4xbf16>
    %26 = vector.shape_cast %25 : vector<1x96x4xbf16> to vector<96x4xbf16>
    %c0_26 = arith.constant 0 : index
    %c97 = arith.constant 97 : index
    %c0_27 = arith.constant 0 : index
    %27 = vector.load %arg1[%c0_26, %c97, %c0_27] : memref<1x456x4xbf16, #tpu.memory_space<vmem>>, vector<1x96x4xbf16>
    %28 = vector.shape_cast %27 : vector<1x96x4xbf16> to vector<96x4xbf16>
    %c0_28 = arith.constant 0 : index
    %c98 = arith.constant 98 : index
    %c0_29 = arith.constant 0 : index
    %29 = vector.load %arg1[%c0_28, %c98, %c0_29] : memref<1x456x4xbf16, #tpu.memory_space<vmem>>, vector<1x96x4xbf16>
    %30 = vector.shape_cast %29 : vector<1x96x4xbf16> to vector<96x4xbf16>
    %c0_30 = arith.constant 0 : index
    %c120 = arith.constant 120 : index
    %c0_31 = arith.constant 0 : index
    %31 = vector.load %arg1[%c0_30, %c120, %c0_31] : memref<1x456x4xbf16, #tpu.memory_space<vmem>>, vector<1x96x4xbf16>
    %32 = vector.shape_cast %31 : vector<1x96x4xbf16> to vector<96x4xbf16>
    %c0_32 = arith.constant 0 : index
    %c121 = arith.constant 121 : index
    %c0_33 = arith.constant 0 : index
    %33 = vector.load %arg1[%c0_32, %c121, %c0_33] : memref<1x456x4xbf16, #tpu.memory_space<vmem>>, vector<1x96x4xbf16>
    %34 = vector.shape_cast %33 : vector<1x96x4xbf16> to vector<96x4xbf16>
    %c0_34 = arith.constant 0 : index
    %c122 = arith.constant 122 : index
    %c0_35 = arith.constant 0 : index
    %35 = vector.load %arg1[%c0_34, %c122, %c0_35] : memref<1x456x4xbf16, #tpu.memory_space<vmem>>, vector<1x96x4xbf16>
    %36 = vector.shape_cast %35 : vector<1x96x4xbf16> to vector<96x4xbf16>
    %c0_36 = arith.constant 0 : index
    %c144 = arith.constant 144 : index
    %c0_37 = arith.constant 0 : index
    %37 = vector.load %arg1[%c0_36, %c144, %c0_37] : memref<1x456x4xbf16, #tpu.memory_space<vmem>>, vector<1x96x4xbf16>
    %38 = vector.shape_cast %37 : vector<1x96x4xbf16> to vector<96x4xbf16>
    %c0_38 = arith.constant 0 : index
    %c145 = arith.constant 145 : index
    %c0_39 = arith.constant 0 : index
    %39 = vector.load %arg1[%c0_38, %c145, %c0_39] : memref<1x456x4xbf16, #tpu.memory_space<vmem>>, vector<1x96x4xbf16>
    %40 = vector.shape_cast %39 : vector<1x96x4xbf16> to vector<96x4xbf16>
    %c0_40 = arith.constant 0 : index
    %c146 = arith.constant 146 : index
    %c0_41 = arith.constant 0 : index
    %41 = vector.load %arg1[%c0_40, %c146, %c0_41] : memref<1x456x4xbf16, #tpu.memory_space<vmem>>, vector<1x96x4xbf16>
    %42 = vector.shape_cast %41 : vector<1x96x4xbf16> to vector<96x4xbf16>
    %43 = tpu.concatenate %26, %28, %30, %32, %34, %36, %38, %40, %42 in 1 : vector<96x4xbf16>, vector<96x4xbf16>, vector<96x4xbf16>, vector<96x4xbf16>, vector<96x4xbf16>, vector<96x4xbf16>, vector<96x4xbf16>, vector<96x4xbf16>, vector<96x4xbf16> -> vector<96x36xbf16>
    %cst_42 = arith.constant dense<0.000000e+00> : vector<96x16xf32>
    %44 = tpu.matmul %43, %1, %cst_42 {dimension_numbers = #tpu.dot_dimension_numbers<[1], [0], [0], [1], [0, 0, 1, 1], [], []>} : vector<96x36xbf16>, vector<36x16xbf16>, vector<96x16xf32> -> vector<96x16xf32>
    %45 = vector.broadcast %0 : vector<1x16xf32> to vector<96x16xf32>
    %46 = arith.addf %44, %45 : vector<96x16xf32>
    %c96_43 = arith.constant 96 : index
    %c0_44 = arith.constant 0 : index
    %47 = vector.load %arg7[%c96_43, %c0_44] : memref<384x16xf32, #tpu.memory_space<vmem>>, vector<96x16xf32>
    tpu.vector_store %arg7[%c96_43, %c0_44], %46 {strides = array<i32>} : memref<384x16xf32, #tpu.memory_space<vmem>>, vector<96x16xf32>,
    %c0_45 = arith.constant 0 : index
    %c192 = arith.constant 192 : index
    %c0_46 = arith.constant 0 : index
    %48 = vector.load %arg1[%c0_45, %c192, %c0_46] : memref<1x456x4xbf16, #tpu.memory_space<vmem>>, vector<1x96x4xbf16>
    %49 = vector.shape_cast %48 : vector<1x96x4xbf16> to vector<96x4xbf16>
    %c0_47 = arith.constant 0 : index
    %c193 = arith.constant 193 : index
    %c0_48 = arith.constant 0 : index
    %50 = vector.load %arg1[%c0_47, %c193, %c0_48] : memref<1x456x4xbf16, #tpu.memory_space<vmem>>, vector<1x96x4xbf16>
    %51 = vector.shape_cast %50 : vector<1x96x4xbf16> to vector<96x4xbf16>
    %c0_49 = arith.constant 0 : index
    %c194 = arith.constant 194 : index
    %c0_50 = arith.constant 0 : index
    %52 = vector.load %arg1[%c0_49, %c194, %c0_50] : memref<1x456x4xbf16, #tpu.memory_space<vmem>>, vector<1x96x4xbf16>
    %53 = vector.shape_cast %52 : vector<1x96x4xbf16> to vector<96x4xbf16>
    %c0_51 = arith.constant 0 : index
    %c216 = arith.constant 216 : index
    %c0_52 = arith.constant 0 : index
    %54 = vector.load %arg1[%c0_51, %c216, %c0_52] : memref<1x456x4xbf16, #tpu.memory_space<vmem>>, vector<1x96x4xbf16>
    %55 = vector.shape_cast %54 : vector<1x96x4xbf16> to vector<96x4xbf16>
    %c0_53 = arith.constant 0 : index
    %c217 = arith.constant 217 : index
    %c0_54 = arith.constant 0 : index
    %56 = vector.load %arg1[%c0_53, %c217, %c0_54] : memref<1x456x4xbf16, #tpu.memory_space<vmem>>, vector<1x96x4xbf16>
    %57 = vector.shape_cast %56 : vector<1x96x4xbf16> to vector<96x4xbf16>
    %c0_55 = arith.constant 0 : index
    %c218 = arith.constant 218 : index
    %c0_56 = arith.constant 0 : index
    %58 = vector.load %arg1[%c0_55, %c218, %c0_56] : memref<1x456x4xbf16, #tpu.memory_space<vmem>>, vector<1x96x4xbf16>
    %59 = vector.shape_cast %58 : vector<1x96x4xbf16> to vector<96x4xbf16>
    %c0_57 = arith.constant 0 : index
    %c240 = arith.constant 240 : index
    %c0_58 = arith.constant 0 : index
    %60 = vector.load %arg1[%c0_57, %c240, %c0_58] : memref<1x456x4xbf16, #tpu.memory_space<vmem>>, vector<1x96x4xbf16>
    %61 = vector.shape_cast %60 : vector<1x96x4xbf16> to vector<96x4xbf16>
    %c0_59 = arith.constant 0 : index
    %c241 = arith.constant 241 : index
    %c0_60 = arith.constant 0 : index
    %62 = vector.load %arg1[%c0_59, %c241, %c0_60] : memref<1x456x4xbf16, #tpu.memory_space<vmem>>, vector<1x96x4xbf16>
    %63 = vector.shape_cast %62 : vector<1x96x4xbf16> to vector<96x4xbf16>
    %c0_61 = arith.constant 0 : index
    %c242 = arith.constant 242 : index
    %c0_62 = arith.constant 0 : index
    %64 = vector.load %arg1[%c0_61, %c242, %c0_62] : memref<1x456x4xbf16, #tpu.memory_space<vmem>>, vector<1x96x4xbf16>
    %65 = vector.shape_cast %64 : vector<1x96x4xbf16> to vector<96x4xbf16>
    %66 = tpu.concatenate %49, %51, %53, %55, %57, %59, %61, %63, %65 in 1 : vector<96x4xbf16>, vector<96x4xbf16>, vector<96x4xbf16>, vector<96x4xbf16>, vector<96x4xbf16>, vector<96x4xbf16>, vector<96x4xbf16>, vector<96x4xbf16>, vector<96x4xbf16> -> vector<96x36xbf16>
    %cst_63 = arith.constant dense<0.000000e+00> : vector<96x16xf32>
    %67 = tpu.matmul %66, %1, %cst_63 {dimension_numbers = #tpu.dot_dimension_numbers<[1], [0], [0], [1], [0, 0, 1, 1], [], []>} : vector<96x36xbf16>, vector<36x16xbf16>, vector<96x16xf32> -> vector<96x16xf32>
    %68 = vector.broadcast %0 : vector<1x16xf32> to vector<96x16xf32>
    %69 = arith.addf %67, %68 : vector<96x16xf32>
    %c192_64 = arith.constant 192 : index
    %c0_65 = arith.constant 0 : index
    %70 = vector.load %arg7[%c192_64, %c0_65] : memref<384x16xf32, #tpu.memory_space<vmem>>, vector<96x16xf32>
    tpu.vector_store %arg7[%c192_64, %c0_65], %69 {strides = array<i32>} : memref<384x16xf32, #tpu.memory_space<vmem>>, vector<96x16xf32>,
    %c0_66 = arith.constant 0 : index
    %c288 = arith.constant 288 : index
    %c0_67 = arith.constant 0 : index
    %71 = vector.load %arg1[%c0_66, %c288, %c0_67] : memref<1x456x4xbf16, #tpu.memory_space<vmem>>, vector<1x96x4xbf16>
    %72 = vector.shape_cast %71 : vector<1x96x4xbf16> to vector<96x4xbf16>
    %c0_68 = arith.constant 0 : index
    %c289 = arith.constant 289 : index
    %c0_69 = arith.constant 0 : index
    %73 = vector.load %arg1[%c0_68, %c289, %c0_69] : memref<1x456x4xbf16, #tpu.memory_space<vmem>>, vector<1x96x4xbf16>
    %74 = vector.shape_cast %73 : vector<1x96x4xbf16> to vector<96x4xbf16>
    %c0_70 = arith.constant 0 : index
    %c290 = arith.constant 290 : index
    %c0_71 = arith.constant 0 : index
    %75 = vector.load %arg1[%c0_70, %c290, %c0_71] : memref<1x456x4xbf16, #tpu.memory_space<vmem>>, vector<1x96x4xbf16>
    %76 = vector.shape_cast %75 : vector<1x96x4xbf16> to vector<96x4xbf16>
    %c0_72 = arith.constant 0 : index
    %c312 = arith.constant 312 : index
    %c0_73 = arith.constant 0 : index
    %77 = vector.load %arg1[%c0_72, %c312, %c0_73] : memref<1x456x4xbf16, #tpu.memory_space<vmem>>, vector<1x96x4xbf16>
    %78 = vector.shape_cast %77 : vector<1x96x4xbf16> to vector<96x4xbf16>
    %c0_74 = arith.constant 0 : index
    %c313 = arith.constant 313 : index
    %c0_75 = arith.constant 0 : index
    %79 = vector.load %arg1[%c0_74, %c313, %c0_75] : memref<1x456x4xbf16, #tpu.memory_space<vmem>>, vector<1x96x4xbf16>
    %80 = vector.shape_cast %79 : vector<1x96x4xbf16> to vector<96x4xbf16>
    %c0_76 = arith.constant 0 : index
    %c314 = arith.constant 314 : index
    %c0_77 = arith.constant 0 : index
    %81 = vector.load %arg1[%c0_76, %c314, %c0_77] : memref<1x456x4xbf16, #tpu.memory_space<vmem>>, vector<1x96x4xbf16>
    %82 = vector.shape_cast %81 : vector<1x96x4xbf16> to vector<96x4xbf16>
    %c0_78 = arith.constant 0 : index
    %c336 = arith.constant 336 : index
    %c0_79 = arith.constant 0 : index
    %83 = vector.load %arg1[%c0_78, %c336, %c0_79] : memref<1x456x4xbf16, #tpu.memory_space<vmem>>, vector<1x96x4xbf16>
    %84 = vector.shape_cast %83 : vector<1x96x4xbf16> to vector<96x4xbf16>
    %c0_80 = arith.constant 0 : index
    %c337 = arith.constant 337 : index
    %c0_81 = arith.constant 0 : index
    %85 = vector.load %arg1[%c0_80, %c337, %c0_81] : memref<1x456x4xbf16, #tpu.memory_space<vmem>>, vector<1x96x4xbf16>
    %86 = vector.shape_cast %85 : vector<1x96x4xbf16> to vector<96x4xbf16>
    %c0_82 = arith.constant 0 : index
    %c338 = arith.constant 338 : index
    %c0_83 = arith.constant 0 : index
    %87 = vector.load %arg1[%c0_82, %c338, %c0_83] : memref<1x456x4xbf16, #tpu.memory_space<vmem>>, vector<1x96x4xbf16>
    %88 = vector.shape_cast %87 : vector<1x96x4xbf16> to vector<96x4xbf16>
    %89 = tpu.concatenate %72, %74, %76, %78, %80, %82, %84, %86, %88 in 1 : vector<96x4xbf16>, vector<96x4xbf16>, vector<96x4xbf16>, vector<96x4xbf16>, vector<96x4xbf16>, vector<96x4xbf16>, vector<96x4xbf16>, vector<96x4xbf16>, vector<96x4xbf16> -> vector<96x36xbf16>
    %cst_84 = arith.constant dense<0.000000e+00> : vector<96x16xf32>
    %90 = tpu.matmul %89, %1, %cst_84 {dimension_numbers = #tpu.dot_dimension_numbers<[1], [0], [0], [1], [0, 0, 1, 1], [], []>} : vector<96x36xbf16>, vector<36x16xbf16>, vector<96x16xf32> -> vector<96x16xf32>
    %91 = vector.broadcast %0 : vector<1x16xf32> to vector<96x16xf32>
    %92 = arith.addf %90, %91 : vector<96x16xf32>
    %c288_85 = arith.constant 288 : index
    %c0_86 = arith.constant 0 : index
    %93 = vector.load %arg7[%c288_85, %c0_86] : memref<384x16xf32, #tpu.memory_space<vmem>>, vector<96x16xf32>
    tpu.vector_store %arg7[%c288_85, %c0_86], %92 {strides = array<i32>} : memref<384x16xf32, #tpu.memory_space<vmem>>, vector<96x16xf32>,
    %cst_87 = arith.constant 0xFF800000 : f32
    %94 = vector.broadcast %cst_87 : f32 to vector<1x16xf32>
    %c0_88 = arith.constant 0 : index
    %c0_89 = arith.constant 0 : index
    %95 = vector.load %arg10[%c0_88, %c0_89] : memref<24x16xf32, #tpu.memory_space<vmem>>, vector<1x16xf32>
    tpu.vector_store %arg10[%c0_88, %c0_89], %94 {strides = array<i32>} : memref<24x16xf32, #tpu.memory_space<vmem>>, vector<1x16xf32>,
    %c0_90 = arith.constant 0 : index
    %c0_91 = arith.constant 0 : index
    %96 = vector.load %arg7[%c0_90, %c0_91] : memref<384x16xf32, #tpu.memory_space<vmem>>, vector<16x16xf32>
    %c24_92 = arith.constant 24 : index
    %c0_93 = arith.constant 0 : index
    %97 = vector.load %arg7[%c24_92, %c0_93] : memref<384x16xf32, #tpu.memory_space<vmem>>, vector<16x16xf32>
    %98 = arith.maximumf %96, %97 : vector<16x16xf32>
    %c1_94 = arith.constant 1 : index
    %c0_95 = arith.constant 0 : index
    %99 = vector.load %arg10[%c1_94, %c0_95] : memref<24x16xf32, #tpu.memory_space<vmem>>, vector<16x16xf32>
    tpu.vector_store %arg10[%c1_94, %c0_95], %98 {strides = array<i32>} : memref<24x16xf32, #tpu.memory_space<vmem>>, vector<16x16xf32>,
    %c0_96 = arith.constant 0 : index
    %c0_97 = arith.constant 0 : index
    %100 = tpu.strided_load %arg10[%c0_96, %c0_97] {strides = array<i32: 2, 1>} : memref<24x16xf32, #tpu.memory_space<vmem>>, vector<8x16xf32>
    %c1_98 = arith.constant 1 : index
    %c0_99 = arith.constant 0 : index
    %101 = tpu.strided_load %arg10[%c1_98, %c0_99] {strides = array<i32: 2, 1>} : memref<24x16xf32, #tpu.memory_space<vmem>>, vector<8x16xf32>
    %102 = arith.maximumf %100, %101 : vector<8x16xf32>
    %c2_100 = arith.constant 2 : index
    %c0_101 = arith.constant 0 : index
    %103 = tpu.strided_load %arg10[%c2_100, %c0_101] {strides = array<i32: 2, 1>} : memref<24x16xf32, #tpu.memory_space<vmem>>, vector<8x16xf32>
    %104 = arith.maximumf %102, %103 : vector<8x16xf32>
    %c0_102 = arith.constant 0 : index
    %c0_103 = arith.constant 0 : index
    %105 = vector.load %arg9[%c0_102, %c0_103] : memref<64x16xf32, #tpu.memory_space<vmem>>, vector<8x16xf32>
    tpu.vector_store %arg9[%c0_102, %c0_103], %104 {strides = array<i32>} : memref<64x16xf32, #tpu.memory_space<vmem>>, vector<8x16xf32>,
    %c24_104 = arith.constant 24 : index
    %c0_105 = arith.constant 0 : index
    %106 = vector.load %arg7[%c24_104, %c0_105] : memref<384x16xf32, #tpu.memory_space<vmem>>, vector<16x16xf32>
    %c48_106 = arith.constant 48 : index
    %c0_107 = arith.constant 0 : index
    %107 = vector.load %arg7[%c48_106, %c0_107] : memref<384x16xf32, #tpu.memory_space<vmem>>, vector<16x16xf32>
    %108 = arith.maximumf %106, %107 : vector<16x16xf32>
    %c72 = arith.constant 72 : index
    %c0_108 = arith.constant 0 : index
    %109 = vector.load %arg7[%c72, %c0_108] : memref<384x16xf32, #tpu.memory_space<vmem>>, vector<16x16xf32>
    %110 = arith.maximumf %108, %109 : vector<16x16xf32>
    %c1_109 = arith.constant 1 : index
    %c0_110 = arith.constant 0 : index
    %111 = vector.load %arg10[%c1_109, %c0_110] : memref<24x16xf32, #tpu.memory_space<vmem>>, vector<16x16xf32>
    tpu.vector_store %arg10[%c1_109, %c0_110], %110 {strides = array<i32>} : memref<24x16xf32, #tpu.memory_space<vmem>>, vector<16x16xf32>,
    %c0_111 = arith.constant 0 : index
    %c0_112 = arith.constant 0 : index
    %112 = tpu.strided_load %arg10[%c0_111, %c0_112] {strides = array<i32: 2, 1>} : memref<24x16xf32, #tpu.memory_space<vmem>>, vector<8x16xf32>
    %c1_113 = arith.constant 1 : index
    %c0_114 = arith.constant 0 : index
    %113 = tpu.strided_load %arg10[%c1_113, %c0_114] {strides = array<i32: 2, 1>} : memref<24x16xf32, #tpu.memory_space<vmem>>, vector<8x16xf32>
    %114 = arith.maximumf %112, %113 : vector<8x16xf32>
    %c2_115 = arith.constant 2 : index
    %c0_116 = arith.constant 0 : index
    %115 = tpu.strided_load %arg10[%c2_115, %c0_116] {strides = array<i32: 2, 1>} : memref<24x16xf32, #tpu.memory_space<vmem>>, vector<8x16xf32>
    %116 = arith.maximumf %114, %115 : vector<8x16xf32>
    %c8 = arith.constant 8 : index
    %c0_117 = arith.constant 0 : index
    %117 = vector.load %arg9[%c8, %c0_117] : memref<64x16xf32, #tpu.memory_space<vmem>>, vector<8x16xf32>
    tpu.vector_store %arg9[%c8, %c0_117], %116 {strides = array<i32>} : memref<64x16xf32, #tpu.memory_space<vmem>>, vector<8x16xf32>,
    %c72_118 = arith.constant 72 : index
    %c0_119 = arith.constant 0 : index
    %118 = vector.load %arg7[%c72_118, %c0_119] : memref<384x16xf32, #tpu.memory_space<vmem>>, vector<16x16xf32>
    %c96_120 = arith.constant 96 : index
    %c0_121 = arith.constant 0 : index
    %119 = vector.load %arg7[%c96_120, %c0_121] : memref<384x16xf32, #tpu.memory_space<vmem>>, vector<16x16xf32>
    %120 = arith.maximumf %118, %119 : vector<16x16xf32>
    %c120_122 = arith.constant 120 : index
    %c0_123 = arith.constant 0 : index
    %121 = vector.load %arg7[%c120_122, %c0_123] : memref<384x16xf32, #tpu.memory_space<vmem>>, vector<16x16xf32>
    %122 = arith.maximumf %120, %121 : vector<16x16xf32>
    %c1_124 = arith.constant 1 : index
    %c0_125 = arith.constant 0 : index
    %123 = vector.load %arg10[%c1_124, %c0_125] : memref<24x16xf32, #tpu.memory_space<vmem>>, vector<16x16xf32>
    tpu.vector_store %arg10[%c1_124, %c0_125], %122 {strides = array<i32>} : memref<24x16xf32, #tpu.memory_space<vmem>>, vector<16x16xf32>,
    %c0_126 = arith.constant 0 : index
    %c0_127 = arith.constant 0 : index
    %124 = tpu.strided_load %arg10[%c0_126, %c0_127] {strides = array<i32: 2, 1>} : memref<24x16xf32, #tpu.memory_space<vmem>>, vector<8x16xf32>
    %c1_128 = arith.constant 1 : index
    %c0_129 = arith.constant 0 : index
    %125 = tpu.strided_load %arg10[%c1_128, %c0_129] {strides = array<i32: 2, 1>} : memref<24x16xf32, #tpu.memory_space<vmem>>, vector<8x16xf32>
    %126 = arith.maximumf %124, %125 : vector<8x16xf32>
    %c2_130 = arith.constant 2 : index
    %c0_131 = arith.constant 0 : index
    %127 = tpu.strided_load %arg10[%c2_130, %c0_131] {strides = array<i32: 2, 1>} : memref<24x16xf32, #tpu.memory_space<vmem>>, vector<8x16xf32>
    %128 = arith.maximumf %126, %127 : vector<8x16xf32>
    %c16 = arith.constant 16 : index
    %c0_132 = arith.constant 0 : index
    %129 = vector.load %arg9[%c16, %c0_132] : memref<64x16xf32, #tpu.memory_space<vmem>>, vector<8x16xf32>
    tpu.vector_store %arg9[%c16, %c0_132], %128 {strides = array<i32>} : memref<64x16xf32, #tpu.memory_space<vmem>>, vector<8x16xf32>,
    %c120_133 = arith.constant 120 : index
    %c0_134 = arith.constant 0 : index
    %130 = vector.load %arg7[%c120_133, %c0_134] : memref<384x16xf32, #tpu.memory_space<vmem>>, vector<16x16xf32>
    %c144_135 = arith.constant 144 : index
    %c0_136 = arith.constant 0 : index
    %131 = vector.load %arg7[%c144_135, %c0_136] : memref<384x16xf32, #tpu.memory_space<vmem>>, vector<16x16xf32>
    %132 = arith.maximumf %130, %131 : vector<16x16xf32>
    %c168 = arith.constant 168 : index
    %c0_137 = arith.constant 0 : index
    %133 = vector.load %arg7[%c168, %c0_137] : memref<384x16xf32, #tpu.memory_space<vmem>>, vector<16x16xf32>
    %134 = arith.maximumf %132, %133 : vector<16x16xf32>
    %c1_138 = arith.constant 1 : index
    %c0_139 = arith.constant 0 : index
    %135 = vector.load %arg10[%c1_138, %c0_139] : memref<24x16xf32, #tpu.memory_space<vmem>>, vector<16x16xf32>
    tpu.vector_store %arg10[%c1_138, %c0_139], %134 {strides = array<i32>} : memref<24x16xf32, #tpu.memory_space<vmem>>, vector<16x16xf32>,
    %c0_140 = arith.constant 0 : index
    %c0_141 = arith.constant 0 : index
    %136 = tpu.strided_load %arg10[%c0_140, %c0_141] {strides = array<i32: 2, 1>} : memref<24x16xf32, #tpu.memory_space<vmem>>, vector<8x16xf32>
    %c1_142 = arith.constant 1 : index
    %c0_143 = arith.constant 0 : index
    %137 = tpu.strided_load %arg10[%c1_142, %c0_143] {strides = array<i32: 2, 1>} : memref<24x16xf32, #tpu.memory_space<vmem>>, vector<8x16xf32>
    %138 = arith.maximumf %136, %137 : vector<8x16xf32>
    %c2_144 = arith.constant 2 : index
    %c0_145 = arith.constant 0 : index
    %139 = tpu.strided_load %arg10[%c2_144, %c0_145] {strides = array<i32: 2, 1>} : memref<24x16xf32, #tpu.memory_space<vmem>>, vector<8x16xf32>
    %140 = arith.maximumf %138, %139 : vector<8x16xf32>
    %c24_146 = arith.constant 24 : index
    %c0_147 = arith.constant 0 : index
    %141 = vector.load %arg9[%c24_146, %c0_147] : memref<64x16xf32, #tpu.memory_space<vmem>>, vector<8x16xf32>
    tpu.vector_store %arg9[%c24_146, %c0_147], %140 {strides = array<i32>} : memref<64x16xf32, #tpu.memory_space<vmem>>, vector<8x16xf32>,
    %c168_148 = arith.constant 168 : index
    %c0_149 = arith.constant 0 : index
    %142 = vector.load %arg7[%c168_148, %c0_149] : memref<384x16xf32, #tpu.memory_space<vmem>>, vector<16x16xf32>
    %c192_150 = arith.constant 192 : index
    %c0_151 = arith.constant 0 : index
    %143 = vector.load %arg7[%c192_150, %c0_151] : memref<384x16xf32, #tpu.memory_space<vmem>>, vector<16x16xf32>
    %144 = arith.maximumf %142, %143 : vector<16x16xf32>
    %c216_152 = arith.constant 216 : index
    %c0_153 = arith.constant 0 : index
    %145 = vector.load %arg7[%c216_152, %c0_153] : memref<384x16xf32, #tpu.memory_space<vmem>>, vector<16x16xf32>
    %146 = arith.maximumf %144, %145 : vector<16x16xf32>
    %c1_154 = arith.constant 1 : index
    %c0_155 = arith.constant 0 : index
    %147 = vector.load %arg10[%c1_154, %c0_155] : memref<24x16xf32, #tpu.memory_space<vmem>>, vector<16x16xf32>
    tpu.vector_store %arg10[%c1_154, %c0_155], %146 {strides = array<i32>} : memref<24x16xf32, #tpu.memory_space<vmem>>, vector<16x16xf32>,
    %c0_156 = arith.constant 0 : index
    %c0_157 = arith.constant 0 : index
    %148 = tpu.strided_load %arg10[%c0_156, %c0_157] {strides = array<i32: 2, 1>} : memref<24x16xf32, #tpu.memory_space<vmem>>, vector<8x16xf32>
    %c1_158 = arith.constant 1 : index
    %c0_159 = arith.constant 0 : index
    %149 = tpu.strided_load %arg10[%c1_158, %c0_159] {strides = array<i32: 2, 1>} : memref<24x16xf32, #tpu.memory_space<vmem>>, vector<8x16xf32>
    %150 = arith.maximumf %148, %149 : vector<8x16xf32>
    %c2_160 = arith.constant 2 : index
    %c0_161 = arith.constant 0 : index
    %151 = tpu.strided_load %arg10[%c2_160, %c0_161] {strides = array<i32: 2, 1>} : memref<24x16xf32, #tpu.memory_space<vmem>>, vector<8x16xf32>
    %152 = arith.maximumf %150, %151 : vector<8x16xf32>
    %c32 = arith.constant 32 : index
    %c0_162 = arith.constant 0 : index
    %153 = vector.load %arg9[%c32, %c0_162] : memref<64x16xf32, #tpu.memory_space<vmem>>, vector<8x16xf32>
    tpu.vector_store %arg9[%c32, %c0_162], %152 {strides = array<i32>} : memref<64x16xf32, #tpu.memory_space<vmem>>, vector<8x16xf32>,
    %c216_163 = arith.constant 216 : index
    %c0_164 = arith.constant 0 : index
    %154 = vector.load %arg7[%c216_163, %c0_164] : memref<384x16xf32, #tpu.memory_space<vmem>>, vector<16x16xf32>
    %c240_165 = arith.constant 240 : index
    %c0_166 = arith.constant 0 : index
    %155 = vector.load %arg7[%c240_165, %c0_166] : memref<384x16xf32, #tpu.memory_space<vmem>>, vector<16x16xf32>
    %156 = arith.maximumf %154, %155 : vector<16x16xf32>
    %c264 = arith.constant 264 : index
    %c0_167 = arith.constant 0 : index
    %157 = vector.load %arg7[%c264, %c0_167] : memref<384x16xf32, #tpu.memory_space<vmem>>, vector<16x16xf32>
    %158 = arith.maximumf %156, %157 : vector<16x16xf32>
    %c1_168 = arith.constant 1 : index
    %c0_169 = arith.constant 0 : index
    %159 = vector.load %arg10[%c1_168, %c0_169] : memref<24x16xf32, #tpu.memory_space<vmem>>, vector<16x16xf32>
    tpu.vector_store %arg10[%c1_168, %c0_169], %158 {strides = array<i32>} : memref<24x16xf32, #tpu.memory_space<vmem>>, vector<16x16xf32>,
    %c0_170 = arith.constant 0 : index
    %c0_171 = arith.constant 0 : index
    %160 = tpu.strided_load %arg10[%c0_170, %c0_171] {strides = array<i32: 2, 1>} : memref<24x16xf32, #tpu.memory_space<vmem>>, vector<8x16xf32>
    %c1_172 = arith.constant 1 : index
    %c0_173 = arith.constant 0 : index
    %161 = tpu.strided_load %arg10[%c1_172, %c0_173] {strides = array<i32: 2, 1>} : memref<24x16xf32, #tpu.memory_space<vmem>>, vector<8x16xf32>
    %162 = arith.maximumf %160, %161 : vector<8x16xf32>
    %c2_174 = arith.constant 2 : index
    %c0_175 = arith.constant 0 : index
    %163 = tpu.strided_load %arg10[%c2_174, %c0_175] {strides = array<i32: 2, 1>} : memref<24x16xf32, #tpu.memory_space<vmem>>, vector<8x16xf32>
    %164 = arith.maximumf %162, %163 : vector<8x16xf32>
    %c40 = arith.constant 40 : index
    %c0_176 = arith.constant 0 : index
    %165 = vector.load %arg9[%c40, %c0_176] : memref<64x16xf32, #tpu.memory_space<vmem>>, vector<8x16xf32>
    tpu.vector_store %arg9[%c40, %c0_176], %164 {strides = array<i32>} : memref<64x16xf32, #tpu.memory_space<vmem>>, vector<8x16xf32>,
    %c264_177 = arith.constant 264 : index
    %c0_178 = arith.constant 0 : index
    %166 = vector.load %arg7[%c264_177, %c0_178] : memref<384x16xf32, #tpu.memory_space<vmem>>, vector<16x16xf32>
    %c288_179 = arith.constant 288 : index
    %c0_180 = arith.constant 0 : index
    %167 = vector.load %arg7[%c288_179, %c0_180] : memref<384x16xf32, #tpu.memory_space<vmem>>, vector<16x16xf32>
    %168 = arith.maximumf %166, %167 : vector<16x16xf32>
    %c312_181 = arith.constant 312 : index
    %c0_182 = arith.constant 0 : index
    %169 = vector.load %arg7[%c312_181, %c0_182] : memref<384x16xf32, #tpu.memory_space<vmem>>, vector<16x16xf32>
    %170 = arith.maximumf %168, %169 : vector<16x16xf32>
    %c1_183 = arith.constant 1 : index
    %c0_184 = arith.constant 0 : index
    %171 = vector.load %arg10[%c1_183, %c0_184] : memref<24x16xf32, #tpu.memory_space<vmem>>, vector<16x16xf32>
    tpu.vector_store %arg10[%c1_183, %c0_184], %170 {strides = array<i32>} : memref<24x16xf32, #tpu.memory_space<vmem>>, vector<16x16xf32>,
    %c0_185 = arith.constant 0 : index
    %c0_186 = arith.constant 0 : index
    %172 = tpu.strided_load %arg10[%c0_185, %c0_186] {strides = array<i32: 2, 1>} : memref<24x16xf32, #tpu.memory_space<vmem>>, vector<8x16xf32>
    %c1_187 = arith.constant 1 : index
    %c0_188 = arith.constant 0 : index
    %173 = tpu.strided_load %arg10[%c1_187, %c0_188] {strides = array<i32: 2, 1>} : memref<24x16xf32, #tpu.memory_space<vmem>>, vector<8x16xf32>
    %174 = arith.maximumf %172, %173 : vector<8x16xf32>
    %c2_189 = arith.constant 2 : index
    %c0_190 = arith.constant 0 : index
    %175 = tpu.strided_load %arg10[%c2_189, %c0_190] {strides = array<i32: 2, 1>} : memref<24x16xf32, #tpu.memory_space<vmem>>, vector<8x16xf32>
    %176 = arith.maximumf %174, %175 : vector<8x16xf32>
    %c48_191 = arith.constant 48 : index
    %c0_192 = arith.constant 0 : index
    %177 = vector.load %arg9[%c48_191, %c0_192] : memref<64x16xf32, #tpu.memory_space<vmem>>, vector<8x16xf32>
    tpu.vector_store %arg9[%c48_191, %c0_192], %176 {strides = array<i32>} : memref<64x16xf32, #tpu.memory_space<vmem>>, vector<8x16xf32>,
    %c312_193 = arith.constant 312 : index
    %c0_194 = arith.constant 0 : index
    %178 = vector.load %arg7[%c312_193, %c0_194] : memref<384x16xf32, #tpu.memory_space<vmem>>, vector<16x16xf32>
    %c336_195 = arith.constant 336 : index
    %c0_196 = arith.constant 0 : index
    %179 = vector.load %arg7[%c336_195, %c0_196] : memref<384x16xf32, #tpu.memory_space<vmem>>, vector<16x16xf32>
    %180 = arith.maximumf %178, %179 : vector<16x16xf32>
    %c360 = arith.constant 360 : index
    %c0_197 = arith.constant 0 : index
    %181 = vector.load %arg7[%c360, %c0_197] : memref<384x16xf32, #tpu.memory_space<vmem>>, vector<16x16xf32>
    %182 = arith.maximumf %180, %181 : vector<16x16xf32>
    %c1_198 = arith.constant 1 : index
    %c0_199 = arith.constant 0 : index
    %183 = vector.load %arg10[%c1_198, %c0_199] : memref<24x16xf32, #tpu.memory_space<vmem>>, vector<16x16xf32>
    tpu.vector_store %arg10[%c1_198, %c0_199], %182 {strides = array<i32>} : memref<24x16xf32, #tpu.memory_space<vmem>>, vector<16x16xf32>,
    %c0_200 = arith.constant 0 : index
    %c0_201 = arith.constant 0 : index
    %184 = tpu.strided_load %arg10[%c0_200, %c0_201] {strides = array<i32: 2, 1>} : memref<24x16xf32, #tpu.memory_space<vmem>>, vector<8x16xf32>
    %c1_202 = arith.constant 1 : index
    %c0_203 = arith.constant 0 : index
    %185 = tpu.strided_load %arg10[%c1_202, %c0_203] {strides = array<i32: 2, 1>} : memref<24x16xf32, #tpu.memory_space<vmem>>, vector<8x16xf32>
    %186 = arith.maximumf %184, %185 : vector<8x16xf32>
    %c2_204 = arith.constant 2 : index
    %c0_205 = arith.constant 0 : index
    %187 = tpu.strided_load %arg10[%c2_204, %c0_205] {strides = array<i32: 2, 1>} : memref<24x16xf32, #tpu.memory_space<vmem>>, vector<8x16xf32>
    %188 = arith.maximumf %186, %187 : vector<8x16xf32>
    %c56 = arith.constant 56 : index
    %c0_206 = arith.constant 0 : index
    %189 = vector.load %arg9[%c56, %c0_206] : memref<64x16xf32, #tpu.memory_space<vmem>>, vector<8x16xf32>
    tpu.vector_store %arg9[%c56, %c0_206], %188 {strides = array<i32>} : memref<64x16xf32, #tpu.memory_space<vmem>>, vector<8x16xf32>,
    %cst_207 = arith.constant 0.000000e+00 : bf16
    %190 = vector.broadcast %cst_207 : bf16 to vector<176x16xbf16>
    %c0_208 = arith.constant 0 : index
    %c0_209 = arith.constant 0 : index
    %191 = vector.load %arg8[%c0_208, %c0_209] : memref<176x16xbf16, #tpu.memory_space<vmem>>, vector<176x16xbf16>
    tpu.vector_store %arg8[%c0_208, %c0_209], %190 {strides = array<i32>} : memref<176x16xbf16, #tpu.memory_space<vmem>>, vector<176x16xbf16>,
    %c0_210 = arith.constant 0 : index
    %c0_211 = arith.constant 0 : index
    %192 = vector.load %arg9[%c0_210, %c0_211] : memref<64x16xf32, #tpu.memory_space<vmem>>, vector<64x16xf32>
    %193 = vector.extract_strided_slice %192 {offsets = [0, 0], sizes = [8, 16], strides = [1, 1]} : vector<64x16xf32> to vector<8x16xf32>
    %cst_212 = arith.constant 0.000000e+00 : f32
    %194 = vector.broadcast %cst_212 : f32 to vector<8x16xf32>
    %195 = arith.maximumf %193, %194 : vector<8x16xf32>
    %196 = arith.truncf %195 : vector<8x16xf32> to vector<8x16xbf16>
    %c17 = arith.constant 17 : index
    %c0_213 = arith.constant 0 : index
    %197 = vector.load %arg8[%c17, %c0_213] : memref<176x16xbf16, #tpu.memory_space<vmem>>, vector<8x16xbf16>
    tpu.vector_store %arg8[%c17, %c0_213], %196 {strides = array<i32>} : memref<176x16xbf16, #tpu.memory_space<vmem>>, vector<8x16xbf16>,
    %198 = vector.extract_strided_slice %192 {offsets = [8, 0], sizes = [8, 16], strides = [1, 1]} : vector<64x16xf32> to vector<8x16xf32>
    %cst_214 = arith.constant 0.000000e+00 : f32
    %199 = vector.broadcast %cst_214 : f32 to vector<8x16xf32>
    %200 = arith.maximumf %198, %199 : vector<8x16xf32>
    %201 = arith.truncf %200 : vector<8x16xf32> to vector<8x16xbf16>
    %c33 = arith.constant 33 : index
    %c0_215 = arith.constant 0 : index
    %202 = vector.load %arg8[%c33, %c0_215] : memref<176x16xbf16, #tpu.memory_space<vmem>>, vector<8x16xbf16>
    tpu.vector_store %arg8[%c33, %c0_215], %201 {strides = array<i32>} : memref<176x16xbf16, #tpu.memory_space<vmem>>, vector<8x16xbf16>,
    %203 = vector.extract_strided_slice %192 {offsets = [16, 0], sizes = [8, 16], strides = [1, 1]} : vector<64x16xf32> to vector<8x16xf32>
    %cst_216 = arith.constant 0.000000e+00 : f32
    %204 = vector.broadcast %cst_216 : f32 to vector<8x16xf32>
    %205 = arith.maximumf %203, %204 : vector<8x16xf32>
    %206 = arith.truncf %205 : vector<8x16xf32> to vector<8x16xbf16>
    %c49_217 = arith.constant 49 : index
    %c0_218 = arith.constant 0 : index
    %207 = vector.load %arg8[%c49_217, %c0_218] : memref<176x16xbf16, #tpu.memory_space<vmem>>, vector<8x16xbf16>
    tpu.vector_store %arg8[%c49_217, %c0_218], %206 {strides = array<i32>} : memref<176x16xbf16, #tpu.memory_space<vmem>>, vector<8x16xbf16>,
    %208 = vector.extract_strided_slice %192 {offsets = [24, 0], sizes = [8, 16], strides = [1, 1]} : vector<64x16xf32> to vector<8x16xf32>
    %cst_219 = arith.constant 0.000000e+00 : f32
    %209 = vector.broadcast %cst_219 : f32 to vector<8x16xf32>
    %210 = arith.maximumf %208, %209 : vector<8x16xf32>
    %211 = arith.truncf %210 : vector<8x16xf32> to vector<8x16xbf16>
    %c65 = arith.constant 65 : index
    %c0_220 = arith.constant 0 : index
    %212 = vector.load %arg8[%c65, %c0_220] : memref<176x16xbf16, #tpu.memory_space<vmem>>, vector<8x16xbf16>
    tpu.vector_store %arg8[%c65, %c0_220], %211 {strides = array<i32>} : memref<176x16xbf16, #tpu.memory_space<vmem>>, vector<8x16xbf16>,
    %213 = vector.extract_strided_slice %192 {offsets = [32, 0], sizes = [8, 16], strides = [1, 1]} : vector<64x16xf32> to vector<8x16xf32>
    %cst_221 = arith.constant 0.000000e+00 : f32
    %214 = vector.broadcast %cst_221 : f32 to vector<8x16xf32>
    %215 = arith.maximumf %213, %214 : vector<8x16xf32>
    %216 = arith.truncf %215 : vector<8x16xf32> to vector<8x16xbf16>
    %c81 = arith.constant 81 : index
    %c0_222 = arith.constant 0 : index
    %217 = vector.load %arg8[%c81, %c0_222] : memref<176x16xbf16, #tpu.memory_space<vmem>>, vector<8x16xbf16>
    tpu.vector_store %arg8[%c81, %c0_222], %216 {strides = array<i32>} : memref<176x16xbf16, #tpu.memory_space<vmem>>, vector<8x16xbf16>,
    %218 = vector.extract_strided_slice %192 {offsets = [40, 0], sizes = [8, 16], strides = [1, 1]} : vector<64x16xf32> to vector<8x16xf32>
    %cst_223 = arith.constant 0.000000e+00 : f32
    %219 = vector.broadcast %cst_223 : f32 to vector<8x16xf32>
    %220 = arith.maximumf %218, %219 : vector<8x16xf32>
    %221 = arith.truncf %220 : vector<8x16xf32> to vector<8x16xbf16>
    %c97_224 = arith.constant 97 : index
    %c0_225 = arith.constant 0 : index
    %222 = vector.load %arg8[%c97_224, %c0_225] : memref<176x16xbf16, #tpu.memory_space<vmem>>, vector<8x16xbf16>
    tpu.vector_store %arg8[%c97_224, %c0_225], %221 {strides = array<i32>} : memref<176x16xbf16, #tpu.memory_space<vmem>>, vector<8x16xbf16>,
    %223 = vector.extract_strided_slice %192 {offsets = [48, 0], sizes = [8, 16], strides = [1, 1]} : vector<64x16xf32> to vector<8x16xf32>
    %cst_226 = arith.constant 0.000000e+00 : f32
    %224 = vector.broadcast %cst_226 : f32 to vector<8x16xf32>
    %225 = arith.maximumf %223, %224 : vector<8x16xf32>
    %226 = arith.truncf %225 : vector<8x16xf32> to vector<8x16xbf16>
    %c113 = arith.constant 113 : index
    %c0_227 = arith.constant 0 : index
    %227 = vector.load %arg8[%c113, %c0_227] : memref<176x16xbf16, #tpu.memory_space<vmem>>, vector<8x16xbf16>
    tpu.vector_store %arg8[%c113, %c0_227], %226 {strides = array<i32>} : memref<176x16xbf16, #tpu.memory_space<vmem>>, vector<8x16xbf16>,
    %228 = vector.extract_strided_slice %192 {offsets = [56, 0], sizes = [8, 16], strides = [1, 1]} : vector<64x16xf32> to vector<8x16xf32>
    %cst_228 = arith.constant 0.000000e+00 : f32
    %229 = vector.broadcast %cst_228 : f32 to vector<8x16xf32>
    %230 = arith.maximumf %228, %229 : vector<8x16xf32>
    %231 = arith.truncf %230 : vector<8x16xf32> to vector<8x16xbf16>
    %c129 = arith.constant 129 : index
    %c0_229 = arith.constant 0 : index
    %232 = vector.load %arg8[%c129, %c0_229] : memref<176x16xbf16, #tpu.memory_space<vmem>>, vector<8x16xbf16>
    tpu.vector_store %arg8[%c129, %c0_229], %231 {strides = array<i32>} : memref<176x16xbf16, #tpu.memory_space<vmem>>, vector<8x16xbf16>,
    %c0_230 = arith.constant 0 : index
    %c0_231 = arith.constant 0 : index
    %c0_232 = arith.constant 0 : index
    %233 = vector.load %arg4[%c0_230, %c0_231, %c0_232] : memref<4x144x16xbf16, #tpu.memory_space<vmem>>, vector<1x144x16xbf16>
    %234 = vector.shape_cast %233 : vector<1x144x16xbf16> to vector<144x16xbf16>
    %c0_233 = arith.constant 0 : index
    %c0_234 = arith.constant 0 : index
    %c0_235 = arith.constant 0 : index
    %235 = vector.load %arg5[%c0_233, %c0_234, %c0_235] : memref<4x1x16xf32, #tpu.memory_space<vmem>>, vector<1x1x16xf32>
    %236 = vector.shape_cast %235 : vector<1x1x16xf32> to vector<1x16xf32>
    %c0_236 = arith.constant 0 : index
    %c0_237 = arith.constant 0 : index
    %237 = vector.load %arg8[%c0_236, %c0_237] : memref<176x16xbf16, #tpu.memory_space<vmem>>, vector<128x16xbf16>
    %c1_238 = arith.constant 1 : index
    %c0_239 = arith.constant 0 : index
    %238 = vector.load %arg8[%c1_238, %c0_239] : memref<176x16xbf16, #tpu.memory_space<vmem>>, vector<128x16xbf16>
    %c2_240 = arith.constant 2 : index
    %c0_241 = arith.constant 0 : index
    %239 = vector.load %arg8[%c2_240, %c0_241] : memref<176x16xbf16, #tpu.memory_space<vmem>>, vector<128x16xbf16>
    %c16_242 = arith.constant 16 : index
    %c0_243 = arith.constant 0 : index
    %240 = vector.load %arg8[%c16_242, %c0_243] : memref<176x16xbf16, #tpu.memory_space<vmem>>, vector<128x16xbf16>
    %c17_244 = arith.constant 17 : index
    %c0_245 = arith.constant 0 : index
    %241 = vector.load %arg8[%c17_244, %c0_245] : memref<176x16xbf16, #tpu.memory_space<vmem>>, vector<128x16xbf16>
    %c18 = arith.constant 18 : index
    %c0_246 = arith.constant 0 : index
    %242 = vector.load %arg8[%c18, %c0_246] : memref<176x16xbf16, #tpu.memory_space<vmem>>, vector<128x16xbf16>
    %c32_247 = arith.constant 32 : index
    %c0_248 = arith.constant 0 : index
    %243 = vector.load %arg8[%c32_247, %c0_248] : memref<176x16xbf16, #tpu.memory_space<vmem>>, vector<128x16xbf16>
    %c33_249 = arith.constant 33 : index
    %c0_250 = arith.constant 0 : index
    %244 = vector.load %arg8[%c33_249, %c0_250] : memref<176x16xbf16, #tpu.memory_space<vmem>>, vector<128x16xbf16>
    %c34 = arith.constant 34 : index
    %c0_251 = arith.constant 0 : index
    %245 = vector.load %arg8[%c34, %c0_251] : memref<176x16xbf16, #tpu.memory_space<vmem>>, vector<128x16xbf16>
    %246 = tpu.concatenate %237, %238, %239, %240, %241, %242, %243, %244, %245 in 1 : vector<128x16xbf16>, vector<128x16xbf16>, vector<128x16xbf16>, vector<128x16xbf16>, vector<128x16xbf16>, vector<128x16xbf16>, vector<128x16xbf16>, vector<128x16xbf16>, vector<128x16xbf16> -> vector<128x144xbf16>
    %cst_252 = arith.constant dense<0.000000e+00> : vector<128x16xf32>
    %247 = tpu.matmul %246, %234, %cst_252 {dimension_numbers = #tpu.dot_dimension_numbers<[1], [0], [0], [1], [0, 0, 1, 1], [], []>} : vector<128x144xbf16>, vector<144x16xbf16>, vector<128x16xf32> -> vector<128x16xf32>
    %248 = vector.broadcast %236 : vector<1x16xf32> to vector<128x16xf32>
    %249 = arith.addf %247, %248 : vector<128x16xf32>
    %250 = vector.extract_strided_slice %249 {offsets = [0, 0], sizes = [8, 16], strides = [1, 1]} : vector<128x16xf32> to vector<8x16xf32>
    %cst_253 = arith.constant 0.000000e+00 : f32
    %251 = vector.broadcast %cst_253 : f32 to vector<8x16xf32>
    %252 = arith.maximumf %250, %251 : vector<8x16xf32>
    %253 = arith.truncf %252 : vector<8x16xf32> to vector<8x16xbf16>
    %c17_254 = arith.constant 17 : index
    %c0_255 = arith.constant 0 : index
    %254 = vector.load %arg8[%c17_254, %c0_255] : memref<176x16xbf16, #tpu.memory_space<vmem>>, vector<8x16xbf16>
    tpu.vector_store %arg8[%c17_254, %c0_255], %253 {strides = array<i32>} : memref<176x16xbf16, #tpu.memory_space<vmem>>, vector<8x16xbf16>,
    %255 = vector.extract_strided_slice %249 {offsets = [16, 0], sizes = [8, 16], strides = [1, 1]} : vector<128x16xf32> to vector<8x16xf32>
    %cst_256 = arith.constant 0.000000e+00 : f32
    %256 = vector.broadcast %cst_256 : f32 to vector<8x16xf32>
    %257 = arith.maximumf %255, %256 : vector<8x16xf32>
    %258 = arith.truncf %257 : vector<8x16xf32> to vector<8x16xbf16>
    %c33_257 = arith.constant 33 : index
    %c0_258 = arith.constant 0 : index
    %259 = vector.load %arg8[%c33_257, %c0_258] : memref<176x16xbf16, #tpu.memory_space<vmem>>, vector<8x16xbf16>
    tpu.vector_store %arg8[%c33_257, %c0_258], %258 {strides = array<i32>} : memref<176x16xbf16, #tpu.memory_space<vmem>>, vector<8x16xbf16>,
    %260 = vector.extract_strided_slice %249 {offsets = [32, 0], sizes = [8, 16], strides = [1, 1]} : vector<128x16xf32> to vector<8x16xf32>
    %cst_259 = arith.constant 0.000000e+00 : f32
    %261 = vector.broadcast %cst_259 : f32 to vector<8x16xf32>
    %262 = arith.maximumf %260, %261 : vector<8x16xf32>
    %263 = arith.truncf %262 : vector<8x16xf32> to vector<8x16xbf16>
    %c49_260 = arith.constant 49 : index
    %c0_261 = arith.constant 0 : index
    %264 = vector.load %arg8[%c49_260, %c0_261] : memref<176x16xbf16, #tpu.memory_space<vmem>>, vector<8x16xbf16>
    tpu.vector_store %arg8[%c49_260, %c0_261], %263 {strides = array<i32>} : memref<176x16xbf16, #tpu.memory_space<vmem>>, vector<8x16xbf16>,
    %265 = vector.extract_strided_slice %249 {offsets = [48, 0], sizes = [8, 16], strides = [1, 1]} : vector<128x16xf32> to vector<8x16xf32>
    %cst_262 = arith.constant 0.000000e+00 : f32
    %266 = vector.broadcast %cst_262 : f32 to vector<8x16xf32>
    %267 = arith.maximumf %265, %266 : vector<8x16xf32>
    %268 = arith.truncf %267 : vector<8x16xf32> to vector<8x16xbf16>
    %c65_263 = arith.constant 65 : index
    %c0_264 = arith.constant 0 : index
    %269 = vector.load %arg8[%c65_263, %c0_264] : memref<176x16xbf16, #tpu.memory_space<vmem>>, vector<8x16xbf16>
    tpu.vector_store %arg8[%c65_263, %c0_264], %268 {strides = array<i32>} : memref<176x16xbf16, #tpu.memory_space<vmem>>, vector<8x16xbf16>,
    %270 = vector.extract_strided_slice %249 {offsets = [64, 0], sizes = [8, 16], strides = [1, 1]} : vector<128x16xf32> to vector<8x16xf32>
    %cst_265 = arith.constant 0.000000e+00 : f32
    %271 = vector.broadcast %cst_265 : f32 to vector<8x16xf32>
    %272 = arith.maximumf %270, %271 : vector<8x16xf32>
    %273 = arith.truncf %272 : vector<8x16xf32> to vector<8x16xbf16>
    %c81_266 = arith.constant 81 : index
    %c0_267 = arith.constant 0 : index
    %274 = vector.load %arg8[%c81_266, %c0_267] : memref<176x16xbf16, #tpu.memory_space<vmem>>, vector<8x16xbf16>
    tpu.vector_store %arg8[%c81_266, %c0_267], %273 {strides = array<i32>} : memref<176x16xbf16, #tpu.memory_space<vmem>>, vector<8x16xbf16>,
    %275 = vector.extract_strided_slice %249 {offsets = [80, 0], sizes = [8, 16], strides = [1, 1]} : vector<128x16xf32> to vector<8x16xf32>
    %cst_268 = arith.constant 0.000000e+00 : f32
    %276 = vector.broadcast %cst_268 : f32 to vector<8x16xf32>
    %277 = arith.maximumf %275, %276 : vector<8x16xf32>
    %278 = arith.truncf %277 : vector<8x16xf32> to vector<8x16xbf16>
    %c97_269 = arith.constant 97 : index
    %c0_270 = arith.constant 0 : index
    %279 = vector.load %arg8[%c97_269, %c0_270] : memref<176x16xbf16, #tpu.memory_space<vmem>>, vector<8x16xbf16>
    tpu.vector_store %arg8[%c97_269, %c0_270], %278 {strides = array<i32>} : memref<176x16xbf16, #tpu.memory_space<vmem>>, vector<8x16xbf16>,
    %280 = vector.extract_strided_slice %249 {offsets = [96, 0], sizes = [8, 16], strides = [1, 1]} : vector<128x16xf32> to vector<8x16xf32>
    %cst_271 = arith.constant 0.000000e+00 : f32
    %281 = vector.broadcast %cst_271 : f32 to vector<8x16xf32>
    %282 = arith.maximumf %280, %281 : vector<8x16xf32>
    %283 = arith.truncf %282 : vector<8x16xf32> to vector<8x16xbf16>
    %c113_272 = arith.constant 113 : index
    %c0_273 = arith.constant 0 : index
    %284 = vector.load %arg8[%c113_272, %c0_273] : memref<176x16xbf16, #tpu.memory_space<vmem>>, vector<8x16xbf16>
    tpu.vector_store %arg8[%c113_272, %c0_273], %283 {strides = array<i32>} : memref<176x16xbf16, #tpu.memory_space<vmem>>, vector<8x16xbf16>,
    %285 = vector.extract_strided_slice %249 {offsets = [112, 0], sizes = [8, 16], strides = [1, 1]} : vector<128x16xf32> to vector<8x16xf32>
    %cst_274 = arith.constant 0.000000e+00 : f32
    %286 = vector.broadcast %cst_274 : f32 to vector<8x16xf32>
    %287 = arith.maximumf %285, %286 : vector<8x16xf32>
    %288 = arith.truncf %287 : vector<8x16xf32> to vector<8x16xbf16>
    %c129_275 = arith.constant 129 : index
    %c0_276 = arith.constant 0 : index
    %289 = vector.load %arg8[%c129_275, %c0_276] : memref<176x16xbf16, #tpu.memory_space<vmem>>, vector<8x16xbf16>
    tpu.vector_store %arg8[%c129_275, %c0_276], %288 {strides = array<i32>} : memref<176x16xbf16, #tpu.memory_space<vmem>>, vector<8x16xbf16>,
    %c1_277 = arith.constant 1 : index
    %c0_278 = arith.constant 0 : index
    %c0_279 = arith.constant 0 : index
    %290 = vector.load %arg4[%c1_277, %c0_278, %c0_279] : memref<4x144x16xbf16, #tpu.memory_space<vmem>>, vector<1x144x16xbf16>
    %291 = vector.shape_cast %290 : vector<1x144x16xbf16> to vector<144x16xbf16>
    %c1_280 = arith.constant 1 : index
    %c0_281 = arith.constant 0 : index
    %c0_282 = arith.constant 0 : index
    %292 = vector.load %arg5[%c1_280, %c0_281, %c0_282] : memref<4x1x16xf32, #tpu.memory_space<vmem>>, vector<1x1x16xf32>
    %293 = vector.shape_cast %292 : vector<1x1x16xf32> to vector<1x16xf32>
    %c0_283 = arith.constant 0 : index
    %c0_284 = arith.constant 0 : index
    %294 = vector.load %arg8[%c0_283, %c0_284] : memref<176x16xbf16, #tpu.memory_space<vmem>>, vector<128x16xbf16>
    %c1_285 = arith.constant 1 : index
    %c0_286 = arith.constant 0 : index
    %295 = vector.load %arg8[%c1_285, %c0_286] : memref<176x16xbf16, #tpu.memory_space<vmem>>, vector<128x16xbf16>
    %c2_287 = arith.constant 2 : index
    %c0_288 = arith.constant 0 : index
    %296 = vector.load %arg8[%c2_287, %c0_288] : memref<176x16xbf16, #tpu.memory_space<vmem>>, vector<128x16xbf16>
    %c16_289 = arith.constant 16 : index
    %c0_290 = arith.constant 0 : index
    %297 = vector.load %arg8[%c16_289, %c0_290] : memref<176x16xbf16, #tpu.memory_space<vmem>>, vector<128x16xbf16>
    %c17_291 = arith.constant 17 : index
    %c0_292 = arith.constant 0 : index
    %298 = vector.load %arg8[%c17_291, %c0_292] : memref<176x16xbf16, #tpu.memory_space<vmem>>, vector<128x16xbf16>
    %c18_293 = arith.constant 18 : index
    %c0_294 = arith.constant 0 : index
    %299 = vector.load %arg8[%c18_293, %c0_294] : memref<176x16xbf16, #tpu.memory_space<vmem>>, vector<128x16xbf16>
    %c32_295 = arith.constant 32 : index
    %c0_296 = arith.constant 0 : index
    %300 = vector.load %arg8[%c32_295, %c0_296] : memref<176x16xbf16, #tpu.memory_space<vmem>>, vector<128x16xbf16>
    %c33_297 = arith.constant 33 : index
    %c0_298 = arith.constant 0 : index
    %301 = vector.load %arg8[%c33_297, %c0_298] : memref<176x16xbf16, #tpu.memory_space<vmem>>, vector<128x16xbf16>
    %c34_299 = arith.constant 34 : index
    %c0_300 = arith.constant 0 : index
    %302 = vector.load %arg8[%c34_299, %c0_300] : memref<176x16xbf16, #tpu.memory_space<vmem>>, vector<128x16xbf16>
    %303 = tpu.concatenate %294, %295, %296, %297, %298, %299, %300, %301, %302 in 1 : vector<128x16xbf16>, vector<128x16xbf16>, vector<128x16xbf16>, vector<128x16xbf16>, vector<128x16xbf16>, vector<128x16xbf16>, vector<128x16xbf16>, vector<128x16xbf16>, vector<128x16xbf16> -> vector<128x144xbf16>
    %cst_301 = arith.constant dense<0.000000e+00> : vector<128x16xf32>
    %304 = tpu.matmul %303, %291, %cst_301 {dimension_numbers = #tpu.dot_dimension_numbers<[1], [0], [0], [1], [0, 0, 1, 1], [], []>} : vector<128x144xbf16>, vector<144x16xbf16>, vector<128x16xf32> -> vector<128x16xf32>
    %305 = vector.broadcast %293 : vector<1x16xf32> to vector<128x16xf32>
    %306 = arith.addf %304, %305 : vector<128x16xf32>
    %c0_302 = arith.constant 0 : index
    %c0_303 = arith.constant 0 : index
    %307 = vector.load %arg9[%c0_302, %c0_303] : memref<64x16xf32, #tpu.memory_space<vmem>>, vector<64x16xf32>
    %308 = vector.extract_strided_slice %306 {offsets = [0, 0], sizes = [8, 16], strides = [1, 1]} : vector<128x16xf32> to vector<8x16xf32>
    %309 = vector.extract_strided_slice %306 {offsets = [16, 0], sizes = [8, 16], strides = [1, 1]} : vector<128x16xf32> to vector<8x16xf32>
    %310 = vector.extract_strided_slice %306 {offsets = [32, 0], sizes = [8, 16], strides = [1, 1]} : vector<128x16xf32> to vector<8x16xf32>
    %311 = vector.extract_strided_slice %306 {offsets = [48, 0], sizes = [8, 16], strides = [1, 1]} : vector<128x16xf32> to vector<8x16xf32>
    %312 = vector.extract_strided_slice %306 {offsets = [64, 0], sizes = [8, 16], strides = [1, 1]} : vector<128x16xf32> to vector<8x16xf32>
    %313 = vector.extract_strided_slice %306 {offsets = [80, 0], sizes = [8, 16], strides = [1, 1]} : vector<128x16xf32> to vector<8x16xf32>
    %314 = vector.extract_strided_slice %306 {offsets = [96, 0], sizes = [8, 16], strides = [1, 1]} : vector<128x16xf32> to vector<8x16xf32>
    %315 = vector.extract_strided_slice %306 {offsets = [112, 0], sizes = [8, 16], strides = [1, 1]} : vector<128x16xf32> to vector<8x16xf32>
    %316 = tpu.concatenate %308, %309, %310, %311, %312, %313, %314, %315 in 0 : vector<8x16xf32>, vector<8x16xf32>, vector<8x16xf32>, vector<8x16xf32>, vector<8x16xf32>, vector<8x16xf32>, vector<8x16xf32>, vector<8x16xf32> -> vector<64x16xf32>
    %317 = arith.addf %307, %316 : vector<64x16xf32>
    %c0_304 = arith.constant 0 : index
    %c0_305 = arith.constant 0 : index
    %318 = vector.load %arg9[%c0_304, %c0_305] : memref<64x16xf32, #tpu.memory_space<vmem>>, vector<64x16xf32>
    tpu.vector_store %arg9[%c0_304, %c0_305], %317 {strides = array<i32>} : memref<64x16xf32, #tpu.memory_space<vmem>>, vector<64x16xf32>,
    %c0_306 = arith.constant 0 : index
    %c0_307 = arith.constant 0 : index
    %319 = vector.load %arg9[%c0_306, %c0_307] : memref<64x16xf32, #tpu.memory_space<vmem>>, vector<64x16xf32>
    %320 = vector.extract_strided_slice %319 {offsets = [0, 0], sizes = [8, 16], strides = [1, 1]} : vector<64x16xf32> to vector<8x16xf32>
    %cst_308 = arith.constant 0.000000e+00 : f32
    %321 = vector.broadcast %cst_308 : f32 to vector<8x16xf32>
    %322 = arith.maximumf %320, %321 : vector<8x16xf32>
    %323 = arith.truncf %322 : vector<8x16xf32> to vector<8x16xbf16>
    %c17_309 = arith.constant 17 : index
    %c0_310 = arith.constant 0 : index
    %324 = vector.load %arg8[%c17_309, %c0_310] : memref<176x16xbf16, #tpu.memory_space<vmem>>, vector<8x16xbf16>
    tpu.vector_store %arg8[%c17_309, %c0_310], %323 {strides = array<i32>} : memref<176x16xbf16, #tpu.memory_space<vmem>>, vector<8x16xbf16>,
    %325 = vector.extract_strided_slice %319 {offsets = [8, 0], sizes = [8, 16], strides = [1, 1]} : vector<64x16xf32> to vector<8x16xf32>
    %cst_311 = arith.constant 0.000000e+00 : f32
    %326 = vector.broadcast %cst_311 : f32 to vector<8x16xf32>
    %327 = arith.maximumf %325, %326 : vector<8x16xf32>
    %328 = arith.truncf %327 : vector<8x16xf32> to vector<8x16xbf16>
    %c33_312 = arith.constant 33 : index
    %c0_313 = arith.constant 0 : index
    %329 = vector.load %arg8[%c33_312, %c0_313] : memref<176x16xbf16, #tpu.memory_space<vmem>>, vector<8x16xbf16>
    tpu.vector_store %arg8[%c33_312, %c0_313], %328 {strides = array<i32>} : memref<176x16xbf16, #tpu.memory_space<vmem>>, vector<8x16xbf16>,
    %330 = vector.extract_strided_slice %319 {offsets = [16, 0], sizes = [8, 16], strides = [1, 1]} : vector<64x16xf32> to vector<8x16xf32>
    %cst_314 = arith.constant 0.000000e+00 : f32
    %331 = vector.broadcast %cst_314 : f32 to vector<8x16xf32>
    %332 = arith.maximumf %330, %331 : vector<8x16xf32>
    %333 = arith.truncf %332 : vector<8x16xf32> to vector<8x16xbf16>
    %c49_315 = arith.constant 49 : index
    %c0_316 = arith.constant 0 : index
    %334 = vector.load %arg8[%c49_315, %c0_316] : memref<176x16xbf16, #tpu.memory_space<vmem>>, vector<8x16xbf16>
    tpu.vector_store %arg8[%c49_315, %c0_316], %333 {strides = array<i32>} : memref<176x16xbf16, #tpu.memory_space<vmem>>, vector<8x16xbf16>,
    %335 = vector.extract_strided_slice %319 {offsets = [24, 0], sizes = [8, 16], strides = [1, 1]} : vector<64x16xf32> to vector<8x16xf32>
    %cst_317 = arith.constant 0.000000e+00 : f32
    %336 = vector.broadcast %cst_317 : f32 to vector<8x16xf32>
    %337 = arith.maximumf %335, %336 : vector<8x16xf32>
    %338 = arith.truncf %337 : vector<8x16xf32> to vector<8x16xbf16>
    %c65_318 = arith.constant 65 : index
    %c0_319 = arith.constant 0 : index
    %339 = vector.load %arg8[%c65_318, %c0_319] : memref<176x16xbf16, #tpu.memory_space<vmem>>, vector<8x16xbf16>
    tpu.vector_store %arg8[%c65_318, %c0_319], %338 {strides = array<i32>} : memref<176x16xbf16, #tpu.memory_space<vmem>>, vector<8x16xbf16>,
    %340 = vector.extract_strided_slice %319 {offsets = [32, 0], sizes = [8, 16], strides = [1, 1]} : vector<64x16xf32> to vector<8x16xf32>
    %cst_320 = arith.constant 0.000000e+00 : f32
    %341 = vector.broadcast %cst_320 : f32 to vector<8x16xf32>
    %342 = arith.maximumf %340, %341 : vector<8x16xf32>
    %343 = arith.truncf %342 : vector<8x16xf32> to vector<8x16xbf16>
    %c81_321 = arith.constant 81 : index
    %c0_322 = arith.constant 0 : index
    %344 = vector.load %arg8[%c81_321, %c0_322] : memref<176x16xbf16, #tpu.memory_space<vmem>>, vector<8x16xbf16>
    tpu.vector_store %arg8[%c81_321, %c0_322], %343 {strides = array<i32>} : memref<176x16xbf16, #tpu.memory_space<vmem>>, vector<8x16xbf16>,
    %345 = vector.extract_strided_slice %319 {offsets = [40, 0], sizes = [8, 16], strides = [1, 1]} : vector<64x16xf32> to vector<8x16xf32>
    %cst_323 = arith.constant 0.000000e+00 : f32
    %346 = vector.broadcast %cst_323 : f32 to vector<8x16xf32>
    %347 = arith.maximumf %345, %346 : vector<8x16xf32>
    %348 = arith.truncf %347 : vector<8x16xf32> to vector<8x16xbf16>
    %c97_324 = arith.constant 97 : index
    %c0_325 = arith.constant 0 : index
    %349 = vector.load %arg8[%c97_324, %c0_325] : memref<176x16xbf16, #tpu.memory_space<vmem>>, vector<8x16xbf16>
    tpu.vector_store %arg8[%c97_324, %c0_325], %348 {strides = array<i32>} : memref<176x16xbf16, #tpu.memory_space<vmem>>, vector<8x16xbf16>,
    %350 = vector.extract_strided_slice %319 {offsets = [48, 0], sizes = [8, 16], strides = [1, 1]} : vector<64x16xf32> to vector<8x16xf32>
    %cst_326 = arith.constant 0.000000e+00 : f32
    %351 = vector.broadcast %cst_326 : f32 to vector<8x16xf32>
    %352 = arith.maximumf %350, %351 : vector<8x16xf32>
    %353 = arith.truncf %352 : vector<8x16xf32> to vector<8x16xbf16>
    %c113_327 = arith.constant 113 : index
    %c0_328 = arith.constant 0 : index
    %354 = vector.load %arg8[%c113_327, %c0_328] : memref<176x16xbf16, #tpu.memory_space<vmem>>, vector<8x16xbf16>
    tpu.vector_store %arg8[%c113_327, %c0_328], %353 {strides = array<i32>} : memref<176x16xbf16, #tpu.memory_space<vmem>>, vector<8x16xbf16>,
    %355 = vector.extract_strided_slice %319 {offsets = [56, 0], sizes = [8, 16], strides = [1, 1]} : vector<64x16xf32> to vector<8x16xf32>
    %cst_329 = arith.constant 0.000000e+00 : f32
    %356 = vector.broadcast %cst_329 : f32 to vector<8x16xf32>
    %357 = arith.maximumf %355, %356 : vector<8x16xf32>
    %358 = arith.truncf %357 : vector<8x16xf32> to vector<8x16xbf16>
    %c129_330 = arith.constant 129 : index
    %c0_331 = arith.constant 0 : index
    %359 = vector.load %arg8[%c129_330, %c0_331] : memref<176x16xbf16, #tpu.memory_space<vmem>>, vector<8x16xbf16>
    tpu.vector_store %arg8[%c129_330, %c0_331], %358 {strides = array<i32>} : memref<176x16xbf16, #tpu.memory_space<vmem>>, vector<8x16xbf16>,
    %c2_332 = arith.constant 2 : index
    %c0_333 = arith.constant 0 : index
    %c0_334 = arith.constant 0 : index
    %360 = vector.load %arg4[%c2_332, %c0_333, %c0_334] : memref<4x144x16xbf16, #tpu.memory_space<vmem>>, vector<1x144x16xbf16>
    %361 = vector.shape_cast %360 : vector<1x144x16xbf16> to vector<144x16xbf16>
    %c2_335 = arith.constant 2 : index
    %c0_336 = arith.constant 0 : index
    %c0_337 = arith.constant 0 : index
    %362 = vector.load %arg5[%c2_335, %c0_336, %c0_337] : memref<4x1x16xf32, #tpu.memory_space<vmem>>, vector<1x1x16xf32>
    %363 = vector.shape_cast %362 : vector<1x1x16xf32> to vector<1x16xf32>
    %c0_338 = arith.constant 0 : index
    %c0_339 = arith.constant 0 : index
    %364 = vector.load %arg8[%c0_338, %c0_339] : memref<176x16xbf16, #tpu.memory_space<vmem>>, vector<128x16xbf16>
    %c1_340 = arith.constant 1 : index
    %c0_341 = arith.constant 0 : index
    %365 = vector.load %arg8[%c1_340, %c0_341] : memref<176x16xbf16, #tpu.memory_space<vmem>>, vector<128x16xbf16>
    %c2_342 = arith.constant 2 : index
    %c0_343 = arith.constant 0 : index
    %366 = vector.load %arg8[%c2_342, %c0_343] : memref<176x16xbf16, #tpu.memory_space<vmem>>, vector<128x16xbf16>
    %c16_344 = arith.constant 16 : index
    %c0_345 = arith.constant 0 : index
    %367 = vector.load %arg8[%c16_344, %c0_345] : memref<176x16xbf16, #tpu.memory_space<vmem>>, vector<128x16xbf16>
    %c17_346 = arith.constant 17 : index
    %c0_347 = arith.constant 0 : index
    %368 = vector.load %arg8[%c17_346, %c0_347] : memref<176x16xbf16, #tpu.memory_space<vmem>>, vector<128x16xbf16>
    %c18_348 = arith.constant 18 : index
    %c0_349 = arith.constant 0 : index
    %369 = vector.load %arg8[%c18_348, %c0_349] : memref<176x16xbf16, #tpu.memory_space<vmem>>, vector<128x16xbf16>
    %c32_350 = arith.constant 32 : index
    %c0_351 = arith.constant 0 : index
    %370 = vector.load %arg8[%c32_350, %c0_351] : memref<176x16xbf16, #tpu.memory_space<vmem>>, vector<128x16xbf16>
    %c33_352 = arith.constant 33 : index
    %c0_353 = arith.constant 0 : index
    %371 = vector.load %arg8[%c33_352, %c0_353] : memref<176x16xbf16, #tpu.memory_space<vmem>>, vector<128x16xbf16>
    %c34_354 = arith.constant 34 : index
    %c0_355 = arith.constant 0 : index
    %372 = vector.load %arg8[%c34_354, %c0_355] : memref<176x16xbf16, #tpu.memory_space<vmem>>, vector<128x16xbf16>
    %373 = tpu.concatenate %364, %365, %366, %367, %368, %369, %370, %371, %372 in 1 : vector<128x16xbf16>, vector<128x16xbf16>, vector<128x16xbf16>, vector<128x16xbf16>, vector<128x16xbf16>, vector<128x16xbf16>, vector<128x16xbf16>, vector<128x16xbf16>, vector<128x16xbf16> -> vector<128x144xbf16>
    %cst_356 = arith.constant dense<0.000000e+00> : vector<128x16xf32>
    %374 = tpu.matmul %373, %361, %cst_356 {dimension_numbers = #tpu.dot_dimension_numbers<[1], [0], [0], [1], [0, 0, 1, 1], [], []>} : vector<128x144xbf16>, vector<144x16xbf16>, vector<128x16xf32> -> vector<128x16xf32>
    %375 = vector.broadcast %363 : vector<1x16xf32> to vector<128x16xf32>
    %376 = arith.addf %374, %375 : vector<128x16xf32>
    %377 = vector.extract_strided_slice %376 {offsets = [0, 0], sizes = [8, 16], strides = [1, 1]} : vector<128x16xf32> to vector<8x16xf32>
    %cst_357 = arith.constant 0.000000e+00 : f32
    %378 = vector.broadcast %cst_357 : f32 to vector<8x16xf32>
    %379 = arith.maximumf %377, %378 : vector<8x16xf32>
    %380 = arith.truncf %379 : vector<8x16xf32> to vector<8x16xbf16>
    %c17_358 = arith.constant 17 : index
    %c0_359 = arith.constant 0 : index
    %381 = vector.load %arg8[%c17_358, %c0_359] : memref<176x16xbf16, #tpu.memory_space<vmem>>, vector<8x16xbf16>
    tpu.vector_store %arg8[%c17_358, %c0_359], %380 {strides = array<i32>} : memref<176x16xbf16, #tpu.memory_space<vmem>>, vector<8x16xbf16>,
    %382 = vector.extract_strided_slice %376 {offsets = [16, 0], sizes = [8, 16], strides = [1, 1]} : vector<128x16xf32> to vector<8x16xf32>
    %cst_360 = arith.constant 0.000000e+00 : f32
    %383 = vector.broadcast %cst_360 : f32 to vector<8x16xf32>
    %384 = arith.maximumf %382, %383 : vector<8x16xf32>
    %385 = arith.truncf %384 : vector<8x16xf32> to vector<8x16xbf16>
    %c33_361 = arith.constant 33 : index
    %c0_362 = arith.constant 0 : index
    %386 = vector.load %arg8[%c33_361, %c0_362] : memref<176x16xbf16, #tpu.memory_space<vmem>>, vector<8x16xbf16>
    tpu.vector_store %arg8[%c33_361, %c0_362], %385 {strides = array<i32>} : memref<176x16xbf16, #tpu.memory_space<vmem>>, vector<8x16xbf16>,
    %387 = vector.extract_strided_slice %376 {offsets = [32, 0], sizes = [8, 16], strides = [1, 1]} : vector<128x16xf32> to vector<8x16xf32>
    %cst_363 = arith.constant 0.000000e+00 : f32
    %388 = vector.broadcast %cst_363 : f32 to vector<8x16xf32>
    %389 = arith.maximumf %387, %388 : vector<8x16xf32>
    %390 = arith.truncf %389 : vector<8x16xf32> to vector<8x16xbf16>
    %c49_364 = arith.constant 49 : index
    %c0_365 = arith.constant 0 : index
    %391 = vector.load %arg8[%c49_364, %c0_365] : memref<176x16xbf16, #tpu.memory_space<vmem>>, vector<8x16xbf16>
    tpu.vector_store %arg8[%c49_364, %c0_365], %390 {strides = array<i32>} : memref<176x16xbf16, #tpu.memory_space<vmem>>, vector<8x16xbf16>,
    %392 = vector.extract_strided_slice %376 {offsets = [48, 0], sizes = [8, 16], strides = [1, 1]} : vector<128x16xf32> to vector<8x16xf32>
    %cst_366 = arith.constant 0.000000e+00 : f32
    %393 = vector.broadcast %cst_366 : f32 to vector<8x16xf32>
    %394 = arith.maximumf %392, %393 : vector<8x16xf32>
    %395 = arith.truncf %394 : vector<8x16xf32> to vector<8x16xbf16>
    %c65_367 = arith.constant 65 : index
    %c0_368 = arith.constant 0 : index
    %396 = vector.load %arg8[%c65_367, %c0_368] : memref<176x16xbf16, #tpu.memory_space<vmem>>, vector<8x16xbf16>
    tpu.vector_store %arg8[%c65_367, %c0_368], %395 {strides = array<i32>} : memref<176x16xbf16, #tpu.memory_space<vmem>>, vector<8x16xbf16>,
    %397 = vector.extract_strided_slice %376 {offsets = [64, 0], sizes = [8, 16], strides = [1, 1]} : vector<128x16xf32> to vector<8x16xf32>
    %cst_369 = arith.constant 0.000000e+00 : f32
    %398 = vector.broadcast %cst_369 : f32 to vector<8x16xf32>
    %399 = arith.maximumf %397, %398 : vector<8x16xf32>
    %400 = arith.truncf %399 : vector<8x16xf32> to vector<8x16xbf16>
    %c81_370 = arith.constant 81 : index
    %c0_371 = arith.constant 0 : index
    %401 = vector.load %arg8[%c81_370, %c0_371] : memref<176x16xbf16, #tpu.memory_space<vmem>>, vector<8x16xbf16>
    tpu.vector_store %arg8[%c81_370, %c0_371], %400 {strides = array<i32>} : memref<176x16xbf16, #tpu.memory_space<vmem>>, vector<8x16xbf16>,
    %402 = vector.extract_strided_slice %376 {offsets = [80, 0], sizes = [8, 16], strides = [1, 1]} : vector<128x16xf32> to vector<8x16xf32>
    %cst_372 = arith.constant 0.000000e+00 : f32
    %403 = vector.broadcast %cst_372 : f32 to vector<8x16xf32>
    %404 = arith.maximumf %402, %403 : vector<8x16xf32>
    %405 = arith.truncf %404 : vector<8x16xf32> to vector<8x16xbf16>
    %c97_373 = arith.constant 97 : index
    %c0_374 = arith.constant 0 : index
    %406 = vector.load %arg8[%c97_373, %c0_374] : memref<176x16xbf16, #tpu.memory_space<vmem>>, vector<8x16xbf16>
    tpu.vector_store %arg8[%c97_373, %c0_374], %405 {strides = array<i32>} : memref<176x16xbf16, #tpu.memory_space<vmem>>, vector<8x16xbf16>,
    %407 = vector.extract_strided_slice %376 {offsets = [96, 0], sizes = [8, 16], strides = [1, 1]} : vector<128x16xf32> to vector<8x16xf32>
    %cst_375 = arith.constant 0.000000e+00 : f32
    %408 = vector.broadcast %cst_375 : f32 to vector<8x16xf32>
    %409 = arith.maximumf %407, %408 : vector<8x16xf32>
    %410 = arith.truncf %409 : vector<8x16xf32> to vector<8x16xbf16>
    %c113_376 = arith.constant 113 : index
    %c0_377 = arith.constant 0 : index
    %411 = vector.load %arg8[%c113_376, %c0_377] : memref<176x16xbf16, #tpu.memory_space<vmem>>, vector<8x16xbf16>
    tpu.vector_store %arg8[%c113_376, %c0_377], %410 {strides = array<i32>} : memref<176x16xbf16, #tpu.memory_space<vmem>>, vector<8x16xbf16>,
    %412 = vector.extract_strided_slice %376 {offsets = [112, 0], sizes = [8, 16], strides = [1, 1]} : vector<128x16xf32> to vector<8x16xf32>
    %cst_378 = arith.constant 0.000000e+00 : f32
    %413 = vector.broadcast %cst_378 : f32 to vector<8x16xf32>
    %414 = arith.maximumf %412, %413 : vector<8x16xf32>
    %415 = arith.truncf %414 : vector<8x16xf32> to vector<8x16xbf16>
    %c129_379 = arith.constant 129 : index
    %c0_380 = arith.constant 0 : index
    %416 = vector.load %arg8[%c129_379, %c0_380] : memref<176x16xbf16, #tpu.memory_space<vmem>>, vector<8x16xbf16>
    tpu.vector_store %arg8[%c129_379, %c0_380], %415 {strides = array<i32>} : memref<176x16xbf16, #tpu.memory_space<vmem>>, vector<8x16xbf16>,
    %c3 = arith.constant 3 : index
    %c0_381 = arith.constant 0 : index
    %c0_382 = arith.constant 0 : index
    %417 = vector.load %arg4[%c3, %c0_381, %c0_382] : memref<4x144x16xbf16, #tpu.memory_space<vmem>>, vector<1x144x16xbf16>
    %418 = vector.shape_cast %417 : vector<1x144x16xbf16> to vector<144x16xbf16>
    %c3_383 = arith.constant 3 : index
    %c0_384 = arith.constant 0 : index
    %c0_385 = arith.constant 0 : index
    %419 = vector.load %arg5[%c3_383, %c0_384, %c0_385] : memref<4x1x16xf32, #tpu.memory_space<vmem>>, vector<1x1x16xf32>
    %420 = vector.shape_cast %419 : vector<1x1x16xf32> to vector<1x16xf32>
    %c0_386 = arith.constant 0 : index
    %c0_387 = arith.constant 0 : index
    %421 = vector.load %arg8[%c0_386, %c0_387] : memref<176x16xbf16, #tpu.memory_space<vmem>>, vector<128x16xbf16>
    %c1_388 = arith.constant 1 : index
    %c0_389 = arith.constant 0 : index
    %422 = vector.load %arg8[%c1_388, %c0_389] : memref<176x16xbf16, #tpu.memory_space<vmem>>, vector<128x16xbf16>
    %c2_390 = arith.constant 2 : index
    %c0_391 = arith.constant 0 : index
    %423 = vector.load %arg8[%c2_390, %c0_391] : memref<176x16xbf16, #tpu.memory_space<vmem>>, vector<128x16xbf16>
    %c16_392 = arith.constant 16 : index
    %c0_393 = arith.constant 0 : index
    %424 = vector.load %arg8[%c16_392, %c0_393] : memref<176x16xbf16, #tpu.memory_space<vmem>>, vector<128x16xbf16>
    %c17_394 = arith.constant 17 : index
    %c0_395 = arith.constant 0 : index
    %425 = vector.load %arg8[%c17_394, %c0_395] : memref<176x16xbf16, #tpu.memory_space<vmem>>, vector<128x16xbf16>
    %c18_396 = arith.constant 18 : index
    %c0_397 = arith.constant 0 : index
    %426 = vector.load %arg8[%c18_396, %c0_397] : memref<176x16xbf16, #tpu.memory_space<vmem>>, vector<128x16xbf16>
    %c32_398 = arith.constant 32 : index
    %c0_399 = arith.constant 0 : index
    %427 = vector.load %arg8[%c32_398, %c0_399] : memref<176x16xbf16, #tpu.memory_space<vmem>>, vector<128x16xbf16>
    %c33_400 = arith.constant 33 : index
    %c0_401 = arith.constant 0 : index
    %428 = vector.load %arg8[%c33_400, %c0_401] : memref<176x16xbf16, #tpu.memory_space<vmem>>, vector<128x16xbf16>
    %c34_402 = arith.constant 34 : index
    %c0_403 = arith.constant 0 : index
    %429 = vector.load %arg8[%c34_402, %c0_403] : memref<176x16xbf16, #tpu.memory_space<vmem>>, vector<128x16xbf16>
    %430 = tpu.concatenate %421, %422, %423, %424, %425, %426, %427, %428, %429 in 1 : vector<128x16xbf16>, vector<128x16xbf16>, vector<128x16xbf16>, vector<128x16xbf16>, vector<128x16xbf16>, vector<128x16xbf16>, vector<128x16xbf16>, vector<128x16xbf16>, vector<128x16xbf16> -> vector<128x144xbf16>
    %cst_404 = arith.constant dense<0.000000e+00> : vector<128x16xf32>
    %431 = tpu.matmul %430, %418, %cst_404 {dimension_numbers = #tpu.dot_dimension_numbers<[1], [0], [0], [1], [0, 0, 1, 1], [], []>} : vector<128x144xbf16>, vector<144x16xbf16>, vector<128x16xf32> -> vector<128x16xf32>
    %432 = vector.broadcast %420 : vector<1x16xf32> to vector<128x16xf32>
    %433 = arith.addf %431, %432 : vector<128x16xf32>
    %c0_405 = arith.constant 0 : index
    %c0_406 = arith.constant 0 : index
    %434 = vector.load %arg9[%c0_405, %c0_406] : memref<64x16xf32, #tpu.memory_space<vmem>>, vector<64x16xf32>
    %435 = vector.extract_strided_slice %433 {offsets = [0, 0], sizes = [8, 16], strides = [1, 1]} : vector<128x16xf32> to vector<8x16xf32>
    %436 = vector.extract_strided_slice %433 {offsets = [16, 0], sizes = [8, 16], strides = [1, 1]} : vector<128x16xf32> to vector<8x16xf32>
    %437 = vector.extract_strided_slice %433 {offsets = [32, 0], sizes = [8, 16], strides = [1, 1]} : vector<128x16xf32> to vector<8x16xf32>
    %438 = vector.extract_strided_slice %433 {offsets = [48, 0], sizes = [8, 16], strides = [1, 1]} : vector<128x16xf32> to vector<8x16xf32>
    %439 = vector.extract_strided_slice %433 {offsets = [64, 0], sizes = [8, 16], strides = [1, 1]} : vector<128x16xf32> to vector<8x16xf32>
    %440 = vector.extract_strided_slice %433 {offsets = [80, 0], sizes = [8, 16], strides = [1, 1]} : vector<128x16xf32> to vector<8x16xf32>
    %441 = vector.extract_strided_slice %433 {offsets = [96, 0], sizes = [8, 16], strides = [1, 1]} : vector<128x16xf32> to vector<8x16xf32>
    %442 = vector.extract_strided_slice %433 {offsets = [112, 0], sizes = [8, 16], strides = [1, 1]} : vector<128x16xf32> to vector<8x16xf32>
    %443 = tpu.concatenate %435, %436, %437, %438, %439, %440, %441, %442 in 0 : vector<8x16xf32>, vector<8x16xf32>, vector<8x16xf32>, vector<8x16xf32>, vector<8x16xf32>, vector<8x16xf32>, vector<8x16xf32>, vector<8x16xf32> -> vector<64x16xf32>
    %444 = arith.addf %434, %443 : vector<64x16xf32>
    %c0_407 = arith.constant 0 : index
    %c0_408 = arith.constant 0 : index
    %445 = vector.load %arg9[%c0_407, %c0_408] : memref<64x16xf32, #tpu.memory_space<vmem>>, vector<64x16xf32>
    tpu.vector_store %arg9[%c0_407, %c0_408], %444 {strides = array<i32>} : memref<64x16xf32, #tpu.memory_space<vmem>>, vector<64x16xf32>,
    %c0_409 = arith.constant 0 : index
    %c0_410 = arith.constant 0 : index
    %446 = vector.load %arg9[%c0_409, %c0_410] : memref<64x16xf32, #tpu.memory_space<vmem>>, vector<64x16xf32>
    %c0_411 = arith.constant 0 : index
    %c0_412 = arith.constant 0 : index
    %c0_413 = arith.constant 0 : index
    %447 = vector.load %arg6[%c0_411, %c0_412, %c0_413] : memref<1x64x16xf32, #tpu.memory_space<vmem>>, vector<1x64x16xf32>
    %448 = vector.shape_cast %447 : vector<1x64x16xf32> to vector<64x16xf32>
    %449 = vector.shape_cast %446 : vector<64x16xf32> to vector<1x64x16xf32>
    tpu.vector_store %arg6[%c0_411, %c0_412, %c0_413], %449 {strides = array<i32>} : memref<1x64x16xf32, #tpu.memory_space<vmem>>, vector<1x64x16xf32>,
    return
  }
  func.func @transform_0(%arg0: i32) -> (i32, i32, i32) {
    %c0_i32 = arith.constant 0 : i32
    %c0_i32_0 = arith.constant 0 : i32
    %c0_i32_1 = arith.constant 0 : i32
    return %arg0, %c0_i32, %c0_i32_0 : i32, i32, i32
  }
  func.func @transform_1(%arg0: i32) -> (i32, i32) {
    %c0_i32 = arith.constant 0 : i32
    %c0_i32_0 = arith.constant 0 : i32
    %c0_i32_1 = arith.constant 0 : i32
    return %c0_i32, %c0_i32_0 : i32, i32
  }
  func.func @transform_2(%arg0: i32) -> (i32, i32) {
    %c0_i32 = arith.constant 0 : i32
    %c0_i32_0 = arith.constant 0 : i32
    %c0_i32_1 = arith.constant 0 : i32
    return %c0_i32, %c0_i32_0 : i32, i32
  }
  func.func @transform_3(%arg0: i32) -> (i32, i32, i32) {
    %c0_i32 = arith.constant 0 : i32
    %c0_i32_0 = arith.constant 0 : i32
    %c0_i32_1 = arith.constant 0 : i32
    %c0_i32_2 = arith.constant 0 : i32
    return %c0_i32, %c0_i32_0, %c0_i32_1 : i32, i32, i32
  }
  func.func @transform_4(%arg0: i32) -> (i32, i32, i32) {
    %c0_i32 = arith.constant 0 : i32
    %c0_i32_0 = arith.constant 0 : i32
    %c0_i32_1 = arith.constant 0 : i32
    %c0_i32_2 = arith.constant 0 : i32
    return %c0_i32, %c0_i32_0, %c0_i32_1 : i32, i32, i32
  }
  func.func @transform_5(%arg0: i32) -> (i32, i32, i32) {
    %c0_i32 = arith.constant 0 : i32
    %c0_i32_0 = arith.constant 0 : i32
    %c0_i32_1 = arith.constant 0 : i32
    return %arg0, %c0_i32, %c0_i32_0 : i32, i32, i32
  }
}

</mosaic_0001>

<llo_original>
// kernel: conv_sequence_forward.1
$region0: #{conv_sequence_forward.1}
  #allocation0 [shape = 'u32[]', space=smem, size = 0x4, offset = 0x4, fixed_abs, tag = 'smem constant byte address 0x4 - core index']
  #allocation1 [shape = 'u32[144,128]{1,0:T(1,128)}', space=vmem, size = 0x12000, scoped, tag = 'internal scratch']
  #allocation2 [shape = 'f32[384,16]{1,0:T(8,128)}', space=vmem, size = 0x30000, scoped, tag = 'scratch operand']
  #allocation3 [shape = 'bf16[176,16]{1,0:T(8,128)(2,1)}', space=vmem, size = 0xb000, scoped, tag = 'scratch operand']
  #allocation4 [shape = 'f32[64,16]{1,0:T(8,128)}', space=vmem, size = 0x8000, scoped, tag = 'scratch operand']
  #allocation5 [shape = 'f32[24,16]{1,0:T(8,128)}', space=vmem, size = 0x3000, scoped, tag = 'scratch operand']
  %s0 = inlined_call_operand.vmem [shape: bf16[2,456,4], index: 0, kind: input, shape index: {}]
  %s1 = inlined_call_operand.vmem [shape: bf16[36,16], index: 1, kind: input, shape index: {}]
  %s2 = inlined_call_operand.vmem [shape: f32[1,16], index: 2, kind: input, shape index: {}]
  %s3 = inlined_call_operand.vmem [shape: bf16[4,144,16], index: 3, kind: input, shape index: {}]
  %s4 = inlined_call_operand.vmem [shape: f32[4,1,16], index: 4, kind: input, shape index: {}]
  %s5 = inlined_call_operand.hbm [shape: f32[2,64,16], index: 5, kind: output, shape index: {}]
  %s6 = sld [smem:[#allocation0]]
  $region53: #{conv_sequence_forward.1} parent=0
    _
  %s8 = ssub.s32 1, %s6
  %s9 = scalar_select 0, %s8, %s6
  $region1: #{conv_sequence_forward.1} parent=0
    #allocation6 [shape = 'u8[65536]{0}', space=vmem, size = 0x10000, scoped, tag = 'output window, operand 0']
    #allocation7 [shape = 's32[2]{0}', space=sflag, size = 0x8, scoped, tag = 'scoped memory for conv_sequence_forward.1']
    %10 = vsyncpa [#allocation7], 0
    %s11 = scalar_lea.sflag [#allocation7], 1
    %12 = vsyncpa %s11, 0
    loop: start=0, step=1, limit=4
    $region2: #{conv_sequence_forward.1} parent=1 // loop_pre_header
      _
    $region3: #{conv_sequence_forward.1} parent=1 // loop_header
      %s14 = sphi 0, %s18
      %p15 = scmp.ge.s32.totalorder %s14, 4
      %s24 = sphi 0, %s26
      %s27 = sphi 0, %s24
      %s28 = sphi 0, %s27
      %s44 = sphi 0, %s28
      %s48 = sphi 0, %s48
      %s50 = sphi 0, %s48
      %s51 = sphi 0, %s50
      %s65 = sphi 0, %s51
      %s69 = sphi 0, %s69
      %s71 = sphi 0, %s69
      %s72 = sphi 0, %s71
      %s86 = sphi 0, %s72
      %s90 = sphi 0, %s90
      %s92 = sphi 0, %s90
      %s93 = sphi 0, %s92
      %s107 = sphi 0, %s93
      %s111 = sphi 0, %s111
      %s113 = sphi 0, %s111
      %s114 = sphi 0, %s113
      %s128 = sphi 0, %s114
      %s134 = sphi 0, %s136
      %s137 = sphi 0, %s134
      %s138 = sphi 0, %s137
      %s154 = sphi 0, %s138
    $region4: #{conv_sequence_forward.1} parent=1 // loop_header_branch
      %17 = sbr.rel (%p15) target = $region8
    $region5: #{conv_sequence_forward.1} parent=1 // loop_body
      %s19 = ssub.s32 %s14, 1
      %s20 = ssub.s32 %s14, 2
      %s21 = sadd.s32 %s14, 1
      %s22 = ssub.s32 %s14, %s21
      %p23 = scmp.eq.s32.totalorder %s22, 0
      %s25 = sadd.s32 %s24, 1
      %s26 = scalar_select %p23, %s24, %s25
      %p29 = pneg %p23
      %p30 = scmp.eq.s32.totalorder %s14, 1
      %p31 = por %p29, %p30
      %p32 = scmp.ne.s32.totalorder %s24, %s27
      %p33 = scmp.eq.s32.totalorder %s14, 0
      %p34 = por %p32, %p33
      %p35 = scmp.ne.s32.totalorder %s24, %s27
      %p36 = scmp.eq.s32.totalorder %s19, 1
      %p37 = por %p35, %p36
      %p38 = scmp.ne.s32.totalorder %s27, %s28
      %p39 = scmp.eq.s32.totalorder %s19, 0
      %p40 = por %p38, %p39
      %p41 = scmp.ne.s32.totalorder %s27, %s28
      %p42 = scmp.eq.s32.totalorder %s20, 1
      %p43 = por %p41, %p42
      %p45 = scmp.ne.s32.totalorder %s28, %s44
      %p46 = scmp.eq.s32.totalorder %s20, 0
      %p47 = por %p45, %p46
      %s49 = sadd.s32 %s48, 1
      %p52 = scmp.eq.s32.totalorder %s14, 1
      %p53 = scmp.ne.s32.totalorder %s48, %s50
      %p54 = scmp.eq.s32.totalorder %s14, 0
      %p55 = por %p53, %p54
      %p56 = scmp.ne.s32.totalorder %s48, %s50
      %p57 = scmp.eq.s32.totalorder %s19, 1
      %p58 = por %p56, %p57
      %p59 = scmp.ne.s32.totalorder %s50, %s51
      %p60 = scmp.eq.s32.totalorder %s19, 0
      %p61 = por %p59, %p60
      %p62 = scmp.ne.s32.totalorder %s50, %s51
      %p63 = scmp.eq.s32.totalorder %s20, 1
      %p64 = por %p62, %p63
      %p66 = scmp.ne.s32.totalorder %s51, %s65
      %p67 = scmp.eq.s32.totalorder %s20, 0
      %p68 = por %p66, %p67
      %s70 = sadd.s32 %s69, 1
      %p73 = scmp.eq.s32.totalorder %s14, 1
      %p74 = scmp.ne.s32.totalorder %s69, %s71
      %p75 = scmp.eq.s32.totalorder %s14, 0
      %p76 = por %p74, %p75
      %p77 = scmp.ne.s32.totalorder %s69, %s71
      %p78 = scmp.eq.s32.totalorder %s19, 1
      %p79 = por %p77, %p78
      %p80 = scmp.ne.s32.totalorder %s71, %s72
      %p81 = scmp.eq.s32.totalorder %s19, 0
      %p82 = por %p80, %p81
      %p83 = scmp.ne.s32.totalorder %s71, %s72
      %p84 = scmp.eq.s32.totalorder %s20, 1
      %p85 = por %p83, %p84
      %p87 = scmp.ne.s32.totalorder %s72, %s86
      %p88 = scmp.eq.s32.totalorder %s20, 0
      %p89 = por %p87, %p88
      %s91 = sadd.s32 %s90, 1
      %p94 = scmp.eq.s32.totalorder %s14, 1
      %p95 = scmp.ne.s32.totalorder %s90, %s92
      %p96 = scmp.eq.s32.totalorder %s14, 0
      %p97 = por %p95, %p96
      %p98 = scmp.ne.s32.totalorder %s90, %s92
      %p99 = scmp.eq.s32.totalorder %s19, 1
      %p100 = por %p98, %p99
      %p101 = scmp.ne.s32.totalorder %s92, %s93
      %p102 = scmp.eq.s32.totalorder %s19, 0
      %p103 = por %p101, %p102
      %p104 = scmp.ne.s32.totalorder %s92, %s93
      %p105 = scmp.eq.s32.totalorder %s20, 1
      %p106 = por %p104, %p105
      %p108 = scmp.ne.s32.totalorder %s93, %s107
      %p109 = scmp.eq.s32.totalorder %s20, 0
      %p110 = por %p108, %p109
      %s112 = sadd.s32 %s111, 1
      %p115 = scmp.eq.s32.totalorder %s14, 1
      %p116 = scmp.ne.s32.totalorder %s111, %s113
      %p117 = scmp.eq.s32.totalorder %s14, 0
      %p118 = por %p116, %p117
      %p119 = scmp.ne.s32.totalorder %s111, %s113
      %p120 = scmp.eq.s32.totalorder %s19, 1
      %p121 = por %p119, %p120
      %p122 = scmp.ne.s32.totalorder %s113, %s114
      %p123 = scmp.eq.s32.totalorder %s19, 0
      %p124 = por %p122, %p123
      %p125 = scmp.ne.s32.totalorder %s113, %s114
      %p126 = scmp.eq.s32.totalorder %s20, 1
      %p127 = por %p125, %p126
      %p129 = scmp.ne.s32.totalorder %s114, %s128
      %p130 = scmp.eq.s32.totalorder %s20, 0
      %p131 = por %p129, %p130
      %s132 = ssub.s32 %s14, %s21
      %p133 = scmp.eq.s32.totalorder %s132, 0
      %s135 = sadd.s32 %s134, 1
      %s136 = scalar_select %p133, %s134, %s135
      %p139 = pneg %p133
      %p140 = scmp.eq.s32.totalorder %s14, 1
      %p141 = por %p139, %p140
      %p142 = scmp.ne.s32.totalorder %s134, %s137
      %p143 = scmp.eq.s32.totalorder %s14, 0
      %p144 = por %p142, %p143
      %p145 = scmp.ne.s32.totalorder %s134, %s137
      %p146 = scmp.eq.s32.totalorder %s19, 1
      %p147 = por %p145, %p146
      %p148 = scmp.ne.s32.totalorder %s137, %s138
      %p149 = scmp.eq.s32.totalorder %s19, 0
      %p150 = por %p148, %p149
      %p151 = scmp.ne.s32.totalorder %s137, %s138
      %p152 = scmp.eq.s32.totalorder %s20, 1
      %p153 = por %p151, %p152
      %p155 = scmp.ne.s32.totalorder %s138, %s154
      %p156 = scmp.eq.s32.totalorder %s20, 0
      %p157 = por %p155, %p156
      %p158 = scmp.le.s32.totalorder 1, %s14
      %p159 = scmp.lt.s32.totalorder %s14, 3
      %p160 = pnand %p158, %p159
      %p161 = pneg %p160
      // Predicated region
      $region9: #{conv_sequence_forward.1} parent=5 // pred_check
        _
      $region10: #{conv_sequence_forward.1} parent=5 // pred_check_branch
        %163 = sbr.rel (%p160) target = $region12
      $region11: #{conv_sequence_forward.1} parent=5 // pred_region
        %s164 = ssub.s32 %s14, 1
        // Predicated region
        $region13: #{conv_sequence_forward.1} parent=11 // pred_check
          %p165 = pneg %p61
        $region14: #{conv_sequence_forward.1} parent=11 // pred_check_branch
          %167 = sbr.rel (%p165) target = $region16
        $region15: #{conv_sequence_forward.1} parent=11 // pred_region
          _
        $region16: #{conv_sequence_forward.1} parent=11 // pred_fallthru
          _
        // Predicated region
        $region17: #{conv_sequence_forward.1} parent=11 // pred_check
          %p168 = pneg %p82
        $region18: #{conv_sequence_forward.1} parent=11 // pred_check_branch
          %170 = sbr.rel (%p168) target = $region20
        $region19: #{conv_sequence_forward.1} parent=11 // pred_region
          _
        $region20: #{conv_sequence_forward.1} parent=11 // pred_fallthru
          _
        // Predicated region
        $region21: #{conv_sequence_forward.1} parent=11 // pred_check
          %p171 = pneg %p103
        $region22: #{conv_sequence_forward.1} parent=11 // pred_check_branch
          %173 = sbr.rel (%p171) target = $region24
        $region23: #{conv_sequence_forward.1} parent=11 // pred_region
          _
        $region24: #{conv_sequence_forward.1} parent=11 // pred_fallthru
          _
        // Predicated region
        $region25: #{conv_sequence_forward.1} parent=11 // pred_check
          %p174 = pneg %p124
        $region26: #{conv_sequence_forward.1} parent=11 // pred_check_branch
          %176 = sbr.rel (%p174) target = $region28
        $region27: #{conv_sequence_forward.1} parent=11 // pred_region
          _
        $region28: #{conv_sequence_forward.1} parent=11 // pred_fallthru
          _
      $region12: #{conv_sequence_forward.1} parent=5 // pred_fallthru
        _
      %p177 = scmp.lt.s32.totalorder %s14, 2
      // Predicated region
      $region29: #{conv_sequence_forward.1} parent=5 // pred_check
        %p178 = pneg %p177
      $region30: #{conv_sequence_forward.1} parent=5 // pred_check_branch
        %180 = sbr.rel (%p178) target = $region32
      $region31: #{conv_sequence_forward.1} parent=5 // pred_region
        // Predicated region
        $region33: #{conv_sequence_forward.1} parent=31 // pred_check
          %p181 = pneg %p34
        $region34: #{conv_sequence_forward.1} parent=31 // pred_check_branch
          %183 = sbr.rel (%p181) target = $region36
        $region35: #{conv_sequence_forward.1} parent=31 // pred_region
          %p184 = scmp.lt.s32.totalorder %s14, 1
          %s185 = scalar_select %p184, %s14, 1
          %s186 = smul.addr %s185, 57
          %s187 = smul.addr %s186, 4
          %s188 = scalar_lea.vmem %s0, %s187
        $region36: #{conv_sequence_forward.1} parent=31 // pred_fallthru
          _
      $region32: #{conv_sequence_forward.1} parent=5 // pred_fallthru
        _
      %p189 = scmp.le.s32.totalorder 1, %s14
      %p190 = scmp.lt.s32.totalorder %s14, 3
      %p191 = pnand %p189, %p190
      %p192 = pneg %p191
      // Predicated region
      $region37: #{conv_sequence_forward.1} parent=5 // pred_check
        _
      $region38: #{conv_sequence_forward.1} parent=5 // pred_check_branch
        %194 = sbr.rel (%p191) target = $region40
      $region39: #{conv_sequence_forward.1} parent=5 // pred_region
        %s195 = ssub.s32 %s14, 1
        %p196 = scmp.lt.s32.totalorder %s19, 1
        %s197 = scalar_select %p196, %s19, 1
        %s198 = smul.addr %s197, 57
        %s199 = smul.addr %s198, 4
        %s200 = scalar_lea.vmem %s0, %s199
        %p201 = pneg %p40
        %p202 = pneg %p37
        %p203 = pneg %p61
        %p204 = pneg %p58
        %p205 = pneg %p82
        %p206 = pneg %p79
        %p207 = pneg %p103
        %p208 = pneg %p100
        %p209 = pneg %p124
        %p210 = pneg %p121
        %p211 = pneg %p150
        %p212 = pneg %p147
        %s213 = sand.u32 %s137, 1
        %s214 = scalar_lea.sflag [#allocation7], %s213
        %s215 = sand.u32 %s137, 1
        %s216 = smul.addr %s215, 64
        %s217 = scalar_lea.vmem [#allocation6], %s216
        %p218 = scmp.lt.s32.totalorder %s19, 1
        %s219 = scalar_select %p218, %s19, 1
        %s220 = smul.addr %s219, 57
        %s221 = smul.addr %s220, 4
        %s222 = scalar_lea.vmem %s0, %s221
        %v224 = vld [vmem:[%s2] sm:$0x1]
        %v225 = vld [vmem:[%s1] sm:$0xf]
        %v226 = vld [vmem:[%s1 + $0x4] sm:$0xf]
        %v227 = vld [vmem:[%s1 + $0x8] sm:$0xf]
        %v228 = vld [vmem:[%s1 + $0xc] sm:$0xf]
        %v229 = vld [vmem:[%s1 + $0x10] sm:$0x3]
        %v230 = vld [vmem:[%s222] sm:$0xf]
        %v231 = vld [vmem:[%s222 + $0x4] sm:$0xf]
        %v232 = vld [vmem:[%s222 + $0x8] sm:$0xf]
        %v233 = vld [vmem:[%s222 + $0xc] sm:$0xf]
        %v234 = vld [vmem:[%s222 + $0x10] sm:$0xf]
        %v235 = vld [vmem:[%s222 + $0x14] sm:$0xf]
        %v236 = vld [vmem:[%s222 + $0x18] sm:$0xf]
        %v237 = vld [vmem:[%s222 + $0x1c] sm:$0xf]
        %v238 = vld [vmem:[%s222 + $0x20] sm:$0xf]
        %v239 = vld [vmem:[%s222 + $0x24] sm:$0xf]
        %v240 = vld [vmem:[%s222 + $0x28] sm:$0xf]
        %v241 = vld [vmem:[%s222 + $0x2c] sm:$0xf]
        %v242 = vld [vmem:[%s222 + $0x30] sm:$0x1]
        %v243 = vld [vmem:[%s222] sm:$0xe]
        %v244 = vld [vmem:[%s222 + $0x30] sm:$0xf]
        %v245 = vld [vmem:[%s222 + $0x34] sm:$0xf]
        %v246 = vld [vmem:[%s222 + $0x38] sm:$0xf]
        %v247 = vld [vmem:[%s222 + $0x3c] sm:$0x1]
        %v248 = vld [vmem:[%s222 + $0xc] sm:$0xe]
        %v249 = vld [vmem:[%s222 + $0x3c] sm:$0xf]
        %v250 = vld [vmem:[%s222 + $0x40] sm:$0xf]
        %v251 = vld [vmem:[%s222 + $0x44] sm:$0xf]
        %v252 = vld [vmem:[%s222 + $0x48] sm:$0x1]
        %v253 = vld [vmem:[%s222 + $0x18] sm:$0xe]
        %v266 = vunpack.c.l.b16 %v230
        %v267 = vunpack.c.l.b16 %v231
        %v268 = vunpack.c.l.b16 %v232
        %v269 = vunpack.c.l.b16 %v233
        %v270 = vunpack.c.l.b16 %v234
        %v271 = vunpack.c.l.b16 %v235
        %v272 = vunpack.c.l.b16 %v236
        %v273 = vunpack.c.l.b16 %v237
        %v274 = vunpack.c.l.b16 %v238
        %v275 = vunpack.c.l.b16 %v239
        %v276 = vunpack.c.l.b16 %v240
        %v277 = vunpack.c.l.b16 %v241
        %v278 = vpack.c.b16 %v267, %v266
        %v279 = vpack.c.b16 %v269, %v268
        %v280 = vpack.c.b16 %v271, %v270
        %v281 = vpack.c.b16 %v273, %v272
        %v282 = vpack.c.b16 %v275, %v274
        %v283 = vpack.c.b16 %v277, %v276
        %v285 = vunpack.c.l.b16 %v242
        %v286 = vpack.c.b16 %v285, %v285
        %vm287 = vsmask.f32 7424
        %v289 = vshrl.u32 %v278, 16
        %v291 = vshll.u32 %v278, 16
        %v293 = vrot.slane %v291, 1
        %v294 = vor.u32 %v289, %v293
        %v296 = vshll.u32 %v279, 16
        %v298 = vrot.slane %v296, 1
        %v299 = vsel %vm287, %v294, %v298
        %v300 = vshrl.u32 %v279, 16
        %v302 = vor.u32 %v300, %v298
        %v304 = vshll.u32 %v280, 16
        %v306 = vrot.slane %v304, 1
        %v307 = vsel %vm287, %v302, %v306
        %v308 = vshrl.u32 %v280, 16
        %v310 = vor.u32 %v308, %v306
        %v312 = vshll.u32 %v281, 16
        %v314 = vrot.slane %v312, 1
        %v315 = vsel %vm287, %v310, %v314
        %v316 = vshrl.u32 %v281, 16
        %v318 = vor.u32 %v316, %v314
        %v320 = vshll.u32 %v282, 16
        %v322 = vrot.slane %v320, 1
        %v323 = vsel %vm287, %v318, %v322
        %v324 = vshrl.u32 %v282, 16
        %v326 = vor.u32 %v324, %v322
        %v328 = vshll.u32 %v283, 16
        %v330 = vrot.slane %v328, 1
        %v331 = vsel %vm287, %v326, %v330
        %v332 = vshrl.u32 %v283, 16
        %v334 = vor.u32 %v332, %v330
        %v336 = vshll.u32 %v286, 16
        %v338 = vrot.slane %v336, 1
        %v339 = vsel %vm287, %v334, %v338
        %340 = vrot.lane.b32.xlu0 %v299, 4
        %v341 = vpop.permute.xlu0 %340
        %342 = vrot.lane.b32.xlu0 %v307, 4
        %v343 = vpop.permute.xlu0 %342
        %344 = vrot.lane.b32.xlu0 %v315, 4
        %v345 = vpop.permute.xlu0 %344
        %346 = vrot.lane.b32.xlu0 %v323, 4
        %v347 = vpop.permute.xlu0 %346
        %348 = vrot.lane.b32.xlu0 %v331, 4
        %v349 = vpop.permute.xlu0 %348
        %350 = vrot.lane.b32.xlu0 %v339, 4
        %v351 = vpop.permute.xlu0 %350
        %v353 = vunpack.c.l.b16 %v243
        %v354 = vpack.c.b16 %v267, %v353
        %vm355 = vcmask 1046528
        %v356 = vrot.slane %v354, 1
        %v357 = vrot.slane %v279, 1
        %v358 = vsel %vm355, %v356, %v357
        %v359 = vrot.slane %v280, 1
        %v360 = vsel %vm355, %v357, %v359
        %v361 = vrot.slane %v281, 1
        %v362 = vsel %vm355, %v359, %v361
        %v363 = vrot.slane %v282, 1
        %v364 = vsel %vm355, %v361, %v363
        %v365 = vrot.slane %v283, 1
        %v366 = vsel %vm355, %v363, %v365
        %v367 = vrot.slane %v286, 1
        %v368 = vsel %vm355, %v365, %v367
        %369 = vrot.lane.b32.xlu0 %v358, 8
        %v370 = vpop.permute.xlu0 %369
        %371 = vrot.lane.b32.xlu0 %v360, 8
        %v372 = vpop.permute.xlu0 %371
        %373 = vrot.lane.b32.xlu0 %v362, 8
        %v374 = vpop.permute.xlu0 %373
        %375 = vrot.lane.b32.xlu0 %v364, 8
        %v376 = vpop.permute.xlu0 %375
        %377 = vrot.lane.b32.xlu0 %v366, 8
        %v378 = vpop.permute.xlu0 %377
        %379 = vrot.lane.b32.xlu0 %v368, 8
        %v380 = vpop.permute.xlu0 %379
        %v384 = vunpack.c.l.b16 %v244
        %v385 = vunpack.c.l.b16 %v245
        %v386 = vunpack.c.l.b16 %v246
        %v387 = vpack.c.b16 %v270, %v269
        %v388 = vpack.c.b16 %v272, %v271
        %v389 = vpack.c.b16 %v274, %v273
        %v390 = vpack.c.b16 %v276, %v275
        %v391 = vpack.c.b16 %v384, %v277
        %v392 = vpack.c.b16 %v386, %v385
        %393 = vrot.lane.b32.xlu0 %v387, 12
        %v394 = vpop.permute.xlu0 %393
        %395 = vrot.lane.b32.xlu0 %v388, 12
        %v396 = vpop.permute.xlu0 %395
        %397 = vrot.lane.b32.xlu0 %v389, 12
        %v398 = vpop.permute.xlu0 %397
        %399 = vrot.lane.b32.xlu0 %v390, 12
        %v400 = vpop.permute.xlu0 %399
        %401 = vrot.lane.b32.xlu0 %v391, 12
        %v402 = vpop.permute.xlu0 %401
        %403 = vrot.lane.b32.xlu0 %v392, 12
        %v404 = vpop.permute.xlu0 %403
        %v406 = vunpack.c.l.b16 %v247
        %v407 = vpack.c.b16 %v406, %v406
        %v409 = vshrl.u32 %v387, 16
        %v411 = vshll.u32 %v387, 16
        %v413 = vrot.slane %v411, 1
        %v414 = vor.u32 %v409, %v413
        %v416 = vshll.u32 %v388, 16
        %v418 = vrot.slane %v416, 1
        %v419 = vsel %vm287, %v414, %v418
        %v420 = vshrl.u32 %v388, 16
        %v422 = vor.u32 %v420, %v418
        %v424 = vshll.u32 %v389, 16
        %v426 = vrot.slane %v424, 1
        %v427 = vsel %vm287, %v422, %v426
        %v428 = vshrl.u32 %v389, 16
        %v430 = vor.u32 %v428, %v426
        %v432 = vshll.u32 %v390, 16
        %v434 = vrot.slane %v432, 1
        %v435 = vsel %vm287, %v430, %v434
        %v436 = vshrl.u32 %v390, 16
        %v438 = vor.u32 %v436, %v434
        %v440 = vshll.u32 %v391, 16
        %v442 = vrot.slane %v440, 1
        %v443 = vsel %vm287, %v438, %v442
        %v444 = vshrl.u32 %v391, 16
        %v446 = vor.u32 %v444, %v442
        %v448 = vshll.u32 %v392, 16
        %v450 = vrot.slane %v448, 1
        %v451 = vsel %vm287, %v446, %v450
        %v452 = vshrl.u32 %v392, 16
        %v454 = vor.u32 %v452, %v450
        %v456 = vshll.u32 %v407, 16
        %v458 = vrot.slane %v456, 1
        %v459 = vsel %vm287, %v454, %v458
        %460 = vrot.lane.b32.xlu0 %v419, 16
        %v461 = vpop.permute.xlu0 %460
        %462 = vrot.lane.b32.xlu0 %v427, 16
        %v463 = vpop.permute.xlu0 %462
        %464 = vrot.lane.b32.xlu0 %v435, 16
        %v465 = vpop.permute.xlu0 %464
        %466 = vrot.lane.b32.xlu0 %v443, 16
        %v467 = vpop.permute.xlu0 %466
        %468 = vrot.lane.b32.xlu0 %v451, 16
        %v469 = vpop.permute.xlu0 %468
        %470 = vrot.lane.b32.xlu0 %v459, 16
        %v471 = vpop.permute.xlu0 %470
        %v473 = vunpack.c.l.b16 %v248
        %v474 = vpack.c.b16 %v270, %v473
        %v475 = vrot.slane %v474, 1
        %v476 = vrot.slane %v388, 1
        %v477 = vsel %vm355, %v475, %v476
        %v478 = vrot.slane %v389, 1
        %v479 = vsel %vm355, %v476, %v478
        %v480 = vrot.slane %v390, 1
        %v481 = vsel %vm355, %v478, %v480
        %v482 = vrot.slane %v391, 1
        %v483 = vsel %vm355, %v480, %v482
        %v484 = vrot.slane %v392, 1
        %v485 = vsel %vm355, %v482, %v484
        %v486 = vrot.slane %v407, 1
        %v487 = vsel %vm355, %v484, %v486
        %488 = vrot.lane.b32.xlu0 %v477, 20
        %v489 = vpop.permute.xlu0 %488
        %490 = vrot.lane.b32.xlu0 %v479, 20
        %v491 = vpop.permute.xlu0 %490
        %492 = vrot.lane.b32.xlu0 %v481, 20
        %v493 = vpop.permute.xlu0 %492
        %494 = vrot.lane.b32.xlu0 %v483, 20
        %v495 = vpop.permute.xlu0 %494
        %496 = vrot.lane.b32.xlu0 %v485, 20
        %v497 = vpop.permute.xlu0 %496
        %498 = vrot.lane.b32.xlu0 %v487, 20
        %v499 = vpop.permute.xlu0 %498
        %v503 = vunpack.c.l.b16 %v249
        %v504 = vunpack.c.l.b16 %v250
        %v505 = vunpack.c.l.b16 %v251
        %v506 = vpack.c.b16 %v385, %v384
        %v507 = vpack.c.b16 %v503, %v386
        %v508 = vpack.c.b16 %v505, %v504
        %509 = vrot.lane.b32.xlu0 %v281, 24
        %v510 = vpop.permute.xlu0 %509
        %511 = vrot.lane.b32.xlu0 %v282, 24
        %v512 = vpop.permute.xlu0 %511
        %513 = vrot.lane.b32.xlu0 %v283, 24
        %v514 = vpop.permute.xlu0 %513
        %515 = vrot.lane.b32.xlu0 %v506, 24
        %v516 = vpop.permute.xlu0 %515
        %517 = vrot.lane.b32.xlu0 %v507, 24
        %v518 = vpop.permute.xlu0 %517
        %519 = vrot.lane.b32.xlu0 %v508, 24
        %v520 = vpop.permute.xlu0 %519
        %v522 = vunpack.c.l.b16 %v252
        %v523 = vpack.c.b16 %v522, %v522
        %v525 = vshll.u32 %v506, 16
        %v527 = vrot.slane %v525, 1
        %v528 = vsel %vm287, %v334, %v527
        %v529 = vshrl.u32 %v506, 16
        %v531 = vor.u32 %v529, %v527
        %v533 = vshll.u32 %v507, 16
        %v535 = vrot.slane %v533, 1
        %v536 = vsel %vm287, %v531, %v535
        %v537 = vshrl.u32 %v507, 16
        %v539 = vor.u32 %v537, %v535
        %v541 = vshll.u32 %v508, 16
        %v543 = vrot.slane %v541, 1
        %v544 = vsel %vm287, %v539, %v543
        %v545 = vshrl.u32 %v508, 16
        %v547 = vor.u32 %v545, %v543
        %v549 = vshll.u32 %v523, 16
        %v551 = vrot.slane %v549, 1
        %v552 = vsel %vm287, %v547, %v551
        %553 = vrot.lane.b32.xlu0 %v323, 28
        %v554 = vpop.permute.xlu0 %553
        %555 = vrot.lane.b32.xlu0 %v331, 28
        %v556 = vpop.permute.xlu0 %555
        %557 = vrot.lane.b32.xlu0 %v528, 28
        %v558 = vpop.permute.xlu0 %557
        %559 = vrot.lane.b32.xlu0 %v536, 28
        %v560 = vpop.permute.xlu0 %559
        %561 = vrot.lane.b32.xlu0 %v544, 28
        %v562 = vpop.permute.xlu0 %561
        %563 = vrot.lane.b32.xlu0 %v552, 28
        %v564 = vpop.permute.xlu0 %563
        %v566 = vunpack.c.l.b16 %v253
        %v567 = vpack.c.b16 %v273, %v566
        %v568 = vrot.slane %v567, 1
        %v569 = vsel %vm355, %v568, %v363
        %v570 = vrot.slane %v506, 1
        %v571 = vsel %vm355, %v365, %v570
        %v572 = vrot.slane %v507, 1
        %v573 = vsel %vm355, %v570, %v572
        %v574 = vrot.slane %v508, 1
        %v575 = vsel %vm355, %v572, %v574
        %v576 = vrot.slane %v523, 1
        %v577 = vsel %vm355, %v574, %v576
        %578 = vrot.lane.b32.xlu0 %v569, 32
        %v579 = vpop.permute.xlu0 %578
        %580 = vrot.lane.b32.xlu0 %v366, 32
        %v581 = vpop.permute.xlu0 %580
        %582 = vrot.lane.b32.xlu0 %v571, 32
        %v583 = vpop.permute.xlu0 %582
        %584 = vrot.lane.b32.xlu0 %v573, 32
        %v585 = vpop.permute.xlu0 %584
        %586 = vrot.lane.b32.xlu0 %v575, 32
        %v587 = vpop.permute.xlu0 %586
        %588 = vrot.lane.b32.xlu0 %v577, 32
        %v589 = vpop.permute.xlu0 %588
        %vm590 = vcmask 31744
        %v592 = vsel %vm590, %v278, %v341
        %v594 = vsel %vm590, %v279, %v343
        %v596 = vsel %vm590, %v280, %v345
        %v598 = vsel %vm590, %v281, %v347
        %v600 = vsel %vm590, %v282, %v349
        %v602 = vsel %vm590, %v283, %v351
        %vm603 = vcmask 64512
        %v605 = vsel %vm603, %v592, %v370
        %v607 = vsel %vm603, %v594, %v372
        %v609 = vsel %vm603, %v596, %v374
        %v611 = vsel %vm603, %v598, %v376
        %v613 = vsel %vm603, %v600, %v378
        %v615 = vsel %vm603, %v602, %v380
        %vm616 = vcmask 97280
        %v618 = vsel %vm616, %v605, %v394
        %v620 = vsel %vm616, %v607, %v396
        %v622 = vsel %vm616, %v609, %v398
        %v624 = vsel %vm616, %v611, %v400
        %v626 = vsel %vm616, %v613, %v402
        %v628 = vsel %vm616, %v615, %v404
        %vm629 = vcmask 130048
        %v631 = vsel %vm629, %v618, %v461
        %v633 = vsel %vm629, %v620, %v463
        %v635 = vsel %vm629, %v622, %v465
        %v637 = vsel %vm629, %v624, %v467
        %v639 = vsel %vm629, %v626, %v469
        %v641 = vsel %vm629, %v628, %v471
        %vm642 = vcmask 162816
        %v644 = vsel %vm642, %v631, %v489
        %v646 = vsel %vm642, %v633, %v491
        %v648 = vsel %vm642, %v635, %v493
        %v650 = vsel %vm642, %v637, %v495
        %v652 = vsel %vm642, %v639, %v497
        %v654 = vsel %vm642, %v641, %v499
        %vm655 = vcmask 195584
        %v657 = vsel %vm655, %v644, %v510
        %v659 = vsel %vm655, %v646, %v512
        %v661 = vsel %vm655, %v648, %v514
        %v663 = vsel %vm655, %v650, %v516
        %v665 = vsel %vm655, %v652, %v518
        %v667 = vsel %vm655, %v654, %v520
        %vm668 = vcmask 228352
        %v670 = vsel %vm668, %v657, %v554
        %v672 = vsel %vm668, %v659, %v556
        %v674 = vsel %vm668, %v661, %v558
        %v676 = vsel %vm668, %v663, %v560
        %v678 = vsel %vm668, %v665, %v562
        %v680 = vsel %vm668, %v667, %v564
        %vm681 = vcmask 261120
        %v683 = vsel %vm681, %v670, %v579
        %v685 = vsel %vm681, %v672, %v581
        %v687 = vsel %vm681, %v674, %v583
        %v689 = vsel %vm681, %v676, %v585
        %v691 = vsel %vm681, %v678, %v587
        %v693 = vsel %vm681, %v680, %v589
        %v695 = vlaneseq
        %v696 = vshrl.u32 %v695, 7
        %v697 = vsub.s32 0, %v696
        %v698 = vrot.slane %v224, %v697
        %v705 = vunpack.c.l.b16 %v225
        %v706 = vunpack.c.l.b16 %v226
        %v707 = vunpack.c.l.b16 %v227
        %v708 = vunpack.c.l.b16 %v228
        %v709 = vunpack.c.l.b16 %v229
        %v710 = vpack.c.b16 %v706, %v705
        %v711 = vpack.c.b16 %v708, %v707
        %v712 = vpack.c.b16 %v709, %v709
        %vm715 = vcmask 293888
        %v716 = vsel %vm715, %v683, 0
        %v718 = vsel %vm715, %v685, 0
        %v720 = vsel %vm715, %v687, 0
        %v722 = vsel %vm715, %v689, 0
        %v724 = vsel %vm715, %v691, 0
        %v726 = vsel %vm715, %v693, 0
        %vm728 = vcmask 1041408
        %v730 = vsel %vm728, %v712, 0
        %732 = vmatprep.subr.bf16.mxu0 0
        %733 = vmatpush1.bf16.msra.mxu0 0
        %734 = vmatprep.subr.bf16.mxu0 0
        %735 = vmatpush1.bf16.msra.mxu0 0
        %736 = vmatprep.subr.bf16.mxu0 0
        %737 = vmatpush1.bf16.msra.mxu0 0
        %738 = vmatprep.subr.bf16.mxu0 0
        %739 = vmatpush1.bf16.msra.mxu0 0
        %740 = vmatprep.subr.bf16.mxu0 0
        %741 = vmatpush1.bf16.msra.mxu0 0
        %742 = vmatprep.subr.bf16.mxu0 0
        %743 = vmatpush1.bf16.msra.mxu0 %v730
        %744 = vmatprep.subr.bf16.mxu0 0
        %745 = vmatpush1.bf16.msra.mxu0 %v711
        %746 = vmatprep.subr.bf16.mxu0 0
        %747 = vmatpush1.bf16.msra.mxu0 %v710
        %748 = vmatprep.subr.bf16.mxu0 0
        %749 = vmatpush2.bf16.msra.mxu0 0
        %750 = vmatprep.subr.bf16.mxu0 0
        %751 = vmatpush2.bf16.msra.mxu0 0
        %752 = vmatprep.subr.bf16.mxu0 0
        %753 = vmatpush2.bf16.msra.mxu0 0
        %754 = vmatprep.subr.bf16.mxu0 0
        %755 = vmatpush2.bf16.msra.mxu0 0
        %756 = vmatprep.subr.bf16.mxu0 0
        %757 = vmatpush2.bf16.msra.mxu0 0
        %758 = vmatprep.subr.bf16.mxu0 0
        %759 = vmatpush2.bf16.msra.mxu0 0
        %760 = vmatprep.subr.bf16.mxu0 0
        %761 = vmatpush2.bf16.msra.mxu0 0
        %762 = vmatprep.subr.bf16.mxu0 0
        %763 = vmatpush2.bf16.msra.mxu0 0
        %764 = vmatprep.mubr.bf16.mxu0 0
        %765 = vmatmul.mubr.bf16.gmra.mxu0 %v716
        %v766 = vpop.f32.mrf.mxu0
        %v767 = vadd.f32 %v698, %v766
        %v768 = vpop.f32.mrf.mxu0
        %v769 = vpop.f32.mrf.mxu0
        %v770 = vadd.f32 %v698, %v769
        %v771 = vpop.f32.mrf.mxu0
        %772 = vmatprep.mubr.bf16.mxu0 0
        %773 = vmatmul.mubr.bf16.gmra.mxu0 %v718
        %v774 = vpop.f32.mrf.mxu0
        %v775 = vadd.f32 %v698, %v774
        %v776 = vpop.f32.mrf.mxu0
        %v777 = vpop.f32.mrf.mxu0
        %v778 = vadd.f32 %v698, %v777
        %v779 = vpop.f32.mrf.mxu0
        %780 = vmatprep.mubr.bf16.mxu0 0
        %781 = vmatmul.mubr.bf16.gmra.mxu0 %v720
        %v782 = vpop.f32.mrf.mxu0
        %v783 = vadd.f32 %v698, %v782
        %v784 = vpop.f32.mrf.mxu0
        %v785 = vpop.f32.mrf.mxu0
        %v786 = vadd.f32 %v698, %v785
        %v787 = vpop.f32.mrf.mxu0
        %788 = vmatprep.mubr.bf16.mxu0 0
        %789 = vmatmul.mubr.bf16.gmra.mxu0 %v722
        %v790 = vpop.f32.mrf.mxu0
        %v791 = vadd.f32 %v698, %v790
        %v792 = vpop.f32.mrf.mxu0
        %v793 = vpop.f32.mrf.mxu0
        %v794 = vadd.f32 %v698, %v793
        %v795 = vpop.f32.mrf.mxu0
        %796 = vmatprep.mubr.bf16.mxu0 0
        %797 = vmatmul.mubr.bf16.gmra.mxu0 %v724
        %v798 = vpop.f32.mrf.mxu0
        %v799 = vadd.f32 %v698, %v798
        %v800 = vpop.f32.mrf.mxu0
        %v801 = vpop.f32.mrf.mxu0
        %v802 = vadd.f32 %v698, %v801
        %v803 = vpop.f32.mrf.mxu0
        %804 = vmatprep.mubr.bf16.mxu0 0
        %805 = vmatmul.mubr.bf16.gmra.mxu0 %v726
        %v806 = vpop.f32.mrf.mxu0
        %v807 = vadd.f32 %v698, %v806
        %v808 = vpop.f32.mrf.mxu0
        %v809 = vpop.f32.mrf.mxu0
        %v810 = vadd.f32 %v698, %v809
        %v811 = vpop.f32.mrf.mxu0
        %812 = vdwg.mxu0
        %813 = vst.msk [vmem:[#allocation2] sm:$0xff] %vm629, %v767
        %814 = vst.msk [vmem:[#allocation2 + $0x8] sm:$0xff] %vm629, %v770
        %815 = vst.msk [vmem:[#allocation2 + $0x10] sm:$0xff] %vm629, %v775
        %816 = vst.msk [vmem:[#allocation2 + $0x18] sm:$0xff] %vm629, %v778
        %817 = vst.msk [vmem:[#allocation2 + $0x20] sm:$0xff] %vm629, %v783
        %818 = vst.msk [vmem:[#allocation2 + $0x28] sm:$0xff] %vm629, %v786
        %819 = vst.msk [vmem:[#allocation2 + $0x30] sm:$0xff] %vm629, %v791
        %820 = vst.msk [vmem:[#allocation2 + $0x38] sm:$0xff] %vm629, %v794
        %821 = vst.msk [vmem:[#allocation2 + $0x40] sm:$0xff] %vm629, %v799
        %822 = vst.msk [vmem:[#allocation2 + $0x48] sm:$0xff] %vm629, %v802
        %823 = vst.msk [vmem:[#allocation2 + $0x50] sm:$0xff] %vm629, %v807
        %824 = vst.msk [vmem:[#allocation2 + $0x58] sm:$0xff] %vm629, %v810
        %v825 = vld [vmem:[%s222 + $0x30] sm:$0xf]
        %v826 = vld [vmem:[%s222 + $0x34] sm:$0xf]
        %v827 = vld [vmem:[%s222 + $0x38] sm:$0xf]
        %v828 = vld [vmem:[%s222 + $0x3c] sm:$0xf]
        %v829 = vld [vmem:[%s222 + $0x40] sm:$0xf]
        %v830 = vld [vmem:[%s222 + $0x44] sm:$0xf]
        %v831 = vld [vmem:[%s222 + $0x48] sm:$0xf]
        %v832 = vld [vmem:[%s222 + $0x4c] sm:$0xf]
        %v833 = vld [vmem:[%s222 + $0x50] sm:$0xf]
        %v834 = vld [vmem:[%s222 + $0x54] sm:$0xf]
        %v835 = vld [vmem:[%s222 + $0x58] sm:$0xf]
        %v836 = vld [vmem:[%s222 + $0x5c] sm:$0xf]
        %v837 = vld [vmem:[%s222 + $0x60] sm:$0x1]
        %v838 = vld [vmem:[%s222 + $0x30] sm:$0xe]
        %v839 = vld [vmem:[%s222 + $0x60] sm:$0xf]
        %v840 = vld [vmem:[%s222 + $0x64] sm:$0xf]
        %v841 = vld [vmem:[%s222 + $0x68] sm:$0xf]
        %v842 = vld [vmem:[%s222 + $0x6c] sm:$0x1]
        %v843 = vld [vmem:[%s222 + $0x3c] sm:$0xe]
        %v844 = vld [vmem:[%s222 + $0x6c] sm:$0xf]
        %v845 = vld [vmem:[%s222 + $0x70] sm:$0xf]
        %v846 = vld [vmem:[%s222 + $0x74] sm:$0xf]
        %v847 = vld [vmem:[%s222 + $0x78] sm:$0x1]
        %v848 = vld [vmem:[%s222 + $0x48] sm:$0xe]
        %v861 = vunpack.c.l.b16 %v825
        %v862 = vunpack.c.l.b16 %v826
        %v863 = vunpack.c.l.b16 %v827
        %v864 = vunpack.c.l.b16 %v828
        %v865 = vunpack.c.l.b16 %v829
        %v866 = vunpack.c.l.b16 %v830
        %v867 = vunpack.c.l.b16 %v831
        %v868 = vunpack.c.l.b16 %v832
        %v869 = vunpack.c.l.b16 %v833
        %v870 = vunpack.c.l.b16 %v834
        %v871 = vunpack.c.l.b16 %v835
        %v872 = vunpack.c.l.b16 %v836
        %v873 = vpack.c.b16 %v862, %v861
        %v874 = vpack.c.b16 %v864, %v863
        %v875 = vpack.c.b16 %v866, %v865
        %v876 = vpack.c.b16 %v868, %v867
        %v877 = vpack.c.b16 %v870, %v869
        %v878 = vpack.c.b16 %v872, %v871
        %v880 = vunpack.c.l.b16 %v837
        %v881 = vpack.c.b16 %v880, %v880
        %v883 = vshrl.u32 %v873, 16
        %v885 = vshll.u32 %v873, 16
        %v887 = vrot.slane %v885, 1
        %v888 = vor.u32 %v883, %v887
        %v890 = vshll.u32 %v874, 16
        %v892 = vrot.slane %v890, 1
        %v893 = vsel %vm287, %v888, %v892
        %v894 = vshrl.u32 %v874, 16
        %v896 = vor.u32 %v894, %v892
        %v898 = vshll.u32 %v875, 16
        %v900 = vrot.slane %v898, 1
        %v901 = vsel %vm287, %v896, %v900
        %v902 = vshrl.u32 %v875, 16
        %v904 = vor.u32 %v902, %v900
        %v906 = vshll.u32 %v876, 16
        %v908 = vrot.slane %v906, 1
        %v909 = vsel %vm287, %v904, %v908
        %v910 = vshrl.u32 %v876, 16
        %v912 = vor.u32 %v910, %v908
        %v914 = vshll.u32 %v877, 16
        %v916 = vrot.slane %v914, 1
        %v917 = vsel %vm287, %v912, %v916
        %v918 = vshrl.u32 %v877, 16
        %v920 = vor.u32 %v918, %v916
        %v922 = vshll.u32 %v878, 16
        %v924 = vrot.slane %v922, 1
        %v925 = vsel %vm287, %v920, %v924
        %v926 = vshrl.u32 %v878, 16
        %v928 = vor.u32 %v926, %v924
        %v930 = vshll.u32 %v881, 16
        %v932 = vrot.slane %v930, 1
        %v933 = vsel %vm287, %v928, %v932
        %934 = vrot.lane.b32.xlu0 %v893, 4
        %v935 = vpop.permute.xlu0 %934
        %936 = vrot.lane.b32.xlu0 %v901, 4
        %v937 = vpop.permute.xlu0 %936
        %938 = vrot.lane.b32.xlu0 %v909, 4
        %v939 = vpop.permute.xlu0 %938
        %940 = vrot.lane.b32.xlu0 %v917, 4
        %v941 = vpop.permute.xlu0 %940
        %942 = vrot.lane.b32.xlu0 %v925, 4
        %v943 = vpop.permute.xlu0 %942
        %944 = vrot.lane.b32.xlu0 %v933, 4
        %v945 = vpop.permute.xlu0 %944
        %v947 = vunpack.c.l.b16 %v838
        %v948 = vpack.c.b16 %v862, %v947
        %v949 = vrot.slane %v948, 1
        %v950 = vrot.slane %v874, 1
        %v951 = vsel %vm355, %v949, %v950
        %v952 = vrot.slane %v875, 1
        %v953 = vsel %vm355, %v950, %v952
        %v954 = vrot.slane %v876, 1
        %v955 = vsel %vm355, %v952, %v954
        %v956 = vrot.slane %v877, 1
        %v957 = vsel %vm355, %v954, %v956
        %v958 = vrot.slane %v878, 1
        %v959 = vsel %vm355, %v956, %v958
        %v960 = vrot.slane %v881, 1
        %v961 = vsel %vm355, %v958, %v960
        %962 = vrot.lane.b32.xlu0 %v951, 8
        %v963 = vpop.permute.xlu0 %962
        %964 = vrot.lane.b32.xlu0 %v953, 8
        %v965 = vpop.permute.xlu0 %964
        %966 = vrot.lane.b32.xlu0 %v955, 8
        %v967 = vpop.permute.xlu0 %966
        %968 = vrot.lane.b32.xlu0 %v957, 8
        %v969 = vpop.permute.xlu0 %968
        %970 = vrot.lane.b32.xlu0 %v959, 8
        %v971 = vpop.permute.xlu0 %970
        %972 = vrot.lane.b32.xlu0 %v961, 8
        %v973 = vpop.permute.xlu0 %972
        %v977 = vunpack.c.l.b16 %v839
        %v978 = vunpack.c.l.b16 %v840
        %v979 = vunpack.c.l.b16 %v841
        %v980 = vpack.c.b16 %v865, %v864
        %v981 = vpack.c.b16 %v867, %v866
        %v982 = vpack.c.b16 %v869, %v868
        %v983 = vpack.c.b16 %v871, %v870
        %v984 = vpack.c.b16 %v977, %v872
        %v985 = vpack.c.b16 %v979, %v978
        %986 = vrot.lane.b32.xlu0 %v980, 12
        %v987 = vpop.permute.xlu0 %986
        %988 = vrot.lane.b32.xlu0 %v981, 12
        %v989 = vpop.permute.xlu0 %988
        %990 = vrot.lane.b32.xlu0 %v982, 12
        %v991 = vpop.permute.xlu0 %990
        %992 = vrot.lane.b32.xlu0 %v983, 12
        %v993 = vpop.permute.xlu0 %992
        %994 = vrot.lane.b32.xlu0 %v984, 12
        %v995 = vpop.permute.xlu0 %994
        %996 = vrot.lane.b32.xlu0 %v985, 12
        %v997 = vpop.permute.xlu0 %996
        %v999 = vunpack.c.l.b16 %v842
        %v1000 = vpack.c.b16 %v999, %v999
        %v1002 = vshrl.u32 %v980, 16
        %v1004 = vshll.u32 %v980, 16
        %v1006 = vrot.slane %v1004, 1
        %v1007 = vor.u32 %v1002, %v1006
        %v1009 = vshll.u32 %v981, 16
        %v1011 = vrot.slane %v1009, 1
        %v1012 = vsel %vm287, %v1007, %v1011
        %v1013 = vshrl.u32 %v981, 16
        %v1015 = vor.u32 %v1013, %v1011
        %v1017 = vshll.u32 %v982, 16
        %v1019 = vrot.slane %v1017, 1
        %v1020 = vsel %vm287, %v1015, %v1019
        %v1021 = vshrl.u32 %v982, 16
        %v1023 = vor.u32 %v1021, %v1019
        %v1025 = vshll.u32 %v983, 16
        %v1027 = vrot.slane %v1025, 1
        %v1028 = vsel %vm287, %v1023, %v1027
        %v1029 = vshrl.u32 %v983, 16
        %v1031 = vor.u32 %v1029, %v1027
        %v1033 = vshll.u32 %v984, 16
        %v1035 = vrot.slane %v1033, 1
        %v1036 = vsel %vm287, %v1031, %v1035
        %v1037 = vshrl.u32 %v984, 16
        %v1039 = vor.u32 %v1037, %v1035
        %v1041 = vshll.u32 %v985, 16
        %v1043 = vrot.slane %v1041, 1
        %v1044 = vsel %vm287, %v1039, %v1043
        %v1045 = vshrl.u32 %v985, 16
        %v1047 = vor.u32 %v1045, %v1043
        %v1049 = vshll.u32 %v1000, 16
        %v1051 = vrot.slane %v1049, 1
        %v1052 = vsel %vm287, %v1047, %v1051
        %1053 = vrot.lane.b32.xlu0 %v1012, 16
        %v1054 = vpop.permute.xlu0 %1053
        %1055 = vrot.lane.b32.xlu0 %v1020, 16
        %v1056 = vpop.permute.xlu0 %1055
        %1057 = vrot.lane.b32.xlu0 %v1028, 16
        %v1058 = vpop.permute.xlu0 %1057
        %1059 = vrot.lane.b32.xlu0 %v1036, 16
        %v1060 = vpop.permute.xlu0 %1059
        %1061 = vrot.lane.b32.xlu0 %v1044, 16
        %v1062 = vpop.permute.xlu0 %1061
        %1063 = vrot.lane.b32.xlu0 %v1052, 16
        %v1064 = vpop.permute.xlu0 %1063
        %v1066 = vunpack.c.l.b16 %v843
        %v1067 = vpack.c.b16 %v865, %v1066
        %v1068 = vrot.slane %v1067, 1
        %v1069 = vrot.slane %v981, 1
        %v1070 = vsel %vm355, %v1068, %v1069
        %v1071 = vrot.slane %v982, 1
        %v1072 = vsel %vm355, %v1069, %v1071
        %v1073 = vrot.slane %v983, 1
        %v1074 = vsel %vm355, %v1071, %v1073
        %v1075 = vrot.slane %v984, 1
        %v1076 = vsel %vm355, %v1073, %v1075
        %v1077 = vrot.slane %v985, 1
        %v1078 = vsel %vm355, %v1075, %v1077
        %v1079 = vrot.slane %v1000, 1
        %v1080 = vsel %vm355, %v1077, %v1079
        %1081 = vrot.lane.b32.xlu0 %v1070, 20
        %v1082 = vpop.permute.xlu0 %1081
        %1083 = vrot.lane.b32.xlu0 %v1072, 20
        %v1084 = vpop.permute.xlu0 %1083
        %1085 = vrot.lane.b32.xlu0 %v1074, 20
        %v1086 = vpop.permute.xlu0 %1085
        %1087 = vrot.lane.b32.xlu0 %v1076, 20
        %v1088 = vpop.permute.xlu0 %1087
        %1089 = vrot.lane.b32.xlu0 %v1078, 20
        %v1090 = vpop.permute.xlu0 %1089
        %1091 = vrot.lane.b32.xlu0 %v1080, 20
        %v1092 = vpop.permute.xlu0 %1091
        %v1096 = vunpack.c.l.b16 %v844
        %v1097 = vunpack.c.l.b16 %v845
        %v1098 = vunpack.c.l.b16 %v846
        %v1099 = vpack.c.b16 %v978, %v977
        %v1100 = vpack.c.b16 %v1096, %v979
        %v1101 = vpack.c.b16 %v1098, %v1097
        %1102 = vrot.lane.b32.xlu0 %v876, 24
        %v1103 = vpop.permute.xlu0 %1102
        %1104 = vrot.lane.b32.xlu0 %v877, 24
        %v1105 = vpop.permute.xlu0 %1104
        %1106 = vrot.lane.b32.xlu0 %v878, 24
        %v1107 = vpop.permute.xlu0 %1106
        %1108 = vrot.lane.b32.xlu0 %v1099, 24
        %v1109 = vpop.permute.xlu0 %1108
        %1110 = vrot.lane.b32.xlu0 %v1100, 24
        %v1111 = vpop.permute.xlu0 %1110
        %1112 = vrot.lane.b32.xlu0 %v1101, 24
        %v1113 = vpop.permute.xlu0 %1112
        %v1115 = vunpack.c.l.b16 %v847
        %v1116 = vpack.c.b16 %v1115, %v1115
        %v1118 = vshll.u32 %v1099, 16
        %v1120 = vrot.slane %v1118, 1
        %v1121 = vsel %vm287, %v928, %v1120
        %v1122 = vshrl.u32 %v1099, 16
        %v1124 = vor.u32 %v1122, %v1120
        %v1126 = vshll.u32 %v1100, 16
        %v1128 = vrot.slane %v1126, 1
        %v1129 = vsel %vm287, %v1124, %v1128
        %v1130 = vshrl.u32 %v1100, 16
        %v1132 = vor.u32 %v1130, %v1128
        %v1134 = vshll.u32 %v1101, 16
        %v1136 = vrot.slane %v1134, 1
        %v1137 = vsel %vm287, %v1132, %v1136
        %v1138 = vshrl.u32 %v1101, 16
        %v1140 = vor.u32 %v1138, %v1136
        %v1142 = vshll.u32 %v1116, 16
        %v1144 = vrot.slane %v1142, 1
        %v1145 = vsel %vm287, %v1140, %v1144
        %1146 = vrot.lane.b32.xlu0 %v917, 28
        %v1147 = vpop.permute.xlu0 %1146
        %1148 = vrot.lane.b32.xlu0 %v925, 28
        %v1149 = vpop.permute.xlu0 %1148
        %1150 = vrot.lane.b32.xlu0 %v1121, 28
        %v1151 = vpop.permute.xlu0 %1150
        %1152 = vrot.lane.b32.xlu0 %v1129, 28
        %v1153 = vpop.permute.xlu0 %1152
        %1154 = vrot.lane.b32.xlu0 %v1137, 28
        %v1155 = vpop.permute.xlu0 %1154
        %1156 = vrot.lane.b32.xlu0 %v1145, 28
        %v1157 = vpop.permute.xlu0 %1156
        %v1159 = vunpack.c.l.b16 %v848
        %v1160 = vpack.c.b16 %v868, %v1159
        %v1161 = vrot.slane %v1160, 1
        %v1162 = vsel %vm355, %v1161, %v956
        %v1163 = vrot.slane %v1099, 1
        %v1164 = vsel %vm355, %v958, %v1163
        %v1165 = vrot.slane %v1100, 1
        %v1166 = vsel %vm355, %v1163, %v1165
        %v1167 = vrot.slane %v1101, 1
        %v1168 = vsel %vm355, %v1165, %v1167
        %v1169 = vrot.slane %v1116, 1
        %v1170 = vsel %vm355, %v1167, %v1169
        %1171 = vrot.lane.b32.xlu0 %v1162, 32
        %v1172 = vpop.permute.xlu0 %1171
        %1173 = vrot.lane.b32.xlu0 %v959, 32
        %v1174 = vpop.permute.xlu0 %1173
        %1175 = vrot.lane.b32.xlu0 %v1164, 32
        %v1176 = vpop.permute.xlu0 %1175
        %1177 = vrot.lane.b32.xlu0 %v1166, 32
        %v1178 = vpop.permute.xlu0 %1177
        %1179 = vrot.lane.b32.xlu0 %v1168, 32
        %v1180 = vpop.permute.xlu0 %1179
        %1181 = vrot.lane.b32.xlu0 %v1170, 32
        %v1182 = vpop.permute.xlu0 %1181
        %v1184 = vsel %vm590, %v873, %v935
        %v1186 = vsel %vm590, %v874, %v937
        %v1188 = vsel %vm590, %v875, %v939
        %v1190 = vsel %vm590, %v876, %v941
        %v1192 = vsel %vm590, %v877, %v943
        %v1194 = vsel %vm590, %v878, %v945
        %v1196 = vsel %vm603, %v1184, %v963
        %v1198 = vsel %vm603, %v1186, %v965
        %v1200 = vsel %vm603, %v1188, %v967
        %v1202 = vsel %vm603, %v1190, %v969
        %v1204 = vsel %vm603, %v1192, %v971
        %v1206 = vsel %vm603, %v1194, %v973
        %v1208 = vsel %vm616, %v1196, %v987
        %v1210 = vsel %vm616, %v1198, %v989
        %v1212 = vsel %vm616, %v1200, %v991
        %v1214 = vsel %vm616, %v1202, %v993
        %v1216 = vsel %vm616, %v1204, %v995
        %v1218 = vsel %vm616, %v1206, %v997
        %v1220 = vsel %vm629, %v1208, %v1054
        %v1222 = vsel %vm629, %v1210, %v1056
        %v1224 = vsel %vm629, %v1212, %v1058
        %v1226 = vsel %vm629, %v1214, %v1060
        %v1228 = vsel %vm629, %v1216, %v1062
        %v1230 = vsel %vm629, %v1218, %v1064
        %v1232 = vsel %vm642, %v1220, %v1082
        %v1234 = vsel %vm642, %v1222, %v1084
        %v1236 = vsel %vm642, %v1224, %v1086
        %v1238 = vsel %vm642, %v1226, %v1088
        %v1240 = vsel %vm642, %v1228, %v1090
        %v1242 = vsel %vm642, %v1230, %v1092
        %v1244 = vsel %vm655, %v1232, %v1103
        %v1246 = vsel %vm655, %v1234, %v1105
        %v1248 = vsel %vm655, %v1236, %v1107
        %v1250 = vsel %vm655, %v1238, %v1109
        %v1252 = vsel %vm655, %v1240, %v1111
        %v1254 = vsel %vm655, %v1242, %v1113
        %v1256 = vsel %vm668, %v1244, %v1147
        %v1258 = vsel %vm668, %v1246, %v1149
        %v1260 = vsel %vm668, %v1248, %v1151
        %v1262 = vsel %vm668, %v1250, %v1153
        %v1264 = vsel %vm668, %v1252, %v1155
        %v1266 = vsel %vm668, %v1254, %v1157
        %v1268 = vsel %vm681, %v1256, %v1172
        %v1270 = vsel %vm681, %v1258, %v1174
        %v1272 = vsel %vm681, %v1260, %v1176
        %v1274 = vsel %vm681, %v1262, %v1178
        %v1276 = vsel %vm681, %v1264, %v1180
        %v1278 = vsel %vm681, %v1266, %v1182
        %v1279 = vsel %vm715, %v1268, 0
        %v1281 = vsel %vm715, %v1270, 0
        %v1283 = vsel %vm715, %v1272, 0
        %v1285 = vsel %vm715, %v1274, 0
        %v1287 = vsel %vm715, %v1276, 0
        %v1289 = vsel %vm715, %v1278, 0
        %1291 = vmatprep.subr.bf16.mxu0 0
        %1292 = vmatpush1.bf16.msra.mxu0 0
        %1293 = vmatprep.subr.bf16.mxu0 0
        %1294 = vmatpush1.bf16.msra.mxu0 0
        %1295 = vmatprep.subr.bf16.mxu0 0
        %1296 = vmatpush1.bf16.msra.mxu0 0
        %1297 = vmatprep.subr.bf16.mxu0 0
        %1298 = vmatpush1.bf16.msra.mxu0 0
        %1299 = vmatprep.subr.bf16.mxu0 0
        %1300 = vmatpush1.bf16.msra.mxu0 0
        %1301 = vmatprep.subr.bf16.mxu0 0
        %1302 = vmatpush1.bf16.msra.mxu0 %v730
        %1303 = vmatprep.subr.bf16.mxu0 0
        %1304 = vmatpush1.bf16.msra.mxu0 %v711
        %1305 = vmatprep.subr.bf16.mxu0 0
        %1306 = vmatpush1.bf16.msra.mxu0 %v710
        %1307 = vmatprep.subr.bf16.mxu0 0
        %1308 = vmatpush2.bf16.msra.mxu0 0
        %1309 = vmatprep.subr.bf16.mxu0 0
        %1310 = vmatpush2.bf16.msra.mxu0 0
        %1311 = vmatprep.subr.bf16.mxu0 0
        %1312 = vmatpush2.bf16.msra.mxu0 0
        %1313 = vmatprep.subr.bf16.mxu0 0
        %1314 = vmatpush2.bf16.msra.mxu0 0
        %1315 = vmatprep.subr.bf16.mxu0 0
        %1316 = vmatpush2.bf16.msra.mxu0 0
        %1317 = vmatprep.subr.bf16.mxu0 0
        %1318 = vmatpush2.bf16.msra.mxu0 0
        %1319 = vmatprep.subr.bf16.mxu0 0
        %1320 = vmatpush2.bf16.msra.mxu0 0
        %1321 = vmatprep.subr.bf16.mxu0 0
        %1322 = vmatpush2.bf16.msra.mxu0 0
        %1323 = vmatprep.mubr.bf16.mxu0 0
        %1324 = vmatmul.mubr.bf16.gmra.mxu0 %v1279
        %v1325 = vpop.f32.mrf.mxu0
        %v1326 = vadd.f32 %v698, %v1325
        %v1327 = vpop.f32.mrf.mxu0
        %v1328 = vpop.f32.mrf.mxu0
        %v1329 = vadd.f32 %v698, %v1328
        %v1330 = vpop.f32.mrf.mxu0
        %1331 = vmatprep.mubr.bf16.mxu0 0
        %1332 = vmatmul.mubr.bf16.gmra.mxu0 %v1281
        %v1333 = vpop.f32.mrf.mxu0
        %v1334 = vadd.f32 %v698, %v1333
        %v1335 = vpop.f32.mrf.mxu0
        %v1336 = vpop.f32.mrf.mxu0
        %v1337 = vadd.f32 %v698, %v1336
        %v1338 = vpop.f32.mrf.mxu0
        %1339 = vmatprep.mubr.bf16.mxu0 0
        %1340 = vmatmul.mubr.bf16.gmra.mxu0 %v1283
        %v1341 = vpop.f32.mrf.mxu0
        %v1342 = vadd.f32 %v698, %v1341
        %v1343 = vpop.f32.mrf.mxu0
        %v1344 = vpop.f32.mrf.mxu0
        %v1345 = vadd.f32 %v698, %v1344
        %v1346 = vpop.f32.mrf.mxu0
        %1347 = vmatprep.mubr.bf16.mxu0 0
        %1348 = vmatmul.mubr.bf16.gmra.mxu0 %v1285
        %v1349 = vpop.f32.mrf.mxu0
        %v1350 = vadd.f32 %v698, %v1349
        %v1351 = vpop.f32.mrf.mxu0
        %v1352 = vpop.f32.mrf.mxu0
        %v1353 = vadd.f32 %v698, %v1352
        %v1354 = vpop.f32.mrf.mxu0
        %1355 = vmatprep.mubr.bf16.mxu0 0
        %1356 = vmatmul.mubr.bf16.gmra.mxu0 %v1287
        %v1357 = vpop.f32.mrf.mxu0
        %v1358 = vadd.f32 %v698, %v1357
        %v1359 = vpop.f32.mrf.mxu0
        %v1360 = vpop.f32.mrf.mxu0
        %v1361 = vadd.f32 %v698, %v1360
        %v1362 = vpop.f32.mrf.mxu0
        %1363 = vmatprep.mubr.bf16.mxu0 0
        %1364 = vmatmul.mubr.bf16.gmra.mxu0 %v1289
        %v1365 = vpop.f32.mrf.mxu0
        %v1366 = vadd.f32 %v698, %v1365
        %v1367 = vpop.f32.mrf.mxu0
        %v1368 = vpop.f32.mrf.mxu0
        %v1369 = vadd.f32 %v698, %v1368
        %v1370 = vpop.f32.mrf.mxu0
        %1371 = vdwg.mxu0
        %1372 = vst.msk [vmem:[#allocation2 + $0x60] sm:$0xff] %vm629, %v1326
        %1373 = vst.msk [vmem:[#allocation2 + $0x68] sm:$0xff] %vm629, %v1329
        %1374 = vst.msk [vmem:[#allocation2 + $0x70] sm:$0xff] %vm629, %v1334
        %1375 = vst.msk [vmem:[#allocation2 + $0x78] sm:$0xff] %vm629, %v1337
        %1376 = vst.msk [vmem:[#allocation2 + $0x80] sm:$0xff] %vm629, %v1342
        %1377 = vst.msk [vmem:[#allocation2 + $0x88] sm:$0xff] %vm629, %v1345
        %1378 = vst.msk [vmem:[#allocation2 + $0x90] sm:$0xff] %vm629, %v1350
        %1379 = vst.msk [vmem:[#allocation2 + $0x98] sm:$0xff] %vm629, %v1353
        %1380 = vst.msk [vmem:[#allocation2 + $0xa0] sm:$0xff] %vm629, %v1358
        %1381 = vst.msk [vmem:[#allocation2 + $0xa8] sm:$0xff] %vm629, %v1361
        %1382 = vst.msk [vmem:[#allocation2 + $0xb0] sm:$0xff] %vm629, %v1366
        %1383 = vst.msk [vmem:[#allocation2 + $0xb8] sm:$0xff] %vm629, %v1369
        %v1384 = vld [vmem:[%s222 + $0x60] sm:$0xf]
        %v1385 = vld [vmem:[%s222 + $0x64] sm:$0xf]
        %v1386 = vld [vmem:[%s222 + $0x68] sm:$0xf]
        %v1387 = vld [vmem:[%s222 + $0x6c] sm:$0xf]
        %v1388 = vld [vmem:[%s222 + $0x70] sm:$0xf]
        %v1389 = vld [vmem:[%s222 + $0x74] sm:$0xf]
        %v1390 = vld [vmem:[%s222 + $0x78] sm:$0xf]
        %v1391 = vld [vmem:[%s222 + $0x7c] sm:$0xf]
        %v1392 = vld [vmem:[%s222 + $0x80] sm:$0xf]
        %v1393 = vld [vmem:[%s222 + $0x84] sm:$0xf]
        %v1394 = vld [vmem:[%s222 + $0x88] sm:$0xf]
        %v1395 = vld [vmem:[%s222 + $0x8c] sm:$0xf]
        %v1396 = vld [vmem:[%s222 + $0x90] sm:$0x1]
        %v1397 = vld [vmem:[%s222 + $0x60] sm:$0xe]
        %v1398 = vld [vmem:[%s222 + $0x90] sm:$0xf]
        %v1399 = vld [vmem:[%s222 + $0x94] sm:$0xf]
        %v1400 = vld [vmem:[%s222 + $0x98] sm:$0xf]
        %v1401 = vld [vmem:[%s222 + $0x9c] sm:$0x1]
        %v1402 = vld [vmem:[%s222 + $0x6c] sm:$0xe]
        %v1403 = vld [vmem:[%s222 + $0x9c] sm:$0xf]
        %v1404 = vld [vmem:[%s222 + $0xa0] sm:$0xf]
        %v1405 = vld [vmem:[%s222 + $0xa4] sm:$0xf]
        %v1406 = vld [vmem:[%s222 + $0xa8] sm:$0x1]
        %v1407 = vld [vmem:[%s222 + $0x78] sm:$0xe]
        %v1420 = vunpack.c.l.b16 %v1384
        %v1421 = vunpack.c.l.b16 %v1385
        %v1422 = vunpack.c.l.b16 %v1386
        %v1423 = vunpack.c.l.b16 %v1387
        %v1424 = vunpack.c.l.b16 %v1388
        %v1425 = vunpack.c.l.b16 %v1389
        %v1426 = vunpack.c.l.b16 %v1390
        %v1427 = vunpack.c.l.b16 %v1391
        %v1428 = vunpack.c.l.b16 %v1392
        %v1429 = vunpack.c.l.b16 %v1393
        %v1430 = vunpack.c.l.b16 %v1394
        %v1431 = vunpack.c.l.b16 %v1395
        %v1432 = vpack.c.b16 %v1421, %v1420
        %v1433 = vpack.c.b16 %v1423, %v1422
        %v1434 = vpack.c.b16 %v1425, %v1424
        %v1435 = vpack.c.b16 %v1427, %v1426
        %v1436 = vpack.c.b16 %v1429, %v1428
        %v1437 = vpack.c.b16 %v1431, %v1430
        %v1439 = vunpack.c.l.b16 %v1396
        %v1440 = vpack.c.b16 %v1439, %v1439
        %v1442 = vshrl.u32 %v1432, 16
        %v1444 = vshll.u32 %v1432, 16
        %v1446 = vrot.slane %v1444, 1
        %v1447 = vor.u32 %v1442, %v1446
        %v1449 = vshll.u32 %v1433, 16
        %v1451 = vrot.slane %v1449, 1
        %v1452 = vsel %vm287, %v1447, %v1451
        %v1453 = vshrl.u32 %v1433, 16
        %v1455 = vor.u32 %v1453, %v1451
        %v1457 = vshll.u32 %v1434, 16
        %v1459 = vrot.slane %v1457, 1
        %v1460 = vsel %vm287, %v1455, %v1459
        %v1461 = vshrl.u32 %v1434, 16
        %v1463 = vor.u32 %v1461, %v1459
        %v1465 = vshll.u32 %v1435, 16
        %v1467 = vrot.slane %v1465, 1
        %v1468 = vsel %vm287, %v1463, %v1467
        %v1469 = vshrl.u32 %v1435, 16
        %v1471 = vor.u32 %v1469, %v1467
        %v1473 = vshll.u32 %v1436, 16
        %v1475 = vrot.slane %v1473, 1
        %v1476 = vsel %vm287, %v1471, %v1475
        %v1477 = vshrl.u32 %v1436, 16
        %v1479 = vor.u32 %v1477, %v1475
        %v1481 = vshll.u32 %v1437, 16
        %v1483 = vrot.slane %v1481, 1
        %v1484 = vsel %vm287, %v1479, %v1483
        %v1485 = vshrl.u32 %v1437, 16
        %v1487 = vor.u32 %v1485, %v1483
        %v1489 = vshll.u32 %v1440, 16
        %v1491 = vrot.slane %v1489, 1
        %v1492 = vsel %vm287, %v1487, %v1491
        %1493 = vrot.lane.b32.xlu0 %v1452, 4
        %v1494 = vpop.permute.xlu0 %1493
        %1495 = vrot.lane.b32.xlu0 %v1460, 4
        %v1496 = vpop.permute.xlu0 %1495
        %1497 = vrot.lane.b32.xlu0 %v1468, 4
        %v1498 = vpop.permute.xlu0 %1497
        %1499 = vrot.lane.b32.xlu0 %v1476, 4
        %v1500 = vpop.permute.xlu0 %1499
        %1501 = vrot.lane.b32.xlu0 %v1484, 4
        %v1502 = vpop.permute.xlu0 %1501
        %1503 = vrot.lane.b32.xlu0 %v1492, 4
        %v1504 = vpop.permute.xlu0 %1503
        %v1506 = vunpack.c.l.b16 %v1397
        %v1507 = vpack.c.b16 %v1421, %v1506
        %v1508 = vrot.slane %v1507, 1
        %v1509 = vrot.slane %v1433, 1
        %v1510 = vsel %vm355, %v1508, %v1509
        %v1511 = vrot.slane %v1434, 1
        %v1512 = vsel %vm355, %v1509, %v1511
        %v1513 = vrot.slane %v1435, 1
        %v1514 = vsel %vm355, %v1511, %v1513
        %v1515 = vrot.slane %v1436, 1
        %v1516 = vsel %vm355, %v1513, %v1515
        %v1517 = vrot.slane %v1437, 1
        %v1518 = vsel %vm355, %v1515, %v1517
        %v1519 = vrot.slane %v1440, 1
        %v1520 = vsel %vm355, %v1517, %v1519
        %1521 = vrot.lane.b32.xlu0 %v1510, 8
        %v1522 = vpop.permute.xlu0 %1521
        %1523 = vrot.lane.b32.xlu0 %v1512, 8
        %v1524 = vpop.permute.xlu0 %1523
        %1525 = vrot.lane.b32.xlu0 %v1514, 8
        %v1526 = vpop.permute.xlu0 %1525
        %1527 = vrot.lane.b32.xlu0 %v1516, 8
        %v1528 = vpop.permute.xlu0 %1527
        %1529 = vrot.lane.b32.xlu0 %v1518, 8
        %v1530 = vpop.permute.xlu0 %1529
        %1531 = vrot.lane.b32.xlu0 %v1520, 8
        %v1532 = vpop.permute.xlu0 %1531
        %v1536 = vunpack.c.l.b16 %v1398
        %v1537 = vunpack.c.l.b16 %v1399
        %v1538 = vunpack.c.l.b16 %v1400
        %v1539 = vpack.c.b16 %v1424, %v1423
        %v1540 = vpack.c.b16 %v1426, %v1425
        %v1541 = vpack.c.b16 %v1428, %v1427
        %v1542 = vpack.c.b16 %v1430, %v1429
        %v1543 = vpack.c.b16 %v1536, %v1431
        %v1544 = vpack.c.b16 %v1538, %v1537
        %1545 = vrot.lane.b32.xlu0 %v1539, 12
        %v1546 = vpop.permute.xlu0 %1545
        %1547 = vrot.lane.b32.xlu0 %v1540, 12
        %v1548 = vpop.permute.xlu0 %1547
        %1549 = vrot.lane.b32.xlu0 %v1541, 12
        %v1550 = vpop.permute.xlu0 %1549
        %1551 = vrot.lane.b32.xlu0 %v1542, 12
        %v1552 = vpop.permute.xlu0 %1551
        %1553 = vrot.lane.b32.xlu0 %v1543, 12
        %v1554 = vpop.permute.xlu0 %1553
        %1555 = vrot.lane.b32.xlu0 %v1544, 12
        %v1556 = vpop.permute.xlu0 %1555
        %v1558 = vunpack.c.l.b16 %v1401
        %v1559 = vpack.c.b16 %v1558, %v1558
        %v1561 = vshrl.u32 %v1539, 16
        %v1563 = vshll.u32 %v1539, 16
        %v1565 = vrot.slane %v1563, 1
        %v1566 = vor.u32 %v1561, %v1565
        %v1568 = vshll.u32 %v1540, 16
        %v1570 = vrot.slane %v1568, 1
        %v1571 = vsel %vm287, %v1566, %v1570
        %v1572 = vshrl.u32 %v1540, 16
        %v1574 = vor.u32 %v1572, %v1570
        %v1576 = vshll.u32 %v1541, 16
        %v1578 = vrot.slane %v1576, 1
        %v1579 = vsel %vm287, %v1574, %v1578
        %v1580 = vshrl.u32 %v1541, 16
        %v1582 = vor.u32 %v1580, %v1578
        %v1584 = vshll.u32 %v1542, 16
        %v1586 = vrot.slane %v1584, 1
        %v1587 = vsel %vm287, %v1582, %v1586
        %v1588 = vshrl.u32 %v1542, 16
        %v1590 = vor.u32 %v1588, %v1586
        %v1592 = vshll.u32 %v1543, 16
        %v1594 = vrot.slane %v1592, 1
        %v1595 = vsel %vm287, %v1590, %v1594
        %v1596 = vshrl.u32 %v1543, 16
        %v1598 = vor.u32 %v1596, %v1594
        %v1600 = vshll.u32 %v1544, 16
        %v1602 = vrot.slane %v1600, 1
        %v1603 = vsel %vm287, %v1598, %v1602
        %v1604 = vshrl.u32 %v1544, 16
        %v1606 = vor.u32 %v1604, %v1602
        %v1608 = vshll.u32 %v1559, 16
        %v1610 = vrot.slane %v1608, 1
        %v1611 = vsel %vm287, %v1606, %v1610
        %1612 = vrot.lane.b32.xlu0 %v1571, 16
        %v1613 = vpop.permute.xlu0 %1612
        %1614 = vrot.lane.b32.xlu0 %v1579, 16
        %v1615 = vpop.permute.xlu0 %1614
        %1616 = vrot.lane.b32.xlu0 %v1587, 16
        %v1617 = vpop.permute.xlu0 %1616
        %1618 = vrot.lane.b32.xlu0 %v1595, 16
        %v1619 = vpop.permute.xlu0 %1618
        %1620 = vrot.lane.b32.xlu0 %v1603, 16
        %v1621 = vpop.permute.xlu0 %1620
        %1622 = vrot.lane.b32.xlu0 %v1611, 16
        %v1623 = vpop.permute.xlu0 %1622
        %v1625 = vunpack.c.l.b16 %v1402
        %v1626 = vpack.c.b16 %v1424, %v1625
        %v1627 = vrot.slane %v1626, 1
        %v1628 = vrot.slane %v1540, 1
        %v1629 = vsel %vm355, %v1627, %v1628
        %v1630 = vrot.slane %v1541, 1
        %v1631 = vsel %vm355, %v1628, %v1630
        %v1632 = vrot.slane %v1542, 1
        %v1633 = vsel %vm355, %v1630, %v1632
        %v1634 = vrot.slane %v1543, 1
        %v1635 = vsel %vm355, %v1632, %v1634
        %v1636 = vrot.slane %v1544, 1
        %v1637 = vsel %vm355, %v1634, %v1636
        %v1638 = vrot.slane %v1559, 1
        %v1639 = vsel %vm355, %v1636, %v1638
        %1640 = vrot.lane.b32.xlu0 %v1629, 20
        %v1641 = vpop.permute.xlu0 %1640
        %1642 = vrot.lane.b32.xlu0 %v1631, 20
        %v1643 = vpop.permute.xlu0 %1642
        %1644 = vrot.lane.b32.xlu0 %v1633, 20
        %v1645 = vpop.permute.xlu0 %1644
        %1646 = vrot.lane.b32.xlu0 %v1635, 20
        %v1647 = vpop.permute.xlu0 %1646
        %1648 = vrot.lane.b32.xlu0 %v1637, 20
        %v1649 = vpop.permute.xlu0 %1648
        %1650 = vrot.lane.b32.xlu0 %v1639, 20
        %v1651 = vpop.permute.xlu0 %1650
        %v1655 = vunpack.c.l.b16 %v1403
        %v1656 = vunpack.c.l.b16 %v1404
        %v1657 = vunpack.c.l.b16 %v1405
        %v1658 = vpack.c.b16 %v1537, %v1536
        %v1659 = vpack.c.b16 %v1655, %v1538
        %v1660 = vpack.c.b16 %v1657, %v1656
        %1661 = vrot.lane.b32.xlu0 %v1435, 24
        %v1662 = vpop.permute.xlu0 %1661
        %1663 = vrot.lane.b32.xlu0 %v1436, 24
        %v1664 = vpop.permute.xlu0 %1663
        %1665 = vrot.lane.b32.xlu0 %v1437, 24
        %v1666 = vpop.permute.xlu0 %1665
        %1667 = vrot.lane.b32.xlu0 %v1658, 24
        %v1668 = vpop.permute.xlu0 %1667
        %1669 = vrot.lane.b32.xlu0 %v1659, 24
        %v1670 = vpop.permute.xlu0 %1669
        %1671 = vrot.lane.b32.xlu0 %v1660, 24
        %v1672 = vpop.permute.xlu0 %1671
        %v1674 = vunpack.c.l.b16 %v1406
        %v1675 = vpack.c.b16 %v1674, %v1674
        %v1677 = vshll.u32 %v1658, 16
        %v1679 = vrot.slane %v1677, 1
        %v1680 = vsel %vm287, %v1487, %v1679
        %v1681 = vshrl.u32 %v1658, 16
        %v1683 = vor.u32 %v1681, %v1679
        %v1685 = vshll.u32 %v1659, 16
        %v1687 = vrot.slane %v1685, 1
        %v1688 = vsel %vm287, %v1683, %v1687
        %v1689 = vshrl.u32 %v1659, 16
        %v1691 = vor.u32 %v1689, %v1687
        %v1693 = vshll.u32 %v1660, 16
        %v1695 = vrot.slane %v1693, 1
        %v1696 = vsel %vm287, %v1691, %v1695
        %v1697 = vshrl.u32 %v1660, 16
        %v1699 = vor.u32 %v1697, %v1695
        %v1701 = vshll.u32 %v1675, 16
        %v1703 = vrot.slane %v1701, 1
        %v1704 = vsel %vm287, %v1699, %v1703
        %1705 = vrot.lane.b32.xlu0 %v1476, 28
        %v1706 = vpop.permute.xlu0 %1705
        %1707 = vrot.lane.b32.xlu0 %v1484, 28
        %v1708 = vpop.permute.xlu0 %1707
        %1709 = vrot.lane.b32.xlu0 %v1680, 28
        %v1710 = vpop.permute.xlu0 %1709
        %1711 = vrot.lane.b32.xlu0 %v1688, 28
        %v1712 = vpop.permute.xlu0 %1711
        %1713 = vrot.lane.b32.xlu0 %v1696, 28
        %v1714 = vpop.permute.xlu0 %1713
        %1715 = vrot.lane.b32.xlu0 %v1704, 28
        %v1716 = vpop.permute.xlu0 %1715
        %v1718 = vunpack.c.l.b16 %v1407
        %v1719 = vpack.c.b16 %v1427, %v1718
        %v1720 = vrot.slane %v1719, 1
        %v1721 = vsel %vm355, %v1720, %v1515
        %v1722 = vrot.slane %v1658, 1
        %v1723 = vsel %vm355, %v1517, %v1722
        %v1724 = vrot.slane %v1659, 1
        %v1725 = vsel %vm355, %v1722, %v1724
        %v1726 = vrot.slane %v1660, 1
        %v1727 = vsel %vm355, %v1724, %v1726
        %v1728 = vrot.slane %v1675, 1
        %v1729 = vsel %vm355, %v1726, %v1728
        %1730 = vrot.lane.b32.xlu0 %v1721, 32
        %v1731 = vpop.permute.xlu0 %1730
        %1732 = vrot.lane.b32.xlu0 %v1518, 32
        %v1733 = vpop.permute.xlu0 %1732
        %1734 = vrot.lane.b32.xlu0 %v1723, 32
        %v1735 = vpop.permute.xlu0 %1734
        %1736 = vrot.lane.b32.xlu0 %v1725, 32
        %v1737 = vpop.permute.xlu0 %1736
        %1738 = vrot.lane.b32.xlu0 %v1727, 32
        %v1739 = vpop.permute.xlu0 %1738
        %1740 = vrot.lane.b32.xlu0 %v1729, 32
        %v1741 = vpop.permute.xlu0 %1740
        %v1743 = vsel %vm590, %v1432, %v1494
        %v1745 = vsel %vm590, %v1433, %v1496
        %v1747 = vsel %vm590, %v1434, %v1498
        %v1749 = vsel %vm590, %v1435, %v1500
        %v1751 = vsel %vm590, %v1436, %v1502
        %v1753 = vsel %vm590, %v1437, %v1504
        %v1755 = vsel %vm603, %v1743, %v1522
        %v1757 = vsel %vm603, %v1745, %v1524
        %v1759 = vsel %vm603, %v1747, %v1526
        %v1761 = vsel %vm603, %v1749, %v1528
        %v1763 = vsel %vm603, %v1751, %v1530
        %v1765 = vsel %vm603, %v1753, %v1532
        %v1767 = vsel %vm616, %v1755, %v1546
        %v1769 = vsel %vm616, %v1757, %v1548
        %v1771 = vsel %vm616, %v1759, %v1550
        %v1773 = vsel %vm616, %v1761, %v1552
        %v1775 = vsel %vm616, %v1763, %v1554
        %v1777 = vsel %vm616, %v1765, %v1556
        %v1779 = vsel %vm629, %v1767, %v1613
        %v1781 = vsel %vm629, %v1769, %v1615
        %v1783 = vsel %vm629, %v1771, %v1617
        %v1785 = vsel %vm629, %v1773, %v1619
        %v1787 = vsel %vm629, %v1775, %v1621
        %v1789 = vsel %vm629, %v1777, %v1623
        %v1791 = vsel %vm642, %v1779, %v1641
        %v1793 = vsel %vm642, %v1781, %v1643
        %v1795 = vsel %vm642, %v1783, %v1645
        %v1797 = vsel %vm642, %v1785, %v1647
        %v1799 = vsel %vm642, %v1787, %v1649
        %v1801 = vsel %vm642, %v1789, %v1651
        %v1803 = vsel %vm655, %v1791, %v1662
        %v1805 = vsel %vm655, %v1793, %v1664
        %v1807 = vsel %vm655, %v1795, %v1666
        %v1809 = vsel %vm655, %v1797, %v1668
        %v1811 = vsel %vm655, %v1799, %v1670
        %v1813 = vsel %vm655, %v1801, %v1672
        %v1815 = vsel %vm668, %v1803, %v1706
        %v1817 = vsel %vm668, %v1805, %v1708
        %v1819 = vsel %vm668, %v1807, %v1710
        %v1821 = vsel %vm668, %v1809, %v1712
        %v1823 = vsel %vm668, %v1811, %v1714
        %v1825 = vsel %vm668, %v1813, %v1716
        %v1827 = vsel %vm681, %v1815, %v1731
        %v1829 = vsel %vm681, %v1817, %v1733
        %v1831 = vsel %vm681, %v1819, %v1735
        %v1833 = vsel %vm681, %v1821, %v1737
        %v1835 = vsel %vm681, %v1823, %v1739
        %v1837 = vsel %vm681, %v1825, %v1741
        %v1838 = vsel %vm715, %v1827, 0
        %v1840 = vsel %vm715, %v1829, 0
        %v1842 = vsel %vm715, %v1831, 0
        %v1844 = vsel %vm715, %v1833, 0
        %v1846 = vsel %vm715, %v1835, 0
        %v1848 = vsel %vm715, %v1837, 0
        %1850 = vmatprep.subr.bf16.mxu0 0
        %1851 = vmatpush1.bf16.msra.mxu0 0
        %1852 = vmatprep.subr.bf16.mxu0 0
        %1853 = vmatpush1.bf16.msra.mxu0 0
        %1854 = vmatprep.subr.bf16.mxu0 0
        %1855 = vmatpush1.bf16.msra.mxu0 0
        %1856 = vmatprep.subr.bf16.mxu0 0
        %1857 = vmatpush1.bf16.msra.mxu0 0
        %1858 = vmatprep.subr.bf16.mxu0 0
        %1859 = vmatpush1.bf16.msra.mxu0 0
        %1860 = vmatprep.subr.bf16.mxu0 0
        %1861 = vmatpush1.bf16.msra.mxu0 %v730
        %1862 = vmatprep.subr.bf16.mxu0 0
        %1863 = vmatpush1.bf16.msra.mxu0 %v711
        %1864 = vmatprep.subr.bf16.mxu0 0
        %1865 = vmatpush1.bf16.msra.mxu0 %v710
        %1866 = vmatprep.subr.bf16.mxu0 0
        %1867 = vmatpush2.bf16.msra.mxu0 0
        %1868 = vmatprep.subr.bf16.mxu0 0
        %1869 = vmatpush2.bf16.msra.mxu0 0
        %1870 = vmatprep.subr.bf16.mxu0 0
        %1871 = vmatpush2.bf16.msra.mxu0 0
        %1872 = vmatprep.subr.bf16.mxu0 0
        %1873 = vmatpush2.bf16.msra.mxu0 0
        %1874 = vmatprep.subr.bf16.mxu0 0
        %1875 = vmatpush2.bf16.msra.mxu0 0
        %1876 = vmatprep.subr.bf16.mxu0 0
        %1877 = vmatpush2.bf16.msra.mxu0 0
        %1878 = vmatprep.subr.bf16.mxu0 0
        %1879 = vmatpush2.bf16.msra.mxu0 0
        %1880 = vmatprep.subr.bf16.mxu0 0
        %1881 = vmatpush2.bf16.msra.mxu0 0
        %1882 = vmatprep.mubr.bf16.mxu0 0
        %1883 = vmatmul.mubr.bf16.gmra.mxu0 %v1838
        %v1884 = vpop.f32.mrf.mxu0
        %v1885 = vadd.f32 %v698, %v1884
        %v1886 = vpop.f32.mrf.mxu0
        %v1887 = vpop.f32.mrf.mxu0
        %v1888 = vadd.f32 %v698, %v1887
        %v1889 = vpop.f32.mrf.mxu0
        %1890 = vmatprep.mubr.bf16.mxu0 0
        %1891 = vmatmul.mubr.bf16.gmra.mxu0 %v1840
        %v1892 = vpop.f32.mrf.mxu0
        %v1893 = vadd.f32 %v698, %v1892
        %v1894 = vpop.f32.mrf.mxu0
        %v1895 = vpop.f32.mrf.mxu0
        %v1896 = vadd.f32 %v698, %v1895
        %v1897 = vpop.f32.mrf.mxu0
        %1898 = vmatprep.mubr.bf16.mxu0 0
        %1899 = vmatmul.mubr.bf16.gmra.mxu0 %v1842
        %v1900 = vpop.f32.mrf.mxu0
        %v1901 = vadd.f32 %v698, %v1900
        %v1902 = vpop.f32.mrf.mxu0
        %v1903 = vpop.f32.mrf.mxu0
        %v1904 = vadd.f32 %v698, %v1903
        %v1905 = vpop.f32.mrf.mxu0
        %1906 = vmatprep.mubr.bf16.mxu0 0
        %1907 = vmatmul.mubr.bf16.gmra.mxu0 %v1844
        %v1908 = vpop.f32.mrf.mxu0
        %v1909 = vadd.f32 %v698, %v1908
        %v1910 = vpop.f32.mrf.mxu0
        %v1911 = vpop.f32.mrf.mxu0
        %v1912 = vadd.f32 %v698, %v1911
        %v1913 = vpop.f32.mrf.mxu0
        %1914 = vmatprep.mubr.bf16.mxu0 0
        %1915 = vmatmul.mubr.bf16.gmra.mxu0 %v1846
        %v1916 = vpop.f32.mrf.mxu0
        %v1917 = vadd.f32 %v698, %v1916
        %v1918 = vpop.f32.mrf.mxu0
        %v1919 = vpop.f32.mrf.mxu0
        %v1920 = vadd.f32 %v698, %v1919
        %v1921 = vpop.f32.mrf.mxu0
        %1922 = vmatprep.mubr.bf16.mxu0 0
        %1923 = vmatmul.mubr.bf16.gmra.mxu0 %v1848
        %v1924 = vpop.f32.mrf.mxu0
        %v1925 = vadd.f32 %v698, %v1924
        %v1926 = vpop.f32.mrf.mxu0
        %v1927 = vpop.f32.mrf.mxu0
        %v1928 = vadd.f32 %v698, %v1927
        %v1929 = vpop.f32.mrf.mxu0
        %1930 = vdwg.mxu0
        %1931 = vst.msk [vmem:[#allocation2 + $0xc0] sm:$0xff] %vm629, %v1885
        %1932 = vst.msk [vmem:[#allocation2 + $0xc8] sm:$0xff] %vm629, %v1888
        %1933 = vst.msk [vmem:[#allocation2 + $0xd0] sm:$0xff] %vm629, %v1893
        %1934 = vst.msk [vmem:[#allocation2 + $0xd8] sm:$0xff] %vm629, %v1896
        %1935 = vst.msk [vmem:[#allocation2 + $0xe0] sm:$0xff] %vm629, %v1901
        %1936 = vst.msk [vmem:[#allocation2 + $0xe8] sm:$0xff] %vm629, %v1904
        %1937 = vst.msk [vmem:[#allocation2 + $0xf0] sm:$0xff] %vm629, %v1909
        %1938 = vst.msk [vmem:[#allocation2 + $0xf8] sm:$0xff] %vm629, %v1912
        %1939 = vst.msk [vmem:[#allocation2 + $0x100] sm:$0xff] %vm629, %v1917
        %1940 = vst.msk [vmem:[#allocation2 + $0x108] sm:$0xff] %vm629, %v1920
        %1941 = vst.msk [vmem:[#allocation2 + $0x110] sm:$0xff] %vm629, %v1925
        %1942 = vst.msk [vmem:[#allocation2 + $0x118] sm:$0xff] %vm629, %v1928
        %v1943 = vld [vmem:[%s222 + $0x90] sm:$0xf]
        %v1944 = vld [vmem:[%s222 + $0x94] sm:$0xf]
        %v1945 = vld [vmem:[%s222 + $0x98] sm:$0xf]
        %v1946 = vld [vmem:[%s222 + $0x9c] sm:$0xf]
        %v1947 = vld [vmem:[%s222 + $0xa0] sm:$0xf]
        %v1948 = vld [vmem:[%s222 + $0xa4] sm:$0xf]
        %v1949 = vld [vmem:[%s222 + $0xa8] sm:$0xf]
        %v1950 = vld [vmem:[%s222 + $0xac] sm:$0xf]
        %v1951 = vld [vmem:[%s222 + $0xb0] sm:$0xf]
        %v1952 = vld [vmem:[%s222 + $0xb4] sm:$0xf]
        %v1953 = vld [vmem:[%s222 + $0xb8] sm:$0xf]
        %v1954 = vld [vmem:[%s222 + $0xbc] sm:$0xf]
        %v1955 = vld [vmem:[%s222 + $0xc0] sm:$0x1]
        %v1956 = vld [vmem:[%s222 + $0x90] sm:$0xe]
        %v1957 = vld [vmem:[%s222 + $0xc0] sm:$0xf]
        %v1958 = vld [vmem:[%s222 + $0xc4] sm:$0xf]
        %v1959 = vld [vmem:[%s222 + $0xc8] sm:$0xf]
        %v1960 = vld [vmem:[%s222 + $0xcc] sm:$0x1]
        %v1961 = vld [vmem:[%s222 + $0x9c] sm:$0xe]
        %v1962 = vld [vmem:[%s222 + $0xcc] sm:$0xf]
        %v1963 = vld [vmem:[%s222 + $0xd0] sm:$0xf]
        %v1964 = vld [vmem:[%s222 + $0xd4] sm:$0xf]
        %v1965 = vld [vmem:[%s222 + $0xd8] sm:$0x1]
        %v1966 = vld [vmem:[%s222 + $0xa8] sm:$0xe]
        %v1979 = vunpack.c.l.b16 %v1943
        %v1980 = vunpack.c.l.b16 %v1944
        %v1981 = vunpack.c.l.b16 %v1945
        %v1982 = vunpack.c.l.b16 %v1946
        %v1983 = vunpack.c.l.b16 %v1947
        %v1984 = vunpack.c.l.b16 %v1948
        %v1985 = vunpack.c.l.b16 %v1949
        %v1986 = vunpack.c.l.b16 %v1950
        %v1987 = vunpack.c.l.b16 %v1951
        %v1988 = vunpack.c.l.b16 %v1952
        %v1989 = vunpack.c.l.b16 %v1953
        %v1990 = vunpack.c.l.b16 %v1954
        %v1991 = vpack.c.b16 %v1980, %v1979
        %v1992 = vpack.c.b16 %v1982, %v1981
        %v1993 = vpack.c.b16 %v1984, %v1983
        %v1994 = vpack.c.b16 %v1986, %v1985
        %v1995 = vpack.c.b16 %v1988, %v1987
        %v1996 = vpack.c.b16 %v1990, %v1989
        %v1998 = vunpack.c.l.b16 %v1955
        %v1999 = vpack.c.b16 %v1998, %v1998
        %v2001 = vshrl.u32 %v1991, 16
        %v2003 = vshll.u32 %v1991, 16
        %v2005 = vrot.slane %v2003, 1
        %v2006 = vor.u32 %v2001, %v2005
        %v2008 = vshll.u32 %v1992, 16
        %v2010 = vrot.slane %v2008, 1
        %v2011 = vsel %vm287, %v2006, %v2010
        %v2012 = vshrl.u32 %v1992, 16
        %v2014 = vor.u32 %v2012, %v2010
        %v2016 = vshll.u32 %v1993, 16
        %v2018 = vrot.slane %v2016, 1
        %v2019 = vsel %vm287, %v2014, %v2018
        %v2020 = vshrl.u32 %v1993, 16
        %v2022 = vor.u32 %v2020, %v2018
        %v2024 = vshll.u32 %v1994, 16
        %v2026 = vrot.slane %v2024, 1
        %v2027 = vsel %vm287, %v2022, %v2026
        %v2028 = vshrl.u32 %v1994, 16
        %v2030 = vor.u32 %v2028, %v2026
        %v2032 = vshll.u32 %v1995, 16
        %v2034 = vrot.slane %v2032, 1
        %v2035 = vsel %vm287, %v2030, %v2034
        %v2036 = vshrl.u32 %v1995, 16
        %v2038 = vor.u32 %v2036, %v2034
        %v2040 = vshll.u32 %v1996, 16
        %v2042 = vrot.slane %v2040, 1
        %v2043 = vsel %vm287, %v2038, %v2042
        %v2044 = vshrl.u32 %v1996, 16
        %v2046 = vor.u32 %v2044, %v2042
        %v2048 = vshll.u32 %v1999, 16
        %v2050 = vrot.slane %v2048, 1
        %v2051 = vsel %vm287, %v2046, %v2050
        %2052 = vrot.lane.b32.xlu0 %v2011, 4
        %v2053 = vpop.permute.xlu0 %2052
        %2054 = vrot.lane.b32.xlu0 %v2019, 4
        %v2055 = vpop.permute.xlu0 %2054
        %2056 = vrot.lane.b32.xlu0 %v2027, 4
        %v2057 = vpop.permute.xlu0 %2056
        %2058 = vrot.lane.b32.xlu0 %v2035, 4
        %v2059 = vpop.permute.xlu0 %2058
        %2060 = vrot.lane.b32.xlu0 %v2043, 4
        %v2061 = vpop.permute.xlu0 %2060
        %2062 = vrot.lane.b32.xlu0 %v2051, 4
        %v2063 = vpop.permute.xlu0 %2062
        %v2065 = vunpack.c.l.b16 %v1956
        %v2066 = vpack.c.b16 %v1980, %v2065
        %v2067 = vrot.slane %v2066, 1
        %v2068 = vrot.slane %v1992, 1
        %v2069 = vsel %vm355, %v2067, %v2068
        %v2070 = vrot.slane %v1993, 1
        %v2071 = vsel %vm355, %v2068, %v2070
        %v2072 = vrot.slane %v1994, 1
        %v2073 = vsel %vm355, %v2070, %v2072
        %v2074 = vrot.slane %v1995, 1
        %v2075 = vsel %vm355, %v2072, %v2074
        %v2076 = vrot.slane %v1996, 1
        %v2077 = vsel %vm355, %v2074, %v2076
        %v2078 = vrot.slane %v1999, 1
        %v2079 = vsel %vm355, %v2076, %v2078
        %2080 = vrot.lane.b32.xlu0 %v2069, 8
        %v2081 = vpop.permute.xlu0 %2080
        %2082 = vrot.lane.b32.xlu0 %v2071, 8
        %v2083 = vpop.permute.xlu0 %2082
        %2084 = vrot.lane.b32.xlu0 %v2073, 8
        %v2085 = vpop.permute.xlu0 %2084
        %2086 = vrot.lane.b32.xlu0 %v2075, 8
        %v2087 = vpop.permute.xlu0 %2086
        %2088 = vrot.lane.b32.xlu0 %v2077, 8
        %v2089 = vpop.permute.xlu0 %2088
        %2090 = vrot.lane.b32.xlu0 %v2079, 8
        %v2091 = vpop.permute.xlu0 %2090
        %v2095 = vunpack.c.l.b16 %v1957
        %v2096 = vunpack.c.l.b16 %v1958
        %v2097 = vunpack.c.l.b16 %v1959
        %v2098 = vpack.c.b16 %v1983, %v1982
        %v2099 = vpack.c.b16 %v1985, %v1984
        %v2100 = vpack.c.b16 %v1987, %v1986
        %v2101 = vpack.c.b16 %v1989, %v1988
        %v2102 = vpack.c.b16 %v2095, %v1990
        %v2103 = vpack.c.b16 %v2097, %v2096
        %2104 = vrot.lane.b32.xlu0 %v2098, 12
        %v2105 = vpop.permute.xlu0 %2104
        %2106 = vrot.lane.b32.xlu0 %v2099, 12
        %v2107 = vpop.permute.xlu0 %2106
        %2108 = vrot.lane.b32.xlu0 %v2100, 12
        %v2109 = vpop.permute.xlu0 %2108
        %2110 = vrot.lane.b32.xlu0 %v2101, 12
        %v2111 = vpop.permute.xlu0 %2110
        %2112 = vrot.lane.b32.xlu0 %v2102, 12
        %v2113 = vpop.permute.xlu0 %2112
        %2114 = vrot.lane.b32.xlu0 %v2103, 12
        %v2115 = vpop.permute.xlu0 %2114
        %v2117 = vunpack.c.l.b16 %v1960
        %v2118 = vpack.c.b16 %v2117, %v2117
        %v2120 = vshrl.u32 %v2098, 16
        %v2122 = vshll.u32 %v2098, 16
        %v2124 = vrot.slane %v2122, 1
        %v2125 = vor.u32 %v2120, %v2124
        %v2127 = vshll.u32 %v2099, 16
        %v2129 = vrot.slane %v2127, 1
        %v2130 = vsel %vm287, %v2125, %v2129
        %v2131 = vshrl.u32 %v2099, 16
        %v2133 = vor.u32 %v2131, %v2129
        %v2135 = vshll.u32 %v2100, 16
        %v2137 = vrot.slane %v2135, 1
        %v2138 = vsel %vm287, %v2133, %v2137
        %v2139 = vshrl.u32 %v2100, 16
        %v2141 = vor.u32 %v2139, %v2137
        %v2143 = vshll.u32 %v2101, 16
        %v2145 = vrot.slane %v2143, 1
        %v2146 = vsel %vm287, %v2141, %v2145
        %v2147 = vshrl.u32 %v2101, 16
        %v2149 = vor.u32 %v2147, %v2145
        %v2151 = vshll.u32 %v2102, 16
        %v2153 = vrot.slane %v2151, 1
        %v2154 = vsel %vm287, %v2149, %v2153
        %v2155 = vshrl.u32 %v2102, 16
        %v2157 = vor.u32 %v2155, %v2153
        %v2159 = vshll.u32 %v2103, 16
        %v2161 = vrot.slane %v2159, 1
        %v2162 = vsel %vm287, %v2157, %v2161
        %v2163 = vshrl.u32 %v2103, 16
        %v2165 = vor.u32 %v2163, %v2161
        %v2167 = vshll.u32 %v2118, 16
        %v2169 = vrot.slane %v2167, 1
        %v2170 = vsel %vm287, %v2165, %v2169
        %2171 = vrot.lane.b32.xlu0 %v2130, 16
        %v2172 = vpop.permute.xlu0 %2171
        %2173 = vrot.lane.b32.xlu0 %v2138, 16
        %v2174 = vpop.permute.xlu0 %2173
        %2175 = vrot.lane.b32.xlu0 %v2146, 16
        %v2176 = vpop.permute.xlu0 %2175
        %2177 = vrot.lane.b32.xlu0 %v2154, 16
        %v2178 = vpop.permute.xlu0 %2177
        %2179 = vrot.lane.b32.xlu0 %v2162, 16
        %v2180 = vpop.permute.xlu0 %2179
        %2181 = vrot.lane.b32.xlu0 %v2170, 16
        %v2182 = vpop.permute.xlu0 %2181
        %v2184 = vunpack.c.l.b16 %v1961
        %v2185 = vpack.c.b16 %v1983, %v2184
        %v2186 = vrot.slane %v2185, 1
        %v2187 = vrot.slane %v2099, 1
        %v2188 = vsel %vm355, %v2186, %v2187
        %v2189 = vrot.slane %v2100, 1
        %v2190 = vsel %vm355, %v2187, %v2189
        %v2191 = vrot.slane %v2101, 1
        %v2192 = vsel %vm355, %v2189, %v2191
        %v2193 = vrot.slane %v2102, 1
        %v2194 = vsel %vm355, %v2191, %v2193
        %v2195 = vrot.slane %v2103, 1
        %v2196 = vsel %vm355, %v2193, %v2195
        %v2197 = vrot.slane %v2118, 1
        %v2198 = vsel %vm355, %v2195, %v2197
        %2199 = vrot.lane.b32.xlu0 %v2188, 20
        %v2200 = vpop.permute.xlu0 %2199
        %2201 = vrot.lane.b32.xlu0 %v2190, 20
        %v2202 = vpop.permute.xlu0 %2201
        %2203 = vrot.lane.b32.xlu0 %v2192, 20
        %v2204 = vpop.permute.xlu0 %2203
        %2205 = vrot.lane.b32.xlu0 %v2194, 20
        %v2206 = vpop.permute.xlu0 %2205
        %2207 = vrot.lane.b32.xlu0 %v2196, 20
        %v2208 = vpop.permute.xlu0 %2207
        %2209 = vrot.lane.b32.xlu0 %v2198, 20
        %v2210 = vpop.permute.xlu0 %2209
        %v2214 = vunpack.c.l.b16 %v1962
        %v2215 = vunpack.c.l.b16 %v1963
        %v2216 = vunpack.c.l.b16 %v1964
        %v2217 = vpack.c.b16 %v2096, %v2095
        %v2218 = vpack.c.b16 %v2214, %v2097
        %v2219 = vpack.c.b16 %v2216, %v2215
        %2220 = vrot.lane.b32.xlu0 %v1994, 24
        %v2221 = vpop.permute.xlu0 %2220
        %2222 = vrot.lane.b32.xlu0 %v1995, 24
        %v2223 = vpop.permute.xlu0 %2222
        %2224 = vrot.lane.b32.xlu0 %v1996, 24
        %v2225 = vpop.permute.xlu0 %2224
        %2226 = vrot.lane.b32.xlu0 %v2217, 24
        %v2227 = vpop.permute.xlu0 %2226
        %2228 = vrot.lane.b32.xlu0 %v2218, 24
        %v2229 = vpop.permute.xlu0 %2228
        %2230 = vrot.lane.b32.xlu0 %v2219, 24
        %v2231 = vpop.permute.xlu0 %2230
        %v2233 = vunpack.c.l.b16 %v1965
        %v2234 = vpack.c.b16 %v2233, %v2233
        %v2236 = vshll.u32 %v2217, 16
        %v2238 = vrot.slane %v2236, 1
        %v2239 = vsel %vm287, %v2046, %v2238
        %v2240 = vshrl.u32 %v2217, 16
        %v2242 = vor.u32 %v2240, %v2238
        %v2244 = vshll.u32 %v2218, 16
        %v2246 = vrot.slane %v2244, 1
        %v2247 = vsel %vm287, %v2242, %v2246
        %v2248 = vshrl.u32 %v2218, 16
        %v2250 = vor.u32 %v2248, %v2246
        %v2252 = vshll.u32 %v2219, 16
        %v2254 = vrot.slane %v2252, 1
        %v2255 = vsel %vm287, %v2250, %v2254
        %v2256 = vshrl.u32 %v2219, 16
        %v2258 = vor.u32 %v2256, %v2254
        %v2260 = vshll.u32 %v2234, 16
        %v2262 = vrot.slane %v2260, 1
        %v2263 = vsel %vm287, %v2258, %v2262
        %2264 = vrot.lane.b32.xlu0 %v2035, 28
        %v2265 = vpop.permute.xlu0 %2264
        %2266 = vrot.lane.b32.xlu0 %v2043, 28
        %v2267 = vpop.permute.xlu0 %2266
        %2268 = vrot.lane.b32.xlu0 %v2239, 28
        %v2269 = vpop.permute.xlu0 %2268
        %2270 = vrot.lane.b32.xlu0 %v2247, 28
        %v2271 = vpop.permute.xlu0 %2270
        %2272 = vrot.lane.b32.xlu0 %v2255, 28
        %v2273 = vpop.permute.xlu0 %2272
        %2274 = vrot.lane.b32.xlu0 %v2263, 28
        %v2275 = vpop.permute.xlu0 %2274
        %v2277 = vunpack.c.l.b16 %v1966
        %v2278 = vpack.c.b16 %v1986, %v2277
        %v2279 = vrot.slane %v2278, 1
        %v2280 = vsel %vm355, %v2279, %v2074
        %v2281 = vrot.slane %v2217, 1
        %v2282 = vsel %vm355, %v2076, %v2281
        %v2283 = vrot.slane %v2218, 1
        %v2284 = vsel %vm355, %v2281, %v2283
        %v2285 = vrot.slane %v2219, 1
        %v2286 = vsel %vm355, %v2283, %v2285
        %v2287 = vrot.slane %v2234, 1
        %v2288 = vsel %vm355, %v2285, %v2287
        %2289 = vrot.lane.b32.xlu0 %v2280, 32
        %v2290 = vpop.permute.xlu0 %2289
        %2291 = vrot.lane.b32.xlu0 %v2077, 32
        %v2292 = vpop.permute.xlu0 %2291
        %2293 = vrot.lane.b32.xlu0 %v2282, 32
        %v2294 = vpop.permute.xlu0 %2293
        %2295 = vrot.lane.b32.xlu0 %v2284, 32
        %v2296 = vpop.permute.xlu0 %2295
        %2297 = vrot.lane.b32.xlu0 %v2286, 32
        %v2298 = vpop.permute.xlu0 %2297
        %2299 = vrot.lane.b32.xlu0 %v2288, 32
        %v2300 = vpop.permute.xlu0 %2299
        %v2302 = vsel %vm590, %v1991, %v2053
        %v2304 = vsel %vm590, %v1992, %v2055
        %v2306 = vsel %vm590, %v1993, %v2057
        %v2308 = vsel %vm590, %v1994, %v2059
        %v2310 = vsel %vm590, %v1995, %v2061
        %v2312 = vsel %vm590, %v1996, %v2063
        %v2314 = vsel %vm603, %v2302, %v2081
        %v2316 = vsel %vm603, %v2304, %v2083
        %v2318 = vsel %vm603, %v2306, %v2085
        %v2320 = vsel %vm603, %v2308, %v2087
        %v2322 = vsel %vm603, %v2310, %v2089
        %v2324 = vsel %vm603, %v2312, %v2091
        %v2326 = vsel %vm616, %v2314, %v2105
        %v2328 = vsel %vm616, %v2316, %v2107
        %v2330 = vsel %vm616, %v2318, %v2109
        %v2332 = vsel %vm616, %v2320, %v2111
        %v2334 = vsel %vm616, %v2322, %v2113
        %v2336 = vsel %vm616, %v2324, %v2115
        %v2338 = vsel %vm629, %v2326, %v2172
        %v2340 = vsel %vm629, %v2328, %v2174
        %v2342 = vsel %vm629, %v2330, %v2176
        %v2344 = vsel %vm629, %v2332, %v2178
        %v2346 = vsel %vm629, %v2334, %v2180
        %v2348 = vsel %vm629, %v2336, %v2182
        %v2350 = vsel %vm642, %v2338, %v2200
        %v2352 = vsel %vm642, %v2340, %v2202
        %v2354 = vsel %vm642, %v2342, %v2204
        %v2356 = vsel %vm642, %v2344, %v2206
        %v2358 = vsel %vm642, %v2346, %v2208
        %v2360 = vsel %vm642, %v2348, %v2210
        %v2362 = vsel %vm655, %v2350, %v2221
        %v2364 = vsel %vm655, %v2352, %v2223
        %v2366 = vsel %vm655, %v2354, %v2225
        %v2368 = vsel %vm655, %v2356, %v2227
        %v2370 = vsel %vm655, %v2358, %v2229
        %v2372 = vsel %vm655, %v2360, %v2231
        %v2374 = vsel %vm668, %v2362, %v2265
        %v2376 = vsel %vm668, %v2364, %v2267
        %v2378 = vsel %vm668, %v2366, %v2269
        %v2380 = vsel %vm668, %v2368, %v2271
        %v2382 = vsel %vm668, %v2370, %v2273
        %v2384 = vsel %vm668, %v2372, %v2275
        %v2386 = vsel %vm681, %v2374, %v2290
        %v2388 = vsel %vm681, %v2376, %v2292
        %v2390 = vsel %vm681, %v2378, %v2294
        %v2392 = vsel %vm681, %v2380, %v2296
        %v2394 = vsel %vm681, %v2382, %v2298
        %v2396 = vsel %vm681, %v2384, %v2300
        %v2397 = vsel %vm715, %v2386, 0
        %v2399 = vsel %vm715, %v2388, 0
        %v2401 = vsel %vm715, %v2390, 0
        %v2403 = vsel %vm715, %v2392, 0
        %v2405 = vsel %vm715, %v2394, 0
        %v2407 = vsel %vm715, %v2396, 0
        %2409 = vmatprep.subr.bf16.mxu0 0
        %2410 = vmatpush1.bf16.msra.mxu0 0
        %2411 = vmatprep.subr.bf16.mxu0 0
        %2412 = vmatpush1.bf16.msra.mxu0 0
        %2413 = vmatprep.subr.bf16.mxu0 0
        %2414 = vmatpush1.bf16.msra.mxu0 0
        %2415 = vmatprep.subr.bf16.mxu0 0
        %2416 = vmatpush1.bf16.msra.mxu0 0
        %2417 = vmatprep.subr.bf16.mxu0 0
        %2418 = vmatpush1.bf16.msra.mxu0 0
        %2419 = vmatprep.subr.bf16.mxu0 0
        %2420 = vmatpush1.bf16.msra.mxu0 %v730
        %2421 = vmatprep.subr.bf16.mxu0 0
        %2422 = vmatpush1.bf16.msra.mxu0 %v711
        %2423 = vmatprep.subr.bf16.mxu0 0
        %2424 = vmatpush1.bf16.msra.mxu0 %v710
        %2425 = vmatprep.subr.bf16.mxu0 0
        %2426 = vmatpush2.bf16.msra.mxu0 0
        %2427 = vmatprep.subr.bf16.mxu0 0
        %2428 = vmatpush2.bf16.msra.mxu0 0
        %2429 = vmatprep.subr.bf16.mxu0 0
        %2430 = vmatpush2.bf16.msra.mxu0 0
        %2431 = vmatprep.subr.bf16.mxu0 0
        %2432 = vmatpush2.bf16.msra.mxu0 0
        %2433 = vmatprep.subr.bf16.mxu0 0
        %2434 = vmatpush2.bf16.msra.mxu0 0
        %2435 = vmatprep.subr.bf16.mxu0 0
        %2436 = vmatpush2.bf16.msra.mxu0 0
        %2437 = vmatprep.subr.bf16.mxu0 0
        %2438 = vmatpush2.bf16.msra.mxu0 0
        %2439 = vmatprep.subr.bf16.mxu0 0
        %2440 = vmatpush2.bf16.msra.mxu0 0
        %2441 = vmatprep.mubr.bf16.mxu0 0
        %2442 = vmatmul.mubr.bf16.gmra.mxu0 %v2397
        %v2443 = vpop.f32.mrf.mxu0
        %v2444 = vadd.f32 %v698, %v2443
        %v2445 = vpop.f32.mrf.mxu0
        %v2446 = vpop.f32.mrf.mxu0
        %v2447 = vadd.f32 %v698, %v2446
        %v2448 = vpop.f32.mrf.mxu0
        %2449 = vmatprep.mubr.bf16.mxu0 0
        %2450 = vmatmul.mubr.bf16.gmra.mxu0 %v2399
        %v2451 = vpop.f32.mrf.mxu0
        %v2452 = vadd.f32 %v698, %v2451
        %v2453 = vpop.f32.mrf.mxu0
        %v2454 = vpop.f32.mrf.mxu0
        %v2455 = vadd.f32 %v698, %v2454
        %v2456 = vpop.f32.mrf.mxu0
        %2457 = vmatprep.mubr.bf16.mxu0 0
        %2458 = vmatmul.mubr.bf16.gmra.mxu0 %v2401
        %v2459 = vpop.f32.mrf.mxu0
        %v2460 = vadd.f32 %v698, %v2459
        %v2461 = vpop.f32.mrf.mxu0
        %v2462 = vpop.f32.mrf.mxu0
        %v2463 = vadd.f32 %v698, %v2462
        %v2464 = vpop.f32.mrf.mxu0
        %2465 = vmatprep.mubr.bf16.mxu0 0
        %2466 = vmatmul.mubr.bf16.gmra.mxu0 %v2403
        %v2467 = vpop.f32.mrf.mxu0
        %v2468 = vadd.f32 %v698, %v2467
        %v2469 = vpop.f32.mrf.mxu0
        %v2470 = vpop.f32.mrf.mxu0
        %v2471 = vadd.f32 %v698, %v2470
        %v2472 = vpop.f32.mrf.mxu0
        %2473 = vmatprep.mubr.bf16.mxu0 0
        %2474 = vmatmul.mubr.bf16.gmra.mxu0 %v2405
        %v2475 = vpop.f32.mrf.mxu0
        %v2476 = vadd.f32 %v698, %v2475
        %v2477 = vpop.f32.mrf.mxu0
        %v2478 = vpop.f32.mrf.mxu0
        %v2479 = vadd.f32 %v698, %v2478
        %v2480 = vpop.f32.mrf.mxu0
        %2481 = vmatprep.mubr.bf16.mxu0 0
        %2482 = vmatmul.mubr.bf16.gmra.mxu0 %v2407
        %v2483 = vpop.f32.mrf.mxu0
        %v2484 = vadd.f32 %v698, %v2483
        %v2485 = vpop.f32.mrf.mxu0
        %v2486 = vpop.f32.mrf.mxu0
        %v2487 = vadd.f32 %v698, %v2486
        %v2488 = vpop.f32.mrf.mxu0
        %2489 = vdwg.mxu0
        %2490 = vst.msk [vmem:[#allocation2 + $0x120] sm:$0xff] %vm629, %v2444
        %2491 = vst.msk [vmem:[#allocation2 + $0x128] sm:$0xff] %vm629, %v2447
        %2492 = vst.msk [vmem:[#allocation2 + $0x130] sm:$0xff] %vm629, %v2452
        %2493 = vst.msk [vmem:[#allocation2 + $0x138] sm:$0xff] %vm629, %v2455
        %2494 = vst.msk [vmem:[#allocation2 + $0x140] sm:$0xff] %vm629, %v2460
        %2495 = vst.msk [vmem:[#allocation2 + $0x148] sm:$0xff] %vm629, %v2463
        %2496 = vst.msk [vmem:[#allocation2 + $0x150] sm:$0xff] %vm629, %v2468
        %2497 = vst.msk [vmem:[#allocation2 + $0x158] sm:$0xff] %vm629, %v2471
        %2498 = vst.msk [vmem:[#allocation2 + $0x160] sm:$0xff] %vm629, %v2476
        %2499 = vst.msk [vmem:[#allocation2 + $0x168] sm:$0xff] %vm629, %v2479
        %2500 = vst.msk [vmem:[#allocation2 + $0x170] sm:$0xff] %vm629, %v2484
        %2501 = vst.msk [vmem:[#allocation2 + $0x178] sm:$0xff] %vm629, %v2487
        %vm2502 = vcmask 122880
        %2503 = vst.msk [vmem:[#allocation5] sm:$0x1] %vm2502, -inf
        %v2504 = vld [vmem:[#allocation2] sm:$0xff]
        %v2505 = vld [vmem:[#allocation2 + $0x8] sm:$0xff]
        %v2506 = vld [vmem:[#allocation2 + $0x18] sm:$0xff]
        %v2507 = vld [vmem:[#allocation2 + $0x20] sm:$0xff]
        %v2508 = vmax.f32 %v2504, %v2506
        %v2509 = vmax.f32 %v2505, %v2507
        %2510 = vst.msk [vmem:[#allocation5 + $0x1] sm:$0xff] %vm629, %v2508
        %2511 = vst.msk [vmem:[#allocation5 + $0x9] sm:$0xff] %vm629, %v2509
        %v2512 = vld [vmem:[#allocation5] ss:$2 sm:$0xff]
        %s2513 = scalar_lea.vmem [#allocation5], 1
        %v2514 = vld [vmem:[%s2513] ss:$2 sm:$0xff]
        %v2515 = vmax.f32 %v2512, %v2514
        %s2516 = scalar_lea.vmem [#allocation5], 2
        %v2517 = vld [vmem:[%s2516] ss:$2 sm:$0xff]
        %v2518 = vmax.f32 %v2515, %v2517
        %2519 = vst.msk [vmem:[#allocation4] sm:$0xff] %vm629, %v2518
        %v2520 = vld [vmem:[#allocation2 + $0x18] sm:$0xff]
        %v2521 = vld [vmem:[#allocation2 + $0x20] sm:$0xff]
        %v2522 = vld [vmem:[#allocation2 + $0x30] sm:$0xff]
        %v2523 = vld [vmem:[#allocation2 + $0x38] sm:$0xff]
        %v2524 = vmax.f32 %v2520, %v2522
        %v2525 = vmax.f32 %v2521, %v2523
        %v2526 = vld [vmem:[#allocation2 + $0x48] sm:$0xff]
        %v2527 = vld [vmem:[#allocation2 + $0x50] sm:$0xff]
        %v2528 = vmax.f32 %v2524, %v2526
        %v2529 = vmax.f32 %v2525, %v2527
        %2530 = vst.msk [vmem:[#allocation5 + $0x1] sm:$0xff] %vm629, %v2528
        %2531 = vst.msk [vmem:[#allocation5 + $0x9] sm:$0xff] %vm629, %v2529
        %v2532 = vld [vmem:[#allocation5] ss:$2 sm:$0xff]
        %v2533 = vld [vmem:[%s2513] ss:$2 sm:$0xff]
        %v2534 = vmax.f32 %v2532, %v2533
        %v2535 = vld [vmem:[%s2516] ss:$2 sm:$0xff]
        %v2536 = vmax.f32 %v2534, %v2535
        %2537 = vst.msk [vmem:[#allocation4 + $0x8] sm:$0xff] %vm629, %v2536
        %v2538 = vld [vmem:[#allocation2 + $0x48] sm:$0xff]
        %v2539 = vld [vmem:[#allocation2 + $0x50] sm:$0xff]
        %v2540 = vld [vmem:[#allocation2 + $0x60] sm:$0xff]
        %v2541 = vld [vmem:[#allocation2 + $0x68] sm:$0xff]
        %v2542 = vmax.f32 %v2538, %v2540
        %v2543 = vmax.f32 %v2539, %v2541
        %v2544 = vld [vmem:[#allocation2 + $0x78] sm:$0xff]
        %v2545 = vld [vmem:[#allocation2 + $0x80] sm:$0xff]
        %v2546 = vmax.f32 %v2542, %v2544
        %v2547 = vmax.f32 %v2543, %v2545
        %2548 = vst.msk [vmem:[#allocation5 + $0x1] sm:$0xff] %vm629, %v2546
        %2549 = vst.msk [vmem:[#allocation5 + $0x9] sm:$0xff] %vm629, %v2547
        %v2550 = vld [vmem:[#allocation5] ss:$2 sm:$0xff]
        %v2551 = vld [vmem:[%s2513] ss:$2 sm:$0xff]
        %v2552 = vmax.f32 %v2550, %v2551
        %v2553 = vld [vmem:[%s2516] ss:$2 sm:$0xff]
        %v2554 = vmax.f32 %v2552, %v2553
        %2555 = vst.msk [vmem:[#allocation4 + $0x10] sm:$0xff] %vm629, %v2554
        %v2556 = vld [vmem:[#allocation2 + $0x78] sm:$0xff]
        %v2557 = vld [vmem:[#allocation2 + $0x80] sm:$0xff]
        %v2558 = vld [vmem:[#allocation2 + $0x90] sm:$0xff]
        %v2559 = vld [vmem:[#allocation2 + $0x98] sm:$0xff]
        %v2560 = vmax.f32 %v2556, %v2558
        %v2561 = vmax.f32 %v2557, %v2559
        %v2562 = vld [vmem:[#allocation2 + $0xa8] sm:$0xff]
        %v2563 = vld [vmem:[#allocation2 + $0xb0] sm:$0xff]
        %v2564 = vmax.f32 %v2560, %v2562
        %v2565 = vmax.f32 %v2561, %v2563
        %2566 = vst.msk [vmem:[#allocation5 + $0x1] sm:$0xff] %vm629, %v2564
        %2567 = vst.msk [vmem:[#allocation5 + $0x9] sm:$0xff] %vm629, %v2565
        %v2568 = vld [vmem:[#allocation5] ss:$2 sm:$0xff]
        %v2569 = vld [vmem:[%s2513] ss:$2 sm:$0xff]
        %v2570 = vmax.f32 %v2568, %v2569
        %v2571 = vld [vmem:[%s2516] ss:$2 sm:$0xff]
        %v2572 = vmax.f32 %v2570, %v2571
        %2573 = vst.msk [vmem:[#allocation4 + $0x18] sm:$0xff] %vm629, %v2572
        %v2574 = vld [vmem:[#allocation2 + $0xa8] sm:$0xff]
        %v2575 = vld [vmem:[#allocation2 + $0xb0] sm:$0xff]
        %v2576 = vld [vmem:[#allocation2 + $0xc0] sm:$0xff]
        %v2577 = vld [vmem:[#allocation2 + $0xc8] sm:$0xff]
        %v2578 = vmax.f32 %v2574, %v2576
        %v2579 = vmax.f32 %v2575, %v2577
        %v2580 = vld [vmem:[#allocation2 + $0xd8] sm:$0xff]
        %v2581 = vld [vmem:[#allocation2 + $0xe0] sm:$0xff]
        %v2582 = vmax.f32 %v2578, %v2580
        %v2583 = vmax.f32 %v2579, %v2581
        %2584 = vst.msk [vmem:[#allocation5 + $0x1] sm:$0xff] %vm629, %v2582
        %2585 = vst.msk [vmem:[#allocation5 + $0x9] sm:$0xff] %vm629, %v2583
        %v2586 = vld [vmem:[#allocation5] ss:$2 sm:$0xff]
        %v2587 = vld [vmem:[%s2513] ss:$2 sm:$0xff]
        %v2588 = vmax.f32 %v2586, %v2587
        %v2589 = vld [vmem:[%s2516] ss:$2 sm:$0xff]
        %v2590 = vmax.f32 %v2588, %v2589
        %2591 = vst.msk [vmem:[#allocation4 + $0x20] sm:$0xff] %vm629, %v2590
        %v2592 = vld [vmem:[#allocation2 + $0xd8] sm:$0xff]
        %v2593 = vld [vmem:[#allocation2 + $0xe0] sm:$0xff]
        %v2594 = vld [vmem:[#allocation2 + $0xf0] sm:$0xff]
        %v2595 = vld [vmem:[#allocation2 + $0xf8] sm:$0xff]
        %v2596 = vmax.f32 %v2592, %v2594
        %v2597 = vmax.f32 %v2593, %v2595
        %v2598 = vld [vmem:[#allocation2 + $0x108] sm:$0xff]
        %v2599 = vld [vmem:[#allocation2 + $0x110] sm:$0xff]
        %v2600 = vmax.f32 %v2596, %v2598
        %v2601 = vmax.f32 %v2597, %v2599
        %2602 = vst.msk [vmem:[#allocation5 + $0x1] sm:$0xff] %vm629, %v2600
        %2603 = vst.msk [vmem:[#allocation5 + $0x9] sm:$0xff] %vm629, %v2601
        %v2604 = vld [vmem:[#allocation5] ss:$2 sm:$0xff]
        %v2605 = vld [vmem:[%s2513] ss:$2 sm:$0xff]
        %v2606 = vmax.f32 %v2604, %v2605
        %v2607 = vld [vmem:[%s2516] ss:$2 sm:$0xff]
        %v2608 = vmax.f32 %v2606, %v2607
        %2609 = vst.msk [vmem:[#allocation4 + $0x28] sm:$0xff] %vm629, %v2608
        %v2610 = vld [vmem:[#allocation2 + $0x108] sm:$0xff]
        %v2611 = vld [vmem:[#allocation2 + $0x110] sm:$0xff]
        %v2612 = vld [vmem:[#allocation2 + $0x120] sm:$0xff]
        %v2613 = vld [vmem:[#allocation2 + $0x128] sm:$0xff]
        %v2614 = vmax.f32 %v2610, %v2612
        %v2615 = vmax.f32 %v2611, %v2613
        %v2616 = vld [vmem:[#allocation2 + $0x138] sm:$0xff]
        %v2617 = vld [vmem:[#allocation2 + $0x140] sm:$0xff]
        %v2618 = vmax.f32 %v2614, %v2616
        %v2619 = vmax.f32 %v2615, %v2617
        %2620 = vst.msk [vmem:[#allocation5 + $0x1] sm:$0xff] %vm629, %v2618
        %2621 = vst.msk [vmem:[#allocation5 + $0x9] sm:$0xff] %vm629, %v2619
        %v2622 = vld [vmem:[#allocation5] ss:$2 sm:$0xff]
        %v2623 = vld [vmem:[%s2513] ss:$2 sm:$0xff]
        %v2624 = vmax.f32 %v2622, %v2623
        %v2625 = vld [vmem:[%s2516] ss:$2 sm:$0xff]
        %v2626 = vmax.f32 %v2624, %v2625
        %2627 = vst.msk [vmem:[#allocation4 + $0x30] sm:$0xff] %vm629, %v2626
        %v2628 = vld [vmem:[#allocation2 + $0x138] sm:$0xff]
        %v2629 = vld [vmem:[#allocation2 + $0x140] sm:$0xff]
        %v2630 = vld [vmem:[#allocation2 + $0x150] sm:$0xff]
        %v2631 = vld [vmem:[#allocation2 + $0x158] sm:$0xff]
        %v2632 = vmax.f32 %v2628, %v2630
        %v2633 = vmax.f32 %v2629, %v2631
        %v2634 = vld [vmem:[#allocation2 + $0x168] sm:$0xff]
        %v2635 = vld [vmem:[#allocation2 + $0x170] sm:$0xff]
        %v2636 = vmax.f32 %v2632, %v2634
        %v2637 = vmax.f32 %v2633, %v2635
        %2638 = vst.msk [vmem:[#allocation5 + $0x1] sm:$0xff] %vm629, %v2636
        %2639 = vst.msk [vmem:[#allocation5 + $0x9] sm:$0xff] %vm629, %v2637
        %v2640 = vld [vmem:[#allocation5] ss:$2 sm:$0xff]
        %v2641 = vld [vmem:[%s2513] ss:$2 sm:$0xff]
        %v2642 = vmax.f32 %v2640, %v2641
        %v2643 = vld [vmem:[%s2516] ss:$2 sm:$0xff]
        %v2644 = vmax.f32 %v2642, %v2643
        %2645 = vst.msk [vmem:[#allocation4 + $0x38] sm:$0xff] %vm629, %v2644
        %vm2646 = vcmask 125952
        %2647 = vst.msk [vmem:[#allocation3] sm:$0xf] %vm2646, 0
        %2648 = vst.msk [vmem:[#allocation3 + $0x4] sm:$0xf] %vm2646, 0
        %2649 = vst.msk [vmem:[#allocation3 + $0x8] sm:$0xf] %vm2646, 0
        %2650 = vst.msk [vmem:[#allocation3 + $0xc] sm:$0xf] %vm2646, 0
        %2651 = vst.msk [vmem:[#allocation3 + $0x10] sm:$0xf] %vm2646, 0
        %2652 = vst.msk [vmem:[#allocation3 + $0x14] sm:$0xf] %vm2646, 0
        %2653 = vst.msk [vmem:[#allocation3 + $0x18] sm:$0xf] %vm2646, 0
        %2654 = vst.msk [vmem:[#allocation3 + $0x1c] sm:$0xf] %vm2646, 0
        %2655 = vst.msk [vmem:[#allocation3 + $0x20] sm:$0xf] %vm2646, 0
        %2656 = vst.msk [vmem:[#allocation3 + $0x24] sm:$0xf] %vm2646, 0
        %2657 = vst.msk [vmem:[#allocation3 + $0x28] sm:$0xf] %vm2646, 0
        %2658 = vst.msk [vmem:[#allocation3 + $0x2c] sm:$0xf] %vm2646, 0
        %2659 = vst.msk [vmem:[#allocation3 + $0x30] sm:$0xf] %vm2646, 0
        %2660 = vst.msk [vmem:[#allocation3 + $0x34] sm:$0xf] %vm2646, 0
        %2661 = vst.msk [vmem:[#allocation3 + $0x38] sm:$0xf] %vm2646, 0
        %2662 = vst.msk [vmem:[#allocation3 + $0x3c] sm:$0xf] %vm2646, 0
        %2663 = vst.msk [vmem:[#allocation3 + $0x40] sm:$0xf] %vm2646, 0
        %2664 = vst.msk [vmem:[#allocation3 + $0x44] sm:$0xf] %vm2646, 0
        %2665 = vst.msk [vmem:[#allocation3 + $0x48] sm:$0xf] %vm2646, 0
        %2666 = vst.msk [vmem:[#allocation3 + $0x4c] sm:$0xf] %vm2646, 0
        %2667 = vst.msk [vmem:[#allocation3 + $0x50] sm:$0xf] %vm2646, 0
        %2668 = vst.msk [vmem:[#allocation3 + $0x54] sm:$0xf] %vm2646, 0
        %v2669 = vld [vmem:[#allocation4] sm:$0xff]
        %v2670 = vld [vmem:[#allocation4 + $0x8] sm:$0xff]
        %v2671 = vld [vmem:[#allocation4 + $0x10] sm:$0xff]
        %v2672 = vld [vmem:[#allocation4 + $0x18] sm:$0xff]
        %v2673 = vld [vmem:[#allocation4 + $0x20] sm:$0xff]
        %v2674 = vld [vmem:[#allocation4 + $0x28] sm:$0xff]
        %v2675 = vld [vmem:[#allocation4 + $0x30] sm:$0xff]
        %v2676 = vld [vmem:[#allocation4 + $0x38] sm:$0xff]
        %v2677 = vmax.f32 %v2669, 0.0
        %v2678 = vpack.c.bf16 %v2677, %v2677
        %v2680 = vunpack.c.l.b16 %v2678
        %v2681 = vpack.c.b16 %v2680, %v2680
        %v2683 = vshrl.u32 %v2681, 16
        %v2685 = vrot.slane %v2683, 7
        %v2686 = vshll.u32 %v2681, 16
        %v2688 = vor.u32 %v2685, %v2686
        %v2689 = vrot.slane %v2685, 4
        %vm2692 = vcmask 125952
        %vm2693 = vsmask.f32 7938
        %vm2694 = vmand %vm2692, %vm2693
        %v2695 = vld [vmem:[#allocation3 + $0x8] sm:$0xf]
        %v2696 = vsel %vm2694, %v2688, %v2695
        %2697 = vst [vmem:[#allocation3 + $0x8] sm:$0xf] %v2696
        %vm2698 = vcmask 122880
        %vm2699 = vsmask.f32 256
        %vm2700 = vmand %vm2698, %vm2699
        %v2701 = vld [vmem:[#allocation3 + $0xc] sm:$0x1]
        %v2702 = vsel %vm2700, %v2689, %v2701
        %2703 = vst [vmem:[#allocation3 + $0xc] sm:$0x1] %v2702
        %v2704 = vmax.f32 %v2670, 0.0
        %v2705 = vpack.c.bf16 %v2704, %v2704
        %v2707 = vunpack.c.l.b16 %v2705
        %v2708 = vpack.c.b16 %v2707, %v2707
        %v2710 = vshrl.u32 %v2708, 16
        %v2712 = vrot.slane %v2710, 7
        %v2713 = vshll.u32 %v2708, 16
        %v2715 = vor.u32 %v2712, %v2713
        %v2716 = vrot.slane %v2712, 4
        %v2719 = vld [vmem:[#allocation3 + $0x10] sm:$0xf]
        %v2720 = vsel %vm2694, %v2715, %v2719
        %2721 = vst [vmem:[#allocation3 + $0x10] sm:$0xf] %v2720
        %v2722 = vld [vmem:[#allocation3 + $0x14] sm:$0x1]
        %v2723 = vsel %vm2700, %v2716, %v2722
        %2724 = vst [vmem:[#allocation3 + $0x14] sm:$0x1] %v2723
        %v2725 = vmax.f32 %v2671, 0.0
        %v2726 = vpack.c.bf16 %v2725, %v2725
        %v2728 = vunpack.c.l.b16 %v2726
        %v2729 = vpack.c.b16 %v2728, %v2728
        %v2731 = vshrl.u32 %v2729, 16
        %v2733 = vrot.slane %v2731, 7
        %v2734 = vshll.u32 %v2729, 16
        %v2736 = vor.u32 %v2733, %v2734
        %v2737 = vrot.slane %v2733, 4
        %v2740 = vld [vmem:[#allocation3 + $0x18] sm:$0xf]
        %v2741 = vsel %vm2694, %v2736, %v2740
        %2742 = vst [vmem:[#allocation3 + $0x18] sm:$0xf] %v2741
        %v2743 = vld [vmem:[#allocation3 + $0x1c] sm:$0x1]
        %v2744 = vsel %vm2700, %v2737, %v2743
        %2745 = vst [vmem:[#allocation3 + $0x1c] sm:$0x1] %v2744
        %v2746 = vmax.f32 %v2672, 0.0
        %v2747 = vpack.c.bf16 %v2746, %v2746
        %v2749 = vunpack.c.l.b16 %v2747
        %v2750 = vpack.c.b16 %v2749, %v2749
        %v2752 = vshrl.u32 %v2750, 16
        %v2754 = vrot.slane %v2752, 7
        %v2755 = vshll.u32 %v2750, 16
        %v2757 = vor.u32 %v2754, %v2755
        %v2758 = vrot.slane %v2754, 4
        %v2761 = vld [vmem:[#allocation3 + $0x20] sm:$0xf]
        %v2762 = vsel %vm2694, %v2757, %v2761
        %2763 = vst [vmem:[#allocation3 + $0x20] sm:$0xf] %v2762
        %v2764 = vld [vmem:[#allocation3 + $0x24] sm:$0x1]
        %v2765 = vsel %vm2700, %v2758, %v2764
        %2766 = vst [vmem:[#allocation3 + $0x24] sm:$0x1] %v2765
        %v2767 = vmax.f32 %v2673, 0.0
        %v2768 = vpack.c.bf16 %v2767, %v2767
        %v2770 = vunpack.c.l.b16 %v2768
        %v2771 = vpack.c.b16 %v2770, %v2770
        %v2773 = vshrl.u32 %v2771, 16
        %v2775 = vrot.slane %v2773, 7
        %v2776 = vshll.u32 %v2771, 16
        %v2778 = vor.u32 %v2775, %v2776
        %v2779 = vrot.slane %v2775, 4
        %v2782 = vld [vmem:[#allocation3 + $0x28] sm:$0xf]
        %v2783 = vsel %vm2694, %v2778, %v2782
        %2784 = vst [vmem:[#allocation3 + $0x28] sm:$0xf] %v2783
        %v2785 = vld [vmem:[#allocation3 + $0x2c] sm:$0x1]
        %v2786 = vsel %vm2700, %v2779, %v2785
        %2787 = vst [vmem:[#allocation3 + $0x2c] sm:$0x1] %v2786
        %v2788 = vmax.f32 %v2674, 0.0
        %v2789 = vpack.c.bf16 %v2788, %v2788
        %v2791 = vunpack.c.l.b16 %v2789
        %v2792 = vpack.c.b16 %v2791, %v2791
        %v2794 = vshrl.u32 %v2792, 16
        %v2796 = vrot.slane %v2794, 7
        %v2797 = vshll.u32 %v2792, 16
        %v2799 = vor.u32 %v2796, %v2797
        %v2800 = vrot.slane %v2796, 4
        %v2803 = vld [vmem:[#allocation3 + $0x30] sm:$0xf]
        %v2804 = vsel %vm2694, %v2799, %v2803
        %2805 = vst [vmem:[#allocation3 + $0x30] sm:$0xf] %v2804
        %v2806 = vld [vmem:[#allocation3 + $0x34] sm:$0x1]
        %v2807 = vsel %vm2700, %v2800, %v2806
        %2808 = vst [vmem:[#allocation3 + $0x34] sm:$0x1] %v2807
        %v2809 = vmax.f32 %v2675, 0.0
        %v2810 = vpack.c.bf16 %v2809, %v2809
        %v2812 = vunpack.c.l.b16 %v2810
        %v2813 = vpack.c.b16 %v2812, %v2812
        %v2815 = vshrl.u32 %v2813, 16
        %v2817 = vrot.slane %v2815, 7
        %v2818 = vshll.u32 %v2813, 16
        %v2820 = vor.u32 %v2817, %v2818
        %v2821 = vrot.slane %v2817, 4
        %v2824 = vld [vmem:[#allocation3 + $0x38] sm:$0xf]
        %v2825 = vsel %vm2694, %v2820, %v2824
        %2826 = vst [vmem:[#allocation3 + $0x38] sm:$0xf] %v2825
        %v2827 = vld [vmem:[#allocation3 + $0x3c] sm:$0x1]
        %v2828 = vsel %vm2700, %v2821, %v2827
        %2829 = vst [vmem:[#allocation3 + $0x3c] sm:$0x1] %v2828
        %v2830 = vmax.f32 %v2676, 0.0
        %v2831 = vpack.c.bf16 %v2830, %v2830
        %v2833 = vunpack.c.l.b16 %v2831
        %v2834 = vpack.c.b16 %v2833, %v2833
        %v2836 = vshrl.u32 %v2834, 16
        %v2838 = vrot.slane %v2836, 7
        %v2839 = vshll.u32 %v2834, 16
        %v2841 = vor.u32 %v2838, %v2839
        %v2842 = vrot.slane %v2838, 4
        %v2845 = vld [vmem:[#allocation3 + $0x40] sm:$0xf]
        %v2846 = vsel %vm2694, %v2841, %v2845
        %2847 = vst [vmem:[#allocation3 + $0x40] sm:$0xf] %v2846
        %v2848 = vld [vmem:[#allocation3 + $0x44] sm:$0x1]
        %v2849 = vsel %vm2700, %v2842, %v2848
        %2850 = vst [vmem:[#allocation3 + $0x44] sm:$0x1] %v2849
        %v2851 = vld [vmem:[%s3] sm:$0xf]
        %v2852 = vld [vmem:[%s3 + $0x4] sm:$0xf]
        %v2853 = vld [vmem:[%s3 + $0x8] sm:$0xf]
        %v2854 = vld [vmem:[%s3 + $0xc] sm:$0xf]
        %v2855 = vld [vmem:[%s3 + $0x10] sm:$0xf]
        %v2856 = vld [vmem:[%s3 + $0x14] sm:$0xf]
        %v2857 = vld [vmem:[%s3 + $0x18] sm:$0xf]
        %v2858 = vld [vmem:[%s3 + $0x1c] sm:$0xf]
        %v2859 = vld [vmem:[%s3 + $0x20] sm:$0xf]
        %v2860 = vld [vmem:[%s3 + $0x24] sm:$0xf]
        %v2861 = vld [vmem:[%s3 + $0x28] sm:$0xf]
        %v2862 = vld [vmem:[%s3 + $0x2c] sm:$0xf]
        %v2863 = vld [vmem:[%s3 + $0x30] sm:$0xf]
        %v2864 = vld [vmem:[%s3 + $0x34] sm:$0xf]
        %v2865 = vld [vmem:[%s3 + $0x38] sm:$0xf]
        %v2866 = vld [vmem:[%s3 + $0x3c] sm:$0xf]
        %v2867 = vld [vmem:[%s3 + $0x40] sm:$0xf]
        %v2868 = vld [vmem:[%s3 + $0x44] sm:$0xf]
        %v2869 = vld [vmem:[%s4] sm:$0x1]
        %v2870 = vld [vmem:[#allocation3] sm:$0xf]
        %v2871 = vld [vmem:[#allocation3 + $0x4] sm:$0xf]
        %v2872 = vld [vmem:[#allocation3 + $0x8] sm:$0xf]
        %v2873 = vld [vmem:[#allocation3 + $0xc] sm:$0xf]
        %v2874 = vld [vmem:[#allocation3 + $0x10] sm:$0xf]
        %v2875 = vld [vmem:[#allocation3 + $0x14] sm:$0xf]
        %v2876 = vld [vmem:[#allocation3 + $0x18] sm:$0xf]
        %v2877 = vld [vmem:[#allocation3 + $0x1c] sm:$0xf]
        %v2878 = vld [vmem:[#allocation3 + $0x20] sm:$0xf]
        %v2879 = vld [vmem:[#allocation3 + $0x24] sm:$0xf]
        %v2880 = vld [vmem:[#allocation3 + $0x28] sm:$0xf]
        %v2881 = vld [vmem:[#allocation3 + $0x2c] sm:$0xf]
        %v2882 = vld [vmem:[#allocation3 + $0x30] sm:$0xf]
        %v2883 = vld [vmem:[#allocation3 + $0x34] sm:$0xf]
        %v2884 = vld [vmem:[#allocation3 + $0x38] sm:$0xf]
        %v2885 = vld [vmem:[#allocation3 + $0x3c] sm:$0xf]
        %v2886 = vld [vmem:[#allocation3 + $0x40] sm:$0x1]
        %v2887 = vld [vmem:[#allocation3] sm:$0xe]
        %v2888 = vld [vmem:[#allocation3 + $0x40] sm:$0xf]
        %v2889 = vld [vmem:[#allocation3 + $0x44] sm:$0xf]
        %v2890 = vld [vmem:[#allocation3 + $0x48] sm:$0x1]
        %v2891 = vld [vmem:[#allocation3 + $0x8] sm:$0xe]
        %v2892 = vld [vmem:[#allocation3 + $0x48] sm:$0xf]
        %v2893 = vld [vmem:[#allocation3 + $0x4c] sm:$0xf]
        %v2894 = vld [vmem:[#allocation3 + $0x50] sm:$0x1]
        %v2895 = vld [vmem:[#allocation3 + $0x10] sm:$0xe]
        %v2912 = vunpack.c.l.b16 %v2870
        %v2913 = vunpack.c.l.b16 %v2871
        %v2914 = vunpack.c.l.b16 %v2872
        %v2915 = vunpack.c.l.b16 %v2873
        %v2916 = vunpack.c.l.b16 %v2874
        %v2917 = vunpack.c.l.b16 %v2875
        %v2918 = vunpack.c.l.b16 %v2876
        %v2919 = vunpack.c.l.b16 %v2877
        %v2920 = vunpack.c.l.b16 %v2878
        %v2921 = vunpack.c.l.b16 %v2879
        %v2922 = vunpack.c.l.b16 %v2880
        %v2923 = vunpack.c.l.b16 %v2881
        %v2924 = vunpack.c.l.b16 %v2882
        %v2925 = vunpack.c.l.b16 %v2883
        %v2926 = vunpack.c.l.b16 %v2884
        %v2927 = vunpack.c.l.b16 %v2885
        %v2928 = vpack.c.b16 %v2913, %v2912
        %v2929 = vpack.c.b16 %v2915, %v2914
        %v2930 = vpack.c.b16 %v2917, %v2916
        %v2931 = vpack.c.b16 %v2919, %v2918
        %v2932 = vpack.c.b16 %v2921, %v2920
        %v2933 = vpack.c.b16 %v2923, %v2922
        %v2934 = vpack.c.b16 %v2925, %v2924
        %v2935 = vpack.c.b16 %v2927, %v2926
        %v2937 = vunpack.c.l.b16 %v2886
        %v2938 = vpack.c.b16 %v2937, %v2937
        %v2940 = vshrl.u32 %v2928, 16
        %v2942 = vshll.u32 %v2928, 16
        %v2944 = vrot.slane %v2942, 1
        %v2945 = vor.u32 %v2940, %v2944
        %v2947 = vshll.u32 %v2929, 16
        %v2949 = vrot.slane %v2947, 1
        %v2950 = vsel %vm287, %v2945, %v2949
        %v2951 = vshrl.u32 %v2929, 16
        %v2953 = vor.u32 %v2951, %v2949
        %v2955 = vshll.u32 %v2930, 16
        %v2957 = vrot.slane %v2955, 1
        %v2958 = vsel %vm287, %v2953, %v2957
        %v2959 = vshrl.u32 %v2930, 16
        %v2961 = vor.u32 %v2959, %v2957
        %v2963 = vshll.u32 %v2931, 16
        %v2965 = vrot.slane %v2963, 1
        %v2966 = vsel %vm287, %v2961, %v2965
        %v2967 = vshrl.u32 %v2931, 16
        %v2969 = vor.u32 %v2967, %v2965
        %v2971 = vshll.u32 %v2932, 16
        %v2973 = vrot.slane %v2971, 1
        %v2974 = vsel %vm287, %v2969, %v2973
        %v2975 = vshrl.u32 %v2932, 16
        %v2977 = vor.u32 %v2975, %v2973
        %v2979 = vshll.u32 %v2933, 16
        %v2981 = vrot.slane %v2979, 1
        %v2982 = vsel %vm287, %v2977, %v2981
        %v2983 = vshrl.u32 %v2933, 16
        %v2985 = vor.u32 %v2983, %v2981
        %v2987 = vshll.u32 %v2934, 16
        %v2989 = vrot.slane %v2987, 1
        %v2990 = vsel %vm287, %v2985, %v2989
        %v2991 = vshrl.u32 %v2934, 16
        %v2993 = vor.u32 %v2991, %v2989
        %v2995 = vshll.u32 %v2935, 16
        %v2997 = vrot.slane %v2995, 1
        %v2998 = vsel %vm287, %v2993, %v2997
        %v2999 = vshrl.u32 %v2935, 16
        %v3001 = vor.u32 %v2999, %v2997
        %v3003 = vshll.u32 %v2938, 16
        %v3005 = vrot.slane %v3003, 1
        %v3006 = vsel %vm287, %v3001, %v3005
        %3007 = vrot.lane.b32.xlu0 %v2950, 16
        %v3008 = vpop.permute.xlu0 %3007
        %3009 = vrot.lane.b32.xlu0 %v2958, 16
        %v3010 = vpop.permute.xlu0 %3009
        %3011 = vrot.lane.b32.xlu0 %v2966, 16
        %v3012 = vpop.permute.xlu0 %3011
        %3013 = vrot.lane.b32.xlu0 %v2974, 16
        %v3014 = vpop.permute.xlu0 %3013
        %3015 = vrot.lane.b32.xlu0 %v2982, 16
        %v3016 = vpop.permute.xlu0 %3015
        %3017 = vrot.lane.b32.xlu0 %v2990, 16
        %v3018 = vpop.permute.xlu0 %3017
        %3019 = vrot.lane.b32.xlu0 %v2998, 16
        %v3020 = vpop.permute.xlu0 %3019
        %3021 = vrot.lane.b32.xlu0 %v3006, 16
        %v3022 = vpop.permute.xlu0 %3021
        %v3024 = vunpack.c.l.b16 %v2887
        %v3025 = vpack.c.b16 %v2913, %v3024
        %v3026 = vrot.slane %v3025, 1
        %v3027 = vrot.slane %v2929, 1
        %v3028 = vsel %vm355, %v3026, %v3027
        %v3029 = vrot.slane %v2930, 1
        %v3030 = vsel %vm355, %v3027, %v3029
        %v3031 = vrot.slane %v2931, 1
        %v3032 = vsel %vm355, %v3029, %v3031
        %v3033 = vrot.slane %v2932, 1
        %v3034 = vsel %vm355, %v3031, %v3033
        %v3035 = vrot.slane %v2933, 1
        %v3036 = vsel %vm355, %v3033, %v3035
        %v3037 = vrot.slane %v2934, 1
        %v3038 = vsel %vm355, %v3035, %v3037
        %v3039 = vrot.slane %v2935, 1
        %v3040 = vsel %vm355, %v3037, %v3039
        %v3041 = vrot.slane %v2938, 1
        %v3042 = vsel %vm355, %v3039, %v3041
        %3043 = vrot.lane.b32.xlu0 %v3028, 32
        %v3044 = vpop.permute.xlu0 %3043
        %3045 = vrot.lane.b32.xlu0 %v3030, 32
        %v3046 = vpop.permute.xlu0 %3045
        %3047 = vrot.lane.b32.xlu0 %v3032, 32
        %v3048 = vpop.permute.xlu0 %3047
        %3049 = vrot.lane.b32.xlu0 %v3034, 32
        %v3050 = vpop.permute.xlu0 %3049
        %3051 = vrot.lane.b32.xlu0 %v3036, 32
        %v3052 = vpop.permute.xlu0 %3051
        %3053 = vrot.lane.b32.xlu0 %v3038, 32
        %v3054 = vpop.permute.xlu0 %3053
        %3055 = vrot.lane.b32.xlu0 %v3040, 32
        %v3056 = vpop.permute.xlu0 %3055
        %3057 = vrot.lane.b32.xlu0 %v3042, 32
        %v3058 = vpop.permute.xlu0 %3057
        %v3061 = vunpack.c.l.b16 %v2888
        %v3062 = vunpack.c.l.b16 %v2889
        %v3063 = vpack.c.b16 %v3062, %v3061
        %3064 = vrot.lane.b32.xlu0 %v2929, 48
        %v3065 = vpop.permute.xlu0 %3064
        %3066 = vrot.lane.b32.xlu0 %v2930, 48
        %v3067 = vpop.permute.xlu0 %3066
        %3068 = vrot.lane.b32.xlu0 %v2931, 48
        %v3069 = vpop.permute.xlu0 %3068
        %3070 = vrot.lane.b32.xlu0 %v2932, 48
        %v3071 = vpop.permute.xlu0 %3070
        %3072 = vrot.lane.b32.xlu0 %v2933, 48
        %v3073 = vpop.permute.xlu0 %3072
        %3074 = vrot.lane.b32.xlu0 %v2934, 48
        %v3075 = vpop.permute.xlu0 %3074
        %3076 = vrot.lane.b32.xlu0 %v2935, 48
        %v3077 = vpop.permute.xlu0 %3076
        %3078 = vrot.lane.b32.xlu0 %v3063, 48
        %v3079 = vpop.permute.xlu0 %3078
        %v3081 = vunpack.c.l.b16 %v2890
        %v3082 = vpack.c.b16 %v3081, %v3081
        %v3084 = vshll.u32 %v3063, 16
        %v3086 = vrot.slane %v3084, 1
        %v3087 = vsel %vm287, %v3001, %v3086
        %v3088 = vshrl.u32 %v3063, 16
        %v3090 = vor.u32 %v3088, %v3086
        %v3092 = vshll.u32 %v3082, 16
        %v3094 = vrot.slane %v3092, 1
        %v3095 = vsel %vm287, %v3090, %v3094
        %3096 = vrot.lane.b32.xlu0 %v2958, 64
        %v3097 = vpop.permute.xlu0 %3096
        %3098 = vrot.lane.b32.xlu0 %v2966, 64
        %v3099 = vpop.permute.xlu0 %3098
        %3100 = vrot.lane.b32.xlu0 %v2974, 64
        %v3101 = vpop.permute.xlu0 %3100
        %3102 = vrot.lane.b32.xlu0 %v2982, 64
        %v3103 = vpop.permute.xlu0 %3102
        %3104 = vrot.lane.b32.xlu0 %v2990, 64
        %v3105 = vpop.permute.xlu0 %3104
        %3106 = vrot.lane.b32.xlu0 %v2998, 64
        %v3107 = vpop.permute.xlu0 %3106
        %3108 = vrot.lane.b32.xlu0 %v3087, 64
        %v3109 = vpop.permute.xlu0 %3108
        %3110 = vrot.lane.b32.xlu0 %v3095, 64
        %v3111 = vpop.permute.xlu0 %3110
        %v3113 = vunpack.c.l.b16 %v2891
        %v3114 = vpack.c.b16 %v2915, %v3113
        %v3115 = vrot.slane %v3114, 1
        %v3116 = vsel %vm355, %v3115, %v3029
        %v3117 = vrot.slane %v3063, 1
        %v3118 = vsel %vm355, %v3039, %v3117
        %v3119 = vrot.slane %v3082, 1
        %v3120 = vsel %vm355, %v3117, %v3119
        %3121 = vrot.lane.b32.xlu0 %v3116, 80
        %v3122 = vpop.permute.xlu0 %3121
        %3123 = vrot.lane.b32.xlu0 %v3032, 80
        %v3124 = vpop.permute.xlu0 %3123
        %3125 = vrot.lane.b32.xlu0 %v3034, 80
        %v3126 = vpop.permute.xlu0 %3125
        %3127 = vrot.lane.b32.xlu0 %v3036, 80
        %v3128 = vpop.permute.xlu0 %3127
        %3129 = vrot.lane.b32.xlu0 %v3038, 80
        %v3130 = vpop.permute.xlu0 %3129
        %3131 = vrot.lane.b32.xlu0 %v3040, 80
        %v3132 = vpop.permute.xlu0 %3131
        %3133 = vrot.lane.b32.xlu0 %v3118, 80
        %v3134 = vpop.permute.xlu0 %3133
        %3135 = vrot.lane.b32.xlu0 %v3120, 80
        %v3136 = vpop.permute.xlu0 %3135
        %v3139 = vunpack.c.l.b16 %v2892
        %v3140 = vunpack.c.l.b16 %v2893
        %v3141 = vpack.c.b16 %v3140, %v3139
        %3142 = vrot.lane.b32.xlu0 %v2930, 96
        %v3143 = vpop.permute.xlu0 %3142
        %3144 = vrot.lane.b32.xlu0 %v2931, 96
        %v3145 = vpop.permute.xlu0 %3144
        %3146 = vrot.lane.b32.xlu0 %v2932, 96
        %v3147 = vpop.permute.xlu0 %3146
        %3148 = vrot.lane.b32.xlu0 %v2933, 96
        %v3149 = vpop.permute.xlu0 %3148
        %3150 = vrot.lane.b32.xlu0 %v2934, 96
        %v3151 = vpop.permute.xlu0 %3150
        %3152 = vrot.lane.b32.xlu0 %v2935, 96
        %v3153 = vpop.permute.xlu0 %3152
        %3154 = vrot.lane.b32.xlu0 %v3063, 96
        %v3155 = vpop.permute.xlu0 %3154
        %3156 = vrot.lane.b32.xlu0 %v3141, 96
        %v3157 = vpop.permute.xlu0 %3156
        %v3159 = vunpack.c.l.b16 %v2894
        %v3160 = vpack.c.b16 %v3159, %v3159
        %v3162 = vshll.u32 %v3141, 16
        %v3164 = vrot.slane %v3162, 1
        %v3165 = vsel %vm287, %v3090, %v3164
        %v3166 = vshrl.u32 %v3141, 16
        %v3168 = vor.u32 %v3166, %v3164
        %v3170 = vshll.u32 %v3160, 16
        %v3172 = vrot.slane %v3170, 1
        %v3173 = vsel %vm287, %v3168, %v3172
        %3174 = vrot.lane.b32.xlu0 %v2966, 112
        %v3175 = vpop.permute.xlu0 %3174
        %3176 = vrot.lane.b32.xlu0 %v2974, 112
        %v3177 = vpop.permute.xlu0 %3176
        %3178 = vrot.lane.b32.xlu0 %v2982, 112
        %v3179 = vpop.permute.xlu0 %3178
        %3180 = vrot.lane.b32.xlu0 %v2990, 112
        %v3181 = vpop.permute.xlu0 %3180
        %3182 = vrot.lane.b32.xlu0 %v2998, 112
        %v3183 = vpop.permute.xlu0 %3182
        %3184 = vrot.lane.b32.xlu0 %v3087, 112
        %v3185 = vpop.permute.xlu0 %3184
        %3186 = vrot.lane.b32.xlu0 %v3165, 112
        %v3187 = vpop.permute.xlu0 %3186
        %3188 = vrot.lane.b32.xlu0 %v3173, 112
        %v3189 = vpop.permute.xlu0 %3188
        %v3191 = vunpack.c.l.b16 %v2895
        %v3192 = vpack.c.b16 %v2917, %v3191
        %v3193 = vrot.slane %v3192, 1
        %v3194 = vsel %vm355, %v3193, %v3031
        %v3195 = vrot.slane %v3141, 1
        %v3196 = vsel %vm355, %v3117, %v3195
        %v3197 = vrot.slane %v3160, 1
        %v3198 = vsel %vm355, %v3195, %v3197
        %v3200 = vsel %vm629, %v2928, %v3008
        %v3202 = vsel %vm629, %v2929, %v3010
        %v3204 = vsel %vm629, %v2930, %v3012
        %v3206 = vsel %vm629, %v2931, %v3014
        %v3208 = vsel %vm629, %v2932, %v3016
        %v3210 = vsel %vm629, %v2933, %v3018
        %v3212 = vsel %vm629, %v2934, %v3020
        %v3214 = vsel %vm629, %v2935, %v3022
        %v3216 = vsel %vm681, %v3200, %v3044
        %v3218 = vsel %vm681, %v3202, %v3046
        %v3220 = vsel %vm681, %v3204, %v3048
        %v3222 = vsel %vm681, %v3206, %v3050
        %v3224 = vsel %vm681, %v3208, %v3052
        %v3226 = vsel %vm681, %v3210, %v3054
        %v3228 = vsel %vm681, %v3212, %v3056
        %v3230 = vsel %vm681, %v3214, %v3058
        %vm3231 = vcmask 392192
        %v3233 = vsel %vm3231, %v3216, %v3065
        %v3235 = vsel %vm3231, %v3218, %v3067
        %v3237 = vsel %vm3231, %v3220, %v3069
        %v3239 = vsel %vm3231, %v3222, %v3071
        %v3241 = vsel %vm3231, %v3224, %v3073
        %v3243 = vsel %vm3231, %v3226, %v3075
        %v3245 = vsel %vm3231, %v3228, %v3077
        %v3247 = vsel %vm3231, %v3230, %v3079
        %vm3248 = vcmask 523264
        %v3250 = vsel %vm3248, %v3233, %v3097
        %v3252 = vsel %vm3248, %v3235, %v3099
        %v3254 = vsel %vm3248, %v3237, %v3101
        %v3256 = vsel %vm3248, %v3239, %v3103
        %v3258 = vsel %vm3248, %v3241, %v3105
        %v3260 = vsel %vm3248, %v3243, %v3107
        %v3262 = vsel %vm3248, %v3245, %v3109
        %v3264 = vsel %vm3248, %v3247, %v3111
        %vm3265 = vcmask 654336
        %v3267 = vsel %vm3265, %v3250, %v3122
        %v3269 = vsel %vm3265, %v3252, %v3124
        %v3271 = vsel %vm3265, %v3254, %v3126
        %v3273 = vsel %vm3265, %v3256, %v3128
        %v3275 = vsel %vm3265, %v3258, %v3130
        %v3277 = vsel %vm3265, %v3260, %v3132
        %v3279 = vsel %vm3265, %v3262, %v3134
        %v3281 = vsel %vm3265, %v3264, %v3136
        %vm3282 = vcmask 785408
        %v3284 = vsel %vm3282, %v3267, %v3143
        %v3286 = vsel %vm3282, %v3269, %v3145
        %v3288 = vsel %vm3282, %v3271, %v3147
        %v3290 = vsel %vm3282, %v3273, %v3149
        %v3292 = vsel %vm3282, %v3275, %v3151
        %v3294 = vsel %vm3282, %v3277, %v3153
        %v3296 = vsel %vm3282, %v3279, %v3155
        %v3298 = vsel %vm3282, %v3281, %v3157
        %vm3299 = vcmask 916480
        %v3301 = vsel %vm3299, %v3284, %v3175
        %v3304 = vsel %vm3299, %v3286, %v3177
        %v3307 = vsel %vm3299, %v3288, %v3179
        %v3310 = vsel %vm3299, %v3290, %v3181
        %v3313 = vsel %vm3299, %v3292, %v3183
        %v3316 = vsel %vm3299, %v3294, %v3185
        %v3319 = vsel %vm3299, %v3296, %v3187
        %v3322 = vsel %vm3299, %v3298, %v3189
        %v3325 = vlaneseq
        %v3326 = vshrl.u32 %v3325, 7
        %v3327 = vsub.s32 0, %v3326
        %v3328 = vrot.slane %v2869, %v3327
        %v3348 = vunpack.c.l.b16 %v2851
        %v3349 = vunpack.c.l.b16 %v2852
        %v3350 = vunpack.c.l.b16 %v2853
        %v3351 = vunpack.c.l.b16 %v2854
        %v3352 = vunpack.c.l.b16 %v2855
        %v3353 = vunpack.c.l.b16 %v2856
        %v3354 = vunpack.c.l.b16 %v2857
        %v3355 = vunpack.c.l.b16 %v2858
        %v3356 = vunpack.c.l.b16 %v2859
        %v3357 = vunpack.c.l.b16 %v2860
        %v3358 = vunpack.c.l.b16 %v2861
        %v3359 = vunpack.c.l.b16 %v2862
        %v3360 = vunpack.c.l.b16 %v2863
        %v3361 = vunpack.c.l.b16 %v2864
        %v3362 = vunpack.c.l.b16 %v2865
        %v3363 = vunpack.c.l.b16 %v2866
        %v3364 = vunpack.c.l.b16 %v2867
        %v3365 = vunpack.c.l.b16 %v2868
        %v3366 = vpack.c.b16 %v3349, %v3348
        %v3367 = vpack.c.b16 %v3351, %v3350
        %v3368 = vpack.c.b16 %v3353, %v3352
        %v3369 = vpack.c.b16 %v3355, %v3354
        %v3370 = vpack.c.b16 %v3357, %v3356
        %v3371 = vpack.c.b16 %v3359, %v3358
        %v3372 = vpack.c.b16 %v3361, %v3360
        %v3373 = vpack.c.b16 %v3363, %v3362
        %v3374 = vpack.c.b16 %v3365, %v3364
        %v3385 = vsel %vm629, %v3194, 0
        %v3388 = vsel %vm629, %v3034, 0
        %v3391 = vsel %vm629, %v3036, 0
        %v3394 = vsel %vm629, %v3038, 0
        %v3397 = vsel %vm629, %v3040, 0
        %v3400 = vsel %vm629, %v3118, 0
        %v3403 = vsel %vm629, %v3196, 0
        %v3406 = vsel %vm629, %v3198, 0
        %3408 = vmatprep.subr.bf16.mxu0 0
        %3409 = vmatpush1.bf16.msra.mxu0 %v3373
        %3410 = vmatprep.subr.bf16.mxu0 0
        %3411 = vmatpush1.bf16.msra.mxu0 %v3372
        %3412 = vmatprep.subr.bf16.mxu0 0
        %3413 = vmatpush1.bf16.msra.mxu0 %v3371
        %3414 = vmatprep.subr.bf16.mxu0 0
        %3415 = vmatpush1.bf16.msra.mxu0 %v3370
        %3416 = vmatprep.subr.bf16.mxu0 0
        %3417 = vmatpush1.bf16.msra.mxu0 %v3369
        %3418 = vmatprep.subr.bf16.mxu0 0
        %3419 = vmatpush1.bf16.msra.mxu0 %v3368
        %3420 = vmatprep.subr.bf16.mxu0 0
        %3421 = vmatpush1.bf16.msra.mxu0 %v3367
        %3422 = vmatprep.subr.bf16.mxu0 0
        %3423 = vmatpush1.bf16.msra.mxu0 %v3366
        %3424 = vmatprep.subr.bf16.mxu0 0
        %3425 = vmatpush2.bf16.msra.mxu0 0
        %3426 = vmatprep.subr.bf16.mxu0 0
        %3427 = vmatpush2.bf16.msra.mxu0 0
        %3428 = vmatprep.subr.bf16.mxu0 0
        %3429 = vmatpush2.bf16.msra.mxu0 0
        %3430 = vmatprep.subr.bf16.mxu0 0
        %3431 = vmatpush2.bf16.msra.mxu0 0
        %3432 = vmatprep.subr.bf16.mxu0 0
        %3433 = vmatpush2.bf16.msra.mxu0 0
        %3434 = vmatprep.subr.bf16.mxu0 0
        %3435 = vmatpush2.bf16.msra.mxu0 0
        %3436 = vmatprep.subr.bf16.mxu0 0
        %3437 = vmatpush2.bf16.msra.mxu0 0
        %3438 = vmatprep.subr.bf16.mxu0 0
        %3439 = vmatpush2.bf16.msra.mxu0 %v3374
        %3440 = vmatprep.mubr.bf16.mxu0 %v3385
        %3441 = vmatmul.mubr.bf16.gmra.mxu0 %v3301
        %v3442 = vpop.f32.mrf.mxu0
        %v3443 = vadd.f32 %v3328, %v3442
        %v3444 = vpop.f32.mrf.mxu0
        %v3445 = vpop.f32.mrf.mxu0
        %v3446 = vpop.f32.mrf.mxu0
        %3447 = vmatprep.mubr.bf16.mxu0 %v3388
        %3448 = vmatmul.mubr.bf16.gmra.mxu0 %v3304
        %v3449 = vpop.f32.mrf.mxu0
        %v3450 = vadd.f32 %v3328, %v3449
        %v3451 = vpop.f32.mrf.mxu0
        %v3452 = vpop.f32.mrf.mxu0
        %v3453 = vpop.f32.mrf.mxu0
        %3454 = vmatprep.mubr.bf16.mxu0 %v3391
        %3455 = vmatmul.mubr.bf16.gmra.mxu0 %v3307
        %v3456 = vpop.f32.mrf.mxu0
        %v3457 = vadd.f32 %v3328, %v3456
        %v3458 = vpop.f32.mrf.mxu0
        %v3459 = vpop.f32.mrf.mxu0
        %v3460 = vpop.f32.mrf.mxu0
        %3461 = vmatprep.mubr.bf16.mxu0 %v3394
        %3462 = vmatmul.mubr.bf16.gmra.mxu0 %v3310
        %v3463 = vpop.f32.mrf.mxu0
        %v3464 = vadd.f32 %v3328, %v3463
        %v3465 = vpop.f32.mrf.mxu0
        %v3466 = vpop.f32.mrf.mxu0
        %v3467 = vpop.f32.mrf.mxu0
        %3468 = vmatprep.mubr.bf16.mxu0 %v3397
        %3469 = vmatmul.mubr.bf16.gmra.mxu0 %v3313
        %v3470 = vpop.f32.mrf.mxu0
        %v3471 = vadd.f32 %v3328, %v3470
        %v3472 = vpop.f32.mrf.mxu0
        %v3473 = vpop.f32.mrf.mxu0
        %v3474 = vpop.f32.mrf.mxu0
        %3475 = vmatprep.mubr.bf16.mxu0 %v3400
        %3476 = vmatmul.mubr.bf16.gmra.mxu0 %v3316
        %v3477 = vpop.f32.mrf.mxu0
        %v3478 = vadd.f32 %v3328, %v3477
        %v3479 = vpop.f32.mrf.mxu0
        %v3480 = vpop.f32.mrf.mxu0
        %v3481 = vpop.f32.mrf.mxu0
        %3482 = vmatprep.mubr.bf16.mxu0 %v3403
        %3483 = vmatmul.mubr.bf16.gmra.mxu0 %v3319
        %v3484 = vpop.f32.mrf.mxu0
        %v3485 = vadd.f32 %v3328, %v3484
        %v3486 = vpop.f32.mrf.mxu0
        %v3487 = vpop.f32.mrf.mxu0
        %v3488 = vpop.f32.mrf.mxu0
        %3489 = vmatprep.mubr.bf16.mxu0 %v3406
        %3490 = vmatmul.mubr.bf16.gmra.mxu0 %v3322
        %v3491 = vpop.f32.mrf.mxu0
        %v3492 = vadd.f32 %v3328, %v3491
        %v3493 = vpop.f32.mrf.mxu0
        %v3494 = vpop.f32.mrf.mxu0
        %v3495 = vpop.f32.mrf.mxu0
        %3496 = vdwg.mxu0
        %v3497 = vmax.f32 %v3443, 0.0
        %v3498 = vpack.c.bf16 %v3497, %v3497
        %v3500 = vunpack.c.l.b16 %v3498
        %v3501 = vpack.c.b16 %v3500, %v3500
        %v3503 = vshrl.u32 %v3501, 16
        %v3505 = vrot.slane %v3503, 7
        %v3506 = vshll.u32 %v3501, 16
        %v3508 = vor.u32 %v3505, %v3506
        %v3509 = vrot.slane %v3505, 4
        %v3512 = vld [vmem:[#allocation3 + $0x8] sm:$0xf]
        %v3513 = vsel %vm2694, %v3508, %v3512
        %3514 = vst [vmem:[#allocation3 + $0x8] sm:$0xf] %v3513
        %v3515 = vld [vmem:[#allocation3 + $0xc] sm:$0x1]
        %v3516 = vsel %vm2700, %v3509, %v3515
        %3517 = vst [vmem:[#allocation3 + $0xc] sm:$0x1] %v3516
        %v3518 = vmax.f32 %v3450, 0.0
        %v3519 = vpack.c.bf16 %v3518, %v3518
        %v3521 = vunpack.c.l.b16 %v3519
        %v3522 = vpack.c.b16 %v3521, %v3521
        %v3524 = vshrl.u32 %v3522, 16
        %v3526 = vrot.slane %v3524, 7
        %v3527 = vshll.u32 %v3522, 16
        %v3529 = vor.u32 %v3526, %v3527
        %v3530 = vrot.slane %v3526, 4
        %v3533 = vld [vmem:[#allocation3 + $0x10] sm:$0xf]
        %v3534 = vsel %vm2694, %v3529, %v3533
        %3535 = vst [vmem:[#allocation3 + $0x10] sm:$0xf] %v3534
        %v3536 = vld [vmem:[#allocation3 + $0x14] sm:$0x1]
        %v3537 = vsel %vm2700, %v3530, %v3536
        %3538 = vst [vmem:[#allocation3 + $0x14] sm:$0x1] %v3537
        %v3539 = vmax.f32 %v3457, 0.0
        %v3540 = vpack.c.bf16 %v3539, %v3539
        %v3542 = vunpack.c.l.b16 %v3540
        %v3543 = vpack.c.b16 %v3542, %v3542
        %v3545 = vshrl.u32 %v3543, 16
        %v3547 = vrot.slane %v3545, 7
        %v3548 = vshll.u32 %v3543, 16
        %v3550 = vor.u32 %v3547, %v3548
        %v3551 = vrot.slane %v3547, 4
        %v3554 = vld [vmem:[#allocation3 + $0x18] sm:$0xf]
        %v3555 = vsel %vm2694, %v3550, %v3554
        %3556 = vst [vmem:[#allocation3 + $0x18] sm:$0xf] %v3555
        %v3557 = vld [vmem:[#allocation3 + $0x1c] sm:$0x1]
        %v3558 = vsel %vm2700, %v3551, %v3557
        %3559 = vst [vmem:[#allocation3 + $0x1c] sm:$0x1] %v3558
        %v3560 = vmax.f32 %v3464, 0.0
        %v3561 = vpack.c.bf16 %v3560, %v3560
        %v3563 = vunpack.c.l.b16 %v3561
        %v3564 = vpack.c.b16 %v3563, %v3563
        %v3566 = vshrl.u32 %v3564, 16
        %v3568 = vrot.slane %v3566, 7
        %v3569 = vshll.u32 %v3564, 16
        %v3571 = vor.u32 %v3568, %v3569
        %v3572 = vrot.slane %v3568, 4
        %v3575 = vld [vmem:[#allocation3 + $0x20] sm:$0xf]
        %v3576 = vsel %vm2694, %v3571, %v3575
        %3577 = vst [vmem:[#allocation3 + $0x20] sm:$0xf] %v3576
        %v3578 = vld [vmem:[#allocation3 + $0x24] sm:$0x1]
        %v3579 = vsel %vm2700, %v3572, %v3578
        %3580 = vst [vmem:[#allocation3 + $0x24] sm:$0x1] %v3579
        %v3581 = vmax.f32 %v3471, 0.0
        %v3582 = vpack.c.bf16 %v3581, %v3581
        %v3584 = vunpack.c.l.b16 %v3582
        %v3585 = vpack.c.b16 %v3584, %v3584
        %v3587 = vshrl.u32 %v3585, 16
        %v3589 = vrot.slane %v3587, 7
        %v3590 = vshll.u32 %v3585, 16
        %v3592 = vor.u32 %v3589, %v3590
        %v3593 = vrot.slane %v3589, 4
        %v3596 = vld [vmem:[#allocation3 + $0x28] sm:$0xf]
        %v3597 = vsel %vm2694, %v3592, %v3596
        %3598 = vst [vmem:[#allocation3 + $0x28] sm:$0xf] %v3597
        %v3599 = vld [vmem:[#allocation3 + $0x2c] sm:$0x1]
        %v3600 = vsel %vm2700, %v3593, %v3599
        %3601 = vst [vmem:[#allocation3 + $0x2c] sm:$0x1] %v3600
        %v3602 = vmax.f32 %v3478, 0.0
        %v3603 = vpack.c.bf16 %v3602, %v3602
        %v3605 = vunpack.c.l.b16 %v3603
        %v3606 = vpack.c.b16 %v3605, %v3605
        %v3608 = vshrl.u32 %v3606, 16
        %v3610 = vrot.slane %v3608, 7
        %v3611 = vshll.u32 %v3606, 16
        %v3613 = vor.u32 %v3610, %v3611
        %v3614 = vrot.slane %v3610, 4
        %v3617 = vld [vmem:[#allocation3 + $0x30] sm:$0xf]
        %v3618 = vsel %vm2694, %v3613, %v3617
        %3619 = vst [vmem:[#allocation3 + $0x30] sm:$0xf] %v3618
        %v3620 = vld [vmem:[#allocation3 + $0x34] sm:$0x1]
        %v3621 = vsel %vm2700, %v3614, %v3620
        %3622 = vst [vmem:[#allocation3 + $0x34] sm:$0x1] %v3621
        %v3623 = vmax.f32 %v3485, 0.0
        %v3624 = vpack.c.bf16 %v3623, %v3623
        %v3626 = vunpack.c.l.b16 %v3624
        %v3627 = vpack.c.b16 %v3626, %v3626
        %v3629 = vshrl.u32 %v3627, 16
        %v3631 = vrot.slane %v3629, 7
        %v3632 = vshll.u32 %v3627, 16
        %v3634 = vor.u32 %v3631, %v3632
        %v3635 = vrot.slane %v3631, 4
        %v3638 = vld [vmem:[#allocation3 + $0x38] sm:$0xf]
        %v3639 = vsel %vm2694, %v3634, %v3638
        %3640 = vst [vmem:[#allocation3 + $0x38] sm:$0xf] %v3639
        %v3641 = vld [vmem:[#allocation3 + $0x3c] sm:$0x1]
        %v3642 = vsel %vm2700, %v3635, %v3641
        %3643 = vst [vmem:[#allocation3 + $0x3c] sm:$0x1] %v3642
        %v3644 = vmax.f32 %v3492, 0.0
        %v3645 = vpack.c.bf16 %v3644, %v3644
        %v3647 = vunpack.c.l.b16 %v3645
        %v3648 = vpack.c.b16 %v3647, %v3647
        %v3650 = vshrl.u32 %v3648, 16
        %v3652 = vrot.slane %v3650, 7
        %v3653 = vshll.u32 %v3648, 16
        %v3655 = vor.u32 %v3652, %v3653
        %v3656 = vrot.slane %v3652, 4
        %v3659 = vld [vmem:[#allocation3 + $0x40] sm:$0xf]
        %v3660 = vsel %vm2694, %v3655, %v3659
        %3661 = vst [vmem:[#allocation3 + $0x40] sm:$0xf] %v3660
        %v3662 = vld [vmem:[#allocation3 + $0x44] sm:$0x1]
        %v3663 = vsel %vm2700, %v3656, %v3662
        %3664 = vst [vmem:[#allocation3 + $0x44] sm:$0x1] %v3663
        %s3665 = scalar_lea.vmem %s3, 72
        %v3666 = vld [vmem:[%s3665] sm:$0xf]
        %v3667 = vld [vmem:[%s3665 + $0x4] sm:$0xf]
        %v3668 = vld [vmem:[%s3665 + $0x8] sm:$0xf]
        %v3669 = vld [vmem:[%s3665 + $0xc] sm:$0xf]
        %v3670 = vld [vmem:[%s3665 + $0x10] sm:$0xf]
        %v3671 = vld [vmem:[%s3665 + $0x14] sm:$0xf]
        %v3672 = vld [vmem:[%s3665 + $0x18] sm:$0xf]
        %v3673 = vld [vmem:[%s3665 + $0x1c] sm:$0xf]
        %v3674 = vld [vmem:[%s3665 + $0x20] sm:$0xf]
        %v3675 = vld [vmem:[%s3665 + $0x24] sm:$0xf]
        %v3676 = vld [vmem:[%s3665 + $0x28] sm:$0xf]
        %v3677 = vld [vmem:[%s3665 + $0x2c] sm:$0xf]
        %v3678 = vld [vmem:[%s3665 + $0x30] sm:$0xf]
        %v3679 = vld [vmem:[%s3665 + $0x34] sm:$0xf]
        %v3680 = vld [vmem:[%s3665 + $0x38] sm:$0xf]
        %v3681 = vld [vmem:[%s3665 + $0x3c] sm:$0xf]
        %v3682 = vld [vmem:[%s3665 + $0x40] sm:$0xf]
        %v3683 = vld [vmem:[%s3665 + $0x44] sm:$0xf]
        %s3684 = scalar_lea.vmem %s4, 1
        %v3685 = vld [vmem:[%s3684] sm:$0x1]
        %v3686 = vld [vmem:[#allocation3] sm:$0xf]
        %v3687 = vld [vmem:[#allocation3 + $0x4] sm:$0xf]
        %v3688 = vld [vmem:[#allocation3 + $0x8] sm:$0xf]
        %v3689 = vld [vmem:[#allocation3 + $0xc] sm:$0xf]
        %v3690 = vld [vmem:[#allocation3 + $0x10] sm:$0xf]
        %v3691 = vld [vmem:[#allocation3 + $0x14] sm:$0xf]
        %v3692 = vld [vmem:[#allocation3 + $0x18] sm:$0xf]
        %v3693 = vld [vmem:[#allocation3 + $0x1c] sm:$0xf]
        %v3694 = vld [vmem:[#allocation3 + $0x20] sm:$0xf]
        %v3695 = vld [vmem:[#allocation3 + $0x24] sm:$0xf]
        %v3696 = vld [vmem:[#allocation3 + $0x28] sm:$0xf]
        %v3697 = vld [vmem:[#allocation3 + $0x2c] sm:$0xf]
        %v3698 = vld [vmem:[#allocation3 + $0x30] sm:$0xf]
        %v3699 = vld [vmem:[#allocation3 + $0x34] sm:$0xf]
        %v3700 = vld [vmem:[#allocation3 + $0x38] sm:$0xf]
        %v3701 = vld [vmem:[#allocation3 + $0x3c] sm:$0xf]
        %v3702 = vld [vmem:[#allocation3 + $0x40] sm:$0x1]
        %v3703 = vld [vmem:[#allocation3] sm:$0xe]
        %v3704 = vld [vmem:[#allocation3 + $0x40] sm:$0xf]
        %v3705 = vld [vmem:[#allocation3 + $0x44] sm:$0xf]
        %v3706 = vld [vmem:[#allocation3 + $0x48] sm:$0x1]
        %v3707 = vld [vmem:[#allocation3 + $0x8] sm:$0xe]
        %v3708 = vld [vmem:[#allocation3 + $0x48] sm:$0xf]
        %v3709 = vld [vmem:[#allocation3 + $0x4c] sm:$0xf]
        %v3710 = vld [vmem:[#allocation3 + $0x50] sm:$0x1]
        %v3711 = vld [vmem:[#allocation3 + $0x10] sm:$0xe]
        %v3728 = vunpack.c.l.b16 %v3686
        %v3729 = vunpack.c.l.b16 %v3687
        %v3730 = vunpack.c.l.b16 %v3688
        %v3731 = vunpack.c.l.b16 %v3689
        %v3732 = vunpack.c.l.b16 %v3690
        %v3733 = vunpack.c.l.b16 %v3691
        %v3734 = vunpack.c.l.b16 %v3692
        %v3735 = vunpack.c.l.b16 %v3693
        %v3736 = vunpack.c.l.b16 %v3694
        %v3737 = vunpack.c.l.b16 %v3695
        %v3738 = vunpack.c.l.b16 %v3696
        %v3739 = vunpack.c.l.b16 %v3697
        %v3740 = vunpack.c.l.b16 %v3698
        %v3741 = vunpack.c.l.b16 %v3699
        %v3742 = vunpack.c.l.b16 %v3700
        %v3743 = vunpack.c.l.b16 %v3701
        %v3744 = vpack.c.b16 %v3729, %v3728
        %v3745 = vpack.c.b16 %v3731, %v3730
        %v3746 = vpack.c.b16 %v3733, %v3732
        %v3747 = vpack.c.b16 %v3735, %v3734
        %v3748 = vpack.c.b16 %v3737, %v3736
        %v3749 = vpack.c.b16 %v3739, %v3738
        %v3750 = vpack.c.b16 %v3741, %v3740
        %v3751 = vpack.c.b16 %v3743, %v3742
        %v3753 = vunpack.c.l.b16 %v3702
        %v3754 = vpack.c.b16 %v3753, %v3753
        %v3756 = vshrl.u32 %v3744, 16
        %v3758 = vshll.u32 %v3744, 16
        %v3760 = vrot.slane %v3758, 1
        %v3761 = vor.u32 %v3756, %v3760
        %v3763 = vshll.u32 %v3745, 16
        %v3765 = vrot.slane %v3763, 1
        %v3766 = vsel %vm287, %v3761, %v3765
        %v3767 = vshrl.u32 %v3745, 16
        %v3769 = vor.u32 %v3767, %v3765
        %v3771 = vshll.u32 %v3746, 16
        %v3773 = vrot.slane %v3771, 1
        %v3774 = vsel %vm287, %v3769, %v3773
        %v3775 = vshrl.u32 %v3746, 16
        %v3777 = vor.u32 %v3775, %v3773
        %v3779 = vshll.u32 %v3747, 16
        %v3781 = vrot.slane %v3779, 1
        %v3782 = vsel %vm287, %v3777, %v3781
        %v3783 = vshrl.u32 %v3747, 16
        %v3785 = vor.u32 %v3783, %v3781
        %v3787 = vshll.u32 %v3748, 16
        %v3789 = vrot.slane %v3787, 1
        %v3790 = vsel %vm287, %v3785, %v3789
        %v3791 = vshrl.u32 %v3748, 16
        %v3793 = vor.u32 %v3791, %v3789
        %v3795 = vshll.u32 %v3749, 16
        %v3797 = vrot.slane %v3795, 1
        %v3798 = vsel %vm287, %v3793, %v3797
        %v3799 = vshrl.u32 %v3749, 16
        %v3801 = vor.u32 %v3799, %v3797
        %v3803 = vshll.u32 %v3750, 16
        %v3805 = vrot.slane %v3803, 1
        %v3806 = vsel %vm287, %v3801, %v3805
        %v3807 = vshrl.u32 %v3750, 16
        %v3809 = vor.u32 %v3807, %v3805
        %v3811 = vshll.u32 %v3751, 16
        %v3813 = vrot.slane %v3811, 1
        %v3814 = vsel %vm287, %v3809, %v3813
        %v3815 = vshrl.u32 %v3751, 16
        %v3817 = vor.u32 %v3815, %v3813
        %v3819 = vshll.u32 %v3754, 16
        %v3821 = vrot.slane %v3819, 1
        %v3822 = vsel %vm287, %v3817, %v3821
        %3823 = vrot.lane.b32.xlu0 %v3766, 16
        %v3824 = vpop.permute.xlu0 %3823
        %3825 = vrot.lane.b32.xlu0 %v3774, 16
        %v3826 = vpop.permute.xlu0 %3825
        %3827 = vrot.lane.b32.xlu0 %v3782, 16
        %v3828 = vpop.permute.xlu0 %3827
        %3829 = vrot.lane.b32.xlu0 %v3790, 16
        %v3830 = vpop.permute.xlu0 %3829
        %3831 = vrot.lane.b32.xlu0 %v3798, 16
        %v3832 = vpop.permute.xlu0 %3831
        %3833 = vrot.lane.b32.xlu0 %v3806, 16
        %v3834 = vpop.permute.xlu0 %3833
        %3835 = vrot.lane.b32.xlu0 %v3814, 16
        %v3836 = vpop.permute.xlu0 %3835
        %3837 = vrot.lane.b32.xlu0 %v3822, 16
        %v3838 = vpop.permute.xlu0 %3837
        %v3840 = vunpack.c.l.b16 %v3703
        %v3841 = vpack.c.b16 %v3729, %v3840
        %v3842 = vrot.slane %v3841, 1
        %v3843 = vrot.slane %v3745, 1
        %v3844 = vsel %vm355, %v3842, %v3843
        %v3845 = vrot.slane %v3746, 1
        %v3846 = vsel %vm355, %v3843, %v3845
        %v3847 = vrot.slane %v3747, 1
        %v3848 = vsel %vm355, %v3845, %v3847
        %v3849 = vrot.slane %v3748, 1
        %v3850 = vsel %vm355, %v3847, %v3849
        %v3851 = vrot.slane %v3749, 1
        %v3852 = vsel %vm355, %v3849, %v3851
        %v3853 = vrot.slane %v3750, 1
        %v3854 = vsel %vm355, %v3851, %v3853
        %v3855 = vrot.slane %v3751, 1
        %v3856 = vsel %vm355, %v3853, %v3855
        %v3857 = vrot.slane %v3754, 1
        %v3858 = vsel %vm355, %v3855, %v3857
        %3859 = vrot.lane.b32.xlu0 %v3844, 32
        %v3860 = vpop.permute.xlu0 %3859
        %3861 = vrot.lane.b32.xlu0 %v3846, 32
        %v3862 = vpop.permute.xlu0 %3861
        %3863 = vrot.lane.b32.xlu0 %v3848, 32
        %v3864 = vpop.permute.xlu0 %3863
        %3865 = vrot.lane.b32.xlu0 %v3850, 32
        %v3866 = vpop.permute.xlu0 %3865
        %3867 = vrot.lane.b32.xlu0 %v3852, 32
        %v3868 = vpop.permute.xlu0 %3867
        %3869 = vrot.lane.b32.xlu0 %v3854, 32
        %v3870 = vpop.permute.xlu0 %3869
        %3871 = vrot.lane.b32.xlu0 %v3856, 32
        %v3872 = vpop.permute.xlu0 %3871
        %3873 = vrot.lane.b32.xlu0 %v3858, 32
        %v3874 = vpop.permute.xlu0 %3873
        %v3877 = vunpack.c.l.b16 %v3704
        %v3878 = vunpack.c.l.b16 %v3705
        %v3879 = vpack.c.b16 %v3878, %v3877
        %3880 = vrot.lane.b32.xlu0 %v3745, 48
        %v3881 = vpop.permute.xlu0 %3880
        %3882 = vrot.lane.b32.xlu0 %v3746, 48
        %v3883 = vpop.permute.xlu0 %3882
        %3884 = vrot.lane.b32.xlu0 %v3747, 48
        %v3885 = vpop.permute.xlu0 %3884
        %3886 = vrot.lane.b32.xlu0 %v3748, 48
        %v3887 = vpop.permute.xlu0 %3886
        %3888 = vrot.lane.b32.xlu0 %v3749, 48
        %v3889 = vpop.permute.xlu0 %3888
        %3890 = vrot.lane.b32.xlu0 %v3750, 48
        %v3891 = vpop.permute.xlu0 %3890
        %3892 = vrot.lane.b32.xlu0 %v3751, 48
        %v3893 = vpop.permute.xlu0 %3892
        %3894 = vrot.lane.b32.xlu0 %v3879, 48
        %v3895 = vpop.permute.xlu0 %3894
        %v3897 = vunpack.c.l.b16 %v3706
        %v3898 = vpack.c.b16 %v3897, %v3897
        %v3900 = vshll.u32 %v3879, 16
        %v3902 = vrot.slane %v3900, 1
        %v3903 = vsel %vm287, %v3817, %v3902
        %v3904 = vshrl.u32 %v3879, 16
        %v3906 = vor.u32 %v3904, %v3902
        %v3908 = vshll.u32 %v3898, 16
        %v3910 = vrot.slane %v3908, 1
        %v3911 = vsel %vm287, %v3906, %v3910
        %3912 = vrot.lane.b32.xlu0 %v3774, 64
        %v3913 = vpop.permute.xlu0 %3912
        %3914 = vrot.lane.b32.xlu0 %v3782, 64
        %v3915 = vpop.permute.xlu0 %3914
        %3916 = vrot.lane.b32.xlu0 %v3790, 64
        %v3917 = vpop.permute.xlu0 %3916
        %3918 = vrot.lane.b32.xlu0 %v3798, 64
        %v3919 = vpop.permute.xlu0 %3918
        %3920 = vrot.lane.b32.xlu0 %v3806, 64
        %v3921 = vpop.permute.xlu0 %3920
        %3922 = vrot.lane.b32.xlu0 %v3814, 64
        %v3923 = vpop.permute.xlu0 %3922
        %3924 = vrot.lane.b32.xlu0 %v3903, 64
        %v3925 = vpop.permute.xlu0 %3924
        %3926 = vrot.lane.b32.xlu0 %v3911, 64
        %v3927 = vpop.permute.xlu0 %3926
        %v3929 = vunpack.c.l.b16 %v3707
        %v3930 = vpack.c.b16 %v3731, %v3929
        %v3931 = vrot.slane %v3930, 1
        %v3932 = vsel %vm355, %v3931, %v3845
        %v3933 = vrot.slane %v3879, 1
        %v3934 = vsel %vm355, %v3855, %v3933
        %v3935 = vrot.slane %v3898, 1
        %v3936 = vsel %vm355, %v3933, %v3935
        %3937 = vrot.lane.b32.xlu0 %v3932, 80
        %v3938 = vpop.permute.xlu0 %3937
        %3939 = vrot.lane.b32.xlu0 %v3848, 80
        %v3940 = vpop.permute.xlu0 %3939
        %3941 = vrot.lane.b32.xlu0 %v3850, 80
        %v3942 = vpop.permute.xlu0 %3941
        %3943 = vrot.lane.b32.xlu0 %v3852, 80
        %v3944 = vpop.permute.xlu0 %3943
        %3945 = vrot.lane.b32.xlu0 %v3854, 80
        %v3946 = vpop.permute.xlu0 %3945
        %3947 = vrot.lane.b32.xlu0 %v3856, 80
        %v3948 = vpop.permute.xlu0 %3947
        %3949 = vrot.lane.b32.xlu0 %v3934, 80
        %v3950 = vpop.permute.xlu0 %3949
        %3951 = vrot.lane.b32.xlu0 %v3936, 80
        %v3952 = vpop.permute.xlu0 %3951
        %v3955 = vunpack.c.l.b16 %v3708
        %v3956 = vunpack.c.l.b16 %v3709
        %v3957 = vpack.c.b16 %v3956, %v3955
        %3958 = vrot.lane.b32.xlu0 %v3746, 96
        %v3959 = vpop.permute.xlu0 %3958
        %3960 = vrot.lane.b32.xlu0 %v3747, 96
        %v3961 = vpop.permute.xlu0 %3960
        %3962 = vrot.lane.b32.xlu0 %v3748, 96
        %v3963 = vpop.permute.xlu0 %3962
        %3964 = vrot.lane.b32.xlu0 %v3749, 96
        %v3965 = vpop.permute.xlu0 %3964
        %3966 = vrot.lane.b32.xlu0 %v3750, 96
        %v3967 = vpop.permute.xlu0 %3966
        %3968 = vrot.lane.b32.xlu0 %v3751, 96
        %v3969 = vpop.permute.xlu0 %3968
        %3970 = vrot.lane.b32.xlu0 %v3879, 96
        %v3971 = vpop.permute.xlu0 %3970
        %3972 = vrot.lane.b32.xlu0 %v3957, 96
        %v3973 = vpop.permute.xlu0 %3972
        %v3975 = vunpack.c.l.b16 %v3710
        %v3976 = vpack.c.b16 %v3975, %v3975
        %v3978 = vshll.u32 %v3957, 16
        %v3980 = vrot.slane %v3978, 1
        %v3981 = vsel %vm287, %v3906, %v3980
        %v3982 = vshrl.u32 %v3957, 16
        %v3984 = vor.u32 %v3982, %v3980
        %v3986 = vshll.u32 %v3976, 16
        %v3988 = vrot.slane %v3986, 1
        %v3989 = vsel %vm287, %v3984, %v3988
        %3990 = vrot.lane.b32.xlu0 %v3782, 112
        %v3991 = vpop.permute.xlu0 %3990
        %3992 = vrot.lane.b32.xlu0 %v3790, 112
        %v3993 = vpop.permute.xlu0 %3992
        %3994 = vrot.lane.b32.xlu0 %v3798, 112
        %v3995 = vpop.permute.xlu0 %3994
        %3996 = vrot.lane.b32.xlu0 %v3806, 112
        %v3997 = vpop.permute.xlu0 %3996
        %3998 = vrot.lane.b32.xlu0 %v3814, 112
        %v3999 = vpop.permute.xlu0 %3998
        %4000 = vrot.lane.b32.xlu0 %v3903, 112
        %v4001 = vpop.permute.xlu0 %4000
        %4002 = vrot.lane.b32.xlu0 %v3981, 112
        %v4003 = vpop.permute.xlu0 %4002
        %4004 = vrot.lane.b32.xlu0 %v3989, 112
        %v4005 = vpop.permute.xlu0 %4004
        %v4007 = vunpack.c.l.b16 %v3711
        %v4008 = vpack.c.b16 %v3733, %v4007
        %v4009 = vrot.slane %v4008, 1
        %v4010 = vsel %vm355, %v4009, %v3847
        %v4011 = vrot.slane %v3957, 1
        %v4012 = vsel %vm355, %v3933, %v4011
        %v4013 = vrot.slane %v3976, 1
        %v4014 = vsel %vm355, %v4011, %v4013
        %v4016 = vsel %vm629, %v3744, %v3824
        %v4018 = vsel %vm629, %v3745, %v3826
        %v4020 = vsel %vm629, %v3746, %v3828
        %v4022 = vsel %vm629, %v3747, %v3830
        %v4024 = vsel %vm629, %v3748, %v3832
        %v4026 = vsel %vm629, %v3749, %v3834
        %v4028 = vsel %vm629, %v3750, %v3836
        %v4030 = vsel %vm629, %v3751, %v3838
        %v4032 = vsel %vm681, %v4016, %v3860
        %v4034 = vsel %vm681, %v4018, %v3862
        %v4036 = vsel %vm681, %v4020, %v3864
        %v4038 = vsel %vm681, %v4022, %v3866
        %v4040 = vsel %vm681, %v4024, %v3868
        %v4042 = vsel %vm681, %v4026, %v3870
        %v4044 = vsel %vm681, %v4028, %v3872
        %v4046 = vsel %vm681, %v4030, %v3874
        %v4048 = vsel %vm3231, %v4032, %v3881
        %v4050 = vsel %vm3231, %v4034, %v3883
        %v4052 = vsel %vm3231, %v4036, %v3885
        %v4054 = vsel %vm3231, %v4038, %v3887
        %v4056 = vsel %vm3231, %v4040, %v3889
        %v4058 = vsel %vm3231, %v4042, %v3891
        %v4060 = vsel %vm3231, %v4044, %v3893
        %v4062 = vsel %vm3231, %v4046, %v3895
        %v4064 = vsel %vm3248, %v4048, %v3913
        %v4066 = vsel %vm3248, %v4050, %v3915
        %v4068 = vsel %vm3248, %v4052, %v3917
        %v4070 = vsel %vm3248, %v4054, %v3919
        %v4072 = vsel %vm3248, %v4056, %v3921
        %v4074 = vsel %vm3248, %v4058, %v3923
        %v4076 = vsel %vm3248, %v4060, %v3925
        %v4078 = vsel %vm3248, %v4062, %v3927
        %v4080 = vsel %vm3265, %v4064, %v3938
        %v4082 = vsel %vm3265, %v4066, %v3940
        %v4084 = vsel %vm3265, %v4068, %v3942
        %v4086 = vsel %vm3265, %v4070, %v3944
        %v4088 = vsel %vm3265, %v4072, %v3946
        %v4090 = vsel %vm3265, %v4074, %v3948
        %v4092 = vsel %vm3265, %v4076, %v3950
        %v4094 = vsel %vm3265, %v4078, %v3952
        %v4096 = vsel %vm3282, %v4080, %v3959
        %v4098 = vsel %vm3282, %v4082, %v3961
        %v4100 = vsel %vm3282, %v4084, %v3963
        %v4102 = vsel %vm3282, %v4086, %v3965
        %v4104 = vsel %vm3282, %v4088, %v3967
        %v4106 = vsel %vm3282, %v4090, %v3969
        %v4108 = vsel %vm3282, %v4092, %v3971
        %v4110 = vsel %vm3282, %v4094, %v3973
        %v4112 = vsel %vm3299, %v4096, %v3991
        %v4115 = vsel %vm3299, %v4098, %v3993
        %v4118 = vsel %vm3299, %v4100, %v3995
        %v4121 = vsel %vm3299, %v4102, %v3997
        %v4124 = vsel %vm3299, %v4104, %v3999
        %v4127 = vsel %vm3299, %v4106, %v4001
        %v4130 = vsel %vm3299, %v4108, %v4003
        %v4133 = vsel %vm3299, %v4110, %v4005
        %v4136 = vlaneseq
        %v4137 = vshrl.u32 %v4136, 7
        %v4138 = vsub.s32 0, %v4137
        %v4139 = vrot.slane %v3685, %v4138
        %v4159 = vunpack.c.l.b16 %v3666
        %v4160 = vunpack.c.l.b16 %v3667
        %v4161 = vunpack.c.l.b16 %v3668
        %v4162 = vunpack.c.l.b16 %v3669
        %v4163 = vunpack.c.l.b16 %v3670
        %v4164 = vunpack.c.l.b16 %v3671
        %v4165 = vunpack.c.l.b16 %v3672
        %v4166 = vunpack.c.l.b16 %v3673
        %v4167 = vunpack.c.l.b16 %v3674
        %v4168 = vunpack.c.l.b16 %v3675
        %v4169 = vunpack.c.l.b16 %v3676
        %v4170 = vunpack.c.l.b16 %v3677
        %v4171 = vunpack.c.l.b16 %v3678
        %v4172 = vunpack.c.l.b16 %v3679
        %v4173 = vunpack.c.l.b16 %v3680
        %v4174 = vunpack.c.l.b16 %v3681
        %v4175 = vunpack.c.l.b16 %v3682
        %v4176 = vunpack.c.l.b16 %v3683
        %v4177 = vpack.c.b16 %v4160, %v4159
        %v4178 = vpack.c.b16 %v4162, %v4161
        %v4179 = vpack.c.b16 %v4164, %v4163
        %v4180 = vpack.c.b16 %v4166, %v4165
        %v4181 = vpack.c.b16 %v4168, %v4167
        %v4182 = vpack.c.b16 %v4170, %v4169
        %v4183 = vpack.c.b16 %v4172, %v4171
        %v4184 = vpack.c.b16 %v4174, %v4173
        %v4185 = vpack.c.b16 %v4176, %v4175
        %v4196 = vsel %vm629, %v4010, 0
        %v4199 = vsel %vm629, %v3850, 0
        %v4202 = vsel %vm629, %v3852, 0
        %v4205 = vsel %vm629, %v3854, 0
        %v4208 = vsel %vm629, %v3856, 0
        %v4211 = vsel %vm629, %v3934, 0
        %v4214 = vsel %vm629, %v4012, 0
        %v4217 = vsel %vm629, %v4014, 0
        %4219 = vmatprep.subr.bf16.mxu0 0
        %4220 = vmatpush1.bf16.msra.mxu0 %v4184
        %4221 = vmatprep.subr.bf16.mxu0 0
        %4222 = vmatpush1.bf16.msra.mxu0 %v4183
        %4223 = vmatprep.subr.bf16.mxu0 0
        %4224 = vmatpush1.bf16.msra.mxu0 %v4182
        %4225 = vmatprep.subr.bf16.mxu0 0
        %4226 = vmatpush1.bf16.msra.mxu0 %v4181
        %4227 = vmatprep.subr.bf16.mxu0 0
        %4228 = vmatpush1.bf16.msra.mxu0 %v4180
        %4229 = vmatprep.subr.bf16.mxu0 0
        %4230 = vmatpush1.bf16.msra.mxu0 %v4179
        %4231 = vmatprep.subr.bf16.mxu0 0
        %4232 = vmatpush1.bf16.msra.mxu0 %v4178
        %4233 = vmatprep.subr.bf16.mxu0 0
        %4234 = vmatpush1.bf16.msra.mxu0 %v4177
        %4235 = vmatprep.subr.bf16.mxu0 0
        %4236 = vmatpush2.bf16.msra.mxu0 0
        %4237 = vmatprep.subr.bf16.mxu0 0
        %4238 = vmatpush2.bf16.msra.mxu0 0
        %4239 = vmatprep.subr.bf16.mxu0 0
        %4240 = vmatpush2.bf16.msra.mxu0 0
        %4241 = vmatprep.subr.bf16.mxu0 0
        %4242 = vmatpush2.bf16.msra.mxu0 0
        %4243 = vmatprep.subr.bf16.mxu0 0
        %4244 = vmatpush2.bf16.msra.mxu0 0
        %4245 = vmatprep.subr.bf16.mxu0 0
        %4246 = vmatpush2.bf16.msra.mxu0 0
        %4247 = vmatprep.subr.bf16.mxu0 0
        %4248 = vmatpush2.bf16.msra.mxu0 0
        %4249 = vmatprep.subr.bf16.mxu0 0
        %4250 = vmatpush2.bf16.msra.mxu0 %v4185
        %4251 = vmatprep.mubr.bf16.mxu0 %v4196
        %4252 = vmatmul.mubr.bf16.gmra.mxu0 %v4112
        %v4253 = vpop.f32.mrf.mxu0
        %v4254 = vadd.f32 %v4139, %v4253
        %v4255 = vpop.f32.mrf.mxu0
        %v4256 = vpop.f32.mrf.mxu0
        %v4257 = vpop.f32.mrf.mxu0
        %4258 = vmatprep.mubr.bf16.mxu0 %v4199
        %4259 = vmatmul.mubr.bf16.gmra.mxu0 %v4115
        %v4260 = vpop.f32.mrf.mxu0
        %v4261 = vadd.f32 %v4139, %v4260
        %v4262 = vpop.f32.mrf.mxu0
        %v4263 = vpop.f32.mrf.mxu0
        %v4264 = vpop.f32.mrf.mxu0
        %4265 = vmatprep.mubr.bf16.mxu0 %v4202
        %4266 = vmatmul.mubr.bf16.gmra.mxu0 %v4118
        %v4267 = vpop.f32.mrf.mxu0
        %v4268 = vadd.f32 %v4139, %v4267
        %v4269 = vpop.f32.mrf.mxu0
        %v4270 = vpop.f32.mrf.mxu0
        %v4271 = vpop.f32.mrf.mxu0
        %4272 = vmatprep.mubr.bf16.mxu0 %v4205
        %4273 = vmatmul.mubr.bf16.gmra.mxu0 %v4121
        %v4274 = vpop.f32.mrf.mxu0
        %v4275 = vadd.f32 %v4139, %v4274
        %v4276 = vpop.f32.mrf.mxu0
        %v4277 = vpop.f32.mrf.mxu0
        %v4278 = vpop.f32.mrf.mxu0
        %4279 = vmatprep.mubr.bf16.mxu0 %v4208
        %4280 = vmatmul.mubr.bf16.gmra.mxu0 %v4124
        %v4281 = vpop.f32.mrf.mxu0
        %v4282 = vadd.f32 %v4139, %v4281
        %v4283 = vpop.f32.mrf.mxu0
        %v4284 = vpop.f32.mrf.mxu0
        %v4285 = vpop.f32.mrf.mxu0
        %4286 = vmatprep.mubr.bf16.mxu0 %v4211
        %4287 = vmatmul.mubr.bf16.gmra.mxu0 %v4127
        %v4288 = vpop.f32.mrf.mxu0
        %v4289 = vadd.f32 %v4139, %v4288
        %v4290 = vpop.f32.mrf.mxu0
        %v4291 = vpop.f32.mrf.mxu0
        %v4292 = vpop.f32.mrf.mxu0
        %4293 = vmatprep.mubr.bf16.mxu0 %v4214
        %4294 = vmatmul.mubr.bf16.gmra.mxu0 %v4130
        %v4295 = vpop.f32.mrf.mxu0
        %v4296 = vadd.f32 %v4139, %v4295
        %v4297 = vpop.f32.mrf.mxu0
        %v4298 = vpop.f32.mrf.mxu0
        %v4299 = vpop.f32.mrf.mxu0
        %4300 = vmatprep.mubr.bf16.mxu0 %v4217
        %4301 = vmatmul.mubr.bf16.gmra.mxu0 %v4133
        %v4302 = vpop.f32.mrf.mxu0
        %v4303 = vadd.f32 %v4139, %v4302
        %v4304 = vpop.f32.mrf.mxu0
        %v4305 = vpop.f32.mrf.mxu0
        %v4306 = vpop.f32.mrf.mxu0
        %4307 = vdwg.mxu0
        %v4308 = vld [vmem:[#allocation4] sm:$0xff]
        %v4309 = vld [vmem:[#allocation4 + $0x8] sm:$0xff]
        %v4310 = vld [vmem:[#allocation4 + $0x10] sm:$0xff]
        %v4311 = vld [vmem:[#allocation4 + $0x18] sm:$0xff]
        %v4312 = vld [vmem:[#allocation4 + $0x20] sm:$0xff]
        %v4313 = vld [vmem:[#allocation4 + $0x28] sm:$0xff]
        %v4314 = vld [vmem:[#allocation4 + $0x30] sm:$0xff]
        %v4315 = vld [vmem:[#allocation4 + $0x38] sm:$0xff]
        %v4316 = vadd.f32 %v4308, %v4254
        %v4317 = vadd.f32 %v4309, %v4261
        %v4318 = vadd.f32 %v4310, %v4268
        %v4319 = vadd.f32 %v4311, %v4275
        %v4320 = vadd.f32 %v4312, %v4282
        %v4321 = vadd.f32 %v4313, %v4289
        %v4322 = vadd.f32 %v4314, %v4296
        %v4323 = vadd.f32 %v4315, %v4303
        %4324 = vst.msk [vmem:[#allocation4] sm:$0xff] %vm629, %v4316
        %4325 = vst.msk [vmem:[#allocation4 + $0x8] sm:$0xff] %vm629, %v4317
        %4326 = vst.msk [vmem:[#allocation4 + $0x10] sm:$0xff] %vm629, %v4318
        %4327 = vst.msk [vmem:[#allocation4 + $0x18] sm:$0xff] %vm629, %v4319
        %4328 = vst.msk [vmem:[#allocation4 + $0x20] sm:$0xff] %vm629, %v4320
        %4329 = vst.msk [vmem:[#allocation4 + $0x28] sm:$0xff] %vm629, %v4321
        %4330 = vst.msk [vmem:[#allocation4 + $0x30] sm:$0xff] %vm629, %v4322
        %4331 = vst.msk [vmem:[#allocation4 + $0x38] sm:$0xff] %vm629, %v4323
        %v4332 = vld [vmem:[#allocation4] sm:$0xff]
        %v4333 = vld [vmem:[#allocation4 + $0x8] sm:$0xff]
        %v4334 = vld [vmem:[#allocation4 + $0x10] sm:$0xff]
        %v4335 = vld [vmem:[#allocation4 + $0x18] sm:$0xff]
        %v4336 = vld [vmem:[#allocation4 + $0x20] sm:$0xff]
        %v4337 = vld [vmem:[#allocation4 + $0x28] sm:$0xff]
        %v4338 = vld [vmem:[#allocation4 + $0x30] sm:$0xff]
        %v4339 = vld [vmem:[#allocation4 + $0x38] sm:$0xff]
        %v4340 = vmax.f32 %v4332, 0.0
        %v4341 = vpack.c.bf16 %v4340, %v4340
        %v4343 = vunpack.c.l.b16 %v4341
        %v4344 = vpack.c.b16 %v4343, %v4343
        %v4346 = vshrl.u32 %v4344, 16
        %v4348 = vrot.slane %v4346, 7
        %v4349 = vshll.u32 %v4344, 16
        %v4351 = vor.u32 %v4348, %v4349
        %v4352 = vrot.slane %v4348, 4
        %v4355 = vld [vmem:[#allocation3 + $0x8] sm:$0xf]
        %v4356 = vsel %vm2694, %v4351, %v4355
        %4357 = vst [vmem:[#allocation3 + $0x8] sm:$0xf] %v4356
        %v4358 = vld [vmem:[#allocation3 + $0xc] sm:$0x1]
        %v4359 = vsel %vm2700, %v4352, %v4358
        %4360 = vst [vmem:[#allocation3 + $0xc] sm:$0x1] %v4359
        %v4361 = vmax.f32 %v4333, 0.0
        %v4362 = vpack.c.bf16 %v4361, %v4361
        %v4364 = vunpack.c.l.b16 %v4362
        %v4365 = vpack.c.b16 %v4364, %v4364
        %v4367 = vshrl.u32 %v4365, 16
        %v4369 = vrot.slane %v4367, 7
        %v4370 = vshll.u32 %v4365, 16
        %v4372 = vor.u32 %v4369, %v4370
        %v4373 = vrot.slane %v4369, 4
        %v4376 = vld [vmem:[#allocation3 + $0x10] sm:$0xf]
        %v4377 = vsel %vm2694, %v4372, %v4376
        %4378 = vst [vmem:[#allocation3 + $0x10] sm:$0xf] %v4377
        %v4379 = vld [vmem:[#allocation3 + $0x14] sm:$0x1]
        %v4380 = vsel %vm2700, %v4373, %v4379
        %4381 = vst [vmem:[#allocation3 + $0x14] sm:$0x1] %v4380
        %v4382 = vmax.f32 %v4334, 0.0
        %v4383 = vpack.c.bf16 %v4382, %v4382
        %v4385 = vunpack.c.l.b16 %v4383
        %v4386 = vpack.c.b16 %v4385, %v4385
        %v4388 = vshrl.u32 %v4386, 16
        %v4390 = vrot.slane %v4388, 7
        %v4391 = vshll.u32 %v4386, 16
        %v4393 = vor.u32 %v4390, %v4391
        %v4394 = vrot.slane %v4390, 4
        %v4397 = vld [vmem:[#allocation3 + $0x18] sm:$0xf]
        %v4398 = vsel %vm2694, %v4393, %v4397
        %4399 = vst [vmem:[#allocation3 + $0x18] sm:$0xf] %v4398
        %v4400 = vld [vmem:[#allocation3 + $0x1c] sm:$0x1]
        %v4401 = vsel %vm2700, %v4394, %v4400
        %4402 = vst [vmem:[#allocation3 + $0x1c] sm:$0x1] %v4401
        %v4403 = vmax.f32 %v4335, 0.0
        %v4404 = vpack.c.bf16 %v4403, %v4403
        %v4406 = vunpack.c.l.b16 %v4404
        %v4407 = vpack.c.b16 %v4406, %v4406
        %v4409 = vshrl.u32 %v4407, 16
        %v4411 = vrot.slane %v4409, 7
        %v4412 = vshll.u32 %v4407, 16
        %v4414 = vor.u32 %v4411, %v4412
        %v4415 = vrot.slane %v4411, 4
        %v4418 = vld [vmem:[#allocation3 + $0x20] sm:$0xf]
        %v4419 = vsel %vm2694, %v4414, %v4418
        %4420 = vst [vmem:[#allocation3 + $0x20] sm:$0xf] %v4419
        %v4421 = vld [vmem:[#allocation3 + $0x24] sm:$0x1]
        %v4422 = vsel %vm2700, %v4415, %v4421
        %4423 = vst [vmem:[#allocation3 + $0x24] sm:$0x1] %v4422
        %v4424 = vmax.f32 %v4336, 0.0
        %v4425 = vpack.c.bf16 %v4424, %v4424
        %v4427 = vunpack.c.l.b16 %v4425
        %v4428 = vpack.c.b16 %v4427, %v4427
        %v4430 = vshrl.u32 %v4428, 16
        %v4432 = vrot.slane %v4430, 7
        %v4433 = vshll.u32 %v4428, 16
        %v4435 = vor.u32 %v4432, %v4433
        %v4436 = vrot.slane %v4432, 4
        %v4439 = vld [vmem:[#allocation3 + $0x28] sm:$0xf]
        %v4440 = vsel %vm2694, %v4435, %v4439
        %4441 = vst [vmem:[#allocation3 + $0x28] sm:$0xf] %v4440
        %v4442 = vld [vmem:[#allocation3 + $0x2c] sm:$0x1]
        %v4443 = vsel %vm2700, %v4436, %v4442
        %4444 = vst [vmem:[#allocation3 + $0x2c] sm:$0x1] %v4443
        %v4445 = vmax.f32 %v4337, 0.0
        %v4446 = vpack.c.bf16 %v4445, %v4445
        %v4448 = vunpack.c.l.b16 %v4446
        %v4449 = vpack.c.b16 %v4448, %v4448
        %v4451 = vshrl.u32 %v4449, 16
        %v4453 = vrot.slane %v4451, 7
        %v4454 = vshll.u32 %v4449, 16
        %v4456 = vor.u32 %v4453, %v4454
        %v4457 = vrot.slane %v4453, 4
        %v4460 = vld [vmem:[#allocation3 + $0x30] sm:$0xf]
        %v4461 = vsel %vm2694, %v4456, %v4460
        %4462 = vst [vmem:[#allocation3 + $0x30] sm:$0xf] %v4461
        %v4463 = vld [vmem:[#allocation3 + $0x34] sm:$0x1]
        %v4464 = vsel %vm2700, %v4457, %v4463
        %4465 = vst [vmem:[#allocation3 + $0x34] sm:$0x1] %v4464
        %v4466 = vmax.f32 %v4338, 0.0
        %v4467 = vpack.c.bf16 %v4466, %v4466
        %v4469 = vunpack.c.l.b16 %v4467
        %v4470 = vpack.c.b16 %v4469, %v4469
        %v4472 = vshrl.u32 %v4470, 16
        %v4474 = vrot.slane %v4472, 7
        %v4475 = vshll.u32 %v4470, 16
        %v4477 = vor.u32 %v4474, %v4475
        %v4478 = vrot.slane %v4474, 4
        %v4481 = vld [vmem:[#allocation3 + $0x38] sm:$0xf]
        %v4482 = vsel %vm2694, %v4477, %v4481
        %4483 = vst [vmem:[#allocation3 + $0x38] sm:$0xf] %v4482
        %v4484 = vld [vmem:[#allocation3 + $0x3c] sm:$0x1]
        %v4485 = vsel %vm2700, %v4478, %v4484
        %4486 = vst [vmem:[#allocation3 + $0x3c] sm:$0x1] %v4485
        %v4487 = vmax.f32 %v4339, 0.0
        %v4488 = vpack.c.bf16 %v4487, %v4487
        %v4490 = vunpack.c.l.b16 %v4488
        %v4491 = vpack.c.b16 %v4490, %v4490
        %v4493 = vshrl.u32 %v4491, 16
        %v4495 = vrot.slane %v4493, 7
        %v4496 = vshll.u32 %v4491, 16
        %v4498 = vor.u32 %v4495, %v4496
        %v4499 = vrot.slane %v4495, 4
        %v4502 = vld [vmem:[#allocation3 + $0x40] sm:$0xf]
        %v4503 = vsel %vm2694, %v4498, %v4502
        %4504 = vst [vmem:[#allocation3 + $0x40] sm:$0xf] %v4503
        %v4505 = vld [vmem:[#allocation3 + $0x44] sm:$0x1]
        %v4506 = vsel %vm2700, %v4499, %v4505
        %4507 = vst [vmem:[#allocation3 + $0x44] sm:$0x1] %v4506
        %s4508 = scalar_lea.vmem %s3, 144
        %v4509 = vld [vmem:[%s4508] sm:$0xf]
        %v4510 = vld [vmem:[%s4508 + $0x4] sm:$0xf]
        %v4511 = vld [vmem:[%s4508 + $0x8] sm:$0xf]
        %v4512 = vld [vmem:[%s4508 + $0xc] sm:$0xf]
        %v4513 = vld [vmem:[%s4508 + $0x10] sm:$0xf]
        %v4514 = vld [vmem:[%s4508 + $0x14] sm:$0xf]
        %v4515 = vld [vmem:[%s4508 + $0x18] sm:$0xf]
        %v4516 = vld [vmem:[%s4508 + $0x1c] sm:$0xf]
        %v4517 = vld [vmem:[%s4508 + $0x20] sm:$0xf]
        %v4518 = vld [vmem:[%s4508 + $0x24] sm:$0xf]
        %v4519 = vld [vmem:[%s4508 + $0x28] sm:$0xf]
        %v4520 = vld [vmem:[%s4508 + $0x2c] sm:$0xf]
        %v4521 = vld [vmem:[%s4508 + $0x30] sm:$0xf]
        %v4522 = vld [vmem:[%s4508 + $0x34] sm:$0xf]
        %v4523 = vld [vmem:[%s4508 + $0x38] sm:$0xf]
        %v4524 = vld [vmem:[%s4508 + $0x3c] sm:$0xf]
        %v4525 = vld [vmem:[%s4508 + $0x40] sm:$0xf]
        %v4526 = vld [vmem:[%s4508 + $0x44] sm:$0xf]
        %s4527 = scalar_lea.vmem %s4, 2
        %v4528 = vld [vmem:[%s4527] sm:$0x1]
        %v4529 = vld [vmem:[#allocation3] sm:$0xf]
        %v4530 = vld [vmem:[#allocation3 + $0x4] sm:$0xf]
        %v4531 = vld [vmem:[#allocation3 + $0x8] sm:$0xf]
        %v4532 = vld [vmem:[#allocation3 + $0xc] sm:$0xf]
        %v4533 = vld [vmem:[#allocation3 + $0x10] sm:$0xf]
        %v4534 = vld [vmem:[#allocation3 + $0x14] sm:$0xf]
        %v4535 = vld [vmem:[#allocation3 + $0x18] sm:$0xf]
        %v4536 = vld [vmem:[#allocation3 + $0x1c] sm:$0xf]
        %v4537 = vld [vmem:[#allocation3 + $0x20] sm:$0xf]
        %v4538 = vld [vmem:[#allocation3 + $0x24] sm:$0xf]
        %v4539 = vld [vmem:[#allocation3 + $0x28] sm:$0xf]
        %v4540 = vld [vmem:[#allocation3 + $0x2c] sm:$0xf]
        %v4541 = vld [vmem:[#allocation3 + $0x30] sm:$0xf]
        %v4542 = vld [vmem:[#allocation3 + $0x34] sm:$0xf]
        %v4543 = vld [vmem:[#allocation3 + $0x38] sm:$0xf]
        %v4544 = vld [vmem:[#allocation3 + $0x3c] sm:$0xf]
        %v4545 = vld [vmem:[#allocation3 + $0x40] sm:$0x1]
        %v4546 = vld [vmem:[#allocation3] sm:$0xe]
        %v4547 = vld [vmem:[#allocation3 + $0x40] sm:$0xf]
        %v4548 = vld [vmem:[#allocation3 + $0x44] sm:$0xf]
        %v4549 = vld [vmem:[#allocation3 + $0x48] sm:$0x1]
        %v4550 = vld [vmem:[#allocation3 + $0x8] sm:$0xe]
        %v4551 = vld [vmem:[#allocation3 + $0x48] sm:$0xf]
        %v4552 = vld [vmem:[#allocation3 + $0x4c] sm:$0xf]
        %v4553 = vld [vmem:[#allocation3 + $0x50] sm:$0x1]
        %v4554 = vld [vmem:[#allocation3 + $0x10] sm:$0xe]
        %v4571 = vunpack.c.l.b16 %v4529
        %v4572 = vunpack.c.l.b16 %v4530
        %v4573 = vunpack.c.l.b16 %v4531
        %v4574 = vunpack.c.l.b16 %v4532
        %v4575 = vunpack.c.l.b16 %v4533
        %v4576 = vunpack.c.l.b16 %v4534
        %v4577 = vunpack.c.l.b16 %v4535
        %v4578 = vunpack.c.l.b16 %v4536
        %v4579 = vunpack.c.l.b16 %v4537
        %v4580 = vunpack.c.l.b16 %v4538
        %v4581 = vunpack.c.l.b16 %v4539
        %v4582 = vunpack.c.l.b16 %v4540
        %v4583 = vunpack.c.l.b16 %v4541
        %v4584 = vunpack.c.l.b16 %v4542
        %v4585 = vunpack.c.l.b16 %v4543
        %v4586 = vunpack.c.l.b16 %v4544
        %v4587 = vpack.c.b16 %v4572, %v4571
        %v4588 = vpack.c.b16 %v4574, %v4573
        %v4589 = vpack.c.b16 %v4576, %v4575
        %v4590 = vpack.c.b16 %v4578, %v4577
        %v4591 = vpack.c.b16 %v4580, %v4579
        %v4592 = vpack.c.b16 %v4582, %v4581
        %v4593 = vpack.c.b16 %v4584, %v4583
        %v4594 = vpack.c.b16 %v4586, %v4585
        %v4596 = vunpack.c.l.b16 %v4545
        %v4597 = vpack.c.b16 %v4596, %v4596
        %v4599 = vshrl.u32 %v4587, 16
        %v4601 = vshll.u32 %v4587, 16
        %v4603 = vrot.slane %v4601, 1
        %v4604 = vor.u32 %v4599, %v4603
        %v4606 = vshll.u32 %v4588, 16
        %v4608 = vrot.slane %v4606, 1
        %v4609 = vsel %vm287, %v4604, %v4608
        %v4610 = vshrl.u32 %v4588, 16
        %v4612 = vor.u32 %v4610, %v4608
        %v4614 = vshll.u32 %v4589, 16
        %v4616 = vrot.slane %v4614, 1
        %v4617 = vsel %vm287, %v4612, %v4616
        %v4618 = vshrl.u32 %v4589, 16
        %v4620 = vor.u32 %v4618, %v4616
        %v4622 = vshll.u32 %v4590, 16
        %v4624 = vrot.slane %v4622, 1
        %v4625 = vsel %vm287, %v4620, %v4624
        %v4626 = vshrl.u32 %v4590, 16
        %v4628 = vor.u32 %v4626, %v4624
        %v4630 = vshll.u32 %v4591, 16
        %v4632 = vrot.slane %v4630, 1
        %v4633 = vsel %vm287, %v4628, %v4632
        %v4634 = vshrl.u32 %v4591, 16
        %v4636 = vor.u32 %v4634, %v4632
        %v4638 = vshll.u32 %v4592, 16
        %v4640 = vrot.slane %v4638, 1
        %v4641 = vsel %vm287, %v4636, %v4640
        %v4642 = vshrl.u32 %v4592, 16
        %v4644 = vor.u32 %v4642, %v4640
        %v4646 = vshll.u32 %v4593, 16
        %v4648 = vrot.slane %v4646, 1
        %v4649 = vsel %vm287, %v4644, %v4648
        %v4650 = vshrl.u32 %v4593, 16
        %v4652 = vor.u32 %v4650, %v4648
        %v4654 = vshll.u32 %v4594, 16
        %v4656 = vrot.slane %v4654, 1
        %v4657 = vsel %vm287, %v4652, %v4656
        %v4658 = vshrl.u32 %v4594, 16
        %v4660 = vor.u32 %v4658, %v4656
        %v4662 = vshll.u32 %v4597, 16
        %v4664 = vrot.slane %v4662, 1
        %v4665 = vsel %vm287, %v4660, %v4664
        %4666 = vrot.lane.b32.xlu0 %v4609, 16
        %v4667 = vpop.permute.xlu0 %4666
        %4668 = vrot.lane.b32.xlu0 %v4617, 16
        %v4669 = vpop.permute.xlu0 %4668
        %4670 = vrot.lane.b32.xlu0 %v4625, 16
        %v4671 = vpop.permute.xlu0 %4670
        %4672 = vrot.lane.b32.xlu0 %v4633, 16
        %v4673 = vpop.permute.xlu0 %4672
        %4674 = vrot.lane.b32.xlu0 %v4641, 16
        %v4675 = vpop.permute.xlu0 %4674
        %4676 = vrot.lane.b32.xlu0 %v4649, 16
        %v4677 = vpop.permute.xlu0 %4676
        %4678 = vrot.lane.b32.xlu0 %v4657, 16
        %v4679 = vpop.permute.xlu0 %4678
        %4680 = vrot.lane.b32.xlu0 %v4665, 16
        %v4681 = vpop.permute.xlu0 %4680
        %v4683 = vunpack.c.l.b16 %v4546
        %v4684 = vpack.c.b16 %v4572, %v4683
        %v4685 = vrot.slane %v4684, 1
        %v4686 = vrot.slane %v4588, 1
        %v4687 = vsel %vm355, %v4685, %v4686
        %v4688 = vrot.slane %v4589, 1
        %v4689 = vsel %vm355, %v4686, %v4688
        %v4690 = vrot.slane %v4590, 1
        %v4691 = vsel %vm355, %v4688, %v4690
        %v4692 = vrot.slane %v4591, 1
        %v4693 = vsel %vm355, %v4690, %v4692
        %v4694 = vrot.slane %v4592, 1
        %v4695 = vsel %vm355, %v4692, %v4694
        %v4696 = vrot.slane %v4593, 1
        %v4697 = vsel %vm355, %v4694, %v4696
        %v4698 = vrot.slane %v4594, 1
        %v4699 = vsel %vm355, %v4696, %v4698
        %v4700 = vrot.slane %v4597, 1
        %v4701 = vsel %vm355, %v4698, %v4700
        %4702 = vrot.lane.b32.xlu0 %v4687, 32
        %v4703 = vpop.permute.xlu0 %4702
        %4704 = vrot.lane.b32.xlu0 %v4689, 32
        %v4705 = vpop.permute.xlu0 %4704
        %4706 = vrot.lane.b32.xlu0 %v4691, 32
        %v4707 = vpop.permute.xlu0 %4706
        %4708 = vrot.lane.b32.xlu0 %v4693, 32
        %v4709 = vpop.permute.xlu0 %4708
        %4710 = vrot.lane.b32.xlu0 %v4695, 32
        %v4711 = vpop.permute.xlu0 %4710
        %4712 = vrot.lane.b32.xlu0 %v4697, 32
        %v4713 = vpop.permute.xlu0 %4712
        %4714 = vrot.lane.b32.xlu0 %v4699, 32
        %v4715 = vpop.permute.xlu0 %4714
        %4716 = vrot.lane.b32.xlu0 %v4701, 32
        %v4717 = vpop.permute.xlu0 %4716
        %v4720 = vunpack.c.l.b16 %v4547
        %v4721 = vunpack.c.l.b16 %v4548
        %v4722 = vpack.c.b16 %v4721, %v4720
        %4723 = vrot.lane.b32.xlu0 %v4588, 48
        %v4724 = vpop.permute.xlu0 %4723
        %4725 = vrot.lane.b32.xlu0 %v4589, 48
        %v4726 = vpop.permute.xlu0 %4725
        %4727 = vrot.lane.b32.xlu0 %v4590, 48
        %v4728 = vpop.permute.xlu0 %4727
        %4729 = vrot.lane.b32.xlu0 %v4591, 48
        %v4730 = vpop.permute.xlu0 %4729
        %4731 = vrot.lane.b32.xlu0 %v4592, 48
        %v4732 = vpop.permute.xlu0 %4731
        %4733 = vrot.lane.b32.xlu0 %v4593, 48
        %v4734 = vpop.permute.xlu0 %4733
        %4735 = vrot.lane.b32.xlu0 %v4594, 48
        %v4736 = vpop.permute.xlu0 %4735
        %4737 = vrot.lane.b32.xlu0 %v4722, 48
        %v4738 = vpop.permute.xlu0 %4737
        %v4740 = vunpack.c.l.b16 %v4549
        %v4741 = vpack.c.b16 %v4740, %v4740
        %v4743 = vshll.u32 %v4722, 16
        %v4745 = vrot.slane %v4743, 1
        %v4746 = vsel %vm287, %v4660, %v4745
        %v4747 = vshrl.u32 %v4722, 16
        %v4749 = vor.u32 %v4747, %v4745
        %v4751 = vshll.u32 %v4741, 16
        %v4753 = vrot.slane %v4751, 1
        %v4754 = vsel %vm287, %v4749, %v4753
        %4755 = vrot.lane.b32.xlu0 %v4617, 64
        %v4756 = vpop.permute.xlu0 %4755
        %4757 = vrot.lane.b32.xlu0 %v4625, 64
        %v4758 = vpop.permute.xlu0 %4757
        %4759 = vrot.lane.b32.xlu0 %v4633, 64
        %v4760 = vpop.permute.xlu0 %4759
        %4761 = vrot.lane.b32.xlu0 %v4641, 64
        %v4762 = vpop.permute.xlu0 %4761
        %4763 = vrot.lane.b32.xlu0 %v4649, 64
        %v4764 = vpop.permute.xlu0 %4763
        %4765 = vrot.lane.b32.xlu0 %v4657, 64
        %v4766 = vpop.permute.xlu0 %4765
        %4767 = vrot.lane.b32.xlu0 %v4746, 64
        %v4768 = vpop.permute.xlu0 %4767
        %4769 = vrot.lane.b32.xlu0 %v4754, 64
        %v4770 = vpop.permute.xlu0 %4769
        %v4772 = vunpack.c.l.b16 %v4550
        %v4773 = vpack.c.b16 %v4574, %v4772
        %v4774 = vrot.slane %v4773, 1
        %v4775 = vsel %vm355, %v4774, %v4688
        %v4776 = vrot.slane %v4722, 1
        %v4777 = vsel %vm355, %v4698, %v4776
        %v4778 = vrot.slane %v4741, 1
        %v4779 = vsel %vm355, %v4776, %v4778
        %4780 = vrot.lane.b32.xlu0 %v4775, 80
        %v4781 = vpop.permute.xlu0 %4780
        %4782 = vrot.lane.b32.xlu0 %v4691, 80
        %v4783 = vpop.permute.xlu0 %4782
        %4784 = vrot.lane.b32.xlu0 %v4693, 80
        %v4785 = vpop.permute.xlu0 %4784
        %4786 = vrot.lane.b32.xlu0 %v4695, 80
        %v4787 = vpop.permute.xlu0 %4786
        %4788 = vrot.lane.b32.xlu0 %v4697, 80
        %v4789 = vpop.permute.xlu0 %4788
        %4790 = vrot.lane.b32.xlu0 %v4699, 80
        %v4791 = vpop.permute.xlu0 %4790
        %4792 = vrot.lane.b32.xlu0 %v4777, 80
        %v4793 = vpop.permute.xlu0 %4792
        %4794 = vrot.lane.b32.xlu0 %v4779, 80
        %v4795 = vpop.permute.xlu0 %4794
        %v4798 = vunpack.c.l.b16 %v4551
        %v4799 = vunpack.c.l.b16 %v4552
        %v4800 = vpack.c.b16 %v4799, %v4798
        %4801 = vrot.lane.b32.xlu0 %v4589, 96
        %v4802 = vpop.permute.xlu0 %4801
        %4803 = vrot.lane.b32.xlu0 %v4590, 96
        %v4804 = vpop.permute.xlu0 %4803
        %4805 = vrot.lane.b32.xlu0 %v4591, 96
        %v4806 = vpop.permute.xlu0 %4805
        %4807 = vrot.lane.b32.xlu0 %v4592, 96
        %v4808 = vpop.permute.xlu0 %4807
        %4809 = vrot.lane.b32.xlu0 %v4593, 96
        %v4810 = vpop.permute.xlu0 %4809
        %4811 = vrot.lane.b32.xlu0 %v4594, 96
        %v4812 = vpop.permute.xlu0 %4811
        %4813 = vrot.lane.b32.xlu0 %v4722, 96
        %v4814 = vpop.permute.xlu0 %4813
        %4815 = vrot.lane.b32.xlu0 %v4800, 96
        %v4816 = vpop.permute.xlu0 %4815
        %v4818 = vunpack.c.l.b16 %v4553
        %v4819 = vpack.c.b16 %v4818, %v4818
        %v4821 = vshll.u32 %v4800, 16
        %v4823 = vrot.slane %v4821, 1
        %v4824 = vsel %vm287, %v4749, %v4823
        %v4825 = vshrl.u32 %v4800, 16
        %v4827 = vor.u32 %v4825, %v4823
        %v4829 = vshll.u32 %v4819, 16
        %v4831 = vrot.slane %v4829, 1
        %v4832 = vsel %vm287, %v4827, %v4831
        %4833 = vrot.lane.b32.xlu0 %v4625, 112
        %v4834 = vpop.permute.xlu0 %4833
        %4835 = vrot.lane.b32.xlu0 %v4633, 112
        %v4836 = vpop.permute.xlu0 %4835
        %4837 = vrot.lane.b32.xlu0 %v4641, 112
        %v4838 = vpop.permute.xlu0 %4837
        %4839 = vrot.lane.b32.xlu0 %v4649, 112
        %v4840 = vpop.permute.xlu0 %4839
        %4841 = vrot.lane.b32.xlu0 %v4657, 112
        %v4842 = vpop.permute.xlu0 %4841
        %4843 = vrot.lane.b32.xlu0 %v4746, 112
        %v4844 = vpop.permute.xlu0 %4843
        %4845 = vrot.lane.b32.xlu0 %v4824, 112
        %v4846 = vpop.permute.xlu0 %4845
        %4847 = vrot.lane.b32.xlu0 %v4832, 112
        %v4848 = vpop.permute.xlu0 %4847
        %v4850 = vunpack.c.l.b16 %v4554
        %v4851 = vpack.c.b16 %v4576, %v4850
        %v4852 = vrot.slane %v4851, 1
        %v4853 = vsel %vm355, %v4852, %v4690
        %v4854 = vrot.slane %v4800, 1
        %v4855 = vsel %vm355, %v4776, %v4854
        %v4856 = vrot.slane %v4819, 1
        %v4857 = vsel %vm355, %v4854, %v4856
        %v4859 = vsel %vm629, %v4587, %v4667
        %v4861 = vsel %vm629, %v4588, %v4669
        %v4863 = vsel %vm629, %v4589, %v4671
        %v4865 = vsel %vm629, %v4590, %v4673
        %v4867 = vsel %vm629, %v4591, %v4675
        %v4869 = vsel %vm629, %v4592, %v4677
        %v4871 = vsel %vm629, %v4593, %v4679
        %v4873 = vsel %vm629, %v4594, %v4681
        %v4875 = vsel %vm681, %v4859, %v4703
        %v4877 = vsel %vm681, %v4861, %v4705
        %v4879 = vsel %vm681, %v4863, %v4707
        %v4881 = vsel %vm681, %v4865, %v4709
        %v4883 = vsel %vm681, %v4867, %v4711
        %v4885 = vsel %vm681, %v4869, %v4713
        %v4887 = vsel %vm681, %v4871, %v4715
        %v4889 = vsel %vm681, %v4873, %v4717
        %v4891 = vsel %vm3231, %v4875, %v4724
        %v4893 = vsel %vm3231, %v4877, %v4726
        %v4895 = vsel %vm3231, %v4879, %v4728
        %v4897 = vsel %vm3231, %v4881, %v4730
        %v4899 = vsel %vm3231, %v4883, %v4732
        %v4901 = vsel %vm3231, %v4885, %v4734
        %v4903 = vsel %vm3231, %v4887, %v4736
        %v4905 = vsel %vm3231, %v4889, %v4738
        %v4907 = vsel %vm3248, %v4891, %v4756
        %v4909 = vsel %vm3248, %v4893, %v4758
        %v4911 = vsel %vm3248, %v4895, %v4760
        %v4913 = vsel %vm3248, %v4897, %v4762
        %v4915 = vsel %vm3248, %v4899, %v4764
        %v4917 = vsel %vm3248, %v4901, %v4766
        %v4919 = vsel %vm3248, %v4903, %v4768
        %v4921 = vsel %vm3248, %v4905, %v4770
        %v4923 = vsel %vm3265, %v4907, %v4781
        %v4925 = vsel %vm3265, %v4909, %v4783
        %v4927 = vsel %vm3265, %v4911, %v4785
        %v4929 = vsel %vm3265, %v4913, %v4787
        %v4931 = vsel %vm3265, %v4915, %v4789
        %v4933 = vsel %vm3265, %v4917, %v4791
        %v4935 = vsel %vm3265, %v4919, %v4793
        %v4937 = vsel %vm3265, %v4921, %v4795
        %v4939 = vsel %vm3282, %v4923, %v4802
        %v4941 = vsel %vm3282, %v4925, %v4804
        %v4943 = vsel %vm3282, %v4927, %v4806
        %v4945 = vsel %vm3282, %v4929, %v4808
        %v4947 = vsel %vm3282, %v4931, %v4810
        %v4949 = vsel %vm3282, %v4933, %v4812
        %v4951 = vsel %vm3282, %v4935, %v4814
        %v4953 = vsel %vm3282, %v4937, %v4816
        %v4955 = vsel %vm3299, %v4939, %v4834
        %v4958 = vsel %vm3299, %v4941, %v4836
        %v4961 = vsel %vm3299, %v4943, %v4838
        %v4964 = vsel %vm3299, %v4945, %v4840
        %v4967 = vsel %vm3299, %v4947, %v4842
        %v4970 = vsel %vm3299, %v4949, %v4844
        %v4973 = vsel %vm3299, %v4951, %v4846
        %v4976 = vsel %vm3299, %v4953, %v4848
        %v4979 = vlaneseq
        %v4980 = vshrl.u32 %v4979, 7
        %v4981 = vsub.s32 0, %v4980
        %v4982 = vrot.slane %v4528, %v4981
        %v5002 = vunpack.c.l.b16 %v4509
        %v5003 = vunpack.c.l.b16 %v4510
        %v5004 = vunpack.c.l.b16 %v4511
        %v5005 = vunpack.c.l.b16 %v4512
        %v5006 = vunpack.c.l.b16 %v4513
        %v5007 = vunpack.c.l.b16 %v4514
        %v5008 = vunpack.c.l.b16 %v4515
        %v5009 = vunpack.c.l.b16 %v4516
        %v5010 = vunpack.c.l.b16 %v4517
        %v5011 = vunpack.c.l.b16 %v4518
        %v5012 = vunpack.c.l.b16 %v4519
        %v5013 = vunpack.c.l.b16 %v4520
        %v5014 = vunpack.c.l.b16 %v4521
        %v5015 = vunpack.c.l.b16 %v4522
        %v5016 = vunpack.c.l.b16 %v4523
        %v5017 = vunpack.c.l.b16 %v4524
        %v5018 = vunpack.c.l.b16 %v4525
        %v5019 = vunpack.c.l.b16 %v4526
        %v5020 = vpack.c.b16 %v5003, %v5002
        %v5021 = vpack.c.b16 %v5005, %v5004
        %v5022 = vpack.c.b16 %v5007, %v5006
        %v5023 = vpack.c.b16 %v5009, %v5008
        %v5024 = vpack.c.b16 %v5011, %v5010
        %v5025 = vpack.c.b16 %v5013, %v5012
        %v5026 = vpack.c.b16 %v5015, %v5014
        %v5027 = vpack.c.b16 %v5017, %v5016
        %v5028 = vpack.c.b16 %v5019, %v5018
        %v5039 = vsel %vm629, %v4853, 0
        %v5042 = vsel %vm629, %v4693, 0
        %v5045 = vsel %vm629, %v4695, 0
        %v5048 = vsel %vm629, %v4697, 0
        %v5051 = vsel %vm629, %v4699, 0
        %v5054 = vsel %vm629, %v4777, 0
        %v5057 = vsel %vm629, %v4855, 0
        %v5060 = vsel %vm629, %v4857, 0
        %5062 = vmatprep.subr.bf16.mxu0 0
        %5063 = vmatpush1.bf16.msra.mxu0 %v5027
        %5064 = vmatprep.subr.bf16.mxu0 0
        %5065 = vmatpush1.bf16.msra.mxu0 %v5026
        %5066 = vmatprep.subr.bf16.mxu0 0
        %5067 = vmatpush1.bf16.msra.mxu0 %v5025
        %5068 = vmatprep.subr.bf16.mxu0 0
        %5069 = vmatpush1.bf16.msra.mxu0 %v5024
        %5070 = vmatprep.subr.bf16.mxu0 0
        %5071 = vmatpush1.bf16.msra.mxu0 %v5023
        %5072 = vmatprep.subr.bf16.mxu0 0
        %5073 = vmatpush1.bf16.msra.mxu0 %v5022
        %5074 = vmatprep.subr.bf16.mxu0 0
        %5075 = vmatpush1.bf16.msra.mxu0 %v5021
        %5076 = vmatprep.subr.bf16.mxu0 0
        %5077 = vmatpush1.bf16.msra.mxu0 %v5020
        %5078 = vmatprep.subr.bf16.mxu0 0
        %5079 = vmatpush2.bf16.msra.mxu0 0
        %5080 = vmatprep.subr.bf16.mxu0 0
        %5081 = vmatpush2.bf16.msra.mxu0 0
        %5082 = vmatprep.subr.bf16.mxu0 0
        %5083 = vmatpush2.bf16.msra.mxu0 0
        %5084 = vmatprep.subr.bf16.mxu0 0
        %5085 = vmatpush2.bf16.msra.mxu0 0
        %5086 = vmatprep.subr.bf16.mxu0 0
        %5087 = vmatpush2.bf16.msra.mxu0 0
        %5088 = vmatprep.subr.bf16.mxu0 0
        %5089 = vmatpush2.bf16.msra.mxu0 0
        %5090 = vmatprep.subr.bf16.mxu0 0
        %5091 = vmatpush2.bf16.msra.mxu0 0
        %5092 = vmatprep.subr.bf16.mxu0 0
        %5093 = vmatpush2.bf16.msra.mxu0 %v5028
        %5094 = vmatprep.mubr.bf16.mxu0 %v5039
        %5095 = vmatmul.mubr.bf16.gmra.mxu0 %v4955
        %v5096 = vpop.f32.mrf.mxu0
        %v5097 = vadd.f32 %v4982, %v5096
        %v5098 = vpop.f32.mrf.mxu0
        %v5099 = vpop.f32.mrf.mxu0
        %v5100 = vpop.f32.mrf.mxu0
        %5101 = vmatprep.mubr.bf16.mxu0 %v5042
        %5102 = vmatmul.mubr.bf16.gmra.mxu0 %v4958
        %v5103 = vpop.f32.mrf.mxu0
        %v5104 = vadd.f32 %v4982, %v5103
        %v5105 = vpop.f32.mrf.mxu0
        %v5106 = vpop.f32.mrf.mxu0
        %v5107 = vpop.f32.mrf.mxu0
        %5108 = vmatprep.mubr.bf16.mxu0 %v5045
        %5109 = vmatmul.mubr.bf16.gmra.mxu0 %v4961
        %v5110 = vpop.f32.mrf.mxu0
        %v5111 = vadd.f32 %v4982, %v5110
        %v5112 = vpop.f32.mrf.mxu0
        %v5113 = vpop.f32.mrf.mxu0
        %v5114 = vpop.f32.mrf.mxu0
        %5115 = vmatprep.mubr.bf16.mxu0 %v5048
        %5116 = vmatmul.mubr.bf16.gmra.mxu0 %v4964
        %v5117 = vpop.f32.mrf.mxu0
        %v5118 = vadd.f32 %v4982, %v5117
        %v5119 = vpop.f32.mrf.mxu0
        %v5120 = vpop.f32.mrf.mxu0
        %v5121 = vpop.f32.mrf.mxu0
        %5122 = vmatprep.mubr.bf16.mxu0 %v5051
        %5123 = vmatmul.mubr.bf16.gmra.mxu0 %v4967
        %v5124 = vpop.f32.mrf.mxu0
        %v5125 = vadd.f32 %v4982, %v5124
        %v5126 = vpop.f32.mrf.mxu0
        %v5127 = vpop.f32.mrf.mxu0
        %v5128 = vpop.f32.mrf.mxu0
        %5129 = vmatprep.mubr.bf16.mxu0 %v5054
        %5130 = vmatmul.mubr.bf16.gmra.mxu0 %v4970
        %v5131 = vpop.f32.mrf.mxu0
        %v5132 = vadd.f32 %v4982, %v5131
        %v5133 = vpop.f32.mrf.mxu0
        %v5134 = vpop.f32.mrf.mxu0
        %v5135 = vpop.f32.mrf.mxu0
        %5136 = vmatprep.mubr.bf16.mxu0 %v5057
        %5137 = vmatmul.mubr.bf16.gmra.mxu0 %v4973
        %v5138 = vpop.f32.mrf.mxu0
        %v5139 = vadd.f32 %v4982, %v5138
        %v5140 = vpop.f32.mrf.mxu0
        %v5141 = vpop.f32.mrf.mxu0
        %v5142 = vpop.f32.mrf.mxu0
        %5143 = vmatprep.mubr.bf16.mxu0 %v5060
        %5144 = vmatmul.mubr.bf16.gmra.mxu0 %v4976
        %v5145 = vpop.f32.mrf.mxu0
        %v5146 = vadd.f32 %v4982, %v5145
        %v5147 = vpop.f32.mrf.mxu0
        %v5148 = vpop.f32.mrf.mxu0
        %v5149 = vpop.f32.mrf.mxu0
        %5150 = vdwg.mxu0
        %v5151 = vmax.f32 %v5097, 0.0
        %v5152 = vpack.c.bf16 %v5151, %v5151
        %v5154 = vunpack.c.l.b16 %v5152
        %v5155 = vpack.c.b16 %v5154, %v5154
        %v5157 = vshrl.u32 %v5155, 16
        %v5159 = vrot.slane %v5157, 7
        %v5160 = vshll.u32 %v5155, 16
        %v5162 = vor.u32 %v5159, %v5160
        %v5163 = vrot.slane %v5159, 4
        %v5166 = vld [vmem:[#allocation3 + $0x8] sm:$0xf]
        %v5167 = vsel %vm2694, %v5162, %v5166
        %5168 = vst [vmem:[#allocation3 + $0x8] sm:$0xf] %v5167
        %v5169 = vld [vmem:[#allocation3 + $0xc] sm:$0x1]
        %v5170 = vsel %vm2700, %v5163, %v5169
        %5171 = vst [vmem:[#allocation3 + $0xc] sm:$0x1] %v5170
        %v5172 = vmax.f32 %v5104, 0.0
        %v5173 = vpack.c.bf16 %v5172, %v5172
        %v5175 = vunpack.c.l.b16 %v5173
        %v5176 = vpack.c.b16 %v5175, %v5175
        %v5178 = vshrl.u32 %v5176, 16
        %v5180 = vrot.slane %v5178, 7
        %v5181 = vshll.u32 %v5176, 16
        %v5183 = vor.u32 %v5180, %v5181
        %v5184 = vrot.slane %v5180, 4
        %v5187 = vld [vmem:[#allocation3 + $0x10] sm:$0xf]
        %v5188 = vsel %vm2694, %v5183, %v5187
        %5189 = vst [vmem:[#allocation3 + $0x10] sm:$0xf] %v5188
        %v5190 = vld [vmem:[#allocation3 + $0x14] sm:$0x1]
        %v5191 = vsel %vm2700, %v5184, %v5190
        %5192 = vst [vmem:[#allocation3 + $0x14] sm:$0x1] %v5191
        %v5193 = vmax.f32 %v5111, 0.0
        %v5194 = vpack.c.bf16 %v5193, %v5193
        %v5196 = vunpack.c.l.b16 %v5194
        %v5197 = vpack.c.b16 %v5196, %v5196
        %v5199 = vshrl.u32 %v5197, 16
        %v5201 = vrot.slane %v5199, 7
        %v5202 = vshll.u32 %v5197, 16
        %v5204 = vor.u32 %v5201, %v5202
        %v5205 = vrot.slane %v5201, 4
        %v5208 = vld [vmem:[#allocation3 + $0x18] sm:$0xf]
        %v5209 = vsel %vm2694, %v5204, %v5208
        %5210 = vst [vmem:[#allocation3 + $0x18] sm:$0xf] %v5209
        %v5211 = vld [vmem:[#allocation3 + $0x1c] sm:$0x1]
        %v5212 = vsel %vm2700, %v5205, %v5211
        %5213 = vst [vmem:[#allocation3 + $0x1c] sm:$0x1] %v5212
        %v5214 = vmax.f32 %v5118, 0.0
        %v5215 = vpack.c.bf16 %v5214, %v5214
        %v5217 = vunpack.c.l.b16 %v5215
        %v5218 = vpack.c.b16 %v5217, %v5217
        %v5220 = vshrl.u32 %v5218, 16
        %v5222 = vrot.slane %v5220, 7
        %v5223 = vshll.u32 %v5218, 16
        %v5225 = vor.u32 %v5222, %v5223
        %v5226 = vrot.slane %v5222, 4
        %v5229 = vld [vmem:[#allocation3 + $0x20] sm:$0xf]
        %v5230 = vsel %vm2694, %v5225, %v5229
        %5231 = vst [vmem:[#allocation3 + $0x20] sm:$0xf] %v5230
        %v5232 = vld [vmem:[#allocation3 + $0x24] sm:$0x1]
        %v5233 = vsel %vm2700, %v5226, %v5232
        %5234 = vst [vmem:[#allocation3 + $0x24] sm:$0x1] %v5233
        %v5235 = vmax.f32 %v5125, 0.0
        %v5236 = vpack.c.bf16 %v5235, %v5235
        %v5238 = vunpack.c.l.b16 %v5236
        %v5239 = vpack.c.b16 %v5238, %v5238
        %v5241 = vshrl.u32 %v5239, 16
        %v5243 = vrot.slane %v5241, 7
        %v5244 = vshll.u32 %v5239, 16
        %v5246 = vor.u32 %v5243, %v5244
        %v5247 = vrot.slane %v5243, 4
        %v5250 = vld [vmem:[#allocation3 + $0x28] sm:$0xf]
        %v5251 = vsel %vm2694, %v5246, %v5250
        %5252 = vst [vmem:[#allocation3 + $0x28] sm:$0xf] %v5251
        %v5253 = vld [vmem:[#allocation3 + $0x2c] sm:$0x1]
        %v5254 = vsel %vm2700, %v5247, %v5253
        %5255 = vst [vmem:[#allocation3 + $0x2c] sm:$0x1] %v5254
        %v5256 = vmax.f32 %v5132, 0.0
        %v5257 = vpack.c.bf16 %v5256, %v5256
        %v5259 = vunpack.c.l.b16 %v5257
        %v5260 = vpack.c.b16 %v5259, %v5259
        %v5262 = vshrl.u32 %v5260, 16
        %v5264 = vrot.slane %v5262, 7
        %v5265 = vshll.u32 %v5260, 16
        %v5267 = vor.u32 %v5264, %v5265
        %v5268 = vrot.slane %v5264, 4
        %v5271 = vld [vmem:[#allocation3 + $0x30] sm:$0xf]
        %v5272 = vsel %vm2694, %v5267, %v5271
        %5273 = vst [vmem:[#allocation3 + $0x30] sm:$0xf] %v5272
        %v5274 = vld [vmem:[#allocation3 + $0x34] sm:$0x1]
        %v5275 = vsel %vm2700, %v5268, %v5274
        %5276 = vst [vmem:[#allocation3 + $0x34] sm:$0x1] %v5275
        %v5277 = vmax.f32 %v5139, 0.0
        %v5278 = vpack.c.bf16 %v5277, %v5277
        %v5280 = vunpack.c.l.b16 %v5278
        %v5281 = vpack.c.b16 %v5280, %v5280
        %v5283 = vshrl.u32 %v5281, 16
        %v5285 = vrot.slane %v5283, 7
        %v5286 = vshll.u32 %v5281, 16
        %v5288 = vor.u32 %v5285, %v5286
        %v5289 = vrot.slane %v5285, 4
        %v5292 = vld [vmem:[#allocation3 + $0x38] sm:$0xf]
        %v5293 = vsel %vm2694, %v5288, %v5292
        %5294 = vst [vmem:[#allocation3 + $0x38] sm:$0xf] %v5293
        %v5295 = vld [vmem:[#allocation3 + $0x3c] sm:$0x1]
        %v5296 = vsel %vm2700, %v5289, %v5295
        %5297 = vst [vmem:[#allocation3 + $0x3c] sm:$0x1] %v5296
        %v5298 = vmax.f32 %v5146, 0.0
        %v5299 = vpack.c.bf16 %v5298, %v5298
        %v5301 = vunpack.c.l.b16 %v5299
        %v5302 = vpack.c.b16 %v5301, %v5301
        %v5304 = vshrl.u32 %v5302, 16
        %v5306 = vrot.slane %v5304, 7
        %v5307 = vshll.u32 %v5302, 16
        %v5309 = vor.u32 %v5306, %v5307
        %v5310 = vrot.slane %v5306, 4
        %v5313 = vld [vmem:[#allocation3 + $0x40] sm:$0xf]
        %v5314 = vsel %vm2694, %v5309, %v5313
        %5315 = vst [vmem:[#allocation3 + $0x40] sm:$0xf] %v5314
        %v5316 = vld [vmem:[#allocation3 + $0x44] sm:$0x1]
        %v5317 = vsel %vm2700, %v5310, %v5316
        %5318 = vst [vmem:[#allocation3 + $0x44] sm:$0x1] %v5317
        %s5319 = scalar_lea.vmem %s3, 216
        %v5320 = vld [vmem:[%s5319] sm:$0xf]
        %v5321 = vld [vmem:[%s5319 + $0x4] sm:$0xf]
        %v5322 = vld [vmem:[%s5319 + $0x8] sm:$0xf]
        %v5323 = vld [vmem:[%s5319 + $0xc] sm:$0xf]
        %v5324 = vld [vmem:[%s5319 + $0x10] sm:$0xf]
        %v5325 = vld [vmem:[%s5319 + $0x14] sm:$0xf]
        %v5326 = vld [vmem:[%s5319 + $0x18] sm:$0xf]
        %v5327 = vld [vmem:[%s5319 + $0x1c] sm:$0xf]
        %v5328 = vld [vmem:[%s5319 + $0x20] sm:$0xf]
        %v5329 = vld [vmem:[%s5319 + $0x24] sm:$0xf]
        %v5330 = vld [vmem:[%s5319 + $0x28] sm:$0xf]
        %v5331 = vld [vmem:[%s5319 + $0x2c] sm:$0xf]
        %v5332 = vld [vmem:[%s5319 + $0x30] sm:$0xf]
        %v5333 = vld [vmem:[%s5319 + $0x34] sm:$0xf]
        %v5334 = vld [vmem:[%s5319 + $0x38] sm:$0xf]
        %v5335 = vld [vmem:[%s5319 + $0x3c] sm:$0xf]
        %v5336 = vld [vmem:[%s5319 + $0x40] sm:$0xf]
        %v5337 = vld [vmem:[%s5319 + $0x44] sm:$0xf]
        %s5338 = scalar_lea.vmem %s4, 3
        %v5339 = vld [vmem:[%s5338] sm:$0x1]
        %v5340 = vld [vmem:[#allocation3] sm:$0xf]
        %v5341 = vld [vmem:[#allocation3 + $0x4] sm:$0xf]
        %v5342 = vld [vmem:[#allocation3 + $0x8] sm:$0xf]
        %v5343 = vld [vmem:[#allocation3 + $0xc] sm:$0xf]
        %v5344 = vld [vmem:[#allocation3 + $0x10] sm:$0xf]
        %v5345 = vld [vmem:[#allocation3 + $0x14] sm:$0xf]
        %v5346 = vld [vmem:[#allocation3 + $0x18] sm:$0xf]
        %v5347 = vld [vmem:[#allocation3 + $0x1c] sm:$0xf]
        %v5348 = vld [vmem:[#allocation3 + $0x20] sm:$0xf]
        %v5349 = vld [vmem:[#allocation3 + $0x24] sm:$0xf]
        %v5350 = vld [vmem:[#allocation3 + $0x28] sm:$0xf]
        %v5351 = vld [vmem:[#allocation3 + $0x2c] sm:$0xf]
        %v5352 = vld [vmem:[#allocation3 + $0x30] sm:$0xf]
        %v5353 = vld [vmem:[#allocation3 + $0x34] sm:$0xf]
        %v5354 = vld [vmem:[#allocation3 + $0x38] sm:$0xf]
        %v5355 = vld [vmem:[#allocation3 + $0x3c] sm:$0xf]
        %v5356 = vld [vmem:[#allocation3 + $0x40] sm:$0x1]
        %v5357 = vld [vmem:[#allocation3] sm:$0xe]
        %v5358 = vld [vmem:[#allocation3 + $0x40] sm:$0xf]
        %v5359 = vld [vmem:[#allocation3 + $0x44] sm:$0xf]
        %v5360 = vld [vmem:[#allocation3 + $0x48] sm:$0x1]
        %v5361 = vld [vmem:[#allocation3 + $0x8] sm:$0xe]
        %v5362 = vld [vmem:[#allocation3 + $0x48] sm:$0xf]
        %v5363 = vld [vmem:[#allocation3 + $0x4c] sm:$0xf]
        %v5364 = vld [vmem:[#allocation3 + $0x50] sm:$0x1]
        %v5365 = vld [vmem:[#allocation3 + $0x10] sm:$0xe]
        %v5382 = vunpack.c.l.b16 %v5340
        %v5383 = vunpack.c.l.b16 %v5341
        %v5384 = vunpack.c.l.b16 %v5342
        %v5385 = vunpack.c.l.b16 %v5343
        %v5386 = vunpack.c.l.b16 %v5344
        %v5387 = vunpack.c.l.b16 %v5345
        %v5388 = vunpack.c.l.b16 %v5346
        %v5389 = vunpack.c.l.b16 %v5347
        %v5390 = vunpack.c.l.b16 %v5348
        %v5391 = vunpack.c.l.b16 %v5349
        %v5392 = vunpack.c.l.b16 %v5350
        %v5393 = vunpack.c.l.b16 %v5351
        %v5394 = vunpack.c.l.b16 %v5352
        %v5395 = vunpack.c.l.b16 %v5353
        %v5396 = vunpack.c.l.b16 %v5354
        %v5397 = vunpack.c.l.b16 %v5355
        %v5398 = vpack.c.b16 %v5383, %v5382
        %v5399 = vpack.c.b16 %v5385, %v5384
        %v5400 = vpack.c.b16 %v5387, %v5386
        %v5401 = vpack.c.b16 %v5389, %v5388
        %v5402 = vpack.c.b16 %v5391, %v5390
        %v5403 = vpack.c.b16 %v5393, %v5392
        %v5404 = vpack.c.b16 %v5395, %v5394
        %v5405 = vpack.c.b16 %v5397, %v5396
        %v5407 = vunpack.c.l.b16 %v5356
        %v5408 = vpack.c.b16 %v5407, %v5407
        %v5410 = vshrl.u32 %v5398, 16
        %v5412 = vshll.u32 %v5398, 16
        %v5414 = vrot.slane %v5412, 1
        %v5415 = vor.u32 %v5410, %v5414
        %v5417 = vshll.u32 %v5399, 16
        %v5419 = vrot.slane %v5417, 1
        %v5420 = vsel %vm287, %v5415, %v5419
        %v5421 = vshrl.u32 %v5399, 16
        %v5423 = vor.u32 %v5421, %v5419
        %v5425 = vshll.u32 %v5400, 16
        %v5427 = vrot.slane %v5425, 1
        %v5428 = vsel %vm287, %v5423, %v5427
        %v5429 = vshrl.u32 %v5400, 16
        %v5431 = vor.u32 %v5429, %v5427
        %v5433 = vshll.u32 %v5401, 16
        %v5435 = vrot.slane %v5433, 1
        %v5436 = vsel %vm287, %v5431, %v5435
        %v5437 = vshrl.u32 %v5401, 16
        %v5439 = vor.u32 %v5437, %v5435
        %v5441 = vshll.u32 %v5402, 16
        %v5443 = vrot.slane %v5441, 1
        %v5444 = vsel %vm287, %v5439, %v5443
        %v5445 = vshrl.u32 %v5402, 16
        %v5447 = vor.u32 %v5445, %v5443
        %v5449 = vshll.u32 %v5403, 16
        %v5451 = vrot.slane %v5449, 1
        %v5452 = vsel %vm287, %v5447, %v5451
        %v5453 = vshrl.u32 %v5403, 16
        %v5455 = vor.u32 %v5453, %v5451
        %v5457 = vshll.u32 %v5404, 16
        %v5459 = vrot.slane %v5457, 1
        %v5460 = vsel %vm287, %v5455, %v5459
        %v5461 = vshrl.u32 %v5404, 16
        %v5463 = vor.u32 %v5461, %v5459
        %v5465 = vshll.u32 %v5405, 16
        %v5467 = vrot.slane %v5465, 1
        %v5468 = vsel %vm287, %v5463, %v5467
        %v5469 = vshrl.u32 %v5405, 16
        %v5471 = vor.u32 %v5469, %v5467
        %v5473 = vshll.u32 %v5408, 16
        %v5475 = vrot.slane %v5473, 1
        %v5476 = vsel %vm287, %v5471, %v5475
        %5477 = vrot.lane.b32.xlu0 %v5420, 16
        %v5478 = vpop.permute.xlu0 %5477
        %5479 = vrot.lane.b32.xlu0 %v5428, 16
        %v5480 = vpop.permute.xlu0 %5479
        %5481 = vrot.lane.b32.xlu0 %v5436, 16
        %v5482 = vpop.permute.xlu0 %5481
        %5483 = vrot.lane.b32.xlu0 %v5444, 16
        %v5484 = vpop.permute.xlu0 %5483
        %5485 = vrot.lane.b32.xlu0 %v5452, 16
        %v5486 = vpop.permute.xlu0 %5485
        %5487 = vrot.lane.b32.xlu0 %v5460, 16
        %v5488 = vpop.permute.xlu0 %5487
        %5489 = vrot.lane.b32.xlu0 %v5468, 16
        %v5490 = vpop.permute.xlu0 %5489
        %5491 = vrot.lane.b32.xlu0 %v5476, 16
        %v5492 = vpop.permute.xlu0 %5491
        %v5494 = vunpack.c.l.b16 %v5357
        %v5495 = vpack.c.b16 %v5383, %v5494
        %v5496 = vrot.slane %v5495, 1
        %v5497 = vrot.slane %v5399, 1
        %v5498 = vsel %vm355, %v5496, %v5497
        %v5499 = vrot.slane %v5400, 1
        %v5500 = vsel %vm355, %v5497, %v5499
        %v5501 = vrot.slane %v5401, 1
        %v5502 = vsel %vm355, %v5499, %v5501
        %v5503 = vrot.slane %v5402, 1
        %v5504 = vsel %vm355, %v5501, %v5503
        %v5505 = vrot.slane %v5403, 1
        %v5506 = vsel %vm355, %v5503, %v5505
        %v5507 = vrot.slane %v5404, 1
        %v5508 = vsel %vm355, %v5505, %v5507
        %v5509 = vrot.slane %v5405, 1
        %v5510 = vsel %vm355, %v5507, %v5509
        %v5511 = vrot.slane %v5408, 1
        %v5512 = vsel %vm355, %v5509, %v5511
        %5513 = vrot.lane.b32.xlu0 %v5498, 32
        %v5514 = vpop.permute.xlu0 %5513
        %5515 = vrot.lane.b32.xlu0 %v5500, 32
        %v5516 = vpop.permute.xlu0 %5515
        %5517 = vrot.lane.b32.xlu0 %v5502, 32
        %v5518 = vpop.permute.xlu0 %5517
        %5519 = vrot.lane.b32.xlu0 %v5504, 32
        %v5520 = vpop.permute.xlu0 %5519
        %5521 = vrot.lane.b32.xlu0 %v5506, 32
        %v5522 = vpop.permute.xlu0 %5521
        %5523 = vrot.lane.b32.xlu0 %v5508, 32
        %v5524 = vpop.permute.xlu0 %5523
        %5525 = vrot.lane.b32.xlu0 %v5510, 32
        %v5526 = vpop.permute.xlu0 %5525
        %5527 = vrot.lane.b32.xlu0 %v5512, 32
        %v5528 = vpop.permute.xlu0 %5527
        %v5531 = vunpack.c.l.b16 %v5358
        %v5532 = vunpack.c.l.b16 %v5359
        %v5533 = vpack.c.b16 %v5532, %v5531
        %5534 = vrot.lane.b32.xlu0 %v5399, 48
        %v5535 = vpop.permute.xlu0 %5534
        %5536 = vrot.lane.b32.xlu0 %v5400, 48
        %v5537 = vpop.permute.xlu0 %5536
        %5538 = vrot.lane.b32.xlu0 %v5401, 48
        %v5539 = vpop.permute.xlu0 %5538
        %5540 = vrot.lane.b32.xlu0 %v5402, 48
        %v5541 = vpop.permute.xlu0 %5540
        %5542 = vrot.lane.b32.xlu0 %v5403, 48
        %v5543 = vpop.permute.xlu0 %5542
        %5544 = vrot.lane.b32.xlu0 %v5404, 48
        %v5545 = vpop.permute.xlu0 %5544
        %5546 = vrot.lane.b32.xlu0 %v5405, 48
        %v5547 = vpop.permute.xlu0 %5546
        %5548 = vrot.lane.b32.xlu0 %v5533, 48
        %v5549 = vpop.permute.xlu0 %5548
        %v5551 = vunpack.c.l.b16 %v5360
        %v5552 = vpack.c.b16 %v5551, %v5551
        %v5554 = vshll.u32 %v5533, 16
        %v5556 = vrot.slane %v5554, 1
        %v5557 = vsel %vm287, %v5471, %v5556
        %v5558 = vshrl.u32 %v5533, 16
        %v5560 = vor.u32 %v5558, %v5556
        %v5562 = vshll.u32 %v5552, 16
        %v5564 = vrot.slane %v5562, 1
        %v5565 = vsel %vm287, %v5560, %v5564
        %5566 = vrot.lane.b32.xlu0 %v5428, 64
        %v5567 = vpop.permute.xlu0 %5566
        %5568 = vrot.lane.b32.xlu0 %v5436, 64
        %v5569 = vpop.permute.xlu0 %5568
        %5570 = vrot.lane.b32.xlu0 %v5444, 64
        %v5571 = vpop.permute.xlu0 %5570
        %5572 = vrot.lane.b32.xlu0 %v5452, 64
        %v5573 = vpop.permute.xlu0 %5572
        %5574 = vrot.lane.b32.xlu0 %v5460, 64
        %v5575 = vpop.permute.xlu0 %5574
        %5576 = vrot.lane.b32.xlu0 %v5468, 64
        %v5577 = vpop.permute.xlu0 %5576
        %5578 = vrot.lane.b32.xlu0 %v5557, 64
        %v5579 = vpop.permute.xlu0 %5578
        %5580 = vrot.lane.b32.xlu0 %v5565, 64
        %v5581 = vpop.permute.xlu0 %5580
        %v5583 = vunpack.c.l.b16 %v5361
        %v5584 = vpack.c.b16 %v5385, %v5583
        %v5585 = vrot.slane %v5584, 1
        %v5586 = vsel %vm355, %v5585, %v5499
        %v5587 = vrot.slane %v5533, 1
        %v5588 = vsel %vm355, %v5509, %v5587
        %v5589 = vrot.slane %v5552, 1
        %v5590 = vsel %vm355, %v5587, %v5589
        %5591 = vrot.lane.b32.xlu0 %v5586, 80
        %v5592 = vpop.permute.xlu0 %5591
        %5593 = vrot.lane.b32.xlu0 %v5502, 80
        %v5594 = vpop.permute.xlu0 %5593
        %5595 = vrot.lane.b32.xlu0 %v5504, 80
        %v5596 = vpop.permute.xlu0 %5595
        %5597 = vrot.lane.b32.xlu0 %v5506, 80
        %v5598 = vpop.permute.xlu0 %5597
        %5599 = vrot.lane.b32.xlu0 %v5508, 80
        %v5600 = vpop.permute.xlu0 %5599
        %5601 = vrot.lane.b32.xlu0 %v5510, 80
        %v5602 = vpop.permute.xlu0 %5601
        %5603 = vrot.lane.b32.xlu0 %v5588, 80
        %v5604 = vpop.permute.xlu0 %5603
        %5605 = vrot.lane.b32.xlu0 %v5590, 80
        %v5606 = vpop.permute.xlu0 %5605
        %v5609 = vunpack.c.l.b16 %v5362
        %v5610 = vunpack.c.l.b16 %v5363
        %v5611 = vpack.c.b16 %v5610, %v5609
        %5612 = vrot.lane.b32.xlu0 %v5400, 96
        %v5613 = vpop.permute.xlu0 %5612
        %5614 = vrot.lane.b32.xlu0 %v5401, 96
        %v5615 = vpop.permute.xlu0 %5614
        %5616 = vrot.lane.b32.xlu0 %v5402, 96
        %v5617 = vpop.permute.xlu0 %5616
        %5618 = vrot.lane.b32.xlu0 %v5403, 96
        %v5619 = vpop.permute.xlu0 %5618
        %5620 = vrot.lane.b32.xlu0 %v5404, 96
        %v5621 = vpop.permute.xlu0 %5620
        %5622 = vrot.lane.b32.xlu0 %v5405, 96
        %v5623 = vpop.permute.xlu0 %5622
        %5624 = vrot.lane.b32.xlu0 %v5533, 96
        %v5625 = vpop.permute.xlu0 %5624
        %5626 = vrot.lane.b32.xlu0 %v5611, 96
        %v5627 = vpop.permute.xlu0 %5626
        %v5629 = vunpack.c.l.b16 %v5364
        %v5630 = vpack.c.b16 %v5629, %v5629
        %v5632 = vshll.u32 %v5611, 16
        %v5634 = vrot.slane %v5632, 1
        %v5635 = vsel %vm287, %v5560, %v5634
        %v5636 = vshrl.u32 %v5611, 16
        %v5638 = vor.u32 %v5636, %v5634
        %v5640 = vshll.u32 %v5630, 16
        %v5642 = vrot.slane %v5640, 1
        %v5643 = vsel %vm287, %v5638, %v5642
        %5644 = vrot.lane.b32.xlu0 %v5436, 112
        %v5645 = vpop.permute.xlu0 %5644
        %5646 = vrot.lane.b32.xlu0 %v5444, 112
        %v5647 = vpop.permute.xlu0 %5646
        %5648 = vrot.lane.b32.xlu0 %v5452, 112
        %v5649 = vpop.permute.xlu0 %5648
        %5650 = vrot.lane.b32.xlu0 %v5460, 112
        %v5651 = vpop.permute.xlu0 %5650
        %5652 = vrot.lane.b32.xlu0 %v5468, 112
        %v5653 = vpop.permute.xlu0 %5652
        %5654 = vrot.lane.b32.xlu0 %v5557, 112
        %v5655 = vpop.permute.xlu0 %5654
        %5656 = vrot.lane.b32.xlu0 %v5635, 112
        %v5657 = vpop.permute.xlu0 %5656
        %5658 = vrot.lane.b32.xlu0 %v5643, 112
        %v5659 = vpop.permute.xlu0 %5658
        %v5661 = vunpack.c.l.b16 %v5365
        %v5662 = vpack.c.b16 %v5387, %v5661
        %v5663 = vrot.slane %v5662, 1
        %v5664 = vsel %vm355, %v5663, %v5501
        %v5665 = vrot.slane %v5611, 1
        %v5666 = vsel %vm355, %v5587, %v5665
        %v5667 = vrot.slane %v5630, 1
        %v5668 = vsel %vm355, %v5665, %v5667
        %v5670 = vsel %vm629, %v5398, %v5478
        %v5672 = vsel %vm629, %v5399, %v5480
        %v5674 = vsel %vm629, %v5400, %v5482
        %v5676 = vsel %vm629, %v5401, %v5484
        %v5678 = vsel %vm629, %v5402, %v5486
        %v5680 = vsel %vm629, %v5403, %v5488
        %v5682 = vsel %vm629, %v5404, %v5490
        %v5684 = vsel %vm629, %v5405, %v5492
        %v5686 = vsel %vm681, %v5670, %v5514
        %v5688 = vsel %vm681, %v5672, %v5516
        %v5690 = vsel %vm681, %v5674, %v5518
        %v5692 = vsel %vm681, %v5676, %v5520
        %v5694 = vsel %vm681, %v5678, %v5522
        %v5696 = vsel %vm681, %v5680, %v5524
        %v5698 = vsel %vm681, %v5682, %v5526
        %v5700 = vsel %vm681, %v5684, %v5528
        %v5702 = vsel %vm3231, %v5686, %v5535
        %v5704 = vsel %vm3231, %v5688, %v5537
        %v5706 = vsel %vm3231, %v5690, %v5539
        %v5708 = vsel %vm3231, %v5692, %v5541
        %v5710 = vsel %vm3231, %v5694, %v5543
        %v5712 = vsel %vm3231, %v5696, %v5545
        %v5714 = vsel %vm3231, %v5698, %v5547
        %v5716 = vsel %vm3231, %v5700, %v5549
        %v5718 = vsel %vm3248, %v5702, %v5567
        %v5720 = vsel %vm3248, %v5704, %v5569
        %v5722 = vsel %vm3248, %v5706, %v5571
        %v5724 = vsel %vm3248, %v5708, %v5573
        %v5726 = vsel %vm3248, %v5710, %v5575
        %v5728 = vsel %vm3248, %v5712, %v5577
        %v5730 = vsel %vm3248, %v5714, %v5579
        %v5732 = vsel %vm3248, %v5716, %v5581
        %v5734 = vsel %vm3265, %v5718, %v5592
        %v5736 = vsel %vm3265, %v5720, %v5594
        %v5738 = vsel %vm3265, %v5722, %v5596
        %v5740 = vsel %vm3265, %v5724, %v5598
        %v5742 = vsel %vm3265, %v5726, %v5600
        %v5744 = vsel %vm3265, %v5728, %v5602
        %v5746 = vsel %vm3265, %v5730, %v5604
        %v5748 = vsel %vm3265, %v5732, %v5606
        %v5750 = vsel %vm3282, %v5734, %v5613
        %v5752 = vsel %vm3282, %v5736, %v5615
        %v5754 = vsel %vm3282, %v5738, %v5617
        %v5756 = vsel %vm3282, %v5740, %v5619
        %v5758 = vsel %vm3282, %v5742, %v5621
        %v5760 = vsel %vm3282, %v5744, %v5623
        %v5762 = vsel %vm3282, %v5746, %v5625
        %v5764 = vsel %vm3282, %v5748, %v5627
        %v5766 = vsel %vm3299, %v5750, %v5645
        %v5769 = vsel %vm3299, %v5752, %v5647
        %v5772 = vsel %vm3299, %v5754, %v5649
        %v5775 = vsel %vm3299, %v5756, %v5651
        %v5778 = vsel %vm3299, %v5758, %v5653
        %v5781 = vsel %vm3299, %v5760, %v5655
        %v5784 = vsel %vm3299, %v5762, %v5657
        %v5787 = vsel %vm3299, %v5764, %v5659
        %v5790 = vlaneseq
        %v5791 = vshrl.u32 %v5790, 7
        %v5792 = vsub.s32 0, %v5791
        %v5793 = vrot.slane %v5339, %v5792
        %v5813 = vunpack.c.l.b16 %v5320
        %v5814 = vunpack.c.l.b16 %v5321
        %v5815 = vunpack.c.l.b16 %v5322
        %v5816 = vunpack.c.l.b16 %v5323
        %v5817 = vunpack.c.l.b16 %v5324
        %v5818 = vunpack.c.l.b16 %v5325
        %v5819 = vunpack.c.l.b16 %v5326
        %v5820 = vunpack.c.l.b16 %v5327
        %v5821 = vunpack.c.l.b16 %v5328
        %v5822 = vunpack.c.l.b16 %v5329
        %v5823 = vunpack.c.l.b16 %v5330
        %v5824 = vunpack.c.l.b16 %v5331
        %v5825 = vunpack.c.l.b16 %v5332
        %v5826 = vunpack.c.l.b16 %v5333
        %v5827 = vunpack.c.l.b16 %v5334
        %v5828 = vunpack.c.l.b16 %v5335
        %v5829 = vunpack.c.l.b16 %v5336
        %v5830 = vunpack.c.l.b16 %v5337
        %v5831 = vpack.c.b16 %v5814, %v5813
        %v5832 = vpack.c.b16 %v5816, %v5815
        %v5833 = vpack.c.b16 %v5818, %v5817
        %v5834 = vpack.c.b16 %v5820, %v5819
        %v5835 = vpack.c.b16 %v5822, %v5821
        %v5836 = vpack.c.b16 %v5824, %v5823
        %v5837 = vpack.c.b16 %v5826, %v5825
        %v5838 = vpack.c.b16 %v5828, %v5827
        %v5839 = vpack.c.b16 %v5830, %v5829
        %v5850 = vsel %vm629, %v5664, 0
        %v5853 = vsel %vm629, %v5504, 0
        %v5856 = vsel %vm629, %v5506, 0
        %v5859 = vsel %vm629, %v5508, 0
        %v5862 = vsel %vm629, %v5510, 0
        %v5865 = vsel %vm629, %v5588, 0
        %v5868 = vsel %vm629, %v5666, 0
        %v5871 = vsel %vm629, %v5668, 0
        %5873 = vmatprep.subr.bf16.mxu0 0
        %5874 = vmatpush1.bf16.msra.mxu0 %v5838
        %5875 = vmatprep.subr.bf16.mxu0 0
        %5876 = vmatpush1.bf16.msra.mxu0 %v5837
        %5877 = vmatprep.subr.bf16.mxu0 0
        %5878 = vmatpush1.bf16.msra.mxu0 %v5836
        %5879 = vmatprep.subr.bf16.mxu0 0
        %5880 = vmatpush1.bf16.msra.mxu0 %v5835
        %5881 = vmatprep.subr.bf16.mxu0 0
        %5882 = vmatpush1.bf16.msra.mxu0 %v5834
        %5883 = vmatprep.subr.bf16.mxu0 0
        %5884 = vmatpush1.bf16.msra.mxu0 %v5833
        %5885 = vmatprep.subr.bf16.mxu0 0
        %5886 = vmatpush1.bf16.msra.mxu0 %v5832
        %5887 = vmatprep.subr.bf16.mxu0 0
        %5888 = vmatpush1.bf16.msra.mxu0 %v5831
        %5889 = vmatprep.subr.bf16.mxu0 0
        %5890 = vmatpush2.bf16.msra.mxu0 0
        %5891 = vmatprep.subr.bf16.mxu0 0
        %5892 = vmatpush2.bf16.msra.mxu0 0
        %5893 = vmatprep.subr.bf16.mxu0 0
        %5894 = vmatpush2.bf16.msra.mxu0 0
        %5895 = vmatprep.subr.bf16.mxu0 0
        %5896 = vmatpush2.bf16.msra.mxu0 0
        %5897 = vmatprep.subr.bf16.mxu0 0
        %5898 = vmatpush2.bf16.msra.mxu0 0
        %5899 = vmatprep.subr.bf16.mxu0 0
        %5900 = vmatpush2.bf16.msra.mxu0 0
        %5901 = vmatprep.subr.bf16.mxu0 0
        %5902 = vmatpush2.bf16.msra.mxu0 0
        %5903 = vmatprep.subr.bf16.mxu0 0
        %5904 = vmatpush2.bf16.msra.mxu0 %v5839
        %5905 = vmatprep.mubr.bf16.mxu0 %v5850
        %5906 = vmatmul.mubr.bf16.gmra.mxu0 %v5766
        %v5907 = vpop.f32.mrf.mxu0
        %v5908 = vadd.f32 %v5793, %v5907
        %v5909 = vpop.f32.mrf.mxu0
        %v5910 = vpop.f32.mrf.mxu0
        %v5911 = vpop.f32.mrf.mxu0
        %5912 = vmatprep.mubr.bf16.mxu0 %v5853
        %5913 = vmatmul.mubr.bf16.gmra.mxu0 %v5769
        %v5914 = vpop.f32.mrf.mxu0
        %v5915 = vadd.f32 %v5793, %v5914
        %v5916 = vpop.f32.mrf.mxu0
        %v5917 = vpop.f32.mrf.mxu0
        %v5918 = vpop.f32.mrf.mxu0
        %5919 = vmatprep.mubr.bf16.mxu0 %v5856
        %5920 = vmatmul.mubr.bf16.gmra.mxu0 %v5772
        %v5921 = vpop.f32.mrf.mxu0
        %v5922 = vadd.f32 %v5793, %v5921
        %v5923 = vpop.f32.mrf.mxu0
        %v5924 = vpop.f32.mrf.mxu0
        %v5925 = vpop.f32.mrf.mxu0
        %5926 = vmatprep.mubr.bf16.mxu0 %v5859
        %5927 = vmatmul.mubr.bf16.gmra.mxu0 %v5775
        %v5928 = vpop.f32.mrf.mxu0
        %v5929 = vadd.f32 %v5793, %v5928
        %v5930 = vpop.f32.mrf.mxu0
        %v5931 = vpop.f32.mrf.mxu0
        %v5932 = vpop.f32.mrf.mxu0
        %5933 = vmatprep.mubr.bf16.mxu0 %v5862
        %5934 = vmatmul.mubr.bf16.gmra.mxu0 %v5778
        %v5935 = vpop.f32.mrf.mxu0
        %v5936 = vadd.f32 %v5793, %v5935
        %v5937 = vpop.f32.mrf.mxu0
        %v5938 = vpop.f32.mrf.mxu0
        %v5939 = vpop.f32.mrf.mxu0
        %5940 = vmatprep.mubr.bf16.mxu0 %v5865
        %5941 = vmatmul.mubr.bf16.gmra.mxu0 %v5781
        %v5942 = vpop.f32.mrf.mxu0
        %v5943 = vadd.f32 %v5793, %v5942
        %v5944 = vpop.f32.mrf.mxu0
        %v5945 = vpop.f32.mrf.mxu0
        %v5946 = vpop.f32.mrf.mxu0
        %5947 = vmatprep.mubr.bf16.mxu0 %v5868
        %5948 = vmatmul.mubr.bf16.gmra.mxu0 %v5784
        %v5949 = vpop.f32.mrf.mxu0
        %v5950 = vadd.f32 %v5793, %v5949
        %v5951 = vpop.f32.mrf.mxu0
        %v5952 = vpop.f32.mrf.mxu0
        %v5953 = vpop.f32.mrf.mxu0
        %5954 = vmatprep.mubr.bf16.mxu0 %v5871
        %5955 = vmatmul.mubr.bf16.gmra.mxu0 %v5787
        %v5956 = vpop.f32.mrf.mxu0
        %v5957 = vadd.f32 %v5793, %v5956
        %v5958 = vpop.f32.mrf.mxu0
        %v5959 = vpop.f32.mrf.mxu0
        %v5960 = vpop.f32.mrf.mxu0
        %5961 = vdwg.mxu0
        %v5962 = vld [vmem:[#allocation4] sm:$0xff]
        %v5963 = vld [vmem:[#allocation4 + $0x8] sm:$0xff]
        %v5964 = vld [vmem:[#allocation4 + $0x10] sm:$0xff]
        %v5965 = vld [vmem:[#allocation4 + $0x18] sm:$0xff]
        %v5966 = vld [vmem:[#allocation4 + $0x20] sm:$0xff]
        %v5967 = vld [vmem:[#allocation4 + $0x28] sm:$0xff]
        %v5968 = vld [vmem:[#allocation4 + $0x30] sm:$0xff]
        %v5969 = vld [vmem:[#allocation4 + $0x38] sm:$0xff]
        %v5970 = vadd.f32 %v5962, %v5908
        %v5971 = vadd.f32 %v5963, %v5915
        %v5972 = vadd.f32 %v5964, %v5922
        %v5973 = vadd.f32 %v5965, %v5929
        %v5974 = vadd.f32 %v5966, %v5936
        %v5975 = vadd.f32 %v5967, %v5943
        %v5976 = vadd.f32 %v5968, %v5950
        %v5977 = vadd.f32 %v5969, %v5957
        %5978 = vst.msk [vmem:[#allocation4] sm:$0xff] %vm629, %v5970
        %5979 = vst.msk [vmem:[#allocation4 + $0x8] sm:$0xff] %vm629, %v5971
        %5980 = vst.msk [vmem:[#allocation4 + $0x10] sm:$0xff] %vm629, %v5972
        %5981 = vst.msk [vmem:[#allocation4 + $0x18] sm:$0xff] %vm629, %v5973
        %5982 = vst.msk [vmem:[#allocation4 + $0x20] sm:$0xff] %vm629, %v5974
        %5983 = vst.msk [vmem:[#allocation4 + $0x28] sm:$0xff] %vm629, %v5975
        %5984 = vst.msk [vmem:[#allocation4 + $0x30] sm:$0xff] %vm629, %v5976
        %5985 = vst.msk [vmem:[#allocation4 + $0x38] sm:$0xff] %vm629, %v5977
        %v5986 = vld [vmem:[#allocation4] sm:$0xff]
        %v5987 = vld [vmem:[#allocation4 + $0x8] sm:$0xff]
        %v5988 = vld [vmem:[#allocation4 + $0x10] sm:$0xff]
        %v5989 = vld [vmem:[#allocation4 + $0x18] sm:$0xff]
        %v5990 = vld [vmem:[#allocation4 + $0x20] sm:$0xff]
        %v5991 = vld [vmem:[#allocation4 + $0x28] sm:$0xff]
        %v5992 = vld [vmem:[#allocation4 + $0x30] sm:$0xff]
        %v5993 = vld [vmem:[#allocation4 + $0x38] sm:$0xff]
        %5994 = vst.msk [vmem:[%s217] sm:$0xff] %vm629, %v5986
        %5995 = vst.msk [vmem:[%s217 + $0x8] sm:$0xff] %vm629, %v5987
        %5996 = vst.msk [vmem:[%s217 + $0x10] sm:$0xff] %vm629, %v5988
        %5997 = vst.msk [vmem:[%s217 + $0x18] sm:$0xff] %vm629, %v5989
        %5998 = vst.msk [vmem:[%s217 + $0x20] sm:$0xff] %vm629, %v5990
        %5999 = vst.msk [vmem:[%s217 + $0x28] sm:$0xff] %vm629, %v5991
        %6000 = vst.msk [vmem:[%s217 + $0x30] sm:$0xff] %vm629, %v5992
        %6001 = vst.msk [vmem:[%s217 + $0x38] sm:$0xff] %vm629, %v5993
        %s6002 = sand.u32 %s137, 1
        %s6003 = scalar_lea.sflag [#allocation7], %s6002
        %s6004 = sand.u32 %s137, 1
        %s6005 = smul.addr %s6004, 64
        %s6006 = scalar_lea.vmem [#allocation6], %s6005
        // Predicated region
        $region41: #{conv_sequence_forward.1} parent=39 // pred_check
          %p6007 = pneg %p147
        $region42: #{conv_sequence_forward.1} parent=39 // pred_check_branch
          %6009 = sbr.rel (%p6007) target = $region44
        $region43: #{conv_sequence_forward.1} parent=39 // pred_region
          %s6011 = ssub.s32 1024, 1024
          %6012 = vsyncadd %s6003, %s6011
          %s6013 = smul.addr %s19, 8
          %s6014 = smul.addr %s6013, 128
          %s6015 = scalar_lea.hbm %s5, %s6014
          %s6016 = sshll.u32 %s6006, 4
          %s6017 = int_to_ptr.vmem [resolvable:$true] %s6016
          %6022 = dma.vmem_to_hbm [thread:$0]  %s6017, 1024, %s6015, %s6003, 128, 128, 8
        $region44: #{conv_sequence_forward.1} parent=39 // pred_fallthru
          _
      $region40: #{conv_sequence_forward.1} parent=5 // pred_fallthru
        _
      %p6023 = scmp.le.s32.totalorder 2, %s14
      // Predicated region
      $region45: #{conv_sequence_forward.1} parent=5 // pred_check
        %p6024 = pneg %p6023
      $region46: #{conv_sequence_forward.1} parent=5 // pred_check_branch
        %6026 = sbr.rel (%p6024) target = $region48
      $region47: #{conv_sequence_forward.1} parent=5 // pred_region
        %s6027 = ssub.s32 %s14, 2
        // Predicated region
        $region49: #{conv_sequence_forward.1} parent=47 // pred_check
          %p6028 = pneg %p153
        $region50: #{conv_sequence_forward.1} parent=47 // pred_check_branch
          %6030 = sbr.rel (%p6028) target = $region52
        $region51: #{conv_sequence_forward.1} parent=47 // pred_region
          %s6031 = sand.u32 %s138, 1
          %s6032 = scalar_lea.sflag [#allocation7], %s6031
          %s6033 = sand.u32 %s138, 1
          %s6034 = smul.addr %s6033, 64
          %s6035 = scalar_lea.vmem [#allocation6], %s6034
          %6036 = dma.done %s6032, 1024
        $region52: #{conv_sequence_forward.1} parent=47 // pred_fallthru
          _
      $region48: #{conv_sequence_forward.1} parent=5 // pred_fallthru
        _
    $region6: #{conv_sequence_forward.1} parent=1 // loop_footer
      %s18 = sadd.s32 1, %s14
    $region7: #{conv_sequence_forward.1} parent=1 // loop_footer_branch
      %13 = sbr.rel target = $region3
    $region8: #{conv_sequence_forward.1} parent=1 // loop_exit
      _
    %6037 = vsyncpa [#allocation7], 1
    %s6038 = scalar_lea.sflag [#allocation7], 1
    %6039 = vsyncpa %s6038, 1

</llo_original>
